<compile_context>
chip_gen: v5e
topology: v5e:2x2
jax: 0.10.0
libtpu: 0.0.40
codegen_flags: <defaults>
</compile_context>

<pallas_src>
import functools

import jax
import jax.numpy as jnp
from jax import lax
from jax.experimental import pallas as pl
from jax.experimental.pallas import tpu as pltpu


def _lstm_2fc_kernel(x_ref,      # (T, Bb, D)   bf16 input block, time-major
                     w_ih_ref,   # (D, 4H)      bf16 = W_ih^T   (i,f,o,g)
                     w_hh_ref,   # (H, 4H)      bf16 = W_hh^T   (i,f,o,g)
                     b_ref,      # (1, 4H)      f32  = b_ih + b_hh (i,f,o,g)
                     w1_ref,     # (H, Hh)      bf16 = fc1.weight^T
                     b1_ref,     # (1, Hh)      f32
                     w2_ref,     # (1, Hh)      f32  = fc2.weight
                     b2_ref,     # (1, 1)       f32
                     out_ref,    # (1, T, Bb)   f32  output block (batch on lanes)
                     hall_scr,   # (T, Bb, H)   bf16 scratch: all hidden states
                     xproj_scr): # (T, Bb, 4H)  bf16 scratch: input projection
    T, Bb, D = x_ref.shape
    H = w_hh_ref.shape[0]

    # ---- Phase 1: input projection for ALL timesteps as one MXU matmul,
    #      off the serial critical path. ----
    # TODO(synk): x's last dim (D=16) under-fills the 128-lane tile; for very
    # large T the projection could be hoisted to the wrapper as a lane-dense
    # (T, B, 4H) feed to drop this scratch entirely.
    x2d = x_ref[...].reshape(T * Bb, D)                        # bf16
    xproj = jnp.dot(x2d, w_ih_ref[...],
                    preferred_element_type=jnp.float32) + b_ref[...]
    xproj_scr[...] = xproj.reshape(T, Bb, 4 * H).astype(xproj_scr.dtype)

    # ---- Phase 2: serial LSTM recurrence. h/c are loop-carried values
    #      (register-resident); only h @ W_hh + gate math per step. ----
    w_hh = w_hh_ref[...]                                       # loop-invariant
    h0 = jnp.zeros((Bb, H), jnp.float32)
    c0 = jnp.zeros((Bb, H), jnp.float32)

    def step(t, carry):
        h, c = carry
        gates = xproj_scr[t].astype(jnp.float32) + jnp.dot(
            h.astype(jnp.bfloat16), w_hh, preferred_element_type=jnp.float32)
        # gate order (i, f, o, g): one contiguous sigmoid + one tanh.
        sig = jax.nn.sigmoid(gates[:, :3 * H])
        i_g = sig[:, 0 * H:1 * H]
        f_g = sig[:, 1 * H:2 * H]
        o_g = sig[:, 2 * H:3 * H]
        g_g = jnp.tanh(gates[:, 3 * H:])
        c_new = f_g * c + i_g * g_g
        h_new = o_g * jnp.tanh(c_new)
        hall_scr[t] = h_new.astype(hall_scr.dtype)
        return (h_new, c_new)

    lax.fori_loop(0, T, step, (h0, c0), unroll=min(T, 8))

    # ---- Phase 3: FC head batched over all (t, b); single lane-dense output
    #      store. Dropout layers are identity (eval). ----
    h2d = hall_scr[...].reshape(T * Bb, H)                     # bf16
    a1 = jnp.maximum(h2d, 0.1 * h2d)                           # LeakyReLU(0.1)
    z1 = jnp.dot(a1, w1_ref[...],
                 preferred_element_type=jnp.float32) + b1_ref[...]
    z1 = z1.reshape(T, Bb, -1)
    a2 = jnp.maximum(z1, 0.1 * z1)                             # LeakyReLU(0.1)
    # fc2 has output dim 1: elementwise-mul + lane reduction keeps the output
    # (T, Bb) lane-dense (no trailing-1 dim, no masked stores).
    z2 = jnp.sum(a2 * w2_ref[...], axis=-1) + b2_ref[...]      # (T, Bb)
    out_ref[0] = z2.astype(out_ref.dtype)


def lstm_single_2fc_forward(x, params, *, b_blk=128):
    """x: (B, T, input_dim) float32 (batch_first, like the PyTorch module)."""
    B, T, D = x.shape
    H = params["w_hh_t"].shape[0]
    Hh = params["w1_t"].shape[1]

    # Pad batch to the 128-lane block; padded rows are independent and sliced
    # off below. G >= 2 feeds both v7x TensorCores when B > b_blk.
    B_pad = ((B + b_blk - 1) // b_blk) * b_blk
    G = B_pad // b_blk

    x_tm = jnp.transpose(x, (1, 0, 2)).astype(jnp.bfloat16)    # (T, B, D)
    if B_pad != B:
        x_tm = jnp.pad(x_tm, ((0, 0), (0, B_pad - B), (0, 0)))

    # bf16 matmul operands (MXU-native); biases / fc2 stay f32.
    w_ih = params["w_ih_t"].astype(jnp.bfloat16)
    w_hh = params["w_hh_t"].astype(jnp.bfloat16)
    w1 = params["w1_t"].astype(jnp.bfloat16)

    # Rough VMEM footprint -> explicit scoped limit with headroom.
    est = (2 * T * b_blk * 128 * 2            # x block x2 (lane-padded), bf16
           + 2 * T * b_blk * 4                # out block x2, f32
           + T * b_blk * 4 * H * 2            # xproj scratch, bf16
           + T * b_blk * H * 2                # hidden-state scratch, bf16
           + 4 * (D * 4 * H + H * 4 * H + H * Hh) * 2
           + 4 * (4 * H + 2 * Hh + 1) * 4)
    vmem_limit = int(min(max(2 * est, 16 * 2**20), 48 * 2**20))

    grid_spec = pltpu.PrefetchScalarGridSpec(
        num_scalar_prefetch=0,
        grid=(G,),                                             # batch blocks
        in_specs=[
            pl.BlockSpec((T, b_blk, D), lambda g: (0, g, 0)),  # x
            pl.BlockSpec((D, 4 * H), lambda g: (0, 0)),        # W_ih^T
            pl.BlockSpec((H, 4 * H), lambda g: (0, 0)),        # W_hh^T
            pl.BlockSpec((1, 4 * H), lambda g: (0, 0)),        # bias
            pl.BlockSpec((H, Hh), lambda g: (0, 0)),           # fc1.W^T
            pl.BlockSpec((1, Hh), lambda g: (0, 0)),           # fc1.b
            pl.BlockSpec((1, Hh), lambda g: (0, 0)),           # fc2.W
            pl.BlockSpec((1, 1), lambda g: (0, 0)),            # fc2.b
        ],
        out_specs=pl.BlockSpec((1, T, b_blk), lambda g: (g, 0, 0)),
        scratch_shapes=[
            pltpu.VMEM((T, b_blk, H), jnp.bfloat16),           # all hidden
            pltpu.VMEM((T, b_blk, 4 * H), jnp.bfloat16),       # input proj
        ],
    )

    out_blocks = pl.pallas_call(
        _lstm_2fc_kernel,
        out_shape=jax.ShapeDtypeStruct((G, T, b_blk), jnp.float32),
        grid_spec=grid_spec,
        compiler_params=pltpu.CompilerParams(
            dimension_semantics=("parallel",),
            vmem_limit_bytes=vmem_limit),
    )(x_tm, w_ih, w_hh, params["b"], w1, params["b1"],
      params["w2"], params["b2"])

    # (G, T, b_blk) -> (B_pad, T) -> (B, T, 1)
    out = jnp.transpose(out_blocks, (0, 2, 1)).reshape(B_pad, T)[:B]
    return out[:, :, None]


def init_params(key, input_dim, hidden_dim):
    """Deterministic init mimicking PyTorch uniform(-k, k); gates pre-permuted
    from PyTorch's (i, f, g, o) packing to (i, f, o, g)."""
    H = hidden_dim
    Hh = hidden_dim // 2
    k_lstm = 1.0 / jnp.sqrt(H)
    k_fc1 = 1.0 / jnp.sqrt(H)
    k_fc2 = 1.0 / jnp.sqrt(Hh)
    ks = jax.random.split(key, 10)

    def u(k, shape, bound):
        return jax.random.uniform(k, shape, jnp.float32, -bound, bound)

    w_ih = u(ks[0], (4 * H, input_dim), k_lstm)   # PyTorch layout (4H, D)
    w_hh = u(ks[1], (4 * H, H), k_lstm)
    b_ih = u(ks[2], (4 * H,), k_lstm)
    b_hh = u(ks[3], (4 * H,), k_lstm)
    w1 = u(ks[4], (Hh, H), k_fc1)                 # fc1.weight
    b1 = u(ks[5], (Hh,), k_fc1)
    w2 = u(ks[6], (1, Hh), k_fc2)                 # fc2.weight
    b2 = u(ks[7], (1,), k_fc2)

    # (i, f, g, o) -> (i, f, o, g) row permutation.
    perm = jnp.concatenate([jnp.arange(0, 2 * H),
                            jnp.arange(3 * H, 4 * H),
                            jnp.arange(2 * H, 3 * H)])
    w_ih = w_ih[perm]
    w_hh = w_hh[perm]
    b = (b_ih + b_hh)[perm]

    return {
        "w_ih_t": w_ih.T,                          # (D, 4H)   i,f,o,g cols
        "w_hh_t": w_hh.T,                          # (H, 4H)
        "b": b.reshape(1, 4 * H),                  # (1, 4H)
        "w1_t": w1.T,                              # (H, Hh)
        "b1": b1.reshape(1, Hh),                   # (1, Hh)
        "w2": w2,                                  # (1, Hh)
        "b2": b2.reshape(1, 1),                    # (1, 1)
    }


def reference_forward(x, params):
    """Pure-JAX f32 reference (same (i,f,o,g) packing => same semantics)."""
    B, T, D = x.shape
    H = params["w_hh_t"].shape[0]

    def cell(carry, x_t):
        h, c = carry
        gates = x_t @ params["w_ih_t"] + h @ params["w_hh_t"] + params["b"]
        i = jax.nn.sigmoid(gates[:, 0 * H:1 * H])
        f = jax.nn.sigmoid(gates[:, 1 * H:2 * H])
        o = jax.nn.sigmoid(gates[:, 2 * H:3 * H])
        g = jnp.tanh(gates[:, 3 * H:4 * H])
        c = f * c + i * g
        h = o * jnp.tanh(c)
        return (h, c), h

    h0 = jnp.zeros((B, H), jnp.float32)
    c0 = jnp.zeros((B, H), jnp.float32)
    _, hs = lax.scan(cell, (h0, c0), jnp.transpose(x, (1, 0, 2)))  # (T, B, H)
    hs = jnp.transpose(hs, (1, 0, 2))                              # (B, T, H)

    a1 = jnp.maximum(hs, 0.1 * hs)
    z1 = a1 @ params["w1_t"] + params["b1"]
    a2 = jnp.maximum(z1, 0.1 * z1)
    z2 = a2 @ params["w2"].T + params["b2"]
    return z2


if __name__ == "__main__":
    B, T, INPUT_DIM, HIDDEN_DIM = 2, 8, 16, 32

    key = jax.random.PRNGKey(0)
    kx, kp = jax.random.split(key)
    x = jax.random.normal(kx, (B, T, INPUT_DIM), jnp.float32)
    params = init_params(kp, INPUT_DIM, HIDDEN_DIM)

    fwd = jax.jit(functools.partial(lstm_single_2fc_forward, params=params))
    out = jax.block_until_ready(fwd(x))
    ref = jax.block_until_ready(reference_forward(x, params))

    assert out.shape == (B, T, 1), out.shape
    # bf16 matmul operands (f32 accumulation) => loosened tolerance vs f32 ref.
    assert jnp.allclose(out, ref, atol=2e-2, rtol=2e-2), \
        float(jnp.max(jnp.abs(out - ref)))
    print("KERNEL_OK")
</pallas_src>

<mosaic_0001>
module attributes {stable_mosaic.version = 11 : i64} {
  func.func @_lstm_2fc_kernel(%arg0: i32, %arg1: memref<8x128x16xbf16, #tpu.memory_space<vmem>>, %arg2: memref<16x128xbf16, #tpu.memory_space<vmem>>, %arg3: memref<32x128xbf16, #tpu.memory_space<vmem>>, %arg4: memref<1x128xf32, #tpu.memory_space<vmem>>, %arg5: memref<32x16xbf16, #tpu.memory_space<vmem>>, %arg6: memref<1x16xf32, #tpu.memory_space<vmem>>, %arg7: memref<1x16xf32, #tpu.memory_space<vmem>>, %arg8: memref<1x1xf32, #tpu.memory_space<vmem>>, %arg9: memref<1x8x128xf32, #tpu.memory_space<vmem>>, %arg10: memref<8x128x32xbf16, #tpu.memory_space<vmem>>, %arg11: memref<8x128x128xbf16, #tpu.memory_space<vmem>>) attributes {dimension_semantics = [#tpu.dimension_semantics<parallel>], iteration_bounds = array<i64: 1>, scalar_prefetch = 0 : i64, scratch_operands = 2 : i64, tpu.core_type = #tpu.core_type<tc>, window_params = [{transform_indices = @transform_0, window_bounds = array<i64: 8, 128, 16>}, {pipeline_mode = #tpu.pipeline_mode<synchronous>, transform_indices = @transform_1, window_bounds = array<i64: 16, 128>}, {pipeline_mode = #tpu.pipeline_mode<synchronous>, transform_indices = @transform_2, window_bounds = array<i64: 32, 128>}, {pipeline_mode = #tpu.pipeline_mode<synchronous>, transform_indices = @transform_3, window_bounds = array<i64: 1, 128>}, {pipeline_mode = #tpu.pipeline_mode<synchronous>, transform_indices = @transform_4, window_bounds = array<i64: 32, 16>}, {pipeline_mode = #tpu.pipeline_mode<synchronous>, transform_indices = @transform_5, window_bounds = array<i64: 1, 16>}, {pipeline_mode = #tpu.pipeline_mode<synchronous>, transform_indices = @transform_6, window_bounds = array<i64: 1, 16>}, {pipeline_mode = #tpu.pipeline_mode<synchronous>, transform_indices = @transform_7, window_bounds = array<i64: 1, 1>}, {transform_indices = @transform_8, window_bounds = array<i64: 1, 8, 128>}]} {
    %c0 = arith.constant 0 : index
    %c0_0 = arith.constant 0 : index
    %c0_1 = arith.constant 0 : index
    %0 = vector.load %arg1[%c0, %c0_0, %c0_1] : memref<8x128x16xbf16, #tpu.memory_space<vmem>>, vector<8x128x16xbf16>
    %1 = vector.shape_cast %0 : vector<8x128x16xbf16> to vector<1024x16xbf16>
    %c0_2 = arith.constant 0 : index
    %c0_3 = arith.constant 0 : index
    %2 = vector.load %arg2[%c0_2, %c0_3] : memref<16x128xbf16, #tpu.memory_space<vmem>>, vector<16x128xbf16>
    %cst = arith.constant dense<0.000000e+00> : vector<1024x128xf32>
    %3 = tpu.matmul %1, %2, %cst {dimension_numbers = #tpu.dot_dimension_numbers<[1], [0], [0], [1], [0, 0, 1, 1], [], []>} : vector<1024x16xbf16>, vector<16x128xbf16>, vector<1024x128xf32> -> vector<1024x128xf32>
    %c0_4 = arith.constant 0 : index
    %c0_5 = arith.constant 0 : index
    %4 = vector.load %arg4[%c0_4, %c0_5] : memref<1x128xf32, #tpu.memory_space<vmem>>, vector<1x128xf32>
    %5 = vector.broadcast %4 : vector<1x128xf32> to vector<1024x128xf32>
    %6 = arith.addf %3, %5 : vector<1024x128xf32>
    %7 = vector.shape_cast %6 : vector<1024x128xf32> to vector<8x128x128xf32>
    %8 = arith.truncf %7 : vector<8x128x128xf32> to vector<8x128x128xbf16>
    %c0_6 = arith.constant 0 : index
    %c0_7 = arith.constant 0 : index
    %c0_8 = arith.constant 0 : index
    %9 = vector.load %arg11[%c0_6, %c0_7, %c0_8] : memref<8x128x128xbf16, #tpu.memory_space<vmem>>, vector<8x128x128xbf16>
    tpu.vector_store %arg11[%c0_6, %c0_7, %c0_8], %8 {strides = array<i32>} : memref<8x128x128xbf16, #tpu.memory_space<vmem>>, vector<8x128x128xbf16>,
    %c0_9 = arith.constant 0 : index
    %c0_10 = arith.constant 0 : index
    %10 = vector.load %arg3[%c0_9, %c0_10] : memref<32x128xbf16, #tpu.memory_space<vmem>>, vector<32x128xbf16>
    %cst_11 = arith.constant 0.000000e+00 : f32
    %11 = vector.broadcast %cst_11 : f32 to vector<128x32xf32>
    %cst_12 = arith.constant 0.000000e+00 : f32
    %12 = vector.broadcast %cst_12 : f32 to vector<128x32xf32>
    %c0_i32 = arith.constant 0 : i32
    %13 = arith.index_cast %c0_i32 : i32 to index
    %c0_13 = arith.constant 0 : index
    %c0_14 = arith.constant 0 : index
    %14 = vector.load %arg11[%13, %c0_13, %c0_14] : memref<8x128x128xbf16, #tpu.memory_space<vmem>>, vector<1x128x128xbf16>
    %15 = vector.shape_cast %14 : vector<1x128x128xbf16> to vector<128x128xbf16>
    %16 = arith.extf %15 : vector<128x128xbf16> to vector<128x128xf32>
    %17 = arith.truncf %11 : vector<128x32xf32> to vector<128x32xbf16>
    %cst_15 = arith.constant dense<0.000000e+00> : vector<128x128xf32>
    %18 = tpu.matmul %17, %10, %cst_15 {dimension_numbers = #tpu.dot_dimension_numbers<[1], [0], [0], [1], [0, 0, 1, 1], [], []>} : vector<128x32xbf16>, vector<32x128xbf16>, vector<128x128xf32> -> vector<128x128xf32>
    %19 = arith.addf %16, %18 : vector<128x128xf32>
    %20 = vector.extract_strided_slice %19 {offsets = [0, 0], sizes = [128, 96], strides = [1, 1]} : vector<128x128xf32> to vector<128x96xf32>
    %21 = arith.negf %20 : vector<128x96xf32>
    %22 = math.exp %21 : vector<128x96xf32>
    %cst_16 = arith.constant 1.000000e+00 : f32
    %23 = vector.broadcast %cst_16 : f32 to vector<128x96xf32>
    %24 = arith.addf %23, %22 : vector<128x96xf32>
    %25 = arith.divf %23, %24 : vector<128x96xf32>
    %26 = vector.extract_strided_slice %25 {offsets = [0, 0], sizes = [128, 32], strides = [1, 1]} : vector<128x96xf32> to vector<128x32xf32>
    %27 = vector.extract_strided_slice %25 {offsets = [0, 32], sizes = [128, 32], strides = [1, 1]} : vector<128x96xf32> to vector<128x32xf32>
    %28 = vector.extract_strided_slice %25 {offsets = [0, 64], sizes = [128, 32], strides = [1, 1]} : vector<128x96xf32> to vector<128x32xf32>
    %29 = vector.extract_strided_slice %19 {offsets = [0, 96], sizes = [128, 32], strides = [1, 1]} : vector<128x128xf32> to vector<128x32xf32>
    %30 = math.tanh %29 : vector<128x32xf32>
    %31 = arith.mulf %27, %12 : vector<128x32xf32>
    %32 = arith.mulf %26, %30 : vector<128x32xf32>
    %33 = arith.addf %31, %32 : vector<128x32xf32>
    %34 = math.tanh %33 : vector<128x32xf32>
    %35 = arith.mulf %28, %34 : vector<128x32xf32>
    %36 = arith.truncf %35 : vector<128x32xf32> to vector<128x32xbf16>
    %37 = arith.index_cast %c0_i32 : i32 to index
    %c0_17 = arith.constant 0 : index
    %c0_18 = arith.constant 0 : index
    %38 = vector.load %arg10[%37, %c0_17, %c0_18] : memref<8x128x32xbf16, #tpu.memory_space<vmem>>, vector<1x128x32xbf16>
    %39 = vector.shape_cast %38 : vector<1x128x32xbf16> to vector<128x32xbf16>
    %40 = vector.shape_cast %36 : vector<128x32xbf16> to vector<1x128x32xbf16>
    tpu.vector_store %arg10[%37, %c0_17, %c0_18], %40 {strides = array<i32>} : memref<8x128x32xbf16, #tpu.memory_space<vmem>>, vector<1x128x32xbf16>,
    %c1_i32 = arith.constant 1 : i32
    %41 = arith.index_cast %c1_i32 : i32 to index
    %c0_19 = arith.constant 0 : index
    %c0_20 = arith.constant 0 : index
    %42 = vector.load %arg11[%41, %c0_19, %c0_20] : memref<8x128x128xbf16, #tpu.memory_space<vmem>>, vector<1x128x128xbf16>
    %43 = vector.shape_cast %42 : vector<1x128x128xbf16> to vector<128x128xbf16>
    %44 = arith.extf %43 : vector<128x128xbf16> to vector<128x128xf32>
    %45 = arith.truncf %35 : vector<128x32xf32> to vector<128x32xbf16>
    %cst_21 = arith.constant dense<0.000000e+00> : vector<128x128xf32>
    %46 = tpu.matmul %45, %10, %cst_21 {dimension_numbers = #tpu.dot_dimension_numbers<[1], [0], [0], [1], [0, 0, 1, 1], [], []>} : vector<128x32xbf16>, vector<32x128xbf16>, vector<128x128xf32> -> vector<128x128xf32>
    %47 = arith.addf %44, %46 : vector<128x128xf32>
    %48 = vector.extract_strided_slice %47 {offsets = [0, 0], sizes = [128, 96], strides = [1, 1]} : vector<128x128xf32> to vector<128x96xf32>
    %49 = arith.negf %48 : vector<128x96xf32>
    %50 = math.exp %49 : vector<128x96xf32>
    %cst_22 = arith.constant 1.000000e+00 : f32
    %51 = vector.broadcast %cst_22 : f32 to vector<128x96xf32>
    %52 = arith.addf %51, %50 : vector<128x96xf32>
    %53 = arith.divf %51, %52 : vector<128x96xf32>
    %54 = vector.extract_strided_slice %53 {offsets = [0, 0], sizes = [128, 32], strides = [1, 1]} : vector<128x96xf32> to vector<128x32xf32>
    %55 = vector.extract_strided_slice %53 {offsets = [0, 32], sizes = [128, 32], strides = [1, 1]} : vector<128x96xf32> to vector<128x32xf32>
    %56 = vector.extract_strided_slice %53 {offsets = [0, 64], sizes = [128, 32], strides = [1, 1]} : vector<128x96xf32> to vector<128x32xf32>
    %57 = vector.extract_strided_slice %47 {offsets = [0, 96], sizes = [128, 32], strides = [1, 1]} : vector<128x128xf32> to vector<128x32xf32>
    %58 = math.tanh %57 : vector<128x32xf32>
    %59 = arith.mulf %55, %33 : vector<128x32xf32>
    %60 = arith.mulf %54, %58 : vector<128x32xf32>
    %61 = arith.addf %59, %60 : vector<128x32xf32>
    %62 = math.tanh %61 : vector<128x32xf32>
    %63 = arith.mulf %56, %62 : vector<128x32xf32>
    %64 = arith.truncf %63 : vector<128x32xf32> to vector<128x32xbf16>
    %65 = arith.index_cast %c1_i32 : i32 to index
    %c0_23 = arith.constant 0 : index
    %c0_24 = arith.constant 0 : index
    %66 = vector.load %arg10[%65, %c0_23, %c0_24] : memref<8x128x32xbf16, #tpu.memory_space<vmem>>, vector<1x128x32xbf16>
    %67 = vector.shape_cast %66 : vector<1x128x32xbf16> to vector<128x32xbf16>
    %68 = vector.shape_cast %64 : vector<128x32xbf16> to vector<1x128x32xbf16>
    tpu.vector_store %arg10[%65, %c0_23, %c0_24], %68 {strides = array<i32>} : memref<8x128x32xbf16, #tpu.memory_space<vmem>>, vector<1x128x32xbf16>,
    %c2_i32 = arith.constant 2 : i32
    %69 = arith.index_cast %c2_i32 : i32 to index
    %c0_25 = arith.constant 0 : index
    %c0_26 = arith.constant 0 : index
    %70 = vector.load %arg11[%69, %c0_25, %c0_26] : memref<8x128x128xbf16, #tpu.memory_space<vmem>>, vector<1x128x128xbf16>
    %71 = vector.shape_cast %70 : vector<1x128x128xbf16> to vector<128x128xbf16>
    %72 = arith.extf %71 : vector<128x128xbf16> to vector<128x128xf32>
    %73 = arith.truncf %63 : vector<128x32xf32> to vector<128x32xbf16>
    %cst_27 = arith.constant dense<0.000000e+00> : vector<128x128xf32>
    %74 = tpu.matmul %73, %10, %cst_27 {dimension_numbers = #tpu.dot_dimension_numbers<[1], [0], [0], [1], [0, 0, 1, 1], [], []>} : vector<128x32xbf16>, vector<32x128xbf16>, vector<128x128xf32> -> vector<128x128xf32>
    %75 = arith.addf %72, %74 : vector<128x128xf32>
    %76 = vector.extract_strided_slice %75 {offsets = [0, 0], sizes = [128, 96], strides = [1, 1]} : vector<128x128xf32> to vector<128x96xf32>
    %77 = arith.negf %76 : vector<128x96xf32>
    %78 = math.exp %77 : vector<128x96xf32>
    %cst_28 = arith.constant 1.000000e+00 : f32
    %79 = vector.broadcast %cst_28 : f32 to vector<128x96xf32>
    %80 = arith.addf %79, %78 : vector<128x96xf32>
    %81 = arith.divf %79, %80 : vector<128x96xf32>
    %82 = vector.extract_strided_slice %81 {offsets = [0, 0], sizes = [128, 32], strides = [1, 1]} : vector<128x96xf32> to vector<128x32xf32>
    %83 = vector.extract_strided_slice %81 {offsets = [0, 32], sizes = [128, 32], strides = [1, 1]} : vector<128x96xf32> to vector<128x32xf32>
    %84 = vector.extract_strided_slice %81 {offsets = [0, 64], sizes = [128, 32], strides = [1, 1]} : vector<128x96xf32> to vector<128x32xf32>
    %85 = vector.extract_strided_slice %75 {offsets = [0, 96], sizes = [128, 32], strides = [1, 1]} : vector<128x128xf32> to vector<128x32xf32>
    %86 = math.tanh %85 : vector<128x32xf32>
    %87 = arith.mulf %83, %61 : vector<128x32xf32>
    %88 = arith.mulf %82, %86 : vector<128x32xf32>
    %89 = arith.addf %87, %88 : vector<128x32xf32>
    %90 = math.tanh %89 : vector<128x32xf32>
    %91 = arith.mulf %84, %90 : vector<128x32xf32>
    %92 = arith.truncf %91 : vector<128x32xf32> to vector<128x32xbf16>
    %93 = arith.index_cast %c2_i32 : i32 to index
    %c0_29 = arith.constant 0 : index
    %c0_30 = arith.constant 0 : index
    %94 = vector.load %arg10[%93, %c0_29, %c0_30] : memref<8x128x32xbf16, #tpu.memory_space<vmem>>, vector<1x128x32xbf16>
    %95 = vector.shape_cast %94 : vector<1x128x32xbf16> to vector<128x32xbf16>
    %96 = vector.shape_cast %92 : vector<128x32xbf16> to vector<1x128x32xbf16>
    tpu.vector_store %arg10[%93, %c0_29, %c0_30], %96 {strides = array<i32>} : memref<8x128x32xbf16, #tpu.memory_space<vmem>>, vector<1x128x32xbf16>,
    %c3_i32 = arith.constant 3 : i32
    %97 = arith.index_cast %c3_i32 : i32 to index
    %c0_31 = arith.constant 0 : index
    %c0_32 = arith.constant 0 : index
    %98 = vector.load %arg11[%97, %c0_31, %c0_32] : memref<8x128x128xbf16, #tpu.memory_space<vmem>>, vector<1x128x128xbf16>
    %99 = vector.shape_cast %98 : vector<1x128x128xbf16> to vector<128x128xbf16>
    %100 = arith.extf %99 : vector<128x128xbf16> to vector<128x128xf32>
    %101 = arith.truncf %91 : vector<128x32xf32> to vector<128x32xbf16>
    %cst_33 = arith.constant dense<0.000000e+00> : vector<128x128xf32>
    %102 = tpu.matmul %101, %10, %cst_33 {dimension_numbers = #tpu.dot_dimension_numbers<[1], [0], [0], [1], [0, 0, 1, 1], [], []>} : vector<128x32xbf16>, vector<32x128xbf16>, vector<128x128xf32> -> vector<128x128xf32>
    %103 = arith.addf %100, %102 : vector<128x128xf32>
    %104 = vector.extract_strided_slice %103 {offsets = [0, 0], sizes = [128, 96], strides = [1, 1]} : vector<128x128xf32> to vector<128x96xf32>
    %105 = arith.negf %104 : vector<128x96xf32>
    %106 = math.exp %105 : vector<128x96xf32>
    %cst_34 = arith.constant 1.000000e+00 : f32
    %107 = vector.broadcast %cst_34 : f32 to vector<128x96xf32>
    %108 = arith.addf %107, %106 : vector<128x96xf32>
    %109 = arith.divf %107, %108 : vector<128x96xf32>
    %110 = vector.extract_strided_slice %109 {offsets = [0, 0], sizes = [128, 32], strides = [1, 1]} : vector<128x96xf32> to vector<128x32xf32>
    %111 = vector.extract_strided_slice %109 {offsets = [0, 32], sizes = [128, 32], strides = [1, 1]} : vector<128x96xf32> to vector<128x32xf32>
    %112 = vector.extract_strided_slice %109 {offsets = [0, 64], sizes = [128, 32], strides = [1, 1]} : vector<128x96xf32> to vector<128x32xf32>
    %113 = vector.extract_strided_slice %103 {offsets = [0, 96], sizes = [128, 32], strides = [1, 1]} : vector<128x128xf32> to vector<128x32xf32>
    %114 = math.tanh %113 : vector<128x32xf32>
    %115 = arith.mulf %111, %89 : vector<128x32xf32>
    %116 = arith.mulf %110, %114 : vector<128x32xf32>
    %117 = arith.addf %115, %116 : vector<128x32xf32>
    %118 = math.tanh %117 : vector<128x32xf32>
    %119 = arith.mulf %112, %118 : vector<128x32xf32>
    %120 = arith.truncf %119 : vector<128x32xf32> to vector<128x32xbf16>
    %121 = arith.index_cast %c3_i32 : i32 to index
    %c0_35 = arith.constant 0 : index
    %c0_36 = arith.constant 0 : index
    %122 = vector.load %arg10[%121, %c0_35, %c0_36] : memref<8x128x32xbf16, #tpu.memory_space<vmem>>, vector<1x128x32xbf16>
    %123 = vector.shape_cast %122 : vector<1x128x32xbf16> to vector<128x32xbf16>
    %124 = vector.shape_cast %120 : vector<128x32xbf16> to vector<1x128x32xbf16>
    tpu.vector_store %arg10[%121, %c0_35, %c0_36], %124 {strides = array<i32>} : memref<8x128x32xbf16, #tpu.memory_space<vmem>>, vector<1x128x32xbf16>,
    %c4_i32 = arith.constant 4 : i32
    %125 = arith.index_cast %c4_i32 : i32 to index
    %c0_37 = arith.constant 0 : index
    %c0_38 = arith.constant 0 : index
    %126 = vector.load %arg11[%125, %c0_37, %c0_38] : memref<8x128x128xbf16, #tpu.memory_space<vmem>>, vector<1x128x128xbf16>
    %127 = vector.shape_cast %126 : vector<1x128x128xbf16> to vector<128x128xbf16>
    %128 = arith.extf %127 : vector<128x128xbf16> to vector<128x128xf32>
    %129 = arith.truncf %119 : vector<128x32xf32> to vector<128x32xbf16>
    %cst_39 = arith.constant dense<0.000000e+00> : vector<128x128xf32>
    %130 = tpu.matmul %129, %10, %cst_39 {dimension_numbers = #tpu.dot_dimension_numbers<[1], [0], [0], [1], [0, 0, 1, 1], [], []>} : vector<128x32xbf16>, vector<32x128xbf16>, vector<128x128xf32> -> vector<128x128xf32>
    %131 = arith.addf %128, %130 : vector<128x128xf32>
    %132 = vector.extract_strided_slice %131 {offsets = [0, 0], sizes = [128, 96], strides = [1, 1]} : vector<128x128xf32> to vector<128x96xf32>
    %133 = arith.negf %132 : vector<128x96xf32>
    %134 = math.exp %133 : vector<128x96xf32>
    %cst_40 = arith.constant 1.000000e+00 : f32
    %135 = vector.broadcast %cst_40 : f32 to vector<128x96xf32>
    %136 = arith.addf %135, %134 : vector<128x96xf32>
    %137 = arith.divf %135, %136 : vector<128x96xf32>
    %138 = vector.extract_strided_slice %137 {offsets = [0, 0], sizes = [128, 32], strides = [1, 1]} : vector<128x96xf32> to vector<128x32xf32>
    %139 = vector.extract_strided_slice %137 {offsets = [0, 32], sizes = [128, 32], strides = [1, 1]} : vector<128x96xf32> to vector<128x32xf32>
    %140 = vector.extract_strided_slice %137 {offsets = [0, 64], sizes = [128, 32], strides = [1, 1]} : vector<128x96xf32> to vector<128x32xf32>
    %141 = vector.extract_strided_slice %131 {offsets = [0, 96], sizes = [128, 32], strides = [1, 1]} : vector<128x128xf32> to vector<128x32xf32>
    %142 = math.tanh %141 : vector<128x32xf32>
    %143 = arith.mulf %139, %117 : vector<128x32xf32>
    %144 = arith.mulf %138, %142 : vector<128x32xf32>
    %145 = arith.addf %143, %144 : vector<128x32xf32>
    %146 = math.tanh %145 : vector<128x32xf32>
    %147 = arith.mulf %140, %146 : vector<128x32xf32>
    %148 = arith.truncf %147 : vector<128x32xf32> to vector<128x32xbf16>
    %149 = arith.index_cast %c4_i32 : i32 to index
    %c0_41 = arith.constant 0 : index
    %c0_42 = arith.constant 0 : index
    %150 = vector.load %arg10[%149, %c0_41, %c0_42] : memref<8x128x32xbf16, #tpu.memory_space<vmem>>, vector<1x128x32xbf16>
    %151 = vector.shape_cast %150 : vector<1x128x32xbf16> to vector<128x32xbf16>
    %152 = vector.shape_cast %148 : vector<128x32xbf16> to vector<1x128x32xbf16>
    tpu.vector_store %arg10[%149, %c0_41, %c0_42], %152 {strides = array<i32>} : memref<8x128x32xbf16, #tpu.memory_space<vmem>>, vector<1x128x32xbf16>,
    %c5_i32 = arith.constant 5 : i32
    %153 = arith.index_cast %c5_i32 : i32 to index
    %c0_43 = arith.constant 0 : index
    %c0_44 = arith.constant 0 : index
    %154 = vector.load %arg11[%153, %c0_43, %c0_44] : memref<8x128x128xbf16, #tpu.memory_space<vmem>>, vector<1x128x128xbf16>
    %155 = vector.shape_cast %154 : vector<1x128x128xbf16> to vector<128x128xbf16>
    %156 = arith.extf %155 : vector<128x128xbf16> to vector<128x128xf32>
    %157 = arith.truncf %147 : vector<128x32xf32> to vector<128x32xbf16>
    %cst_45 = arith.constant dense<0.000000e+00> : vector<128x128xf32>
    %158 = tpu.matmul %157, %10, %cst_45 {dimension_numbers = #tpu.dot_dimension_numbers<[1], [0], [0], [1], [0, 0, 1, 1], [], []>} : vector<128x32xbf16>, vector<32x128xbf16>, vector<128x128xf32> -> vector<128x128xf32>
    %159 = arith.addf %156, %158 : vector<128x128xf32>
    %160 = vector.extract_strided_slice %159 {offsets = [0, 0], sizes = [128, 96], strides = [1, 1]} : vector<128x128xf32> to vector<128x96xf32>
    %161 = arith.negf %160 : vector<128x96xf32>
    %162 = math.exp %161 : vector<128x96xf32>
    %cst_46 = arith.constant 1.000000e+00 : f32
    %163 = vector.broadcast %cst_46 : f32 to vector<128x96xf32>
    %164 = arith.addf %163, %162 : vector<128x96xf32>
    %165 = arith.divf %163, %164 : vector<128x96xf32>
    %166 = vector.extract_strided_slice %165 {offsets = [0, 0], sizes = [128, 32], strides = [1, 1]} : vector<128x96xf32> to vector<128x32xf32>
    %167 = vector.extract_strided_slice %165 {offsets = [0, 32], sizes = [128, 32], strides = [1, 1]} : vector<128x96xf32> to vector<128x32xf32>
    %168 = vector.extract_strided_slice %165 {offsets = [0, 64], sizes = [128, 32], strides = [1, 1]} : vector<128x96xf32> to vector<128x32xf32>
    %169 = vector.extract_strided_slice %159 {offsets = [0, 96], sizes = [128, 32], strides = [1, 1]} : vector<128x128xf32> to vector<128x32xf32>
    %170 = math.tanh %169 : vector<128x32xf32>
    %171 = arith.mulf %167, %145 : vector<128x32xf32>
    %172 = arith.mulf %166, %170 : vector<128x32xf32>
    %173 = arith.addf %171, %172 : vector<128x32xf32>
    %174 = math.tanh %173 : vector<128x32xf32>
    %175 = arith.mulf %168, %174 : vector<128x32xf32>
    %176 = arith.truncf %175 : vector<128x32xf32> to vector<128x32xbf16>
    %177 = arith.index_cast %c5_i32 : i32 to index
    %c0_47 = arith.constant 0 : index
    %c0_48 = arith.constant 0 : index
    %178 = vector.load %arg10[%177, %c0_47, %c0_48] : memref<8x128x32xbf16, #tpu.memory_space<vmem>>, vector<1x128x32xbf16>
    %179 = vector.shape_cast %178 : vector<1x128x32xbf16> to vector<128x32xbf16>
    %180 = vector.shape_cast %176 : vector<128x32xbf16> to vector<1x128x32xbf16>
    tpu.vector_store %arg10[%177, %c0_47, %c0_48], %180 {strides = array<i32>} : memref<8x128x32xbf16, #tpu.memory_space<vmem>>, vector<1x128x32xbf16>,
    %c6_i32 = arith.constant 6 : i32
    %181 = arith.index_cast %c6_i32 : i32 to index
    %c0_49 = arith.constant 0 : index
    %c0_50 = arith.constant 0 : index
    %182 = vector.load %arg11[%181, %c0_49, %c0_50] : memref<8x128x128xbf16, #tpu.memory_space<vmem>>, vector<1x128x128xbf16>
    %183 = vector.shape_cast %182 : vector<1x128x128xbf16> to vector<128x128xbf16>
    %184 = arith.extf %183 : vector<128x128xbf16> to vector<128x128xf32>
    %185 = arith.truncf %175 : vector<128x32xf32> to vector<128x32xbf16>
    %cst_51 = arith.constant dense<0.000000e+00> : vector<128x128xf32>
    %186 = tpu.matmul %185, %10, %cst_51 {dimension_numbers = #tpu.dot_dimension_numbers<[1], [0], [0], [1], [0, 0, 1, 1], [], []>} : vector<128x32xbf16>, vector<32x128xbf16>, vector<128x128xf32> -> vector<128x128xf32>
    %187 = arith.addf %184, %186 : vector<128x128xf32>
    %188 = vector.extract_strided_slice %187 {offsets = [0, 0], sizes = [128, 96], strides = [1, 1]} : vector<128x128xf32> to vector<128x96xf32>
    %189 = arith.negf %188 : vector<128x96xf32>
    %190 = math.exp %189 : vector<128x96xf32>
    %cst_52 = arith.constant 1.000000e+00 : f32
    %191 = vector.broadcast %cst_52 : f32 to vector<128x96xf32>
    %192 = arith.addf %191, %190 : vector<128x96xf32>
    %193 = arith.divf %191, %192 : vector<128x96xf32>
    %194 = vector.extract_strided_slice %193 {offsets = [0, 0], sizes = [128, 32], strides = [1, 1]} : vector<128x96xf32> to vector<128x32xf32>
    %195 = vector.extract_strided_slice %193 {offsets = [0, 32], sizes = [128, 32], strides = [1, 1]} : vector<128x96xf32> to vector<128x32xf32>
    %196 = vector.extract_strided_slice %193 {offsets = [0, 64], sizes = [128, 32], strides = [1, 1]} : vector<128x96xf32> to vector<128x32xf32>
    %197 = vector.extract_strided_slice %187 {offsets = [0, 96], sizes = [128, 32], strides = [1, 1]} : vector<128x128xf32> to vector<128x32xf32>
    %198 = math.tanh %197 : vector<128x32xf32>
    %199 = arith.mulf %195, %173 : vector<128x32xf32>
    %200 = arith.mulf %194, %198 : vector<128x32xf32>
    %201 = arith.addf %199, %200 : vector<128x32xf32>
    %202 = math.tanh %201 : vector<128x32xf32>
    %203 = arith.mulf %196, %202 : vector<128x32xf32>
    %204 = arith.truncf %203 : vector<128x32xf32> to vector<128x32xbf16>
    %205 = arith.index_cast %c6_i32 : i32 to index
    %c0_53 = arith.constant 0 : index
    %c0_54 = arith.constant 0 : index
    %206 = vector.load %arg10[%205, %c0_53, %c0_54] : memref<8x128x32xbf16, #tpu.memory_space<vmem>>, vector<1x128x32xbf16>
    %207 = vector.shape_cast %206 : vector<1x128x32xbf16> to vector<128x32xbf16>
    %208 = vector.shape_cast %204 : vector<128x32xbf16> to vector<1x128x32xbf16>
    tpu.vector_store %arg10[%205, %c0_53, %c0_54], %208 {strides = array<i32>} : memref<8x128x32xbf16, #tpu.memory_space<vmem>>, vector<1x128x32xbf16>,
    %c7_i32 = arith.constant 7 : i32
    %209 = arith.index_cast %c7_i32 : i32 to index
    %c0_55 = arith.constant 0 : index
    %c0_56 = arith.constant 0 : index
    %210 = vector.load %arg11[%209, %c0_55, %c0_56] : memref<8x128x128xbf16, #tpu.memory_space<vmem>>, vector<1x128x128xbf16>
    %211 = vector.shape_cast %210 : vector<1x128x128xbf16> to vector<128x128xbf16>
    %212 = arith.extf %211 : vector<128x128xbf16> to vector<128x128xf32>
    %213 = arith.truncf %203 : vector<128x32xf32> to vector<128x32xbf16>
    %cst_57 = arith.constant dense<0.000000e+00> : vector<128x128xf32>
    %214 = tpu.matmul %213, %10, %cst_57 {dimension_numbers = #tpu.dot_dimension_numbers<[1], [0], [0], [1], [0, 0, 1, 1], [], []>} : vector<128x32xbf16>, vector<32x128xbf16>, vector<128x128xf32> -> vector<128x128xf32>
    %215 = arith.addf %212, %214 : vector<128x128xf32>
    %216 = vector.extract_strided_slice %215 {offsets = [0, 0], sizes = [128, 96], strides = [1, 1]} : vector<128x128xf32> to vector<128x96xf32>
    %217 = arith.negf %216 : vector<128x96xf32>
    %218 = math.exp %217 : vector<128x96xf32>
    %cst_58 = arith.constant 1.000000e+00 : f32
    %219 = vector.broadcast %cst_58 : f32 to vector<128x96xf32>
    %220 = arith.addf %219, %218 : vector<128x96xf32>
    %221 = arith.divf %219, %220 : vector<128x96xf32>
    %222 = vector.extract_strided_slice %221 {offsets = [0, 0], sizes = [128, 32], strides = [1, 1]} : vector<128x96xf32> to vector<128x32xf32>
    %223 = vector.extract_strided_slice %221 {offsets = [0, 32], sizes = [128, 32], strides = [1, 1]} : vector<128x96xf32> to vector<128x32xf32>
    %224 = vector.extract_strided_slice %221 {offsets = [0, 64], sizes = [128, 32], strides = [1, 1]} : vector<128x96xf32> to vector<128x32xf32>
    %225 = vector.extract_strided_slice %215 {offsets = [0, 96], sizes = [128, 32], strides = [1, 1]} : vector<128x128xf32> to vector<128x32xf32>
    %226 = math.tanh %225 : vector<128x32xf32>
    %227 = arith.mulf %223, %201 : vector<128x32xf32>
    %228 = arith.mulf %222, %226 : vector<128x32xf32>
    %229 = arith.addf %227, %228 : vector<128x32xf32>
    %230 = math.tanh %229 : vector<128x32xf32>
    %231 = arith.mulf %224, %230 : vector<128x32xf32>
    %232 = arith.truncf %231 : vector<128x32xf32> to vector<128x32xbf16>
    %233 = arith.index_cast %c7_i32 : i32 to index
    %c0_59 = arith.constant 0 : index
    %c0_60 = arith.constant 0 : index
    %234 = vector.load %arg10[%233, %c0_59, %c0_60] : memref<8x128x32xbf16, #tpu.memory_space<vmem>>, vector<1x128x32xbf16>
    %235 = vector.shape_cast %234 : vector<1x128x32xbf16> to vector<128x32xbf16>
    %236 = vector.shape_cast %232 : vector<128x32xbf16> to vector<1x128x32xbf16>
    tpu.vector_store %arg10[%233, %c0_59, %c0_60], %236 {strides = array<i32>} : memref<8x128x32xbf16, #tpu.memory_space<vmem>>, vector<1x128x32xbf16>,
    %c8_i32 = arith.constant 8 : i32
    %c0_61 = arith.constant 0 : index
    %c0_62 = arith.constant 0 : index
    %c0_63 = arith.constant 0 : index
    %237 = vector.load %arg10[%c0_61, %c0_62, %c0_63] : memref<8x128x32xbf16, #tpu.memory_space<vmem>>, vector<8x128x32xbf16>
    %238 = vector.shape_cast %237 : vector<8x128x32xbf16> to vector<1024x32xbf16>
    %cst_64 = arith.constant 1.000980e-01 : bf16
    %239 = vector.broadcast %cst_64 : bf16 to vector<1024x32xbf16>
    %240 = arith.mulf %239, %238 : vector<1024x32xbf16>
    %241 = arith.maximumf %238, %240 : vector<1024x32xbf16>
    %c0_65 = arith.constant 0 : index
    %c0_66 = arith.constant 0 : index
    %242 = vector.load %arg5[%c0_65, %c0_66] : memref<32x16xbf16, #tpu.memory_space<vmem>>, vector<32x16xbf16>
    %cst_67 = arith.constant dense<0.000000e+00> : vector<1024x16xf32>
    %243 = tpu.matmul %241, %242, %cst_67 {dimension_numbers = #tpu.dot_dimension_numbers<[1], [0], [0], [1], [0, 0, 1, 1], [], []>} : vector<1024x32xbf16>, vector<32x16xbf16>, vector<1024x16xf32> -> vector<1024x16xf32>
    %c0_68 = arith.constant 0 : index
    %c0_69 = arith.constant 0 : index
    %244 = vector.load %arg6[%c0_68, %c0_69] : memref<1x16xf32, #tpu.memory_space<vmem>>, vector<1x16xf32>
    %245 = vector.broadcast %244 : vector<1x16xf32> to vector<1024x16xf32>
    %246 = arith.addf %243, %245 : vector<1024x16xf32>
    %247 = vector.shape_cast %246 : vector<1024x16xf32> to vector<8x128x16xf32>
    %cst_70 = arith.constant 1.000000e-01 : f32
    %248 = vector.broadcast %cst_70 : f32 to vector<8x128x16xf32>
    %249 = arith.mulf %248, %247 : vector<8x128x16xf32>
    %250 = arith.maximumf %247, %249 : vector<8x128x16xf32>
    %c0_71 = arith.constant 0 : index
    %c0_72 = arith.constant 0 : index
    %251 = vector.load %arg7[%c0_71, %c0_72] : memref<1x16xf32, #tpu.memory_space<vmem>>, vector<1x16xf32>
    %252 = vector.shape_cast %251 : vector<1x16xf32> to vector<1x1x16xf32>
    %253 = vector.broadcast %252 : vector<1x1x16xf32> to vector<8x128x16xf32>
    %254 = arith.mulf %250, %253 : vector<8x128x16xf32>
    %cst_73 = arith.constant dense<0.000000e+00> : vector<8x128xf32>
    %255 = vector.multi_reduction <add>, %254, %cst_73 [2] : vector<8x128x16xf32> to vector<8x128xf32>
    %c0_74 = arith.constant 0 : index
    %c0_75 = arith.constant 0 : index
    %256 = vector.load %arg8[%c0_74, %c0_75] : memref<1x1xf32, #tpu.memory_space<vmem>>, vector<1x1xf32>
    %257 = vector.broadcast %256 : vector<1x1xf32> to vector<8x128xf32>
    %258 = arith.addf %255, %257 : vector<8x128xf32>
    %c0_76 = arith.constant 0 : index
    %c0_77 = arith.constant 0 : index
    %c0_78 = arith.constant 0 : index
    %259 = vector.load %arg9[%c0_76, %c0_77, %c0_78] : memref<1x8x128xf32, #tpu.memory_space<vmem>>, vector<1x8x128xf32>
    %260 = vector.shape_cast %259 : vector<1x8x128xf32> to vector<8x128xf32>
    %261 = vector.shape_cast %258 : vector<8x128xf32> to vector<1x8x128xf32>
    tpu.vector_store %arg9[%c0_76, %c0_77, %c0_78], %261 {strides = array<i32>} : memref<1x8x128xf32, #tpu.memory_space<vmem>>, vector<1x8x128xf32>,
    return
  }
  func.func @transform_0(%arg0: i32) -> (i32, i32, i32) {
    %c0_i32 = arith.constant 0 : i32
    %c0_i32_0 = arith.constant 0 : i32
    %c0_i32_1 = arith.constant 0 : i32
    return %c0_i32, %arg0, %c0_i32_0 : i32, i32, i32
  }
  func.func @transform_1(%arg0: i32) -> (i32, i32) {
    %c0_i32 = arith.constant 0 : i32
    %c0_i32_0 = arith.constant 0 : i32
    %c0_i32_1 = arith.constant 0 : i32
    return %c0_i32, %c0_i32_0 : i32, i32
  }
  func.func @transform_2(%arg0: i32) -> (i32, i32) {
    %c0_i32 = arith.constant 0 : i32
    %c0_i32_0 = arith.constant 0 : i32
    %c0_i32_1 = arith.constant 0 : i32
    return %c0_i32, %c0_i32_0 : i32, i32
  }
  func.func @transform_3(%arg0: i32) -> (i32, i32) {
    %c0_i32 = arith.constant 0 : i32
    %c0_i32_0 = arith.constant 0 : i32
    %c0_i32_1 = arith.constant 0 : i32
    return %c0_i32, %c0_i32_0 : i32, i32
  }
  func.func @transform_4(%arg0: i32) -> (i32, i32) {
    %c0_i32 = arith.constant 0 : i32
    %c0_i32_0 = arith.constant 0 : i32
    %c0_i32_1 = arith.constant 0 : i32
    return %c0_i32, %c0_i32_0 : i32, i32
  }
  func.func @transform_5(%arg0: i32) -> (i32, i32) {
    %c0_i32 = arith.constant 0 : i32
    %c0_i32_0 = arith.constant 0 : i32
    %c0_i32_1 = arith.constant 0 : i32
    return %c0_i32, %c0_i32_0 : i32, i32
  }
  func.func @transform_6(%arg0: i32) -> (i32, i32) {
    %c0_i32 = arith.constant 0 : i32
    %c0_i32_0 = arith.constant 0 : i32
    %c0_i32_1 = arith.constant 0 : i32
    return %c0_i32, %c0_i32_0 : i32, i32
  }
  func.func @transform_7(%arg0: i32) -> (i32, i32) {
    %c0_i32 = arith.constant 0 : i32
    %c0_i32_0 = arith.constant 0 : i32
    %c0_i32_1 = arith.constant 0 : i32
    return %c0_i32, %c0_i32_0 : i32, i32
  }
  func.func @transform_8(%arg0: i32) -> (i32, i32, i32) {
    %c0_i32 = arith.constant 0 : i32
    %c0_i32_0 = arith.constant 0 : i32
    %c0_i32_1 = arith.constant 0 : i32
    return %arg0, %c0_i32, %c0_i32_0 : i32, i32, i32
  }
}

</mosaic_0001>

<llo_original>
// kernel: lstm_single_2fc_forward.1
$region0: #{lstm_single_2fc_forward.1}
  #allocation0 [shape = 'u32[]', space=smem, size = 0x4, offset = 0x4, fixed_abs, tag = 'smem constant byte address 0x4 - core index']
  #allocation1 [shape = 'u32[72,128]{1,0:T(1,128)}', space=vmem, size = 0x9000, scoped, tag = 'internal scratch']
  #allocation2 [shape = 'bf16[8,128,32]{2,1,0:T(8,128)(2,1)}', space=vmem, size = 0x40000, scoped, tag = 'scratch operand']
  #allocation3 [shape = 'bf16[8,128,128]{2,1,0:T(8,128)(2,1)}', space=vmem, size = 0x40000, scoped, tag = 'scratch operand']
  #allocation4 [shape = 'f32[1,1]{1,0:T(1,128)S(1)}', space=vmem, size = 0x200, scoped, tag = 'scoped memory for lstm_single_2fc_forward.1']
  %s0 = inlined_call_operand.vmem [shape: bf16[8,128,16], index: 0, kind: input, shape index: {}]
  %s1 = inlined_call_operand.vmem [shape: bf16[16,128], index: 1, kind: input, shape index: {}]
  %s2 = inlined_call_operand.vmem [shape: bf16[32,128], index: 2, kind: input, shape index: {}]
  %s3 = inlined_call_operand.vmem [shape: f32[1,128], index: 3, kind: input, shape index: {}]
  %s4 = inlined_call_operand.vmem [shape: bf16[32,16], index: 4, kind: input, shape index: {}]
  %s5 = inlined_call_operand.vmem [shape: f32[1,16], index: 5, kind: input, shape index: {}]
  %s6 = inlined_call_operand.vmem [shape: f32[1,16], index: 6, kind: input, shape index: {}]
  %s7 = inlined_call_operand.<no memory space> [shape: f32[1,1], index: 7, kind: input, shape index: {}]
  %s8 = inlined_call_operand.vmem [shape: f32[1,8,128], index: 8, kind: output, shape index: {}]
  %s9 = sld [smem:[#allocation0]]
  $region42: #{lstm_single_2fc_forward.1} parent=0
    _
  %s11 = ssub.s32 1, %s9
  %s12 = scalar_select 0, %s11, %s9
  %v13 = vstv %s7
  %14 = vst [vmem:[#allocation4] sm:$0x1] %v13
  // Predicated region
  $region2: #{lstm_single_2fc_forward.1} parent=0 // pred_check
    _
  $region3: #{lstm_single_2fc_forward.1} parent=0 // pred_check_branch
    %16 = sbr.rel (0) target = $region5
  $region4: #{lstm_single_2fc_forward.1} parent=0 // pred_region
    _
  $region5: #{lstm_single_2fc_forward.1} parent=0 // pred_fallthru
    _
  // Predicated region
  $region6: #{lstm_single_2fc_forward.1} parent=0 // pred_check
    _
  $region7: #{lstm_single_2fc_forward.1} parent=0 // pred_check_branch
    %18 = sbr.rel (0) target = $region9
  $region8: #{lstm_single_2fc_forward.1} parent=0 // pred_region
    _
  $region9: #{lstm_single_2fc_forward.1} parent=0 // pred_fallthru
    _
  // Predicated region
  $region10: #{lstm_single_2fc_forward.1} parent=0 // pred_check
    _
  $region11: #{lstm_single_2fc_forward.1} parent=0 // pred_check_branch
    %20 = sbr.rel (0) target = $region13
  $region12: #{lstm_single_2fc_forward.1} parent=0 // pred_region
    _
  $region13: #{lstm_single_2fc_forward.1} parent=0 // pred_fallthru
    _
  // Predicated region
  $region14: #{lstm_single_2fc_forward.1} parent=0 // pred_check
    _
  $region15: #{lstm_single_2fc_forward.1} parent=0 // pred_check_branch
    %22 = sbr.rel (0) target = $region17
  $region16: #{lstm_single_2fc_forward.1} parent=0 // pred_region
    _
  $region17: #{lstm_single_2fc_forward.1} parent=0 // pred_fallthru
    _
  // Predicated region
  $region18: #{lstm_single_2fc_forward.1} parent=0 // pred_check
    _
  $region19: #{lstm_single_2fc_forward.1} parent=0 // pred_check_branch
    %24 = sbr.rel (0) target = $region21
  $region20: #{lstm_single_2fc_forward.1} parent=0 // pred_region
    _
  $region21: #{lstm_single_2fc_forward.1} parent=0 // pred_fallthru
    _
  // Predicated region
  $region22: #{lstm_single_2fc_forward.1} parent=0 // pred_check
    _
  $region23: #{lstm_single_2fc_forward.1} parent=0 // pred_check_branch
    %26 = sbr.rel (0) target = $region25
  $region24: #{lstm_single_2fc_forward.1} parent=0 // pred_region
    _
  $region25: #{lstm_single_2fc_forward.1} parent=0 // pred_fallthru
    _
  // Predicated region
  $region26: #{lstm_single_2fc_forward.1} parent=0 // pred_check
    _
  $region27: #{lstm_single_2fc_forward.1} parent=0 // pred_check_branch
    %28 = sbr.rel (0) target = $region29
  $region28: #{lstm_single_2fc_forward.1} parent=0 // pred_region
    _
  $region29: #{lstm_single_2fc_forward.1} parent=0 // pred_fallthru
    _
  // Predicated region
  $region30: #{lstm_single_2fc_forward.1} parent=0 // pred_check
    _
  $region31: #{lstm_single_2fc_forward.1} parent=0 // pred_check_branch
    %30 = sbr.rel (0) target = $region33
  $region32: #{lstm_single_2fc_forward.1} parent=0 // pred_region
    _
  $region33: #{lstm_single_2fc_forward.1} parent=0 // pred_fallthru
    _
  %v32 = vld [vmem:[%s0] sm:$0xf]
  %v33 = vld [vmem:[%s0 + $0x4] sm:$0xf]
  %v34 = vld [vmem:[%s0 + $0x8] sm:$0xf]
  %v35 = vld [vmem:[%s0 + $0xc] sm:$0xf]
  %v36 = vld [vmem:[%s0 + $0x10] sm:$0xf]
  %v37 = vld [vmem:[%s0 + $0x14] sm:$0xf]
  %v38 = vld [vmem:[%s0 + $0x18] sm:$0xf]
  %v39 = vld [vmem:[%s0 + $0x1c] sm:$0xf]
  %v40 = vld [vmem:[%s0 + $0x20] sm:$0xf]
  %v41 = vld [vmem:[%s0 + $0x24] sm:$0xf]
  %v42 = vld [vmem:[%s0 + $0x28] sm:$0xf]
  %v43 = vld [vmem:[%s0 + $0x2c] sm:$0xf]
  %v44 = vld [vmem:[%s0 + $0x30] sm:$0xf]
  %v45 = vld [vmem:[%s0 + $0x34] sm:$0xf]
  %v46 = vld [vmem:[%s0 + $0x38] sm:$0xf]
  %v47 = vld [vmem:[%s0 + $0x3c] sm:$0xf]
  %v48 = vld [vmem:[%s0 + $0x40] sm:$0xf]
  %v49 = vld [vmem:[%s0 + $0x44] sm:$0xf]
  %v50 = vld [vmem:[%s0 + $0x48] sm:$0xf]
  %v51 = vld [vmem:[%s0 + $0x4c] sm:$0xf]
  %v52 = vld [vmem:[%s0 + $0x50] sm:$0xf]
  %v53 = vld [vmem:[%s0 + $0x54] sm:$0xf]
  %v54 = vld [vmem:[%s0 + $0x58] sm:$0xf]
  %v55 = vld [vmem:[%s0 + $0x5c] sm:$0xf]
  %v56 = vld [vmem:[%s0 + $0x60] sm:$0xf]
  %v57 = vld [vmem:[%s0 + $0x64] sm:$0xf]
  %v58 = vld [vmem:[%s0 + $0x68] sm:$0xf]
  %v59 = vld [vmem:[%s0 + $0x6c] sm:$0xf]
  %v60 = vld [vmem:[%s0 + $0x70] sm:$0xf]
  %v61 = vld [vmem:[%s0 + $0x74] sm:$0xf]
  %v62 = vld [vmem:[%s0 + $0x78] sm:$0xf]
  %v63 = vld [vmem:[%s0 + $0x7c] sm:$0xf]
  %v64 = vld [vmem:[%s0 + $0x80] sm:$0xf]
  %v65 = vld [vmem:[%s0 + $0x84] sm:$0xf]
  %v66 = vld [vmem:[%s0 + $0x88] sm:$0xf]
  %v67 = vld [vmem:[%s0 + $0x8c] sm:$0xf]
  %v68 = vld [vmem:[%s0 + $0x90] sm:$0xf]
  %v69 = vld [vmem:[%s0 + $0x94] sm:$0xf]
  %v70 = vld [vmem:[%s0 + $0x98] sm:$0xf]
  %v71 = vld [vmem:[%s0 + $0x9c] sm:$0xf]
  %v72 = vld [vmem:[%s0 + $0xa0] sm:$0xf]
  %v73 = vld [vmem:[%s0 + $0xa4] sm:$0xf]
  %v74 = vld [vmem:[%s0 + $0xa8] sm:$0xf]
  %v75 = vld [vmem:[%s0 + $0xac] sm:$0xf]
  %v76 = vld [vmem:[%s0 + $0xb0] sm:$0xf]
  %v77 = vld [vmem:[%s0 + $0xb4] sm:$0xf]
  %v78 = vld [vmem:[%s0 + $0xb8] sm:$0xf]
  %v79 = vld [vmem:[%s0 + $0xbc] sm:$0xf]
  %v80 = vld [vmem:[%s0 + $0xc0] sm:$0xf]
  %v81 = vld [vmem:[%s0 + $0xc4] sm:$0xf]
  %v82 = vld [vmem:[%s0 + $0xc8] sm:$0xf]
  %v83 = vld [vmem:[%s0 + $0xcc] sm:$0xf]
  %v84 = vld [vmem:[%s0 + $0xd0] sm:$0xf]
  %v85 = vld [vmem:[%s0 + $0xd4] sm:$0xf]
  %v86 = vld [vmem:[%s0 + $0xd8] sm:$0xf]
  %v87 = vld [vmem:[%s0 + $0xdc] sm:$0xf]
  %v88 = vld [vmem:[%s0 + $0xe0] sm:$0xf]
  %v89 = vld [vmem:[%s0 + $0xe4] sm:$0xf]
  %v90 = vld [vmem:[%s0 + $0xe8] sm:$0xf]
  %v91 = vld [vmem:[%s0 + $0xec] sm:$0xf]
  %v92 = vld [vmem:[%s0 + $0xf0] sm:$0xf]
  %v93 = vld [vmem:[%s0 + $0xf4] sm:$0xf]
  %v94 = vld [vmem:[%s0 + $0xf8] sm:$0xf]
  %v95 = vld [vmem:[%s0 + $0xfc] sm:$0xf]
  %v96 = vld [vmem:[%s0 + $0x100] sm:$0xf]
  %v97 = vld [vmem:[%s0 + $0x104] sm:$0xf]
  %v98 = vld [vmem:[%s0 + $0x108] sm:$0xf]
  %v99 = vld [vmem:[%s0 + $0x10c] sm:$0xf]
  %v100 = vld [vmem:[%s0 + $0x110] sm:$0xf]
  %v101 = vld [vmem:[%s0 + $0x114] sm:$0xf]
  %v102 = vld [vmem:[%s0 + $0x118] sm:$0xf]
  %v103 = vld [vmem:[%s0 + $0x11c] sm:$0xf]
  %v104 = vld [vmem:[%s0 + $0x120] sm:$0xf]
  %v105 = vld [vmem:[%s0 + $0x124] sm:$0xf]
  %v106 = vld [vmem:[%s0 + $0x128] sm:$0xf]
  %v107 = vld [vmem:[%s0 + $0x12c] sm:$0xf]
  %v108 = vld [vmem:[%s0 + $0x130] sm:$0xf]
  %v109 = vld [vmem:[%s0 + $0x134] sm:$0xf]
  %v110 = vld [vmem:[%s0 + $0x138] sm:$0xf]
  %v111 = vld [vmem:[%s0 + $0x13c] sm:$0xf]
  %v112 = vld [vmem:[%s0 + $0x140] sm:$0xf]
  %v113 = vld [vmem:[%s0 + $0x144] sm:$0xf]
  %v114 = vld [vmem:[%s0 + $0x148] sm:$0xf]
  %v115 = vld [vmem:[%s0 + $0x14c] sm:$0xf]
  %v116 = vld [vmem:[%s0 + $0x150] sm:$0xf]
  %v117 = vld [vmem:[%s0 + $0x154] sm:$0xf]
  %v118 = vld [vmem:[%s0 + $0x158] sm:$0xf]
  %v119 = vld [vmem:[%s0 + $0x15c] sm:$0xf]
  %v120 = vld [vmem:[%s0 + $0x160] sm:$0xf]
  %v121 = vld [vmem:[%s0 + $0x164] sm:$0xf]
  %v122 = vld [vmem:[%s0 + $0x168] sm:$0xf]
  %v123 = vld [vmem:[%s0 + $0x16c] sm:$0xf]
  %v124 = vld [vmem:[%s0 + $0x170] sm:$0xf]
  %v125 = vld [vmem:[%s0 + $0x174] sm:$0xf]
  %v126 = vld [vmem:[%s0 + $0x178] sm:$0xf]
  %v127 = vld [vmem:[%s0 + $0x17c] sm:$0xf]
  %v128 = vld [vmem:[%s0 + $0x180] sm:$0xf]
  %v129 = vld [vmem:[%s0 + $0x184] sm:$0xf]
  %v130 = vld [vmem:[%s0 + $0x188] sm:$0xf]
  %v131 = vld [vmem:[%s0 + $0x18c] sm:$0xf]
  %v132 = vld [vmem:[%s0 + $0x190] sm:$0xf]
  %v133 = vld [vmem:[%s0 + $0x194] sm:$0xf]
  %v134 = vld [vmem:[%s0 + $0x198] sm:$0xf]
  %v135 = vld [vmem:[%s0 + $0x19c] sm:$0xf]
  %v136 = vld [vmem:[%s0 + $0x1a0] sm:$0xf]
  %v137 = vld [vmem:[%s0 + $0x1a4] sm:$0xf]
  %v138 = vld [vmem:[%s0 + $0x1a8] sm:$0xf]
  %v139 = vld [vmem:[%s0 + $0x1ac] sm:$0xf]
  %v140 = vld [vmem:[%s0 + $0x1b0] sm:$0xf]
  %v141 = vld [vmem:[%s0 + $0x1b4] sm:$0xf]
  %v142 = vld [vmem:[%s0 + $0x1b8] sm:$0xf]
  %v143 = vld [vmem:[%s0 + $0x1bc] sm:$0xf]
  %v144 = vld [vmem:[%s0 + $0x1c0] sm:$0xf]
  %v145 = vld [vmem:[%s0 + $0x1c4] sm:$0xf]
  %v146 = vld [vmem:[%s0 + $0x1c8] sm:$0xf]
  %v147 = vld [vmem:[%s0 + $0x1cc] sm:$0xf]
  %v148 = vld [vmem:[%s0 + $0x1d0] sm:$0xf]
  %v149 = vld [vmem:[%s0 + $0x1d4] sm:$0xf]
  %v150 = vld [vmem:[%s0 + $0x1d8] sm:$0xf]
  %v151 = vld [vmem:[%s0 + $0x1dc] sm:$0xf]
  %v152 = vld [vmem:[%s0 + $0x1e0] sm:$0xf]
  %v153 = vld [vmem:[%s0 + $0x1e4] sm:$0xf]
  %v154 = vld [vmem:[%s0 + $0x1e8] sm:$0xf]
  %v155 = vld [vmem:[%s0 + $0x1ec] sm:$0xf]
  %v156 = vld [vmem:[%s0 + $0x1f0] sm:$0xf]
  %v157 = vld [vmem:[%s0 + $0x1f4] sm:$0xf]
  %v158 = vld [vmem:[%s0 + $0x1f8] sm:$0xf]
  %v159 = vld [vmem:[%s0 + $0x1fc] sm:$0xf]
  %v160 = vld [vmem:[%s1] sm:$0xf]
  %v161 = vld [vmem:[%s1 + $0x4] sm:$0xf]
  %v162 = vld [vmem:[%s3] sm:$0x1]
  %v164 = vperm.slane %v162, 0
  %v294 = vunpack.c.l.b16 %v32
  %v295 = vunpack.c.l.b16 %v33
  %v296 = vunpack.c.l.b16 %v34
  %v297 = vunpack.c.l.b16 %v35
  %v298 = vunpack.c.l.b16 %v36
  %v299 = vunpack.c.l.b16 %v37
  %v300 = vunpack.c.l.b16 %v38
  %v301 = vunpack.c.l.b16 %v39
  %v302 = vunpack.c.l.b16 %v40
  %v303 = vunpack.c.l.b16 %v41
  %v304 = vunpack.c.l.b16 %v42
  %v305 = vunpack.c.l.b16 %v43
  %v306 = vunpack.c.l.b16 %v44
  %v307 = vunpack.c.l.b16 %v45
  %v308 = vunpack.c.l.b16 %v46
  %v309 = vunpack.c.l.b16 %v47
  %v310 = vunpack.c.l.b16 %v48
  %v311 = vunpack.c.l.b16 %v49
  %v312 = vunpack.c.l.b16 %v50
  %v313 = vunpack.c.l.b16 %v51
  %v314 = vunpack.c.l.b16 %v52
  %v315 = vunpack.c.l.b16 %v53
  %v316 = vunpack.c.l.b16 %v54
  %v317 = vunpack.c.l.b16 %v55
  %v318 = vunpack.c.l.b16 %v56
  %v319 = vunpack.c.l.b16 %v57
  %v320 = vunpack.c.l.b16 %v58
  %v321 = vunpack.c.l.b16 %v59
  %v322 = vunpack.c.l.b16 %v60
  %v323 = vunpack.c.l.b16 %v61
  %v324 = vunpack.c.l.b16 %v62
  %v325 = vunpack.c.l.b16 %v63
  %v326 = vunpack.c.l.b16 %v64
  %v327 = vunpack.c.l.b16 %v65
  %v328 = vunpack.c.l.b16 %v66
  %v329 = vunpack.c.l.b16 %v67
  %v330 = vunpack.c.l.b16 %v68
  %v331 = vunpack.c.l.b16 %v69
  %v332 = vunpack.c.l.b16 %v70
  %v333 = vunpack.c.l.b16 %v71
  %v334 = vunpack.c.l.b16 %v72
  %v335 = vunpack.c.l.b16 %v73
  %v336 = vunpack.c.l.b16 %v74
  %v337 = vunpack.c.l.b16 %v75
  %v338 = vunpack.c.l.b16 %v76
  %v339 = vunpack.c.l.b16 %v77
  %v340 = vunpack.c.l.b16 %v78
  %v341 = vunpack.c.l.b16 %v79
  %v342 = vunpack.c.l.b16 %v80
  %v343 = vunpack.c.l.b16 %v81
  %v344 = vunpack.c.l.b16 %v82
  %v345 = vunpack.c.l.b16 %v83
  %v346 = vunpack.c.l.b16 %v84
  %v347 = vunpack.c.l.b16 %v85
  %v348 = vunpack.c.l.b16 %v86
  %v349 = vunpack.c.l.b16 %v87
  %v350 = vunpack.c.l.b16 %v88
  %v351 = vunpack.c.l.b16 %v89
  %v352 = vunpack.c.l.b16 %v90
  %v353 = vunpack.c.l.b16 %v91
  %v354 = vunpack.c.l.b16 %v92
  %v355 = vunpack.c.l.b16 %v93
  %v356 = vunpack.c.l.b16 %v94
  %v357 = vunpack.c.l.b16 %v95
  %v358 = vunpack.c.l.b16 %v96
  %v359 = vunpack.c.l.b16 %v97
  %v360 = vunpack.c.l.b16 %v98
  %v361 = vunpack.c.l.b16 %v99
  %v362 = vunpack.c.l.b16 %v100
  %v363 = vunpack.c.l.b16 %v101
  %v364 = vunpack.c.l.b16 %v102
  %v365 = vunpack.c.l.b16 %v103
  %v366 = vunpack.c.l.b16 %v104
  %v367 = vunpack.c.l.b16 %v105
  %v368 = vunpack.c.l.b16 %v106
  %v369 = vunpack.c.l.b16 %v107
  %v370 = vunpack.c.l.b16 %v108
  %v371 = vunpack.c.l.b16 %v109
  %v372 = vunpack.c.l.b16 %v110
  %v373 = vunpack.c.l.b16 %v111
  %v374 = vunpack.c.l.b16 %v112
  %v375 = vunpack.c.l.b16 %v113
  %v376 = vunpack.c.l.b16 %v114
  %v377 = vunpack.c.l.b16 %v115
  %v378 = vunpack.c.l.b16 %v116
  %v379 = vunpack.c.l.b16 %v117
  %v380 = vunpack.c.l.b16 %v118
  %v381 = vunpack.c.l.b16 %v119
  %v382 = vunpack.c.l.b16 %v120
  %v383 = vunpack.c.l.b16 %v121
  %v384 = vunpack.c.l.b16 %v122
  %v385 = vunpack.c.l.b16 %v123
  %v386 = vunpack.c.l.b16 %v124
  %v387 = vunpack.c.l.b16 %v125
  %v388 = vunpack.c.l.b16 %v126
  %v389 = vunpack.c.l.b16 %v127
  %v390 = vunpack.c.l.b16 %v128
  %v391 = vunpack.c.l.b16 %v129
  %v392 = vunpack.c.l.b16 %v130
  %v393 = vunpack.c.l.b16 %v131
  %v394 = vunpack.c.l.b16 %v132
  %v395 = vunpack.c.l.b16 %v133
  %v396 = vunpack.c.l.b16 %v134
  %v397 = vunpack.c.l.b16 %v135
  %v398 = vunpack.c.l.b16 %v136
  %v399 = vunpack.c.l.b16 %v137
  %v400 = vunpack.c.l.b16 %v138
  %v401 = vunpack.c.l.b16 %v139
  %v402 = vunpack.c.l.b16 %v140
  %v403 = vunpack.c.l.b16 %v141
  %v404 = vunpack.c.l.b16 %v142
  %v405 = vunpack.c.l.b16 %v143
  %v406 = vunpack.c.l.b16 %v144
  %v407 = vunpack.c.l.b16 %v145
  %v408 = vunpack.c.l.b16 %v146
  %v409 = vunpack.c.l.b16 %v147
  %v410 = vunpack.c.l.b16 %v148
  %v411 = vunpack.c.l.b16 %v149
  %v412 = vunpack.c.l.b16 %v150
  %v413 = vunpack.c.l.b16 %v151
  %v414 = vunpack.c.l.b16 %v152
  %v415 = vunpack.c.l.b16 %v153
  %v416 = vunpack.c.l.b16 %v154
  %v417 = vunpack.c.l.b16 %v155
  %v418 = vunpack.c.l.b16 %v156
  %v419 = vunpack.c.l.b16 %v157
  %v420 = vunpack.c.l.b16 %v158
  %v421 = vunpack.c.l.b16 %v159
  %v422 = vpack.c.b16 %v295, %v294
  %v423 = vpack.c.b16 %v297, %v296
  %v424 = vpack.c.b16 %v299, %v298
  %v425 = vpack.c.b16 %v301, %v300
  %v426 = vpack.c.b16 %v303, %v302
  %v427 = vpack.c.b16 %v305, %v304
  %v428 = vpack.c.b16 %v307, %v306
  %v429 = vpack.c.b16 %v309, %v308
  %v430 = vpack.c.b16 %v311, %v310
  %v431 = vpack.c.b16 %v313, %v312
  %v432 = vpack.c.b16 %v315, %v314
  %v433 = vpack.c.b16 %v317, %v316
  %v434 = vpack.c.b16 %v319, %v318
  %v435 = vpack.c.b16 %v321, %v320
  %v436 = vpack.c.b16 %v323, %v322
  %v437 = vpack.c.b16 %v325, %v324
  %v438 = vpack.c.b16 %v327, %v326
  %v439 = vpack.c.b16 %v329, %v328
  %v440 = vpack.c.b16 %v331, %v330
  %v441 = vpack.c.b16 %v333, %v332
  %v442 = vpack.c.b16 %v335, %v334
  %v443 = vpack.c.b16 %v337, %v336
  %v444 = vpack.c.b16 %v339, %v338
  %v445 = vpack.c.b16 %v341, %v340
  %v446 = vpack.c.b16 %v343, %v342
  %v447 = vpack.c.b16 %v345, %v344
  %v448 = vpack.c.b16 %v347, %v346
  %v449 = vpack.c.b16 %v349, %v348
  %v450 = vpack.c.b16 %v351, %v350
  %v451 = vpack.c.b16 %v353, %v352
  %v452 = vpack.c.b16 %v355, %v354
  %v453 = vpack.c.b16 %v357, %v356
  %v454 = vpack.c.b16 %v359, %v358
  %v455 = vpack.c.b16 %v361, %v360
  %v456 = vpack.c.b16 %v363, %v362
  %v457 = vpack.c.b16 %v365, %v364
  %v458 = vpack.c.b16 %v367, %v366
  %v459 = vpack.c.b16 %v369, %v368
  %v460 = vpack.c.b16 %v371, %v370
  %v461 = vpack.c.b16 %v373, %v372
  %v462 = vpack.c.b16 %v375, %v374
  %v463 = vpack.c.b16 %v377, %v376
  %v464 = vpack.c.b16 %v379, %v378
  %v465 = vpack.c.b16 %v381, %v380
  %v466 = vpack.c.b16 %v383, %v382
  %v467 = vpack.c.b16 %v385, %v384
  %v468 = vpack.c.b16 %v387, %v386
  %v469 = vpack.c.b16 %v389, %v388
  %v470 = vpack.c.b16 %v391, %v390
  %v471 = vpack.c.b16 %v393, %v392
  %v472 = vpack.c.b16 %v395, %v394
  %v473 = vpack.c.b16 %v397, %v396
  %v474 = vpack.c.b16 %v399, %v398
  %v475 = vpack.c.b16 %v401, %v400
  %v476 = vpack.c.b16 %v403, %v402
  %v477 = vpack.c.b16 %v405, %v404
  %v478 = vpack.c.b16 %v407, %v406
  %v479 = vpack.c.b16 %v409, %v408
  %v480 = vpack.c.b16 %v411, %v410
  %v481 = vpack.c.b16 %v413, %v412
  %v482 = vpack.c.b16 %v415, %v414
  %v483 = vpack.c.b16 %v417, %v416
  %v484 = vpack.c.b16 %v419, %v418
  %v485 = vpack.c.b16 %v421, %v420
  %v488 = vunpack.c.l.b16 %v160
  %v489 = vunpack.c.l.b16 %v161
  %v490 = vpack.c.b16 %v489, %v488
  %vm492 = vcmask 130048
  %v494 = vsel %vm492, %v422, 0
  %v497 = vsel %vm492, %v423, 0
  %v500 = vsel %vm492, %v424, 0
  %v503 = vsel %vm492, %v425, 0
  %v506 = vsel %vm492, %v426, 0
  %v509 = vsel %vm492, %v427, 0
  %v512 = vsel %vm492, %v428, 0
  %v515 = vsel %vm492, %v429, 0
  %v518 = vsel %vm492, %v430, 0
  %v521 = vsel %vm492, %v431, 0
  %v524 = vsel %vm492, %v432, 0
  %v527 = vsel %vm492, %v433, 0
  %v530 = vsel %vm492, %v434, 0
  %v533 = vsel %vm492, %v435, 0
  %v536 = vsel %vm492, %v436, 0
  %v539 = vsel %vm492, %v437, 0
  %v542 = vsel %vm492, %v438, 0
  %v545 = vsel %vm492, %v439, 0
  %v548 = vsel %vm492, %v440, 0
  %v551 = vsel %vm492, %v441, 0
  %v554 = vsel %vm492, %v442, 0
  %v557 = vsel %vm492, %v443, 0
  %v560 = vsel %vm492, %v444, 0
  %v563 = vsel %vm492, %v445, 0
  %v566 = vsel %vm492, %v446, 0
  %v569 = vsel %vm492, %v447, 0
  %v572 = vsel %vm492, %v448, 0
  %v575 = vsel %vm492, %v449, 0
  %v578 = vsel %vm492, %v450, 0
  %v581 = vsel %vm492, %v451, 0
  %v584 = vsel %vm492, %v452, 0
  %v587 = vsel %vm492, %v453, 0
  %v590 = vsel %vm492, %v454, 0
  %v593 = vsel %vm492, %v455, 0
  %v596 = vsel %vm492, %v456, 0
  %v599 = vsel %vm492, %v457, 0
  %v602 = vsel %vm492, %v458, 0
  %v605 = vsel %vm492, %v459, 0
  %v608 = vsel %vm492, %v460, 0
  %v611 = vsel %vm492, %v461, 0
  %v614 = vsel %vm492, %v462, 0
  %v617 = vsel %vm492, %v463, 0
  %v620 = vsel %vm492, %v464, 0
  %v623 = vsel %vm492, %v465, 0
  %v626 = vsel %vm492, %v466, 0
  %v629 = vsel %vm492, %v467, 0
  %v632 = vsel %vm492, %v468, 0
  %v635 = vsel %vm492, %v469, 0
  %v638 = vsel %vm492, %v470, 0
  %v641 = vsel %vm492, %v471, 0
  %v644 = vsel %vm492, %v472, 0
  %v647 = vsel %vm492, %v473, 0
  %v650 = vsel %vm492, %v474, 0
  %v653 = vsel %vm492, %v475, 0
  %v656 = vsel %vm492, %v476, 0
  %v659 = vsel %vm492, %v477, 0
  %v662 = vsel %vm492, %v478, 0
  %v665 = vsel %vm492, %v479, 0
  %v668 = vsel %vm492, %v480, 0
  %v671 = vsel %vm492, %v481, 0
  %v674 = vsel %vm492, %v482, 0
  %v677 = vsel %vm492, %v483, 0
  %v680 = vsel %vm492, %v484, 0
  %v683 = vsel %vm492, %v485, 0
  %685 = vmatpush.bf16.msra.mxu0 0
  %686 = vmatpush.bf16.msra.mxu0 0
  %687 = vmatpush.bf16.msra.mxu0 0
  %688 = vmatpush.bf16.msra.mxu0 0
  %689 = vmatpush.bf16.msra.mxu0 0
  %690 = vmatpush.bf16.msra.mxu0 0
  %691 = vmatpush.bf16.msra.mxu0 0
  %692 = vmatpush.bf16.msra.mxu0 %v490
  %693 = vmatmul.bf16.gmra.mxu0 %v494
  %v694 = vpop.f32.mrf.mxu0
  %v695 = vadd.f32 %v164, %v694
  %v696 = vpop.f32.mrf.mxu0
  %v697 = vadd.f32 %v164, %v696
  %698 = vmatmul.bf16.gmra.mxu0 %v497
  %v699 = vpop.f32.mrf.mxu0
  %v700 = vadd.f32 %v164, %v699
  %v701 = vpop.f32.mrf.mxu0
  %v702 = vadd.f32 %v164, %v701
  %703 = vmatmul.bf16.gmra.mxu0 %v500
  %v704 = vpop.f32.mrf.mxu0
  %v705 = vadd.f32 %v164, %v704
  %v706 = vpop.f32.mrf.mxu0
  %v707 = vadd.f32 %v164, %v706
  %708 = vmatmul.bf16.gmra.mxu0 %v503
  %v709 = vpop.f32.mrf.mxu0
  %v710 = vadd.f32 %v164, %v709
  %v711 = vpop.f32.mrf.mxu0
  %v712 = vadd.f32 %v164, %v711
  %713 = vmatmul.bf16.gmra.mxu0 %v506
  %v714 = vpop.f32.mrf.mxu0
  %v715 = vadd.f32 %v164, %v714
  %v716 = vpop.f32.mrf.mxu0
  %v717 = vadd.f32 %v164, %v716
  %718 = vmatmul.bf16.gmra.mxu0 %v509
  %v719 = vpop.f32.mrf.mxu0
  %v720 = vadd.f32 %v164, %v719
  %v721 = vpop.f32.mrf.mxu0
  %v722 = vadd.f32 %v164, %v721
  %723 = vmatmul.bf16.gmra.mxu0 %v512
  %v724 = vpop.f32.mrf.mxu0
  %v725 = vadd.f32 %v164, %v724
  %v726 = vpop.f32.mrf.mxu0
  %v727 = vadd.f32 %v164, %v726
  %728 = vmatmul.bf16.gmra.mxu0 %v515
  %v729 = vpop.f32.mrf.mxu0
  %v730 = vadd.f32 %v164, %v729
  %v731 = vpop.f32.mrf.mxu0
  %v732 = vadd.f32 %v164, %v731
  %733 = vmatmul.bf16.gmra.mxu0 %v518
  %v734 = vpop.f32.mrf.mxu0
  %v735 = vadd.f32 %v164, %v734
  %v736 = vpop.f32.mrf.mxu0
  %v737 = vadd.f32 %v164, %v736
  %738 = vmatmul.bf16.gmra.mxu0 %v521
  %v739 = vpop.f32.mrf.mxu0
  %v740 = vadd.f32 %v164, %v739
  %v741 = vpop.f32.mrf.mxu0
  %v742 = vadd.f32 %v164, %v741
  %743 = vmatmul.bf16.gmra.mxu0 %v524
  %v744 = vpop.f32.mrf.mxu0
  %v745 = vadd.f32 %v164, %v744
  %v746 = vpop.f32.mrf.mxu0
  %v747 = vadd.f32 %v164, %v746
  %748 = vmatmul.bf16.gmra.mxu0 %v527
  %v749 = vpop.f32.mrf.mxu0
  %v750 = vadd.f32 %v164, %v749
  %v751 = vpop.f32.mrf.mxu0
  %v752 = vadd.f32 %v164, %v751
  %753 = vmatmul.bf16.gmra.mxu0 %v530
  %v754 = vpop.f32.mrf.mxu0
  %v755 = vadd.f32 %v164, %v754
  %v756 = vpop.f32.mrf.mxu0
  %v757 = vadd.f32 %v164, %v756
  %758 = vmatmul.bf16.gmra.mxu0 %v533
  %v759 = vpop.f32.mrf.mxu0
  %v760 = vadd.f32 %v164, %v759
  %v761 = vpop.f32.mrf.mxu0
  %v762 = vadd.f32 %v164, %v761
  %763 = vmatmul.bf16.gmra.mxu0 %v536
  %v764 = vpop.f32.mrf.mxu0
  %v765 = vadd.f32 %v164, %v764
  %v766 = vpop.f32.mrf.mxu0
  %v767 = vadd.f32 %v164, %v766
  %768 = vmatmul.bf16.gmra.mxu0 %v539
  %v769 = vpop.f32.mrf.mxu0
  %v770 = vadd.f32 %v164, %v769
  %v771 = vpop.f32.mrf.mxu0
  %v772 = vadd.f32 %v164, %v771
  %773 = vmatmul.bf16.gmra.mxu0 %v542
  %v774 = vpop.f32.mrf.mxu0
  %v775 = vadd.f32 %v164, %v774
  %v776 = vpop.f32.mrf.mxu0
  %v777 = vadd.f32 %v164, %v776
  %778 = vmatmul.bf16.gmra.mxu0 %v545
  %v779 = vpop.f32.mrf.mxu0
  %v780 = vadd.f32 %v164, %v779
  %v781 = vpop.f32.mrf.mxu0
  %v782 = vadd.f32 %v164, %v781
  %783 = vmatmul.bf16.gmra.mxu0 %v548
  %v784 = vpop.f32.mrf.mxu0
  %v785 = vadd.f32 %v164, %v784
  %v786 = vpop.f32.mrf.mxu0
  %v787 = vadd.f32 %v164, %v786
  %788 = vmatmul.bf16.gmra.mxu0 %v551
  %v789 = vpop.f32.mrf.mxu0
  %v790 = vadd.f32 %v164, %v789
  %v791 = vpop.f32.mrf.mxu0
  %v792 = vadd.f32 %v164, %v791
  %793 = vmatmul.bf16.gmra.mxu0 %v554
  %v794 = vpop.f32.mrf.mxu0
  %v795 = vadd.f32 %v164, %v794
  %v796 = vpop.f32.mrf.mxu0
  %v797 = vadd.f32 %v164, %v796
  %798 = vmatmul.bf16.gmra.mxu0 %v557
  %v799 = vpop.f32.mrf.mxu0
  %v800 = vadd.f32 %v164, %v799
  %v801 = vpop.f32.mrf.mxu0
  %v802 = vadd.f32 %v164, %v801
  %803 = vmatmul.bf16.gmra.mxu0 %v560
  %v804 = vpop.f32.mrf.mxu0
  %v805 = vadd.f32 %v164, %v804
  %v806 = vpop.f32.mrf.mxu0
  %v807 = vadd.f32 %v164, %v806
  %808 = vmatmul.bf16.gmra.mxu0 %v563
  %v809 = vpop.f32.mrf.mxu0
  %v810 = vadd.f32 %v164, %v809
  %v811 = vpop.f32.mrf.mxu0
  %v812 = vadd.f32 %v164, %v811
  %813 = vmatmul.bf16.gmra.mxu0 %v566
  %v814 = vpop.f32.mrf.mxu0
  %v815 = vadd.f32 %v164, %v814
  %v816 = vpop.f32.mrf.mxu0
  %v817 = vadd.f32 %v164, %v816
  %818 = vmatmul.bf16.gmra.mxu0 %v569
  %v819 = vpop.f32.mrf.mxu0
  %v820 = vadd.f32 %v164, %v819
  %v821 = vpop.f32.mrf.mxu0
  %v822 = vadd.f32 %v164, %v821
  %823 = vmatmul.bf16.gmra.mxu0 %v572
  %v824 = vpop.f32.mrf.mxu0
  %v825 = vadd.f32 %v164, %v824
  %v826 = vpop.f32.mrf.mxu0
  %v827 = vadd.f32 %v164, %v826
  %828 = vmatmul.bf16.gmra.mxu0 %v575
  %v829 = vpop.f32.mrf.mxu0
  %v830 = vadd.f32 %v164, %v829
  %v831 = vpop.f32.mrf.mxu0
  %v832 = vadd.f32 %v164, %v831
  %833 = vmatmul.bf16.gmra.mxu0 %v578
  %v834 = vpop.f32.mrf.mxu0
  %v835 = vadd.f32 %v164, %v834
  %v836 = vpop.f32.mrf.mxu0
  %v837 = vadd.f32 %v164, %v836
  %838 = vmatmul.bf16.gmra.mxu0 %v581
  %v839 = vpop.f32.mrf.mxu0
  %v840 = vadd.f32 %v164, %v839
  %v841 = vpop.f32.mrf.mxu0
  %v842 = vadd.f32 %v164, %v841
  %843 = vmatmul.bf16.gmra.mxu0 %v584
  %v844 = vpop.f32.mrf.mxu0
  %v845 = vadd.f32 %v164, %v844
  %v846 = vpop.f32.mrf.mxu0
  %v847 = vadd.f32 %v164, %v846
  %848 = vmatmul.bf16.gmra.mxu0 %v587
  %v849 = vpop.f32.mrf.mxu0
  %v850 = vadd.f32 %v164, %v849
  %v851 = vpop.f32.mrf.mxu0
  %v852 = vadd.f32 %v164, %v851
  %853 = vmatmul.bf16.gmra.mxu0 %v590
  %v854 = vpop.f32.mrf.mxu0
  %v855 = vadd.f32 %v164, %v854
  %v856 = vpop.f32.mrf.mxu0
  %v857 = vadd.f32 %v164, %v856
  %858 = vmatmul.bf16.gmra.mxu0 %v593
  %v859 = vpop.f32.mrf.mxu0
  %v860 = vadd.f32 %v164, %v859
  %v861 = vpop.f32.mrf.mxu0
  %v862 = vadd.f32 %v164, %v861
  %863 = vmatmul.bf16.gmra.mxu0 %v596
  %v864 = vpop.f32.mrf.mxu0
  %v865 = vadd.f32 %v164, %v864
  %v866 = vpop.f32.mrf.mxu0
  %v867 = vadd.f32 %v164, %v866
  %868 = vmatmul.bf16.gmra.mxu0 %v599
  %v869 = vpop.f32.mrf.mxu0
  %v870 = vadd.f32 %v164, %v869
  %v871 = vpop.f32.mrf.mxu0
  %v872 = vadd.f32 %v164, %v871
  %873 = vmatmul.bf16.gmra.mxu0 %v602
  %v874 = vpop.f32.mrf.mxu0
  %v875 = vadd.f32 %v164, %v874
  %v876 = vpop.f32.mrf.mxu0
  %v877 = vadd.f32 %v164, %v876
  %878 = vmatmul.bf16.gmra.mxu0 %v605
  %v879 = vpop.f32.mrf.mxu0
  %v880 = vadd.f32 %v164, %v879
  %v881 = vpop.f32.mrf.mxu0
  %v882 = vadd.f32 %v164, %v881
  %883 = vmatmul.bf16.gmra.mxu0 %v608
  %v884 = vpop.f32.mrf.mxu0
  %v885 = vadd.f32 %v164, %v884
  %v886 = vpop.f32.mrf.mxu0
  %v887 = vadd.f32 %v164, %v886
  %888 = vmatmul.bf16.gmra.mxu0 %v611
  %v889 = vpop.f32.mrf.mxu0
  %v890 = vadd.f32 %v164, %v889
  %v891 = vpop.f32.mrf.mxu0
  %v892 = vadd.f32 %v164, %v891
  %893 = vmatmul.bf16.gmra.mxu0 %v614
  %v894 = vpop.f32.mrf.mxu0
  %v895 = vadd.f32 %v164, %v894
  %v896 = vpop.f32.mrf.mxu0
  %v897 = vadd.f32 %v164, %v896
  %898 = vmatmul.bf16.gmra.mxu0 %v617
  %v899 = vpop.f32.mrf.mxu0
  %v900 = vadd.f32 %v164, %v899
  %v901 = vpop.f32.mrf.mxu0
  %v902 = vadd.f32 %v164, %v901
  %903 = vmatmul.bf16.gmra.mxu0 %v620
  %v904 = vpop.f32.mrf.mxu0
  %v905 = vadd.f32 %v164, %v904
  %v906 = vpop.f32.mrf.mxu0
  %v907 = vadd.f32 %v164, %v906
  %908 = vmatmul.bf16.gmra.mxu0 %v623
  %v909 = vpop.f32.mrf.mxu0
  %v910 = vadd.f32 %v164, %v909
  %v911 = vpop.f32.mrf.mxu0
  %v912 = vadd.f32 %v164, %v911
  %913 = vmatmul.bf16.gmra.mxu0 %v626
  %v914 = vpop.f32.mrf.mxu0
  %v915 = vadd.f32 %v164, %v914
  %v916 = vpop.f32.mrf.mxu0
  %v917 = vadd.f32 %v164, %v916
  %918 = vmatmul.bf16.gmra.mxu0 %v629
  %v919 = vpop.f32.mrf.mxu0
  %v920 = vadd.f32 %v164, %v919
  %v921 = vpop.f32.mrf.mxu0
  %v922 = vadd.f32 %v164, %v921
  %923 = vmatmul.bf16.gmra.mxu0 %v632
  %v924 = vpop.f32.mrf.mxu0
  %v925 = vadd.f32 %v164, %v924
  %v926 = vpop.f32.mrf.mxu0
  %v927 = vadd.f32 %v164, %v926
  %928 = vmatmul.bf16.gmra.mxu0 %v635
  %v929 = vpop.f32.mrf.mxu0
  %v930 = vadd.f32 %v164, %v929
  %v931 = vpop.f32.mrf.mxu0
  %v932 = vadd.f32 %v164, %v931
  %933 = vmatmul.bf16.gmra.mxu0 %v638
  %v934 = vpop.f32.mrf.mxu0
  %v935 = vadd.f32 %v164, %v934
  %v936 = vpop.f32.mrf.mxu0
  %v937 = vadd.f32 %v164, %v936
  %938 = vmatmul.bf16.gmra.mxu0 %v641
  %v939 = vpop.f32.mrf.mxu0
  %v940 = vadd.f32 %v164, %v939
  %v941 = vpop.f32.mrf.mxu0
  %v942 = vadd.f32 %v164, %v941
  %943 = vmatmul.bf16.gmra.mxu0 %v644
  %v944 = vpop.f32.mrf.mxu0
  %v945 = vadd.f32 %v164, %v944
  %v946 = vpop.f32.mrf.mxu0
  %v947 = vadd.f32 %v164, %v946
  %948 = vmatmul.bf16.gmra.mxu0 %v647
  %v949 = vpop.f32.mrf.mxu0
  %v950 = vadd.f32 %v164, %v949
  %v951 = vpop.f32.mrf.mxu0
  %v952 = vadd.f32 %v164, %v951
  %953 = vmatmul.bf16.gmra.mxu0 %v650
  %v954 = vpop.f32.mrf.mxu0
  %v955 = vadd.f32 %v164, %v954
  %v956 = vpop.f32.mrf.mxu0
  %v957 = vadd.f32 %v164, %v956
  %958 = vmatmul.bf16.gmra.mxu0 %v653
  %v959 = vpop.f32.mrf.mxu0
  %v960 = vadd.f32 %v164, %v959
  %v961 = vpop.f32.mrf.mxu0
  %v962 = vadd.f32 %v164, %v961
  %963 = vmatmul.bf16.gmra.mxu0 %v656
  %v964 = vpop.f32.mrf.mxu0
  %v965 = vadd.f32 %v164, %v964
  %v966 = vpop.f32.mrf.mxu0
  %v967 = vadd.f32 %v164, %v966
  %968 = vmatmul.bf16.gmra.mxu0 %v659
  %v969 = vpop.f32.mrf.mxu0
  %v970 = vadd.f32 %v164, %v969
  %v971 = vpop.f32.mrf.mxu0
  %v972 = vadd.f32 %v164, %v971
  %973 = vmatmul.bf16.gmra.mxu0 %v662
  %v974 = vpop.f32.mrf.mxu0
  %v975 = vadd.f32 %v164, %v974
  %v976 = vpop.f32.mrf.mxu0
  %v977 = vadd.f32 %v164, %v976
  %978 = vmatmul.bf16.gmra.mxu0 %v665
  %v979 = vpop.f32.mrf.mxu0
  %v980 = vadd.f32 %v164, %v979
  %v981 = vpop.f32.mrf.mxu0
  %v982 = vadd.f32 %v164, %v981
  %983 = vmatmul.bf16.gmra.mxu0 %v668
  %v984 = vpop.f32.mrf.mxu0
  %v985 = vadd.f32 %v164, %v984
  %v986 = vpop.f32.mrf.mxu0
  %v987 = vadd.f32 %v164, %v986
  %988 = vmatmul.bf16.gmra.mxu0 %v671
  %v989 = vpop.f32.mrf.mxu0
  %v990 = vadd.f32 %v164, %v989
  %v991 = vpop.f32.mrf.mxu0
  %v992 = vadd.f32 %v164, %v991
  %993 = vmatmul.bf16.gmra.mxu0 %v674
  %v994 = vpop.f32.mrf.mxu0
  %v995 = vadd.f32 %v164, %v994
  %v996 = vpop.f32.mrf.mxu0
  %v997 = vadd.f32 %v164, %v996
  %998 = vmatmul.bf16.gmra.mxu0 %v677
  %v999 = vpop.f32.mrf.mxu0
  %v1000 = vadd.f32 %v164, %v999
  %v1001 = vpop.f32.mrf.mxu0
  %v1002 = vadd.f32 %v164, %v1001
  %1003 = vmatmul.bf16.gmra.mxu0 %v680
  %v1004 = vpop.f32.mrf.mxu0
  %v1005 = vadd.f32 %v164, %v1004
  %v1006 = vpop.f32.mrf.mxu0
  %v1007 = vadd.f32 %v164, %v1006
  %1008 = vmatmul.bf16.gmra.mxu0 %v683
  %v1009 = vpop.f32.mrf.mxu0
  %v1010 = vadd.f32 %v164, %v1009
  %v1011 = vpop.f32.mrf.mxu0
  %v1012 = vadd.f32 %v164, %v1011
  %1013 = vdwg.mxu0
  %v1014 = vpack.c.bf16 %v695, %v695
  %v1015 = vpack.c.bf16 %v697, %v697
  %v1016 = vpack.c.bf16 %v700, %v700
  %v1017 = vpack.c.bf16 %v702, %v702
  %v1018 = vpack.c.bf16 %v705, %v705
  %v1019 = vpack.c.bf16 %v707, %v707
  %v1020 = vpack.c.bf16 %v710, %v710
  %v1021 = vpack.c.bf16 %v712, %v712
  %v1022 = vpack.c.bf16 %v715, %v715
  %v1023 = vpack.c.bf16 %v717, %v717
  %v1024 = vpack.c.bf16 %v720, %v720
  %v1025 = vpack.c.bf16 %v722, %v722
  %v1026 = vpack.c.bf16 %v725, %v725
  %v1027 = vpack.c.bf16 %v727, %v727
  %v1028 = vpack.c.bf16 %v730, %v730
  %v1029 = vpack.c.bf16 %v732, %v732
  %v1030 = vpack.c.bf16 %v735, %v735
  %v1031 = vpack.c.bf16 %v737, %v737
  %v1032 = vpack.c.bf16 %v740, %v740
  %v1033 = vpack.c.bf16 %v742, %v742
  %v1034 = vpack.c.bf16 %v745, %v745
  %v1035 = vpack.c.bf16 %v747, %v747
  %v1036 = vpack.c.bf16 %v750, %v750
  %v1037 = vpack.c.bf16 %v752, %v752
  %v1038 = vpack.c.bf16 %v755, %v755
  %v1039 = vpack.c.bf16 %v757, %v757
  %v1040 = vpack.c.bf16 %v760, %v760
  %v1041 = vpack.c.bf16 %v762, %v762
  %v1042 = vpack.c.bf16 %v765, %v765
  %v1043 = vpack.c.bf16 %v767, %v767
  %v1044 = vpack.c.bf16 %v770, %v770
  %v1045 = vpack.c.bf16 %v772, %v772
  %v1046 = vpack.c.bf16 %v775, %v775
  %v1047 = vpack.c.bf16 %v777, %v777
  %v1048 = vpack.c.bf16 %v780, %v780
  %v1049 = vpack.c.bf16 %v782, %v782
  %v1050 = vpack.c.bf16 %v785, %v785
  %v1051 = vpack.c.bf16 %v787, %v787
  %v1052 = vpack.c.bf16 %v790, %v790
  %v1053 = vpack.c.bf16 %v792, %v792
  %v1054 = vpack.c.bf16 %v795, %v795
  %v1055 = vpack.c.bf16 %v797, %v797
  %v1056 = vpack.c.bf16 %v800, %v800
  %v1057 = vpack.c.bf16 %v802, %v802
  %v1058 = vpack.c.bf16 %v805, %v805
  %v1059 = vpack.c.bf16 %v807, %v807
  %v1060 = vpack.c.bf16 %v810, %v810
  %v1061 = vpack.c.bf16 %v812, %v812
  %v1062 = vpack.c.bf16 %v815, %v815
  %v1063 = vpack.c.bf16 %v817, %v817
  %v1064 = vpack.c.bf16 %v820, %v820
  %v1065 = vpack.c.bf16 %v822, %v822
  %v1066 = vpack.c.bf16 %v825, %v825
  %v1067 = vpack.c.bf16 %v827, %v827
  %v1068 = vpack.c.bf16 %v830, %v830
  %v1069 = vpack.c.bf16 %v832, %v832
  %v1070 = vpack.c.bf16 %v835, %v835
  %v1071 = vpack.c.bf16 %v837, %v837
  %v1072 = vpack.c.bf16 %v840, %v840
  %v1073 = vpack.c.bf16 %v842, %v842
  %v1074 = vpack.c.bf16 %v845, %v845
  %v1075 = vpack.c.bf16 %v847, %v847
  %v1076 = vpack.c.bf16 %v850, %v850
  %v1077 = vpack.c.bf16 %v852, %v852
  %v1078 = vpack.c.bf16 %v855, %v855
  %v1079 = vpack.c.bf16 %v857, %v857
  %v1080 = vpack.c.bf16 %v860, %v860
  %v1081 = vpack.c.bf16 %v862, %v862
  %v1082 = vpack.c.bf16 %v865, %v865
  %v1083 = vpack.c.bf16 %v867, %v867
  %v1084 = vpack.c.bf16 %v870, %v870
  %v1085 = vpack.c.bf16 %v872, %v872
  %v1086 = vpack.c.bf16 %v875, %v875
  %v1087 = vpack.c.bf16 %v877, %v877
  %v1088 = vpack.c.bf16 %v880, %v880
  %v1089 = vpack.c.bf16 %v882, %v882
  %v1090 = vpack.c.bf16 %v885, %v885
  %v1091 = vpack.c.bf16 %v887, %v887
  %v1092 = vpack.c.bf16 %v890, %v890
  %v1093 = vpack.c.bf16 %v892, %v892
  %v1094 = vpack.c.bf16 %v895, %v895
  %v1095 = vpack.c.bf16 %v897, %v897
  %v1096 = vpack.c.bf16 %v900, %v900
  %v1097 = vpack.c.bf16 %v902, %v902
  %v1098 = vpack.c.bf16 %v905, %v905
  %v1099 = vpack.c.bf16 %v907, %v907
  %v1100 = vpack.c.bf16 %v910, %v910
  %v1101 = vpack.c.bf16 %v912, %v912
  %v1102 = vpack.c.bf16 %v915, %v915
  %v1103 = vpack.c.bf16 %v917, %v917
  %v1104 = vpack.c.bf16 %v920, %v920
  %v1105 = vpack.c.bf16 %v922, %v922
  %v1106 = vpack.c.bf16 %v925, %v925
  %v1107 = vpack.c.bf16 %v927, %v927
  %v1108 = vpack.c.bf16 %v930, %v930
  %v1109 = vpack.c.bf16 %v932, %v932
  %v1110 = vpack.c.bf16 %v935, %v935
  %v1111 = vpack.c.bf16 %v937, %v937
  %v1112 = vpack.c.bf16 %v940, %v940
  %v1113 = vpack.c.bf16 %v942, %v942
  %v1114 = vpack.c.bf16 %v945, %v945
  %v1115 = vpack.c.bf16 %v947, %v947
  %v1116 = vpack.c.bf16 %v950, %v950
  %v1117 = vpack.c.bf16 %v952, %v952
  %v1118 = vpack.c.bf16 %v955, %v955
  %v1119 = vpack.c.bf16 %v957, %v957
  %v1120 = vpack.c.bf16 %v960, %v960
  %v1121 = vpack.c.bf16 %v962, %v962
  %v1122 = vpack.c.bf16 %v965, %v965
  %v1123 = vpack.c.bf16 %v967, %v967
  %v1124 = vpack.c.bf16 %v970, %v970
  %v1125 = vpack.c.bf16 %v972, %v972
  %v1126 = vpack.c.bf16 %v975, %v975
  %v1127 = vpack.c.bf16 %v977, %v977
  %v1128 = vpack.c.bf16 %v980, %v980
  %v1129 = vpack.c.bf16 %v982, %v982
  %v1130 = vpack.c.bf16 %v985, %v985
  %v1131 = vpack.c.bf16 %v987, %v987
  %v1132 = vpack.c.bf16 %v990, %v990
  %v1133 = vpack.c.bf16 %v992, %v992
  %v1134 = vpack.c.bf16 %v995, %v995
  %v1135 = vpack.c.bf16 %v997, %v997
  %v1136 = vpack.c.bf16 %v1000, %v1000
  %v1137 = vpack.c.bf16 %v1002, %v1002
  %v1138 = vpack.c.bf16 %v1005, %v1005
  %v1139 = vpack.c.bf16 %v1007, %v1007
  %v1140 = vpack.c.bf16 %v1010, %v1010
  %v1141 = vpack.c.bf16 %v1012, %v1012
  %1142 = vst [vmem:[#allocation3] sm:$0xf] %v1014
  %1143 = vst [vmem:[#allocation3 + $0x4] sm:$0xf] %v1015
  %1144 = vst [vmem:[#allocation3 + $0x8] sm:$0xf] %v1016
  %1145 = vst [vmem:[#allocation3 + $0xc] sm:$0xf] %v1017
  %1146 = vst [vmem:[#allocation3 + $0x10] sm:$0xf] %v1018
  %1147 = vst [vmem:[#allocation3 + $0x14] sm:$0xf] %v1019
  %1148 = vst [vmem:[#allocation3 + $0x18] sm:$0xf] %v1020
  %1149 = vst [vmem:[#allocation3 + $0x1c] sm:$0xf] %v1021
  %1150 = vst [vmem:[#allocation3 + $0x20] sm:$0xf] %v1022
  %1151 = vst [vmem:[#allocation3 + $0x24] sm:$0xf] %v1023
  %1152 = vst [vmem:[#allocation3 + $0x28] sm:$0xf] %v1024
  %1153 = vst [vmem:[#allocation3 + $0x2c] sm:$0xf] %v1025
  %1154 = vst [vmem:[#allocation3 + $0x30] sm:$0xf] %v1026
  %1155 = vst [vmem:[#allocation3 + $0x34] sm:$0xf] %v1027
  %1156 = vst [vmem:[#allocation3 + $0x38] sm:$0xf] %v1028
  %1157 = vst [vmem:[#allocation3 + $0x3c] sm:$0xf] %v1029
  %1158 = vst [vmem:[#allocation3 + $0x40] sm:$0xf] %v1030
  %1159 = vst [vmem:[#allocation3 + $0x44] sm:$0xf] %v1031
  %1160 = vst [vmem:[#allocation3 + $0x48] sm:$0xf] %v1032
  %1161 = vst [vmem:[#allocation3 + $0x4c] sm:$0xf] %v1033
  %1162 = vst [vmem:[#allocation3 + $0x50] sm:$0xf] %v1034
  %1163 = vst [vmem:[#allocation3 + $0x54] sm:$0xf] %v1035
  %1164 = vst [vmem:[#allocation3 + $0x58] sm:$0xf] %v1036
  %1165 = vst [vmem:[#allocation3 + $0x5c] sm:$0xf] %v1037
  %1166 = vst [vmem:[#allocation3 + $0x60] sm:$0xf] %v1038
  %1167 = vst [vmem:[#allocation3 + $0x64] sm:$0xf] %v1039
  %1168 = vst [vmem:[#allocation3 + $0x68] sm:$0xf] %v1040
  %1169 = vst [vmem:[#allocation3 + $0x6c] sm:$0xf] %v1041
  %1170 = vst [vmem:[#allocation3 + $0x70] sm:$0xf] %v1042
  %1171 = vst [vmem:[#allocation3 + $0x74] sm:$0xf] %v1043
  %1172 = vst [vmem:[#allocation3 + $0x78] sm:$0xf] %v1044
  %1173 = vst [vmem:[#allocation3 + $0x7c] sm:$0xf] %v1045
  %1174 = vst [vmem:[#allocation3 + $0x80] sm:$0xf] %v1046
  %1175 = vst [vmem:[#allocation3 + $0x84] sm:$0xf] %v1047
  %1176 = vst [vmem:[#allocation3 + $0x88] sm:$0xf] %v1048
  %1177 = vst [vmem:[#allocation3 + $0x8c] sm:$0xf] %v1049
  %1178 = vst [vmem:[#allocation3 + $0x90] sm:$0xf] %v1050
  %1179 = vst [vmem:[#allocation3 + $0x94] sm:$0xf] %v1051
  %1180 = vst [vmem:[#allocation3 + $0x98] sm:$0xf] %v1052
  %1181 = vst [vmem:[#allocation3 + $0x9c] sm:$0xf] %v1053
  %1182 = vst [vmem:[#allocation3 + $0xa0] sm:$0xf] %v1054
  %1183 = vst [vmem:[#allocation3 + $0xa4] sm:$0xf] %v1055
  %1184 = vst [vmem:[#allocation3 + $0xa8] sm:$0xf] %v1056
  %1185 = vst [vmem:[#allocation3 + $0xac] sm:$0xf] %v1057
  %1186 = vst [vmem:[#allocation3 + $0xb0] sm:$0xf] %v1058
  %1187 = vst [vmem:[#allocation3 + $0xb4] sm:$0xf] %v1059
  %1188 = vst [vmem:[#allocation3 + $0xb8] sm:$0xf] %v1060
  %1189 = vst [vmem:[#allocation3 + $0xbc] sm:$0xf] %v1061
  %1190 = vst [vmem:[#allocation3 + $0xc0] sm:$0xf] %v1062
  %1191 = vst [vmem:[#allocation3 + $0xc4] sm:$0xf] %v1063
  %1192 = vst [vmem:[#allocation3 + $0xc8] sm:$0xf] %v1064
  %1193 = vst [vmem:[#allocation3 + $0xcc] sm:$0xf] %v1065
  %1194 = vst [vmem:[#allocation3 + $0xd0] sm:$0xf] %v1066
  %1195 = vst [vmem:[#allocation3 + $0xd4] sm:$0xf] %v1067
  %1196 = vst [vmem:[#allocation3 + $0xd8] sm:$0xf] %v1068
  %1197 = vst [vmem:[#allocation3 + $0xdc] sm:$0xf] %v1069
  %1198 = vst [vmem:[#allocation3 + $0xe0] sm:$0xf] %v1070
  %1199 = vst [vmem:[#allocation3 + $0xe4] sm:$0xf] %v1071
  %1200 = vst [vmem:[#allocation3 + $0xe8] sm:$0xf] %v1072
  %1201 = vst [vmem:[#allocation3 + $0xec] sm:$0xf] %v1073
  %1202 = vst [vmem:[#allocation3 + $0xf0] sm:$0xf] %v1074
  %1203 = vst [vmem:[#allocation3 + $0xf4] sm:$0xf] %v1075
  %1204 = vst [vmem:[#allocation3 + $0xf8] sm:$0xf] %v1076
  %1205 = vst [vmem:[#allocation3 + $0xfc] sm:$0xf] %v1077
  %1206 = vst [vmem:[#allocation3 + $0x100] sm:$0xf] %v1078
  %1207 = vst [vmem:[#allocation3 + $0x104] sm:$0xf] %v1079
  %1208 = vst [vmem:[#allocation3 + $0x108] sm:$0xf] %v1080
  %1209 = vst [vmem:[#allocation3 + $0x10c] sm:$0xf] %v1081
  %1210 = vst [vmem:[#allocation3 + $0x110] sm:$0xf] %v1082
  %1211 = vst [vmem:[#allocation3 + $0x114] sm:$0xf] %v1083
  %1212 = vst [vmem:[#allocation3 + $0x118] sm:$0xf] %v1084
  %1213 = vst [vmem:[#allocation3 + $0x11c] sm:$0xf] %v1085
  %1214 = vst [vmem:[#allocation3 + $0x120] sm:$0xf] %v1086
  %1215 = vst [vmem:[#allocation3 + $0x124] sm:$0xf] %v1087
  %1216 = vst [vmem:[#allocation3 + $0x128] sm:$0xf] %v1088
  %1217 = vst [vmem:[#allocation3 + $0x12c] sm:$0xf] %v1089
  %1218 = vst [vmem:[#allocation3 + $0x130] sm:$0xf] %v1090
  %1219 = vst [vmem:[#allocation3 + $0x134] sm:$0xf] %v1091
  %1220 = vst [vmem:[#allocation3 + $0x138] sm:$0xf] %v1092
  %1221 = vst [vmem:[#allocation3 + $0x13c] sm:$0xf] %v1093
  %1222 = vst [vmem:[#allocation3 + $0x140] sm:$0xf] %v1094
  %1223 = vst [vmem:[#allocation3 + $0x144] sm:$0xf] %v1095
  %1224 = vst [vmem:[#allocation3 + $0x148] sm:$0xf] %v1096
  %1225 = vst [vmem:[#allocation3 + $0x14c] sm:$0xf] %v1097
  %1226 = vst [vmem:[#allocation3 + $0x150] sm:$0xf] %v1098
  %1227 = vst [vmem:[#allocation3 + $0x154] sm:$0xf] %v1099
  %1228 = vst [vmem:[#allocation3 + $0x158] sm:$0xf] %v1100
  %1229 = vst [vmem:[#allocation3 + $0x15c] sm:$0xf] %v1101
  %1230 = vst [vmem:[#allocation3 + $0x160] sm:$0xf] %v1102
  %1231 = vst [vmem:[#allocation3 + $0x164] sm:$0xf] %v1103
  %1232 = vst [vmem:[#allocation3 + $0x168] sm:$0xf] %v1104
  %1233 = vst [vmem:[#allocation3 + $0x16c] sm:$0xf] %v1105
  %1234 = vst [vmem:[#allocation3 + $0x170] sm:$0xf] %v1106
  %1235 = vst [vmem:[#allocation3 + $0x174] sm:$0xf] %v1107
  %1236 = vst [vmem:[#allocation3 + $0x178] sm:$0xf] %v1108
  %1237 = vst [vmem:[#allocation3 + $0x17c] sm:$0xf] %v1109
  %1238 = vst [vmem:[#allocation3 + $0x180] sm:$0xf] %v1110
  %1239 = vst [vmem:[#allocation3 + $0x184] sm:$0xf] %v1111
  %1240 = vst [vmem:[#allocation3 + $0x188] sm:$0xf] %v1112
  %1241 = vst [vmem:[#allocation3 + $0x18c] sm:$0xf] %v1113
  %1242 = vst [vmem:[#allocation3 + $0x190] sm:$0xf] %v1114
  %1243 = vst [vmem:[#allocation3 + $0x194] sm:$0xf] %v1115
  %1244 = vst [vmem:[#allocation3 + $0x198] sm:$0xf] %v1116
  %1245 = vst [vmem:[#allocation3 + $0x19c] sm:$0xf] %v1117
  %1246 = vst [vmem:[#allocation3 + $0x1a0] sm:$0xf] %v1118
  %1247 = vst [vmem:[#allocation3 + $0x1a4] sm:$0xf] %v1119
  %1248 = vst [vmem:[#allocation3 + $0x1a8] sm:$0xf] %v1120
  %1249 = vst [vmem:[#allocation3 + $0x1ac] sm:$0xf] %v1121
  %1250 = vst [vmem:[#allocation3 + $0x1b0] sm:$0xf] %v1122
  %1251 = vst [vmem:[#allocation3 + $0x1b4] sm:$0xf] %v1123
  %1252 = vst [vmem:[#allocation3 + $0x1b8] sm:$0xf] %v1124
  %1253 = vst [vmem:[#allocation3 + $0x1bc] sm:$0xf] %v1125
  %1254 = vst [vmem:[#allocation3 + $0x1c0] sm:$0xf] %v1126
  %1255 = vst [vmem:[#allocation3 + $0x1c4] sm:$0xf] %v1127
  %1256 = vst [vmem:[#allocation3 + $0x1c8] sm:$0xf] %v1128
  %1257 = vst [vmem:[#allocation3 + $0x1cc] sm:$0xf] %v1129
  %1258 = vst [vmem:[#allocation3 + $0x1d0] sm:$0xf] %v1130
  %1259 = vst [vmem:[#allocation3 + $0x1d4] sm:$0xf] %v1131
  %1260 = vst [vmem:[#allocation3 + $0x1d8] sm:$0xf] %v1132
  %1261 = vst [vmem:[#allocation3 + $0x1dc] sm:$0xf] %v1133
  %1262 = vst [vmem:[#allocation3 + $0x1e0] sm:$0xf] %v1134
  %1263 = vst [vmem:[#allocation3 + $0x1e4] sm:$0xf] %v1135
  %1264 = vst [vmem:[#allocation3 + $0x1e8] sm:$0xf] %v1136
  %1265 = vst [vmem:[#allocation3 + $0x1ec] sm:$0xf] %v1137
  %1266 = vst [vmem:[#allocation3 + $0x1f0] sm:$0xf] %v1138
  %1267 = vst [vmem:[#allocation3 + $0x1f4] sm:$0xf] %v1139
  %1268 = vst [vmem:[#allocation3 + $0x1f8] sm:$0xf] %v1140
  %1269 = vst [vmem:[#allocation3 + $0x1fc] sm:$0xf] %v1141
  %v1270 = vld [vmem:[%s2] sm:$0xf]
  %v1271 = vld [vmem:[%s2 + $0x4] sm:$0xf]
  %v1272 = vld [vmem:[%s2 + $0x8] sm:$0xf]
  %v1273 = vld [vmem:[%s2 + $0xc] sm:$0xf]
  %v1274 = vld [vmem:[#allocation3] sm:$0xf]
  %v1275 = vld [vmem:[#allocation3 + $0x4] sm:$0xf]
  %v1276 = vld [vmem:[#allocation3 + $0x8] sm:$0xf]
  %v1277 = vld [vmem:[#allocation3 + $0xc] sm:$0xf]
  %v1278 = vld [vmem:[#allocation3 + $0x10] sm:$0xf]
  %v1279 = vld [vmem:[#allocation3 + $0x14] sm:$0xf]
  %v1280 = vld [vmem:[#allocation3 + $0x18] sm:$0xf]
  %v1281 = vld [vmem:[#allocation3 + $0x1c] sm:$0xf]
  %v1282 = vld [vmem:[#allocation3 + $0x20] sm:$0xf]
  %v1283 = vld [vmem:[#allocation3 + $0x24] sm:$0xf]
  %v1284 = vld [vmem:[#allocation3 + $0x28] sm:$0xf]
  %v1285 = vld [vmem:[#allocation3 + $0x2c] sm:$0xf]
  %v1286 = vld [vmem:[#allocation3 + $0x30] sm:$0xf]
  %v1287 = vld [vmem:[#allocation3 + $0x34] sm:$0xf]
  %v1288 = vld [vmem:[#allocation3 + $0x38] sm:$0xf]
  %v1289 = vld [vmem:[#allocation3 + $0x3c] sm:$0xf]
  %v1290 = vunpack.c.l.bf16 %v1274
  %v1291 = vunpack.c.l.bf16 %v1275
  %v1292 = vunpack.c.l.bf16 %v1276
  %v1293 = vunpack.c.l.bf16 %v1277
  %v1294 = vunpack.c.l.bf16 %v1278
  %v1295 = vunpack.c.l.bf16 %v1279
  %v1296 = vunpack.c.l.bf16 %v1280
  %v1297 = vunpack.c.l.bf16 %v1281
  %v1298 = vunpack.c.l.bf16 %v1282
  %v1299 = vunpack.c.l.bf16 %v1283
  %v1300 = vunpack.c.l.bf16 %v1284
  %v1301 = vunpack.c.l.bf16 %v1285
  %v1302 = vunpack.c.l.bf16 %v1286
  %v1303 = vunpack.c.l.bf16 %v1287
  %v1304 = vunpack.c.l.bf16 %v1288
  %v1305 = vunpack.c.l.bf16 %v1289
  %v1310 = vunpack.c.l.b16 %v1270
  %v1311 = vunpack.c.l.b16 %v1271
  %v1312 = vunpack.c.l.b16 %v1272
  %v1313 = vunpack.c.l.b16 %v1273
  %v1314 = vpack.c.b16 %v1311, %v1310
  %v1315 = vpack.c.b16 %v1313, %v1312
  %vm1318 = vcmask 261120
  %v1320 = vsel %vm1318, 0, 0
  %1322 = vmatpush.bf16.msra.mxu0 0
  %1323 = vmatpush.bf16.msra.mxu0 0
  %1324 = vmatpush.bf16.msra.mxu0 0
  %1325 = vmatpush.bf16.msra.mxu0 0
  %1326 = vmatpush.bf16.msra.mxu0 0
  %1327 = vmatpush.bf16.msra.mxu0 0
  %1328 = vmatpush.bf16.msra.mxu0 %v1315
  %1329 = vmatpush.bf16.msra.mxu0 %v1314
  %1330 = vmatmul.bf16.gmra.mxu0 %v1320
  %v1331 = vpop.f32.mrf.mxu0
  %v1332 = vadd.f32 0.0, %v1331
  %v1333 = vpop.f32.mrf.mxu0
  %v1334 = vadd.f32 0.0, %v1333
  %1335 = vmatmul.bf16.gmra.mxu0 %v1320
  %v1336 = vpop.f32.mrf.mxu0
  %v1337 = vadd.f32 0.0, %v1336
  %v1338 = vpop.f32.mrf.mxu0
  %v1339 = vadd.f32 0.0, %v1338
  %1340 = vmatmul.bf16.gmra.mxu0 %v1320
  %v1341 = vpop.f32.mrf.mxu0
  %v1342 = vadd.f32 0.0, %v1341
  %v1343 = vpop.f32.mrf.mxu0
  %v1344 = vadd.f32 0.0, %v1343
  %1345 = vmatmul.bf16.gmra.mxu0 %v1320
  %v1346 = vpop.f32.mrf.mxu0
  %v1347 = vadd.f32 0.0, %v1346
  %v1348 = vpop.f32.mrf.mxu0
  %v1349 = vadd.f32 0.0, %v1348
  %1350 = vmatmul.bf16.gmra.mxu0 %v1320
  %v1351 = vpop.f32.mrf.mxu0
  %v1352 = vadd.f32 0.0, %v1351
  %v1353 = vpop.f32.mrf.mxu0
  %v1354 = vadd.f32 0.0, %v1353
  %1355 = vmatmul.bf16.gmra.mxu0 %v1320
  %v1356 = vpop.f32.mrf.mxu0
  %v1357 = vadd.f32 0.0, %v1356
  %v1358 = vpop.f32.mrf.mxu0
  %v1359 = vadd.f32 0.0, %v1358
  %1360 = vmatmul.bf16.gmra.mxu0 %v1320
  %v1361 = vpop.f32.mrf.mxu0
  %v1362 = vadd.f32 0.0, %v1361
  %v1363 = vpop.f32.mrf.mxu0
  %v1364 = vadd.f32 0.0, %v1363
  %1365 = vmatmul.bf16.gmra.mxu0 %v1320
  %v1366 = vpop.f32.mrf.mxu0
  %v1367 = vadd.f32 0.0, %v1366
  %v1368 = vpop.f32.mrf.mxu0
  %v1369 = vadd.f32 0.0, %v1368
  %1370 = vdwg.mxu0
  %v1371 = vadd.f32 %v1290, %v1332
  %v1372 = vadd.f32 %v1291, %v1334
  %v1373 = vadd.f32 %v1292, %v1337
  %v1374 = vadd.f32 %v1293, %v1339
  %v1375 = vadd.f32 %v1294, %v1342
  %v1376 = vadd.f32 %v1295, %v1344
  %v1377 = vadd.f32 %v1296, %v1347
  %v1378 = vadd.f32 %v1297, %v1349
  %v1379 = vadd.f32 %v1298, %v1352
  %v1380 = vadd.f32 %v1299, %v1354
  %v1381 = vadd.f32 %v1300, %v1357
  %v1382 = vadd.f32 %v1301, %v1359
  %v1383 = vadd.f32 %v1302, %v1362
  %v1384 = vadd.f32 %v1303, %v1364
  %v1385 = vadd.f32 %v1304, %v1367
  %v1386 = vadd.f32 %v1305, %v1369
  %v1387 = vxor.u32 %v1371, 2147483648
  %v1388 = vxor.u32 %v1372, 2147483648
  %v1389 = vxor.u32 %v1373, 2147483648
  %v1390 = vxor.u32 %v1374, 2147483648
  %v1391 = vxor.u32 %v1375, 2147483648
  %v1392 = vxor.u32 %v1376, 2147483648
  %v1393 = vxor.u32 %v1377, 2147483648
  %v1394 = vxor.u32 %v1378, 2147483648
  %v1395 = vxor.u32 %v1379, 2147483648
  %v1396 = vxor.u32 %v1380, 2147483648
  %v1397 = vxor.u32 %v1381, 2147483648
  %v1398 = vxor.u32 %v1382, 2147483648
  %v1399 = vxor.u32 %v1383, 2147483648
  %v1400 = vxor.u32 %v1384, 2147483648
  %v1401 = vxor.u32 %v1385, 2147483648
  %v1402 = vxor.u32 %v1386, 2147483648
  %v1403 = vmul.f32 %v1387, 1.442695
  %v1404 = vpow.pop %v1403
  %v1405 = vmul.f32 %v1388, 1.442695
  %v1406 = vpow.pop %v1405
  %v1407 = vmul.f32 %v1389, 1.442695
  %v1408 = vpow.pop %v1407
  %v1409 = vmul.f32 %v1390, 1.442695
  %v1410 = vpow.pop %v1409
  %v1411 = vmul.f32 %v1391, 1.442695
  %v1412 = vpow.pop %v1411
  %v1413 = vmul.f32 %v1392, 1.442695
  %v1414 = vpow.pop %v1413
  %v1415 = vmul.f32 %v1393, 1.442695
  %v1416 = vpow.pop %v1415
  %v1417 = vmul.f32 %v1394, 1.442695
  %v1418 = vpow.pop %v1417
  %v1419 = vmul.f32 %v1395, 1.442695
  %v1420 = vpow.pop %v1419
  %v1421 = vmul.f32 %v1396, 1.442695
  %v1422 = vpow.pop %v1421
  %v1423 = vmul.f32 %v1397, 1.442695
  %v1424 = vpow.pop %v1423
  %v1425 = vmul.f32 %v1398, 1.442695
  %v1426 = vpow.pop %v1425
  %v1427 = vmul.f32 %v1399, 1.442695
  %v1428 = vpow.pop %v1427
  %v1429 = vmul.f32 %v1400, 1.442695
  %v1430 = vpow.pop %v1429
  %v1431 = vmul.f32 %v1401, 1.442695
  %v1432 = vpow.pop %v1431
  %v1433 = vmul.f32 %v1402, 1.442695
  %v1434 = vpow.pop %v1433
  %v1435 = vadd.f32 %v1404, 1.0
  %v1436 = vadd.f32 %v1406, 1.0
  %v1437 = vadd.f32 %v1408, 1.0
  %v1438 = vadd.f32 %v1410, 1.0
  %v1439 = vadd.f32 %v1412, 1.0
  %v1440 = vadd.f32 %v1414, 1.0
  %v1441 = vadd.f32 %v1416, 1.0
  %v1442 = vadd.f32 %v1418, 1.0
  %v1443 = vadd.f32 %v1420, 1.0
  %v1444 = vadd.f32 %v1422, 1.0
  %v1445 = vadd.f32 %v1424, 1.0
  %v1446 = vadd.f32 %v1426, 1.0
  %v1447 = vadd.f32 %v1428, 1.0
  %v1448 = vadd.f32 %v1430, 1.0
  %v1449 = vadd.f32 %v1432, 1.0
  %v1450 = vadd.f32 %v1434, 1.0
  %v1451 = vrcp.pop %v1435
  %v1452 = vmul.f32 %v1435, %v1451
  %v1453 = vsub.f32 1.0, %v1452
  %v1454 = vmul.f32 %v1451, %v1453
  %v1455 = vadd.f32 %v1451, %v1454
  %vm1456 = vweird.f32 %v1435
  %vm1457 = vweird.f32 %v1451
  %vm1458 = vmor %vm1456, %vm1457
  %v1459 = vsel %vm1458, %v1451, %v1455
  %v1460 = vand.u32 2147483647, %v1435
  %vm1461 = vcmp.eq.f32.partialorder %v1460, 8.507059e+37
  %v1462 = vand.u32 %v1435, 2147483648
  %v1463 = vor.u32 1.1754944e-38, %v1462
  %v1464 = vsel %vm1461, %v1463, %v1459
  %v1465 = vmul.f32 1.0, %v1464
  %v1466 = vrcp.pop %v1436
  %v1467 = vmul.f32 %v1436, %v1466
  %v1468 = vsub.f32 1.0, %v1467
  %v1469 = vmul.f32 %v1466, %v1468
  %v1470 = vadd.f32 %v1466, %v1469
  %vm1471 = vweird.f32 %v1436
  %vm1472 = vweird.f32 %v1466
  %vm1473 = vmor %vm1471, %vm1472
  %v1474 = vsel %vm1473, %v1466, %v1470
  %v1475 = vand.u32 2147483647, %v1436
  %vm1476 = vcmp.eq.f32.partialorder %v1475, 8.507059e+37
  %v1477 = vand.u32 %v1436, 2147483648
  %v1478 = vor.u32 1.1754944e-38, %v1477
  %v1479 = vsel %vm1476, %v1478, %v1474
  %v1480 = vmul.f32 1.0, %v1479
  %v1481 = vrcp.pop %v1437
  %v1482 = vmul.f32 %v1437, %v1481
  %v1483 = vsub.f32 1.0, %v1482
  %v1484 = vmul.f32 %v1481, %v1483
  %v1485 = vadd.f32 %v1481, %v1484
  %vm1486 = vweird.f32 %v1437
  %vm1487 = vweird.f32 %v1481
  %vm1488 = vmor %vm1486, %vm1487
  %v1489 = vsel %vm1488, %v1481, %v1485
  %v1490 = vand.u32 2147483647, %v1437
  %vm1491 = vcmp.eq.f32.partialorder %v1490, 8.507059e+37
  %v1492 = vand.u32 %v1437, 2147483648
  %v1493 = vor.u32 1.1754944e-38, %v1492
  %v1494 = vsel %vm1491, %v1493, %v1489
  %v1495 = vmul.f32 1.0, %v1494
  %v1496 = vrcp.pop %v1438
  %v1497 = vmul.f32 %v1438, %v1496
  %v1498 = vsub.f32 1.0, %v1497
  %v1499 = vmul.f32 %v1496, %v1498
  %v1500 = vadd.f32 %v1496, %v1499
  %vm1501 = vweird.f32 %v1438
  %vm1502 = vweird.f32 %v1496
  %vm1503 = vmor %vm1501, %vm1502
  %v1504 = vsel %vm1503, %v1496, %v1500
  %v1505 = vand.u32 2147483647, %v1438
  %vm1506 = vcmp.eq.f32.partialorder %v1505, 8.507059e+37
  %v1507 = vand.u32 %v1438, 2147483648
  %v1508 = vor.u32 1.1754944e-38, %v1507
  %v1509 = vsel %vm1506, %v1508, %v1504
  %v1510 = vmul.f32 1.0, %v1509
  %v1511 = vrcp.pop %v1439
  %v1512 = vmul.f32 %v1439, %v1511
  %v1513 = vsub.f32 1.0, %v1512
  %v1514 = vmul.f32 %v1511, %v1513
  %v1515 = vadd.f32 %v1511, %v1514
  %vm1516 = vweird.f32 %v1439
  %vm1517 = vweird.f32 %v1511
  %vm1518 = vmor %vm1516, %vm1517
  %v1519 = vsel %vm1518, %v1511, %v1515
  %v1520 = vand.u32 2147483647, %v1439
  %vm1521 = vcmp.eq.f32.partialorder %v1520, 8.507059e+37
  %v1522 = vand.u32 %v1439, 2147483648
  %v1523 = vor.u32 1.1754944e-38, %v1522
  %v1524 = vsel %vm1521, %v1523, %v1519
  %v1525 = vmul.f32 1.0, %v1524
  %v1526 = vrcp.pop %v1440
  %v1527 = vmul.f32 %v1440, %v1526
  %v1528 = vsub.f32 1.0, %v1527
  %v1529 = vmul.f32 %v1526, %v1528
  %v1530 = vadd.f32 %v1526, %v1529
  %vm1531 = vweird.f32 %v1440
  %vm1532 = vweird.f32 %v1526
  %vm1533 = vmor %vm1531, %vm1532
  %v1534 = vsel %vm1533, %v1526, %v1530
  %v1535 = vand.u32 2147483647, %v1440
  %vm1536 = vcmp.eq.f32.partialorder %v1535, 8.507059e+37
  %v1537 = vand.u32 %v1440, 2147483648
  %v1538 = vor.u32 1.1754944e-38, %v1537
  %v1539 = vsel %vm1536, %v1538, %v1534
  %v1540 = vmul.f32 1.0, %v1539
  %v1541 = vrcp.pop %v1441
  %v1542 = vmul.f32 %v1441, %v1541
  %v1543 = vsub.f32 1.0, %v1542
  %v1544 = vmul.f32 %v1541, %v1543
  %v1545 = vadd.f32 %v1541, %v1544
  %vm1546 = vweird.f32 %v1441
  %vm1547 = vweird.f32 %v1541
  %vm1548 = vmor %vm1546, %vm1547
  %v1549 = vsel %vm1548, %v1541, %v1545
  %v1550 = vand.u32 2147483647, %v1441
  %vm1551 = vcmp.eq.f32.partialorder %v1550, 8.507059e+37
  %v1552 = vand.u32 %v1441, 2147483648
  %v1553 = vor.u32 1.1754944e-38, %v1552
  %v1554 = vsel %vm1551, %v1553, %v1549
  %v1555 = vmul.f32 1.0, %v1554
  %v1556 = vrcp.pop %v1442
  %v1557 = vmul.f32 %v1442, %v1556
  %v1558 = vsub.f32 1.0, %v1557
  %v1559 = vmul.f32 %v1556, %v1558
  %v1560 = vadd.f32 %v1556, %v1559
  %vm1561 = vweird.f32 %v1442
  %vm1562 = vweird.f32 %v1556
  %vm1563 = vmor %vm1561, %vm1562
  %v1564 = vsel %vm1563, %v1556, %v1560
  %v1565 = vand.u32 2147483647, %v1442
  %vm1566 = vcmp.eq.f32.partialorder %v1565, 8.507059e+37
  %v1567 = vand.u32 %v1442, 2147483648
  %v1568 = vor.u32 1.1754944e-38, %v1567
  %v1569 = vsel %vm1566, %v1568, %v1564
  %v1570 = vmul.f32 1.0, %v1569
  %v1571 = vrcp.pop %v1443
  %v1572 = vmul.f32 %v1443, %v1571
  %v1573 = vsub.f32 1.0, %v1572
  %v1574 = vmul.f32 %v1571, %v1573
  %v1575 = vadd.f32 %v1571, %v1574
  %vm1576 = vweird.f32 %v1443
  %vm1577 = vweird.f32 %v1571
  %vm1578 = vmor %vm1576, %vm1577
  %v1579 = vsel %vm1578, %v1571, %v1575
  %v1580 = vand.u32 2147483647, %v1443
  %vm1581 = vcmp.eq.f32.partialorder %v1580, 8.507059e+37
  %v1582 = vand.u32 %v1443, 2147483648
  %v1583 = vor.u32 1.1754944e-38, %v1582
  %v1584 = vsel %vm1581, %v1583, %v1579
  %v1585 = vmul.f32 1.0, %v1584
  %v1586 = vrcp.pop %v1444
  %v1587 = vmul.f32 %v1444, %v1586
  %v1588 = vsub.f32 1.0, %v1587
  %v1589 = vmul.f32 %v1586, %v1588
  %v1590 = vadd.f32 %v1586, %v1589
  %vm1591 = vweird.f32 %v1444
  %vm1592 = vweird.f32 %v1586
  %vm1593 = vmor %vm1591, %vm1592
  %v1594 = vsel %vm1593, %v1586, %v1590
  %v1595 = vand.u32 2147483647, %v1444
  %vm1596 = vcmp.eq.f32.partialorder %v1595, 8.507059e+37
  %v1597 = vand.u32 %v1444, 2147483648
  %v1598 = vor.u32 1.1754944e-38, %v1597
  %v1599 = vsel %vm1596, %v1598, %v1594
  %v1600 = vmul.f32 1.0, %v1599
  %v1601 = vrcp.pop %v1445
  %v1602 = vmul.f32 %v1445, %v1601
  %v1603 = vsub.f32 1.0, %v1602
  %v1604 = vmul.f32 %v1601, %v1603
  %v1605 = vadd.f32 %v1601, %v1604
  %vm1606 = vweird.f32 %v1445
  %vm1607 = vweird.f32 %v1601
  %vm1608 = vmor %vm1606, %vm1607
  %v1609 = vsel %vm1608, %v1601, %v1605
  %v1610 = vand.u32 2147483647, %v1445
  %vm1611 = vcmp.eq.f32.partialorder %v1610, 8.507059e+37
  %v1612 = vand.u32 %v1445, 2147483648
  %v1613 = vor.u32 1.1754944e-38, %v1612
  %v1614 = vsel %vm1611, %v1613, %v1609
  %v1615 = vmul.f32 1.0, %v1614
  %v1616 = vrcp.pop %v1446
  %v1617 = vmul.f32 %v1446, %v1616
  %v1618 = vsub.f32 1.0, %v1617
  %v1619 = vmul.f32 %v1616, %v1618
  %v1620 = vadd.f32 %v1616, %v1619
  %vm1621 = vweird.f32 %v1446
  %vm1622 = vweird.f32 %v1616
  %vm1623 = vmor %vm1621, %vm1622
  %v1624 = vsel %vm1623, %v1616, %v1620
  %v1625 = vand.u32 2147483647, %v1446
  %vm1626 = vcmp.eq.f32.partialorder %v1625, 8.507059e+37
  %v1627 = vand.u32 %v1446, 2147483648
  %v1628 = vor.u32 1.1754944e-38, %v1627
  %v1629 = vsel %vm1626, %v1628, %v1624
  %v1630 = vmul.f32 1.0, %v1629
  %v1631 = vrcp.pop %v1447
  %v1632 = vmul.f32 %v1447, %v1631
  %v1633 = vsub.f32 1.0, %v1632
  %v1634 = vmul.f32 %v1631, %v1633
  %v1635 = vadd.f32 %v1631, %v1634
  %vm1636 = vweird.f32 %v1447
  %vm1637 = vweird.f32 %v1631
  %vm1638 = vmor %vm1636, %vm1637
  %v1639 = vsel %vm1638, %v1631, %v1635
  %v1640 = vand.u32 2147483647, %v1447
  %vm1641 = vcmp.eq.f32.partialorder %v1640, 8.507059e+37
  %v1642 = vand.u32 %v1447, 2147483648
  %v1643 = vor.u32 1.1754944e-38, %v1642
  %v1644 = vsel %vm1641, %v1643, %v1639
  %v1645 = vmul.f32 1.0, %v1644
  %v1646 = vrcp.pop %v1448
  %v1647 = vmul.f32 %v1448, %v1646
  %v1648 = vsub.f32 1.0, %v1647
  %v1649 = vmul.f32 %v1646, %v1648
  %v1650 = vadd.f32 %v1646, %v1649
  %vm1651 = vweird.f32 %v1448
  %vm1652 = vweird.f32 %v1646
  %vm1653 = vmor %vm1651, %vm1652
  %v1654 = vsel %vm1653, %v1646, %v1650
  %v1655 = vand.u32 2147483647, %v1448
  %vm1656 = vcmp.eq.f32.partialorder %v1655, 8.507059e+37
  %v1657 = vand.u32 %v1448, 2147483648
  %v1658 = vor.u32 1.1754944e-38, %v1657
  %v1659 = vsel %vm1656, %v1658, %v1654
  %v1660 = vmul.f32 1.0, %v1659
  %v1661 = vrcp.pop %v1449
  %v1662 = vmul.f32 %v1449, %v1661
  %v1663 = vsub.f32 1.0, %v1662
  %v1664 = vmul.f32 %v1661, %v1663
  %v1665 = vadd.f32 %v1661, %v1664
  %vm1666 = vweird.f32 %v1449
  %vm1667 = vweird.f32 %v1661
  %vm1668 = vmor %vm1666, %vm1667
  %v1669 = vsel %vm1668, %v1661, %v1665
  %v1670 = vand.u32 2147483647, %v1449
  %vm1671 = vcmp.eq.f32.partialorder %v1670, 8.507059e+37
  %v1672 = vand.u32 %v1449, 2147483648
  %v1673 = vor.u32 1.1754944e-38, %v1672
  %v1674 = vsel %vm1671, %v1673, %v1669
  %v1675 = vmul.f32 1.0, %v1674
  %v1676 = vrcp.pop %v1450
  %v1677 = vmul.f32 %v1450, %v1676
  %v1678 = vsub.f32 1.0, %v1677
  %v1679 = vmul.f32 %v1676, %v1678
  %v1680 = vadd.f32 %v1676, %v1679
  %vm1681 = vweird.f32 %v1450
  %vm1682 = vweird.f32 %v1676
  %vm1683 = vmor %vm1681, %vm1682
  %v1684 = vsel %vm1683, %v1676, %v1680
  %v1685 = vand.u32 2147483647, %v1450
  %vm1686 = vcmp.eq.f32.partialorder %v1685, 8.507059e+37
  %v1687 = vand.u32 %v1450, 2147483648
  %v1688 = vor.u32 1.1754944e-38, %v1687
  %v1689 = vsel %vm1686, %v1688, %v1684
  %v1690 = vmul.f32 1.0, %v1689
  %v1691 = vtanh.pop %v1371
  %v1692 = vtanh.pop %v1372
  %v1693 = vtanh.pop %v1373
  %v1694 = vtanh.pop %v1374
  %v1695 = vtanh.pop %v1375
  %v1696 = vtanh.pop %v1376
  %v1697 = vtanh.pop %v1377
  %v1698 = vtanh.pop %v1378
  %v1699 = vtanh.pop %v1379
  %v1700 = vtanh.pop %v1380
  %v1701 = vtanh.pop %v1381
  %v1702 = vtanh.pop %v1382
  %v1703 = vtanh.pop %v1383
  %v1704 = vtanh.pop %v1384
  %v1705 = vtanh.pop %v1385
  %v1706 = vtanh.pop %v1386
  %v1707 = vmul.f32 %v1465, 0.0
  %v1708 = vmul.f32 %v1480, 0.0
  %v1709 = vmul.f32 %v1495, 0.0
  %v1710 = vmul.f32 %v1510, 0.0
  %v1711 = vmul.f32 %v1525, 0.0
  %v1712 = vmul.f32 %v1540, 0.0
  %v1713 = vmul.f32 %v1555, 0.0
  %v1714 = vmul.f32 %v1570, 0.0
  %v1715 = vmul.f32 %v1585, 0.0
  %v1716 = vmul.f32 %v1600, 0.0
  %v1717 = vmul.f32 %v1615, 0.0
  %v1718 = vmul.f32 %v1630, 0.0
  %v1719 = vmul.f32 %v1645, 0.0
  %v1720 = vmul.f32 %v1660, 0.0
  %v1721 = vmul.f32 %v1675, 0.0
  %v1722 = vmul.f32 %v1690, 0.0
  %1739 = vrot.lane.b32.xlu0 %v1691, 32
  %v1740 = vpop.permute.xlu0 %1739
  %1741 = vrot.lane.b32.xlu0 %v1692, 32
  %v1742 = vpop.permute.xlu0 %1741
  %1743 = vrot.lane.b32.xlu0 %v1693, 32
  %v1744 = vpop.permute.xlu0 %1743
  %1745 = vrot.lane.b32.xlu0 %v1694, 32
  %v1746 = vpop.permute.xlu0 %1745
  %1747 = vrot.lane.b32.xlu0 %v1695, 32
  %v1748 = vpop.permute.xlu0 %1747
  %1749 = vrot.lane.b32.xlu0 %v1696, 32
  %v1750 = vpop.permute.xlu0 %1749
  %1751 = vrot.lane.b32.xlu0 %v1697, 32
  %v1752 = vpop.permute.xlu0 %1751
  %1753 = vrot.lane.b32.xlu0 %v1698, 32
  %v1754 = vpop.permute.xlu0 %1753
  %1755 = vrot.lane.b32.xlu0 %v1699, 32
  %v1756 = vpop.permute.xlu0 %1755
  %1757 = vrot.lane.b32.xlu0 %v1700, 32
  %v1758 = vpop.permute.xlu0 %1757
  %1759 = vrot.lane.b32.xlu0 %v1701, 32
  %v1760 = vpop.permute.xlu0 %1759
  %1761 = vrot.lane.b32.xlu0 %v1702, 32
  %v1762 = vpop.permute.xlu0 %1761
  %1763 = vrot.lane.b32.xlu0 %v1703, 32
  %v1764 = vpop.permute.xlu0 %1763
  %1765 = vrot.lane.b32.xlu0 %v1704, 32
  %v1766 = vpop.permute.xlu0 %1765
  %1767 = vrot.lane.b32.xlu0 %v1705, 32
  %v1768 = vpop.permute.xlu0 %1767
  %1769 = vrot.lane.b32.xlu0 %v1706, 32
  %v1770 = vpop.permute.xlu0 %1769
  %v1787 = vmul.f32 %v1465, %v1740
  %v1788 = vmul.f32 %v1480, %v1742
  %v1789 = vmul.f32 %v1495, %v1744
  %v1790 = vmul.f32 %v1510, %v1746
  %v1791 = vmul.f32 %v1525, %v1748
  %v1792 = vmul.f32 %v1540, %v1750
  %v1793 = vmul.f32 %v1555, %v1752
  %v1794 = vmul.f32 %v1570, %v1754
  %v1795 = vmul.f32 %v1585, %v1756
  %v1796 = vmul.f32 %v1600, %v1758
  %v1797 = vmul.f32 %v1615, %v1760
  %v1798 = vmul.f32 %v1630, %v1762
  %v1799 = vmul.f32 %v1645, %v1764
  %v1800 = vmul.f32 %v1660, %v1766
  %v1801 = vmul.f32 %v1675, %v1768
  %v1802 = vmul.f32 %v1690, %v1770
  %1819 = vrot.lane.b32.xlu0 %v1787, 32
  %v1820 = vpop.permute.xlu0 %1819
  %1821 = vrot.lane.b32.xlu0 %v1788, 32
  %v1822 = vpop.permute.xlu0 %1821
  %1823 = vrot.lane.b32.xlu0 %v1789, 32
  %v1824 = vpop.permute.xlu0 %1823
  %1825 = vrot.lane.b32.xlu0 %v1790, 32
  %v1826 = vpop.permute.xlu0 %1825
  %1827 = vrot.lane.b32.xlu0 %v1791, 32
  %v1828 = vpop.permute.xlu0 %1827
  %1829 = vrot.lane.b32.xlu0 %v1792, 32
  %v1830 = vpop.permute.xlu0 %1829
  %1831 = vrot.lane.b32.xlu0 %v1793, 32
  %v1832 = vpop.permute.xlu0 %1831
  %1833 = vrot.lane.b32.xlu0 %v1794, 32
  %v1834 = vpop.permute.xlu0 %1833
  %1835 = vrot.lane.b32.xlu0 %v1795, 32
  %v1836 = vpop.permute.xlu0 %1835
  %1837 = vrot.lane.b32.xlu0 %v1796, 32
  %v1838 = vpop.permute.xlu0 %1837
  %1839 = vrot.lane.b32.xlu0 %v1797, 32
  %v1840 = vpop.permute.xlu0 %1839
  %1841 = vrot.lane.b32.xlu0 %v1798, 32
  %v1842 = vpop.permute.xlu0 %1841
  %1843 = vrot.lane.b32.xlu0 %v1799, 32
  %v1844 = vpop.permute.xlu0 %1843
  %1845 = vrot.lane.b32.xlu0 %v1800, 32
  %v1846 = vpop.permute.xlu0 %1845
  %1847 = vrot.lane.b32.xlu0 %v1801, 32
  %v1848 = vpop.permute.xlu0 %1847
  %1849 = vrot.lane.b32.xlu0 %v1802, 32
  %v1850 = vpop.permute.xlu0 %1849
  %v1867 = vadd.f32 %v1707, %v1820
  %v1868 = vadd.f32 %v1708, %v1822
  %v1869 = vadd.f32 %v1709, %v1824
  %v1870 = vadd.f32 %v1710, %v1826
  %v1871 = vadd.f32 %v1711, %v1828
  %v1872 = vadd.f32 %v1712, %v1830
  %v1873 = vadd.f32 %v1713, %v1832
  %v1874 = vadd.f32 %v1714, %v1834
  %v1875 = vadd.f32 %v1715, %v1836
  %v1876 = vadd.f32 %v1716, %v1838
  %v1877 = vadd.f32 %v1717, %v1840
  %v1878 = vadd.f32 %v1718, %v1842
  %v1879 = vadd.f32 %v1719, %v1844
  %v1880 = vadd.f32 %v1720, %v1846
  %v1881 = vadd.f32 %v1721, %v1848
  %v1882 = vadd.f32 %v1722, %v1850
  %v1883 = vtanh.pop %v1867
  %v1884 = vtanh.pop %v1868
  %v1885 = vtanh.pop %v1869
  %v1886 = vtanh.pop %v1870
  %v1887 = vtanh.pop %v1871
  %v1888 = vtanh.pop %v1872
  %v1889 = vtanh.pop %v1873
  %v1890 = vtanh.pop %v1874
  %v1891 = vtanh.pop %v1875
  %v1892 = vtanh.pop %v1876
  %v1893 = vtanh.pop %v1877
  %v1894 = vtanh.pop %v1878
  %v1895 = vtanh.pop %v1879
  %v1896 = vtanh.pop %v1880
  %v1897 = vtanh.pop %v1881
  %v1898 = vtanh.pop %v1882
  %1915 = vrot.lane.b32.xlu0 %v1883, 32
  %v1916 = vpop.permute.xlu0 %1915
  %1917 = vrot.lane.b32.xlu0 %v1884, 32
  %v1918 = vpop.permute.xlu0 %1917
  %1919 = vrot.lane.b32.xlu0 %v1885, 32
  %v1920 = vpop.permute.xlu0 %1919
  %1921 = vrot.lane.b32.xlu0 %v1886, 32
  %v1922 = vpop.permute.xlu0 %1921
  %1923 = vrot.lane.b32.xlu0 %v1887, 32
  %v1924 = vpop.permute.xlu0 %1923
  %1925 = vrot.lane.b32.xlu0 %v1888, 32
  %v1926 = vpop.permute.xlu0 %1925
  %1927 = vrot.lane.b32.xlu0 %v1889, 32
  %v1928 = vpop.permute.xlu0 %1927
  %1929 = vrot.lane.b32.xlu0 %v1890, 32
  %v1930 = vpop.permute.xlu0 %1929
  %1931 = vrot.lane.b32.xlu0 %v1891, 32
  %v1932 = vpop.permute.xlu0 %1931
  %1933 = vrot.lane.b32.xlu0 %v1892, 32
  %v1934 = vpop.permute.xlu0 %1933
  %1935 = vrot.lane.b32.xlu0 %v1893, 32
  %v1936 = vpop.permute.xlu0 %1935
  %1937 = vrot.lane.b32.xlu0 %v1894, 32
  %v1938 = vpop.permute.xlu0 %1937
  %1939 = vrot.lane.b32.xlu0 %v1895, 32
  %v1940 = vpop.permute.xlu0 %1939
  %1941 = vrot.lane.b32.xlu0 %v1896, 32
  %v1942 = vpop.permute.xlu0 %1941
  %1943 = vrot.lane.b32.xlu0 %v1897, 32
  %v1944 = vpop.permute.xlu0 %1943
  %1945 = vrot.lane.b32.xlu0 %v1898, 32
  %v1946 = vpop.permute.xlu0 %1945
  %v1963 = vmul.f32 %v1465, %v1916
  %v1964 = vmul.f32 %v1480, %v1918
  %v1965 = vmul.f32 %v1495, %v1920
  %v1966 = vmul.f32 %v1510, %v1922
  %v1967 = vmul.f32 %v1525, %v1924
  %v1968 = vmul.f32 %v1540, %v1926
  %v1969 = vmul.f32 %v1555, %v1928
  %v1970 = vmul.f32 %v1570, %v1930
  %v1971 = vmul.f32 %v1585, %v1932
  %v1972 = vmul.f32 %v1600, %v1934
  %v1973 = vmul.f32 %v1615, %v1936
  %v1974 = vmul.f32 %v1630, %v1938
  %v1975 = vmul.f32 %v1645, %v1940
  %v1976 = vmul.f32 %v1660, %v1942
  %v1977 = vmul.f32 %v1675, %v1944
  %v1978 = vmul.f32 %v1690, %v1946
  %v1979 = vpack.c.bf16 %v1963, %v1963
  %v1980 = vpack.c.bf16 %v1964, %v1964
  %v1981 = vpack.c.bf16 %v1965, %v1965
  %v1982 = vpack.c.bf16 %v1966, %v1966
  %v1983 = vpack.c.bf16 %v1967, %v1967
  %v1984 = vpack.c.bf16 %v1968, %v1968
  %v1985 = vpack.c.bf16 %v1969, %v1969
  %v1986 = vpack.c.bf16 %v1970, %v1970
  %v1987 = vpack.c.bf16 %v1971, %v1971
  %v1988 = vpack.c.bf16 %v1972, %v1972
  %v1989 = vpack.c.bf16 %v1973, %v1973
  %v1990 = vpack.c.bf16 %v1974, %v1974
  %v1991 = vpack.c.bf16 %v1975, %v1975
  %v1992 = vpack.c.bf16 %v1976, %v1976
  %v1993 = vpack.c.bf16 %v1977, %v1977
  %v1994 = vpack.c.bf16 %v1978, %v1978
  %2011 = vrot.lane.b32.xlu0 %v1979, 64
  %v2012 = vpop.permute.xlu0 %2011
  %2013 = vrot.lane.b32.xlu0 %v1980, 64
  %v2014 = vpop.permute.xlu0 %2013
  %2015 = vrot.lane.b32.xlu0 %v1981, 64
  %v2016 = vpop.permute.xlu0 %2015
  %2017 = vrot.lane.b32.xlu0 %v1982, 64
  %v2018 = vpop.permute.xlu0 %2017
  %2019 = vrot.lane.b32.xlu0 %v1983, 64
  %v2020 = vpop.permute.xlu0 %2019
  %2021 = vrot.lane.b32.xlu0 %v1984, 64
  %v2022 = vpop.permute.xlu0 %2021
  %2023 = vrot.lane.b32.xlu0 %v1985, 64
  %v2024 = vpop.permute.xlu0 %2023
  %2025 = vrot.lane.b32.xlu0 %v1986, 64
  %v2026 = vpop.permute.xlu0 %2025
  %2027 = vrot.lane.b32.xlu0 %v1987, 64
  %v2028 = vpop.permute.xlu0 %2027
  %2029 = vrot.lane.b32.xlu0 %v1988, 64
  %v2030 = vpop.permute.xlu0 %2029
  %2031 = vrot.lane.b32.xlu0 %v1989, 64
  %v2032 = vpop.permute.xlu0 %2031
  %2033 = vrot.lane.b32.xlu0 %v1990, 64
  %v2034 = vpop.permute.xlu0 %2033
  %2035 = vrot.lane.b32.xlu0 %v1991, 64
  %v2036 = vpop.permute.xlu0 %2035
  %2037 = vrot.lane.b32.xlu0 %v1992, 64
  %v2038 = vpop.permute.xlu0 %2037
  %2039 = vrot.lane.b32.xlu0 %v1993, 64
  %v2040 = vpop.permute.xlu0 %2039
  %2041 = vrot.lane.b32.xlu0 %v1994, 64
  %v2042 = vpop.permute.xlu0 %2041
  %vm2059 = vcmask 257024
  %2060 = vst.msk [vmem:[#allocation2] sm:$0xf] %vm2059, %v2012
  %2061 = vst.msk [vmem:[#allocation2 + $0x4] sm:$0xf] %vm2059, %v2014
  %2062 = vst.msk [vmem:[#allocation2 + $0x8] sm:$0xf] %vm2059, %v2016
  %2063 = vst.msk [vmem:[#allocation2 + $0xc] sm:$0xf] %vm2059, %v2018
  %2064 = vst.msk [vmem:[#allocation2 + $0x10] sm:$0xf] %vm2059, %v2020
  %2065 = vst.msk [vmem:[#allocation2 + $0x14] sm:$0xf] %vm2059, %v2022
  %2066 = vst.msk [vmem:[#allocation2 + $0x18] sm:$0xf] %vm2059, %v2024
  %2067 = vst.msk [vmem:[#allocation2 + $0x1c] sm:$0xf] %vm2059, %v2026
  %2068 = vst.msk [vmem:[#allocation2 + $0x20] sm:$0xf] %vm2059, %v2028
  %2069 = vst.msk [vmem:[#allocation2 + $0x24] sm:$0xf] %vm2059, %v2030
  %2070 = vst.msk [vmem:[#allocation2 + $0x28] sm:$0xf] %vm2059, %v2032
  %2071 = vst.msk [vmem:[#allocation2 + $0x2c] sm:$0xf] %vm2059, %v2034
  %2072 = vst.msk [vmem:[#allocation2 + $0x30] sm:$0xf] %vm2059, %v2036
  %2073 = vst.msk [vmem:[#allocation2 + $0x34] sm:$0xf] %vm2059, %v2038
  %2074 = vst.msk [vmem:[#allocation2 + $0x38] sm:$0xf] %vm2059, %v2040
  %2075 = vst.msk [vmem:[#allocation2 + $0x3c] sm:$0xf] %vm2059, %v2042
  %s2076 = scalar_lea.vmem [#allocation3], 64
  %v2077 = vld [vmem:[%s2076] sm:$0xf]
  %v2078 = vld [vmem:[%s2076 + $0x4] sm:$0xf]
  %v2079 = vld [vmem:[%s2076 + $0x8] sm:$0xf]
  %v2080 = vld [vmem:[%s2076 + $0xc] sm:$0xf]
  %v2081 = vld [vmem:[%s2076 + $0x10] sm:$0xf]
  %v2082 = vld [vmem:[%s2076 + $0x14] sm:$0xf]
  %v2083 = vld [vmem:[%s2076 + $0x18] sm:$0xf]
  %v2084 = vld [vmem:[%s2076 + $0x1c] sm:$0xf]
  %v2085 = vld [vmem:[%s2076 + $0x20] sm:$0xf]
  %v2086 = vld [vmem:[%s2076 + $0x24] sm:$0xf]
  %v2087 = vld [vmem:[%s2076 + $0x28] sm:$0xf]
  %v2088 = vld [vmem:[%s2076 + $0x2c] sm:$0xf]
  %v2089 = vld [vmem:[%s2076 + $0x30] sm:$0xf]
  %v2090 = vld [vmem:[%s2076 + $0x34] sm:$0xf]
  %v2091 = vld [vmem:[%s2076 + $0x38] sm:$0xf]
  %v2092 = vld [vmem:[%s2076 + $0x3c] sm:$0xf]
  %v2093 = vunpack.c.l.bf16 %v2077
  %v2094 = vunpack.c.l.bf16 %v2078
  %v2095 = vunpack.c.l.bf16 %v2079
  %v2096 = vunpack.c.l.bf16 %v2080
  %v2097 = vunpack.c.l.bf16 %v2081
  %v2098 = vunpack.c.l.bf16 %v2082
  %v2099 = vunpack.c.l.bf16 %v2083
  %v2100 = vunpack.c.l.bf16 %v2084
  %v2101 = vunpack.c.l.bf16 %v2085
  %v2102 = vunpack.c.l.bf16 %v2086
  %v2103 = vunpack.c.l.bf16 %v2087
  %v2104 = vunpack.c.l.bf16 %v2088
  %v2105 = vunpack.c.l.bf16 %v2089
  %v2106 = vunpack.c.l.bf16 %v2090
  %v2107 = vunpack.c.l.bf16 %v2091
  %v2108 = vunpack.c.l.bf16 %v2092
  %v2109 = vunpack.c.l.b16 %v1979
  %v2110 = vunpack.c.l.b16 %v1980
  %v2111 = vunpack.c.l.b16 %v1981
  %v2112 = vunpack.c.l.b16 %v1982
  %v2113 = vunpack.c.l.b16 %v1983
  %v2114 = vunpack.c.l.b16 %v1984
  %v2115 = vunpack.c.l.b16 %v1985
  %v2116 = vunpack.c.l.b16 %v1986
  %v2117 = vunpack.c.l.b16 %v1987
  %v2118 = vunpack.c.l.b16 %v1988
  %v2119 = vunpack.c.l.b16 %v1989
  %v2120 = vunpack.c.l.b16 %v1990
  %v2121 = vunpack.c.l.b16 %v1991
  %v2122 = vunpack.c.l.b16 %v1992
  %v2123 = vunpack.c.l.b16 %v1993
  %v2124 = vunpack.c.l.b16 %v1994
  %v2125 = vpack.c.b16 %v2110, %v2109
  %v2126 = vpack.c.b16 %v2112, %v2111
  %v2127 = vpack.c.b16 %v2114, %v2113
  %v2128 = vpack.c.b16 %v2116, %v2115
  %v2129 = vpack.c.b16 %v2118, %v2117
  %v2130 = vpack.c.b16 %v2120, %v2119
  %v2131 = vpack.c.b16 %v2122, %v2121
  %v2132 = vpack.c.b16 %v2124, %v2123
  %2133 = vrot.lane.b32.xlu0 %v2125, 64
  %v2134 = vpop.permute.xlu0 %2133
  %2135 = vrot.lane.b32.xlu0 %v2126, 64
  %v2136 = vpop.permute.xlu0 %2135
  %2137 = vrot.lane.b32.xlu0 %v2127, 64
  %v2138 = vpop.permute.xlu0 %2137
  %2139 = vrot.lane.b32.xlu0 %v2128, 64
  %v2140 = vpop.permute.xlu0 %2139
  %2141 = vrot.lane.b32.xlu0 %v2129, 64
  %v2142 = vpop.permute.xlu0 %2141
  %2143 = vrot.lane.b32.xlu0 %v2130, 64
  %v2144 = vpop.permute.xlu0 %2143
  %2145 = vrot.lane.b32.xlu0 %v2131, 64
  %v2146 = vpop.permute.xlu0 %2145
  %2147 = vrot.lane.b32.xlu0 %v2132, 64
  %v2148 = vpop.permute.xlu0 %2147
  %v2150 = vsel %vm1318, %v2134, 0
  %v2153 = vsel %vm1318, %v2136, 0
  %v2156 = vsel %vm1318, %v2138, 0
  %v2159 = vsel %vm1318, %v2140, 0
  %v2162 = vsel %vm1318, %v2142, 0
  %v2165 = vsel %vm1318, %v2144, 0
  %v2168 = vsel %vm1318, %v2146, 0
  %v2171 = vsel %vm1318, %v2148, 0
  %2173 = vmatpush.bf16.msra.mxu0 0
  %2174 = vmatpush.bf16.msra.mxu0 0
  %2175 = vmatpush.bf16.msra.mxu0 0
  %2176 = vmatpush.bf16.msra.mxu0 0
  %2177 = vmatpush.bf16.msra.mxu0 0
  %2178 = vmatpush.bf16.msra.mxu0 0
  %2179 = vmatpush.bf16.msra.mxu0 %v1315
  %2180 = vmatpush.bf16.msra.mxu0 %v1314
  %2181 = vmatmul.bf16.gmra.mxu0 %v2150
  %v2182 = vpop.f32.mrf.mxu0
  %v2183 = vadd.f32 0.0, %v2182
  %v2184 = vpop.f32.mrf.mxu0
  %v2185 = vadd.f32 0.0, %v2184
  %2186 = vmatmul.bf16.gmra.mxu0 %v2153
  %v2187 = vpop.f32.mrf.mxu0
  %v2188 = vadd.f32 0.0, %v2187
  %v2189 = vpop.f32.mrf.mxu0
  %v2190 = vadd.f32 0.0, %v2189
  %2191 = vmatmul.bf16.gmra.mxu0 %v2156
  %v2192 = vpop.f32.mrf.mxu0
  %v2193 = vadd.f32 0.0, %v2192
  %v2194 = vpop.f32.mrf.mxu0
  %v2195 = vadd.f32 0.0, %v2194
  %2196 = vmatmul.bf16.gmra.mxu0 %v2159
  %v2197 = vpop.f32.mrf.mxu0
  %v2198 = vadd.f32 0.0, %v2197
  %v2199 = vpop.f32.mrf.mxu0
  %v2200 = vadd.f32 0.0, %v2199
  %2201 = vmatmul.bf16.gmra.mxu0 %v2162
  %v2202 = vpop.f32.mrf.mxu0
  %v2203 = vadd.f32 0.0, %v2202
  %v2204 = vpop.f32.mrf.mxu0
  %v2205 = vadd.f32 0.0, %v2204
  %2206 = vmatmul.bf16.gmra.mxu0 %v2165
  %v2207 = vpop.f32.mrf.mxu0
  %v2208 = vadd.f32 0.0, %v2207
  %v2209 = vpop.f32.mrf.mxu0
  %v2210 = vadd.f32 0.0, %v2209
  %2211 = vmatmul.bf16.gmra.mxu0 %v2168
  %v2212 = vpop.f32.mrf.mxu0
  %v2213 = vadd.f32 0.0, %v2212
  %v2214 = vpop.f32.mrf.mxu0
  %v2215 = vadd.f32 0.0, %v2214
  %2216 = vmatmul.bf16.gmra.mxu0 %v2171
  %v2217 = vpop.f32.mrf.mxu0
  %v2218 = vadd.f32 0.0, %v2217
  %v2219 = vpop.f32.mrf.mxu0
  %v2220 = vadd.f32 0.0, %v2219
  %2221 = vdwg.mxu0
  %v2222 = vadd.f32 %v2093, %v2183
  %v2223 = vadd.f32 %v2094, %v2185
  %v2224 = vadd.f32 %v2095, %v2188
  %v2225 = vadd.f32 %v2096, %v2190
  %v2226 = vadd.f32 %v2097, %v2193
  %v2227 = vadd.f32 %v2098, %v2195
  %v2228 = vadd.f32 %v2099, %v2198
  %v2229 = vadd.f32 %v2100, %v2200
  %v2230 = vadd.f32 %v2101, %v2203
  %v2231 = vadd.f32 %v2102, %v2205
  %v2232 = vadd.f32 %v2103, %v2208
  %v2233 = vadd.f32 %v2104, %v2210
  %v2234 = vadd.f32 %v2105, %v2213
  %v2235 = vadd.f32 %v2106, %v2215
  %v2236 = vadd.f32 %v2107, %v2218
  %v2237 = vadd.f32 %v2108, %v2220
  %v2238 = vxor.u32 %v2222, 2147483648
  %v2239 = vxor.u32 %v2223, 2147483648
  %v2240 = vxor.u32 %v2224, 2147483648
  %v2241 = vxor.u32 %v2225, 2147483648
  %v2242 = vxor.u32 %v2226, 2147483648
  %v2243 = vxor.u32 %v2227, 2147483648
  %v2244 = vxor.u32 %v2228, 2147483648
  %v2245 = vxor.u32 %v2229, 2147483648
  %v2246 = vxor.u32 %v2230, 2147483648
  %v2247 = vxor.u32 %v2231, 2147483648
  %v2248 = vxor.u32 %v2232, 2147483648
  %v2249 = vxor.u32 %v2233, 2147483648
  %v2250 = vxor.u32 %v2234, 2147483648
  %v2251 = vxor.u32 %v2235, 2147483648
  %v2252 = vxor.u32 %v2236, 2147483648
  %v2253 = vxor.u32 %v2237, 2147483648
  %v2254 = vmul.f32 %v2238, 1.442695
  %v2255 = vpow.pop %v2254
  %v2256 = vmul.f32 %v2239, 1.442695
  %v2257 = vpow.pop %v2256
  %v2258 = vmul.f32 %v2240, 1.442695
  %v2259 = vpow.pop %v2258
  %v2260 = vmul.f32 %v2241, 1.442695
  %v2261 = vpow.pop %v2260
  %v2262 = vmul.f32 %v2242, 1.442695
  %v2263 = vpow.pop %v2262
  %v2264 = vmul.f32 %v2243, 1.442695
  %v2265 = vpow.pop %v2264
  %v2266 = vmul.f32 %v2244, 1.442695
  %v2267 = vpow.pop %v2266
  %v2268 = vmul.f32 %v2245, 1.442695
  %v2269 = vpow.pop %v2268
  %v2270 = vmul.f32 %v2246, 1.442695
  %v2271 = vpow.pop %v2270
  %v2272 = vmul.f32 %v2247, 1.442695
  %v2273 = vpow.pop %v2272
  %v2274 = vmul.f32 %v2248, 1.442695
  %v2275 = vpow.pop %v2274
  %v2276 = vmul.f32 %v2249, 1.442695
  %v2277 = vpow.pop %v2276
  %v2278 = vmul.f32 %v2250, 1.442695
  %v2279 = vpow.pop %v2278
  %v2280 = vmul.f32 %v2251, 1.442695
  %v2281 = vpow.pop %v2280
  %v2282 = vmul.f32 %v2252, 1.442695
  %v2283 = vpow.pop %v2282
  %v2284 = vmul.f32 %v2253, 1.442695
  %v2285 = vpow.pop %v2284
  %v2286 = vadd.f32 %v2255, 1.0
  %v2287 = vadd.f32 %v2257, 1.0
  %v2288 = vadd.f32 %v2259, 1.0
  %v2289 = vadd.f32 %v2261, 1.0
  %v2290 = vadd.f32 %v2263, 1.0
  %v2291 = vadd.f32 %v2265, 1.0
  %v2292 = vadd.f32 %v2267, 1.0
  %v2293 = vadd.f32 %v2269, 1.0
  %v2294 = vadd.f32 %v2271, 1.0
  %v2295 = vadd.f32 %v2273, 1.0
  %v2296 = vadd.f32 %v2275, 1.0
  %v2297 = vadd.f32 %v2277, 1.0
  %v2298 = vadd.f32 %v2279, 1.0
  %v2299 = vadd.f32 %v2281, 1.0
  %v2300 = vadd.f32 %v2283, 1.0
  %v2301 = vadd.f32 %v2285, 1.0
  %v2302 = vrcp.pop %v2286
  %v2303 = vmul.f32 %v2286, %v2302
  %v2304 = vsub.f32 1.0, %v2303
  %v2305 = vmul.f32 %v2302, %v2304
  %v2306 = vadd.f32 %v2302, %v2305
  %vm2307 = vweird.f32 %v2286
  %vm2308 = vweird.f32 %v2302
  %vm2309 = vmor %vm2307, %vm2308
  %v2310 = vsel %vm2309, %v2302, %v2306
  %v2311 = vand.u32 2147483647, %v2286
  %vm2312 = vcmp.eq.f32.partialorder %v2311, 8.507059e+37
  %v2313 = vand.u32 %v2286, 2147483648
  %v2314 = vor.u32 1.1754944e-38, %v2313
  %v2315 = vsel %vm2312, %v2314, %v2310
  %v2316 = vmul.f32 1.0, %v2315
  %v2317 = vrcp.pop %v2287
  %v2318 = vmul.f32 %v2287, %v2317
  %v2319 = vsub.f32 1.0, %v2318
  %v2320 = vmul.f32 %v2317, %v2319
  %v2321 = vadd.f32 %v2317, %v2320
  %vm2322 = vweird.f32 %v2287
  %vm2323 = vweird.f32 %v2317
  %vm2324 = vmor %vm2322, %vm2323
  %v2325 = vsel %vm2324, %v2317, %v2321
  %v2326 = vand.u32 2147483647, %v2287
  %vm2327 = vcmp.eq.f32.partialorder %v2326, 8.507059e+37
  %v2328 = vand.u32 %v2287, 2147483648
  %v2329 = vor.u32 1.1754944e-38, %v2328
  %v2330 = vsel %vm2327, %v2329, %v2325
  %v2331 = vmul.f32 1.0, %v2330
  %v2332 = vrcp.pop %v2288
  %v2333 = vmul.f32 %v2288, %v2332
  %v2334 = vsub.f32 1.0, %v2333
  %v2335 = vmul.f32 %v2332, %v2334
  %v2336 = vadd.f32 %v2332, %v2335
  %vm2337 = vweird.f32 %v2288
  %vm2338 = vweird.f32 %v2332
  %vm2339 = vmor %vm2337, %vm2338
  %v2340 = vsel %vm2339, %v2332, %v2336
  %v2341 = vand.u32 2147483647, %v2288
  %vm2342 = vcmp.eq.f32.partialorder %v2341, 8.507059e+37
  %v2343 = vand.u32 %v2288, 2147483648
  %v2344 = vor.u32 1.1754944e-38, %v2343
  %v2345 = vsel %vm2342, %v2344, %v2340
  %v2346 = vmul.f32 1.0, %v2345
  %v2347 = vrcp.pop %v2289
  %v2348 = vmul.f32 %v2289, %v2347
  %v2349 = vsub.f32 1.0, %v2348
  %v2350 = vmul.f32 %v2347, %v2349
  %v2351 = vadd.f32 %v2347, %v2350
  %vm2352 = vweird.f32 %v2289
  %vm2353 = vweird.f32 %v2347
  %vm2354 = vmor %vm2352, %vm2353
  %v2355 = vsel %vm2354, %v2347, %v2351
  %v2356 = vand.u32 2147483647, %v2289
  %vm2357 = vcmp.eq.f32.partialorder %v2356, 8.507059e+37
  %v2358 = vand.u32 %v2289, 2147483648
  %v2359 = vor.u32 1.1754944e-38, %v2358
  %v2360 = vsel %vm2357, %v2359, %v2355
  %v2361 = vmul.f32 1.0, %v2360
  %v2362 = vrcp.pop %v2290
  %v2363 = vmul.f32 %v2290, %v2362
  %v2364 = vsub.f32 1.0, %v2363
  %v2365 = vmul.f32 %v2362, %v2364
  %v2366 = vadd.f32 %v2362, %v2365
  %vm2367 = vweird.f32 %v2290
  %vm2368 = vweird.f32 %v2362
  %vm2369 = vmor %vm2367, %vm2368
  %v2370 = vsel %vm2369, %v2362, %v2366
  %v2371 = vand.u32 2147483647, %v2290
  %vm2372 = vcmp.eq.f32.partialorder %v2371, 8.507059e+37
  %v2373 = vand.u32 %v2290, 2147483648
  %v2374 = vor.u32 1.1754944e-38, %v2373
  %v2375 = vsel %vm2372, %v2374, %v2370
  %v2376 = vmul.f32 1.0, %v2375
  %v2377 = vrcp.pop %v2291
  %v2378 = vmul.f32 %v2291, %v2377
  %v2379 = vsub.f32 1.0, %v2378
  %v2380 = vmul.f32 %v2377, %v2379
  %v2381 = vadd.f32 %v2377, %v2380
  %vm2382 = vweird.f32 %v2291
  %vm2383 = vweird.f32 %v2377
  %vm2384 = vmor %vm2382, %vm2383
  %v2385 = vsel %vm2384, %v2377, %v2381
  %v2386 = vand.u32 2147483647, %v2291
  %vm2387 = vcmp.eq.f32.partialorder %v2386, 8.507059e+37
  %v2388 = vand.u32 %v2291, 2147483648
  %v2389 = vor.u32 1.1754944e-38, %v2388
  %v2390 = vsel %vm2387, %v2389, %v2385
  %v2391 = vmul.f32 1.0, %v2390
  %v2392 = vrcp.pop %v2292
  %v2393 = vmul.f32 %v2292, %v2392
  %v2394 = vsub.f32 1.0, %v2393
  %v2395 = vmul.f32 %v2392, %v2394
  %v2396 = vadd.f32 %v2392, %v2395
  %vm2397 = vweird.f32 %v2292
  %vm2398 = vweird.f32 %v2392
  %vm2399 = vmor %vm2397, %vm2398
  %v2400 = vsel %vm2399, %v2392, %v2396
  %v2401 = vand.u32 2147483647, %v2292
  %vm2402 = vcmp.eq.f32.partialorder %v2401, 8.507059e+37
  %v2403 = vand.u32 %v2292, 2147483648
  %v2404 = vor.u32 1.1754944e-38, %v2403
  %v2405 = vsel %vm2402, %v2404, %v2400
  %v2406 = vmul.f32 1.0, %v2405
  %v2407 = vrcp.pop %v2293
  %v2408 = vmul.f32 %v2293, %v2407
  %v2409 = vsub.f32 1.0, %v2408
  %v2410 = vmul.f32 %v2407, %v2409
  %v2411 = vadd.f32 %v2407, %v2410
  %vm2412 = vweird.f32 %v2293
  %vm2413 = vweird.f32 %v2407
  %vm2414 = vmor %vm2412, %vm2413
  %v2415 = vsel %vm2414, %v2407, %v2411
  %v2416 = vand.u32 2147483647, %v2293
  %vm2417 = vcmp.eq.f32.partialorder %v2416, 8.507059e+37
  %v2418 = vand.u32 %v2293, 2147483648
  %v2419 = vor.u32 1.1754944e-38, %v2418
  %v2420 = vsel %vm2417, %v2419, %v2415
  %v2421 = vmul.f32 1.0, %v2420
  %v2422 = vrcp.pop %v2294
  %v2423 = vmul.f32 %v2294, %v2422
  %v2424 = vsub.f32 1.0, %v2423
  %v2425 = vmul.f32 %v2422, %v2424
  %v2426 = vadd.f32 %v2422, %v2425
  %vm2427 = vweird.f32 %v2294
  %vm2428 = vweird.f32 %v2422
  %vm2429 = vmor %vm2427, %vm2428
  %v2430 = vsel %vm2429, %v2422, %v2426
  %v2431 = vand.u32 2147483647, %v2294
  %vm2432 = vcmp.eq.f32.partialorder %v2431, 8.507059e+37
  %v2433 = vand.u32 %v2294, 2147483648
  %v2434 = vor.u32 1.1754944e-38, %v2433
  %v2435 = vsel %vm2432, %v2434, %v2430
  %v2436 = vmul.f32 1.0, %v2435
  %v2437 = vrcp.pop %v2295
  %v2438 = vmul.f32 %v2295, %v2437
  %v2439 = vsub.f32 1.0, %v2438
  %v2440 = vmul.f32 %v2437, %v2439
  %v2441 = vadd.f32 %v2437, %v2440
  %vm2442 = vweird.f32 %v2295
  %vm2443 = vweird.f32 %v2437
  %vm2444 = vmor %vm2442, %vm2443
  %v2445 = vsel %vm2444, %v2437, %v2441
  %v2446 = vand.u32 2147483647, %v2295
  %vm2447 = vcmp.eq.f32.partialorder %v2446, 8.507059e+37
  %v2448 = vand.u32 %v2295, 2147483648
  %v2449 = vor.u32 1.1754944e-38, %v2448
  %v2450 = vsel %vm2447, %v2449, %v2445
  %v2451 = vmul.f32 1.0, %v2450
  %v2452 = vrcp.pop %v2296
  %v2453 = vmul.f32 %v2296, %v2452
  %v2454 = vsub.f32 1.0, %v2453
  %v2455 = vmul.f32 %v2452, %v2454
  %v2456 = vadd.f32 %v2452, %v2455
  %vm2457 = vweird.f32 %v2296
  %vm2458 = vweird.f32 %v2452
  %vm2459 = vmor %vm2457, %vm2458
  %v2460 = vsel %vm2459, %v2452, %v2456
  %v2461 = vand.u32 2147483647, %v2296
  %vm2462 = vcmp.eq.f32.partialorder %v2461, 8.507059e+37
  %v2463 = vand.u32 %v2296, 2147483648
  %v2464 = vor.u32 1.1754944e-38, %v2463
  %v2465 = vsel %vm2462, %v2464, %v2460
  %v2466 = vmul.f32 1.0, %v2465
  %v2467 = vrcp.pop %v2297
  %v2468 = vmul.f32 %v2297, %v2467
  %v2469 = vsub.f32 1.0, %v2468
  %v2470 = vmul.f32 %v2467, %v2469
  %v2471 = vadd.f32 %v2467, %v2470
  %vm2472 = vweird.f32 %v2297
  %vm2473 = vweird.f32 %v2467
  %vm2474 = vmor %vm2472, %vm2473
  %v2475 = vsel %vm2474, %v2467, %v2471
  %v2476 = vand.u32 2147483647, %v2297
  %vm2477 = vcmp.eq.f32.partialorder %v2476, 8.507059e+37
  %v2478 = vand.u32 %v2297, 2147483648
  %v2479 = vor.u32 1.1754944e-38, %v2478
  %v2480 = vsel %vm2477, %v2479, %v2475
  %v2481 = vmul.f32 1.0, %v2480
  %v2482 = vrcp.pop %v2298
  %v2483 = vmul.f32 %v2298, %v2482
  %v2484 = vsub.f32 1.0, %v2483
  %v2485 = vmul.f32 %v2482, %v2484
  %v2486 = vadd.f32 %v2482, %v2485
  %vm2487 = vweird.f32 %v2298
  %vm2488 = vweird.f32 %v2482
  %vm2489 = vmor %vm2487, %vm2488
  %v2490 = vsel %vm2489, %v2482, %v2486
  %v2491 = vand.u32 2147483647, %v2298
  %vm2492 = vcmp.eq.f32.partialorder %v2491, 8.507059e+37
  %v2493 = vand.u32 %v2298, 2147483648
  %v2494 = vor.u32 1.1754944e-38, %v2493
  %v2495 = vsel %vm2492, %v2494, %v2490
  %v2496 = vmul.f32 1.0, %v2495
  %v2497 = vrcp.pop %v2299
  %v2498 = vmul.f32 %v2299, %v2497
  %v2499 = vsub.f32 1.0, %v2498
  %v2500 = vmul.f32 %v2497, %v2499
  %v2501 = vadd.f32 %v2497, %v2500
  %vm2502 = vweird.f32 %v2299
  %vm2503 = vweird.f32 %v2497
  %vm2504 = vmor %vm2502, %vm2503
  %v2505 = vsel %vm2504, %v2497, %v2501
  %v2506 = vand.u32 2147483647, %v2299
  %vm2507 = vcmp.eq.f32.partialorder %v2506, 8.507059e+37
  %v2508 = vand.u32 %v2299, 2147483648
  %v2509 = vor.u32 1.1754944e-38, %v2508
  %v2510 = vsel %vm2507, %v2509, %v2505
  %v2511 = vmul.f32 1.0, %v2510
  %v2512 = vrcp.pop %v2300
  %v2513 = vmul.f32 %v2300, %v2512
  %v2514 = vsub.f32 1.0, %v2513
  %v2515 = vmul.f32 %v2512, %v2514
  %v2516 = vadd.f32 %v2512, %v2515
  %vm2517 = vweird.f32 %v2300
  %vm2518 = vweird.f32 %v2512
  %vm2519 = vmor %vm2517, %vm2518
  %v2520 = vsel %vm2519, %v2512, %v2516
  %v2521 = vand.u32 2147483647, %v2300
  %vm2522 = vcmp.eq.f32.partialorder %v2521, 8.507059e+37
  %v2523 = vand.u32 %v2300, 2147483648
  %v2524 = vor.u32 1.1754944e-38, %v2523
  %v2525 = vsel %vm2522, %v2524, %v2520
  %v2526 = vmul.f32 1.0, %v2525
  %v2527 = vrcp.pop %v2301
  %v2528 = vmul.f32 %v2301, %v2527
  %v2529 = vsub.f32 1.0, %v2528
  %v2530 = vmul.f32 %v2527, %v2529
  %v2531 = vadd.f32 %v2527, %v2530
  %vm2532 = vweird.f32 %v2301
  %vm2533 = vweird.f32 %v2527
  %vm2534 = vmor %vm2532, %vm2533
  %v2535 = vsel %vm2534, %v2527, %v2531
  %v2536 = vand.u32 2147483647, %v2301
  %vm2537 = vcmp.eq.f32.partialorder %v2536, 8.507059e+37
  %v2538 = vand.u32 %v2301, 2147483648
  %v2539 = vor.u32 1.1754944e-38, %v2538
  %v2540 = vsel %vm2537, %v2539, %v2535
  %v2541 = vmul.f32 1.0, %v2540
  %v2542 = vtanh.pop %v2222
  %v2543 = vtanh.pop %v2223
  %v2544 = vtanh.pop %v2224
  %v2545 = vtanh.pop %v2225
  %v2546 = vtanh.pop %v2226
  %v2547 = vtanh.pop %v2227
  %v2548 = vtanh.pop %v2228
  %v2549 = vtanh.pop %v2229
  %v2550 = vtanh.pop %v2230
  %v2551 = vtanh.pop %v2231
  %v2552 = vtanh.pop %v2232
  %v2553 = vtanh.pop %v2233
  %v2554 = vtanh.pop %v2234
  %v2555 = vtanh.pop %v2235
  %v2556 = vtanh.pop %v2236
  %v2557 = vtanh.pop %v2237
  %v2558 = vmul.f32 %v2316, %v1867
  %v2559 = vmul.f32 %v2331, %v1868
  %v2560 = vmul.f32 %v2346, %v1869
  %v2561 = vmul.f32 %v2361, %v1870
  %v2562 = vmul.f32 %v2376, %v1871
  %v2563 = vmul.f32 %v2391, %v1872
  %v2564 = vmul.f32 %v2406, %v1873
  %v2565 = vmul.f32 %v2421, %v1874
  %v2566 = vmul.f32 %v2436, %v1875
  %v2567 = vmul.f32 %v2451, %v1876
  %v2568 = vmul.f32 %v2466, %v1877
  %v2569 = vmul.f32 %v2481, %v1878
  %v2570 = vmul.f32 %v2496, %v1879
  %v2571 = vmul.f32 %v2511, %v1880
  %v2572 = vmul.f32 %v2526, %v1881
  %v2573 = vmul.f32 %v2541, %v1882
  %2590 = vrot.lane.b32.xlu0 %v2542, 32
  %v2591 = vpop.permute.xlu0 %2590
  %2592 = vrot.lane.b32.xlu0 %v2543, 32
  %v2593 = vpop.permute.xlu0 %2592
  %2594 = vrot.lane.b32.xlu0 %v2544, 32
  %v2595 = vpop.permute.xlu0 %2594
  %2596 = vrot.lane.b32.xlu0 %v2545, 32
  %v2597 = vpop.permute.xlu0 %2596
  %2598 = vrot.lane.b32.xlu0 %v2546, 32
  %v2599 = vpop.permute.xlu0 %2598
  %2600 = vrot.lane.b32.xlu0 %v2547, 32
  %v2601 = vpop.permute.xlu0 %2600
  %2602 = vrot.lane.b32.xlu0 %v2548, 32
  %v2603 = vpop.permute.xlu0 %2602
  %2604 = vrot.lane.b32.xlu0 %v2549, 32
  %v2605 = vpop.permute.xlu0 %2604
  %2606 = vrot.lane.b32.xlu0 %v2550, 32
  %v2607 = vpop.permute.xlu0 %2606
  %2608 = vrot.lane.b32.xlu0 %v2551, 32
  %v2609 = vpop.permute.xlu0 %2608
  %2610 = vrot.lane.b32.xlu0 %v2552, 32
  %v2611 = vpop.permute.xlu0 %2610
  %2612 = vrot.lane.b32.xlu0 %v2553, 32
  %v2613 = vpop.permute.xlu0 %2612
  %2614 = vrot.lane.b32.xlu0 %v2554, 32
  %v2615 = vpop.permute.xlu0 %2614
  %2616 = vrot.lane.b32.xlu0 %v2555, 32
  %v2617 = vpop.permute.xlu0 %2616
  %2618 = vrot.lane.b32.xlu0 %v2556, 32
  %v2619 = vpop.permute.xlu0 %2618
  %2620 = vrot.lane.b32.xlu0 %v2557, 32
  %v2621 = vpop.permute.xlu0 %2620
  %v2638 = vmul.f32 %v2316, %v2591
  %v2639 = vmul.f32 %v2331, %v2593
  %v2640 = vmul.f32 %v2346, %v2595
  %v2641 = vmul.f32 %v2361, %v2597
  %v2642 = vmul.f32 %v2376, %v2599
  %v2643 = vmul.f32 %v2391, %v2601
  %v2644 = vmul.f32 %v2406, %v2603
  %v2645 = vmul.f32 %v2421, %v2605
  %v2646 = vmul.f32 %v2436, %v2607
  %v2647 = vmul.f32 %v2451, %v2609
  %v2648 = vmul.f32 %v2466, %v2611
  %v2649 = vmul.f32 %v2481, %v2613
  %v2650 = vmul.f32 %v2496, %v2615
  %v2651 = vmul.f32 %v2511, %v2617
  %v2652 = vmul.f32 %v2526, %v2619
  %v2653 = vmul.f32 %v2541, %v2621
  %2670 = vrot.lane.b32.xlu0 %v2638, 32
  %v2671 = vpop.permute.xlu0 %2670
  %2672 = vrot.lane.b32.xlu0 %v2639, 32
  %v2673 = vpop.permute.xlu0 %2672
  %2674 = vrot.lane.b32.xlu0 %v2640, 32
  %v2675 = vpop.permute.xlu0 %2674
  %2676 = vrot.lane.b32.xlu0 %v2641, 32
  %v2677 = vpop.permute.xlu0 %2676
  %2678 = vrot.lane.b32.xlu0 %v2642, 32
  %v2679 = vpop.permute.xlu0 %2678
  %2680 = vrot.lane.b32.xlu0 %v2643, 32
  %v2681 = vpop.permute.xlu0 %2680
  %2682 = vrot.lane.b32.xlu0 %v2644, 32
  %v2683 = vpop.permute.xlu0 %2682
  %2684 = vrot.lane.b32.xlu0 %v2645, 32
  %v2685 = vpop.permute.xlu0 %2684
  %2686 = vrot.lane.b32.xlu0 %v2646, 32
  %v2687 = vpop.permute.xlu0 %2686
  %2688 = vrot.lane.b32.xlu0 %v2647, 32
  %v2689 = vpop.permute.xlu0 %2688
  %2690 = vrot.lane.b32.xlu0 %v2648, 32
  %v2691 = vpop.permute.xlu0 %2690
  %2692 = vrot.lane.b32.xlu0 %v2649, 32
  %v2693 = vpop.permute.xlu0 %2692
  %2694 = vrot.lane.b32.xlu0 %v2650, 32
  %v2695 = vpop.permute.xlu0 %2694
  %2696 = vrot.lane.b32.xlu0 %v2651, 32
  %v2697 = vpop.permute.xlu0 %2696
  %2698 = vrot.lane.b32.xlu0 %v2652, 32
  %v2699 = vpop.permute.xlu0 %2698
  %2700 = vrot.lane.b32.xlu0 %v2653, 32
  %v2701 = vpop.permute.xlu0 %2700
  %v2718 = vadd.f32 %v2558, %v2671
  %v2719 = vadd.f32 %v2559, %v2673
  %v2720 = vadd.f32 %v2560, %v2675
  %v2721 = vadd.f32 %v2561, %v2677
  %v2722 = vadd.f32 %v2562, %v2679
  %v2723 = vadd.f32 %v2563, %v2681
  %v2724 = vadd.f32 %v2564, %v2683
  %v2725 = vadd.f32 %v2565, %v2685
  %v2726 = vadd.f32 %v2566, %v2687
  %v2727 = vadd.f32 %v2567, %v2689
  %v2728 = vadd.f32 %v2568, %v2691
  %v2729 = vadd.f32 %v2569, %v2693
  %v2730 = vadd.f32 %v2570, %v2695
  %v2731 = vadd.f32 %v2571, %v2697
  %v2732 = vadd.f32 %v2572, %v2699
  %v2733 = vadd.f32 %v2573, %v2701
  %v2734 = vtanh.pop %v2718
  %v2735 = vtanh.pop %v2719
  %v2736 = vtanh.pop %v2720
  %v2737 = vtanh.pop %v2721
  %v2738 = vtanh.pop %v2722
  %v2739 = vtanh.pop %v2723
  %v2740 = vtanh.pop %v2724
  %v2741 = vtanh.pop %v2725
  %v2742 = vtanh.pop %v2726
  %v2743 = vtanh.pop %v2727
  %v2744 = vtanh.pop %v2728
  %v2745 = vtanh.pop %v2729
  %v2746 = vtanh.pop %v2730
  %v2747 = vtanh.pop %v2731
  %v2748 = vtanh.pop %v2732
  %v2749 = vtanh.pop %v2733
  %2766 = vrot.lane.b32.xlu0 %v2734, 32
  %v2767 = vpop.permute.xlu0 %2766
  %2768 = vrot.lane.b32.xlu0 %v2735, 32
  %v2769 = vpop.permute.xlu0 %2768
  %2770 = vrot.lane.b32.xlu0 %v2736, 32
  %v2771 = vpop.permute.xlu0 %2770
  %2772 = vrot.lane.b32.xlu0 %v2737, 32
  %v2773 = vpop.permute.xlu0 %2772
  %2774 = vrot.lane.b32.xlu0 %v2738, 32
  %v2775 = vpop.permute.xlu0 %2774
  %2776 = vrot.lane.b32.xlu0 %v2739, 32
  %v2777 = vpop.permute.xlu0 %2776
  %2778 = vrot.lane.b32.xlu0 %v2740, 32
  %v2779 = vpop.permute.xlu0 %2778
  %2780 = vrot.lane.b32.xlu0 %v2741, 32
  %v2781 = vpop.permute.xlu0 %2780
  %2782 = vrot.lane.b32.xlu0 %v2742, 32
  %v2783 = vpop.permute.xlu0 %2782
  %2784 = vrot.lane.b32.xlu0 %v2743, 32
  %v2785 = vpop.permute.xlu0 %2784
  %2786 = vrot.lane.b32.xlu0 %v2744, 32
  %v2787 = vpop.permute.xlu0 %2786
  %2788 = vrot.lane.b32.xlu0 %v2745, 32
  %v2789 = vpop.permute.xlu0 %2788
  %2790 = vrot.lane.b32.xlu0 %v2746, 32
  %v2791 = vpop.permute.xlu0 %2790
  %2792 = vrot.lane.b32.xlu0 %v2747, 32
  %v2793 = vpop.permute.xlu0 %2792
  %2794 = vrot.lane.b32.xlu0 %v2748, 32
  %v2795 = vpop.permute.xlu0 %2794
  %2796 = vrot.lane.b32.xlu0 %v2749, 32
  %v2797 = vpop.permute.xlu0 %2796
  %v2814 = vmul.f32 %v2316, %v2767
  %v2815 = vmul.f32 %v2331, %v2769
  %v2816 = vmul.f32 %v2346, %v2771
  %v2817 = vmul.f32 %v2361, %v2773
  %v2818 = vmul.f32 %v2376, %v2775
  %v2819 = vmul.f32 %v2391, %v2777
  %v2820 = vmul.f32 %v2406, %v2779
  %v2821 = vmul.f32 %v2421, %v2781
  %v2822 = vmul.f32 %v2436, %v2783
  %v2823 = vmul.f32 %v2451, %v2785
  %v2824 = vmul.f32 %v2466, %v2787
  %v2825 = vmul.f32 %v2481, %v2789
  %v2826 = vmul.f32 %v2496, %v2791
  %v2827 = vmul.f32 %v2511, %v2793
  %v2828 = vmul.f32 %v2526, %v2795
  %v2829 = vmul.f32 %v2541, %v2797
  %v2830 = vpack.c.bf16 %v2814, %v2814
  %v2831 = vpack.c.bf16 %v2815, %v2815
  %v2832 = vpack.c.bf16 %v2816, %v2816
  %v2833 = vpack.c.bf16 %v2817, %v2817
  %v2834 = vpack.c.bf16 %v2818, %v2818
  %v2835 = vpack.c.bf16 %v2819, %v2819
  %v2836 = vpack.c.bf16 %v2820, %v2820
  %v2837 = vpack.c.bf16 %v2821, %v2821
  %v2838 = vpack.c.bf16 %v2822, %v2822
  %v2839 = vpack.c.bf16 %v2823, %v2823
  %v2840 = vpack.c.bf16 %v2824, %v2824
  %v2841 = vpack.c.bf16 %v2825, %v2825
  %v2842 = vpack.c.bf16 %v2826, %v2826
  %v2843 = vpack.c.bf16 %v2827, %v2827
  %v2844 = vpack.c.bf16 %v2828, %v2828
  %v2845 = vpack.c.bf16 %v2829, %v2829
  %2862 = vrot.lane.b32.xlu0 %v2830, 64
  %v2863 = vpop.permute.xlu0 %2862
  %2864 = vrot.lane.b32.xlu0 %v2831, 64
  %v2865 = vpop.permute.xlu0 %2864
  %2866 = vrot.lane.b32.xlu0 %v2832, 64
  %v2867 = vpop.permute.xlu0 %2866
  %2868 = vrot.lane.b32.xlu0 %v2833, 64
  %v2869 = vpop.permute.xlu0 %2868
  %2870 = vrot.lane.b32.xlu0 %v2834, 64
  %v2871 = vpop.permute.xlu0 %2870
  %2872 = vrot.lane.b32.xlu0 %v2835, 64
  %v2873 = vpop.permute.xlu0 %2872
  %2874 = vrot.lane.b32.xlu0 %v2836, 64
  %v2875 = vpop.permute.xlu0 %2874
  %2876 = vrot.lane.b32.xlu0 %v2837, 64
  %v2877 = vpop.permute.xlu0 %2876
  %2878 = vrot.lane.b32.xlu0 %v2838, 64
  %v2879 = vpop.permute.xlu0 %2878
  %2880 = vrot.lane.b32.xlu0 %v2839, 64
  %v2881 = vpop.permute.xlu0 %2880
  %2882 = vrot.lane.b32.xlu0 %v2840, 64
  %v2883 = vpop.permute.xlu0 %2882
  %2884 = vrot.lane.b32.xlu0 %v2841, 64
  %v2885 = vpop.permute.xlu0 %2884
  %2886 = vrot.lane.b32.xlu0 %v2842, 64
  %v2887 = vpop.permute.xlu0 %2886
  %2888 = vrot.lane.b32.xlu0 %v2843, 64
  %v2889 = vpop.permute.xlu0 %2888
  %2890 = vrot.lane.b32.xlu0 %v2844, 64
  %v2891 = vpop.permute.xlu0 %2890
  %2892 = vrot.lane.b32.xlu0 %v2845, 64
  %v2893 = vpop.permute.xlu0 %2892
  %s2910 = scalar_lea.vmem [#allocation2], 64
  %2911 = vst.msk [vmem:[%s2910] sm:$0xf] %vm2059, %v2863
  %2912 = vst.msk [vmem:[%s2910 + $0x4] sm:$0xf] %vm2059, %v2865
  %2913 = vst.msk [vmem:[%s2910 + $0x8] sm:$0xf] %vm2059, %v2867
  %2914 = vst.msk [vmem:[%s2910 + $0xc] sm:$0xf] %vm2059, %v2869
  %2915 = vst.msk [vmem:[%s2910 + $0x10] sm:$0xf] %vm2059, %v2871
  %2916 = vst.msk [vmem:[%s2910 + $0x14] sm:$0xf] %vm2059, %v2873
  %2917 = vst.msk [vmem:[%s2910 + $0x18] sm:$0xf] %vm2059, %v2875
  %2918 = vst.msk [vmem:[%s2910 + $0x1c] sm:$0xf] %vm2059, %v2877
  %2919 = vst.msk [vmem:[%s2910 + $0x20] sm:$0xf] %vm2059, %v2879
  %2920 = vst.msk [vmem:[%s2910 + $0x24] sm:$0xf] %vm2059, %v2881
  %2921 = vst.msk [vmem:[%s2910 + $0x28] sm:$0xf] %vm2059, %v2883
  %2922 = vst.msk [vmem:[%s2910 + $0x2c] sm:$0xf] %vm2059, %v2885
  %2923 = vst.msk [vmem:[%s2910 + $0x30] sm:$0xf] %vm2059, %v2887
  %2924 = vst.msk [vmem:[%s2910 + $0x34] sm:$0xf] %vm2059, %v2889
  %2925 = vst.msk [vmem:[%s2910 + $0x38] sm:$0xf] %vm2059, %v2891
  %2926 = vst.msk [vmem:[%s2910 + $0x3c] sm:$0xf] %vm2059, %v2893
  %s2927 = scalar_lea.vmem [#allocation3], 128
  %v2928 = vld [vmem:[%s2927] sm:$0xf]
  %v2929 = vld [vmem:[%s2927 + $0x4] sm:$0xf]
  %v2930 = vld [vmem:[%s2927 + $0x8] sm:$0xf]
  %v2931 = vld [vmem:[%s2927 + $0xc] sm:$0xf]
  %v2932 = vld [vmem:[%s2927 + $0x10] sm:$0xf]
  %v2933 = vld [vmem:[%s2927 + $0x14] sm:$0xf]
  %v2934 = vld [vmem:[%s2927 + $0x18] sm:$0xf]
  %v2935 = vld [vmem:[%s2927 + $0x1c] sm:$0xf]
  %v2936 = vld [vmem:[%s2927 + $0x20] sm:$0xf]
  %v2937 = vld [vmem:[%s2927 + $0x24] sm:$0xf]
  %v2938 = vld [vmem:[%s2927 + $0x28] sm:$0xf]
  %v2939 = vld [vmem:[%s2927 + $0x2c] sm:$0xf]
  %v2940 = vld [vmem:[%s2927 + $0x30] sm:$0xf]
  %v2941 = vld [vmem:[%s2927 + $0x34] sm:$0xf]
  %v2942 = vld [vmem:[%s2927 + $0x38] sm:$0xf]
  %v2943 = vld [vmem:[%s2927 + $0x3c] sm:$0xf]
  %v2944 = vunpack.c.l.bf16 %v2928
  %v2945 = vunpack.c.l.bf16 %v2929
  %v2946 = vunpack.c.l.bf16 %v2930
  %v2947 = vunpack.c.l.bf16 %v2931
  %v2948 = vunpack.c.l.bf16 %v2932
  %v2949 = vunpack.c.l.bf16 %v2933
  %v2950 = vunpack.c.l.bf16 %v2934
  %v2951 = vunpack.c.l.bf16 %v2935
  %v2952 = vunpack.c.l.bf16 %v2936
  %v2953 = vunpack.c.l.bf16 %v2937
  %v2954 = vunpack.c.l.bf16 %v2938
  %v2955 = vunpack.c.l.bf16 %v2939
  %v2956 = vunpack.c.l.bf16 %v2940
  %v2957 = vunpack.c.l.bf16 %v2941
  %v2958 = vunpack.c.l.bf16 %v2942
  %v2959 = vunpack.c.l.bf16 %v2943
  %v2960 = vunpack.c.l.b16 %v2830
  %v2961 = vunpack.c.l.b16 %v2831
  %v2962 = vunpack.c.l.b16 %v2832
  %v2963 = vunpack.c.l.b16 %v2833
  %v2964 = vunpack.c.l.b16 %v2834
  %v2965 = vunpack.c.l.b16 %v2835
  %v2966 = vunpack.c.l.b16 %v2836
  %v2967 = vunpack.c.l.b16 %v2837
  %v2968 = vunpack.c.l.b16 %v2838
  %v2969 = vunpack.c.l.b16 %v2839
  %v2970 = vunpack.c.l.b16 %v2840
  %v2971 = vunpack.c.l.b16 %v2841
  %v2972 = vunpack.c.l.b16 %v2842
  %v2973 = vunpack.c.l.b16 %v2843
  %v2974 = vunpack.c.l.b16 %v2844
  %v2975 = vunpack.c.l.b16 %v2845
  %v2976 = vpack.c.b16 %v2961, %v2960
  %v2977 = vpack.c.b16 %v2963, %v2962
  %v2978 = vpack.c.b16 %v2965, %v2964
  %v2979 = vpack.c.b16 %v2967, %v2966
  %v2980 = vpack.c.b16 %v2969, %v2968
  %v2981 = vpack.c.b16 %v2971, %v2970
  %v2982 = vpack.c.b16 %v2973, %v2972
  %v2983 = vpack.c.b16 %v2975, %v2974
  %2984 = vrot.lane.b32.xlu0 %v2976, 64
  %v2985 = vpop.permute.xlu0 %2984
  %2986 = vrot.lane.b32.xlu0 %v2977, 64
  %v2987 = vpop.permute.xlu0 %2986
  %2988 = vrot.lane.b32.xlu0 %v2978, 64
  %v2989 = vpop.permute.xlu0 %2988
  %2990 = vrot.lane.b32.xlu0 %v2979, 64
  %v2991 = vpop.permute.xlu0 %2990
  %2992 = vrot.lane.b32.xlu0 %v2980, 64
  %v2993 = vpop.permute.xlu0 %2992
  %2994 = vrot.lane.b32.xlu0 %v2981, 64
  %v2995 = vpop.permute.xlu0 %2994
  %2996 = vrot.lane.b32.xlu0 %v2982, 64
  %v2997 = vpop.permute.xlu0 %2996
  %2998 = vrot.lane.b32.xlu0 %v2983, 64
  %v2999 = vpop.permute.xlu0 %2998
  %v3001 = vsel %vm1318, %v2985, 0
  %v3004 = vsel %vm1318, %v2987, 0
  %v3007 = vsel %vm1318, %v2989, 0
  %v3010 = vsel %vm1318, %v2991, 0
  %v3013 = vsel %vm1318, %v2993, 0
  %v3016 = vsel %vm1318, %v2995, 0
  %v3019 = vsel %vm1318, %v2997, 0
  %v3022 = vsel %vm1318, %v2999, 0
  %3024 = vmatpush.bf16.msra.mxu0 0
  %3025 = vmatpush.bf16.msra.mxu0 0
  %3026 = vmatpush.bf16.msra.mxu0 0
  %3027 = vmatpush.bf16.msra.mxu0 0
  %3028 = vmatpush.bf16.msra.mxu0 0
  %3029 = vmatpush.bf16.msra.mxu0 0
  %3030 = vmatpush.bf16.msra.mxu0 %v1315
  %3031 = vmatpush.bf16.msra.mxu0 %v1314
  %3032 = vmatmul.bf16.gmra.mxu0 %v3001
  %v3033 = vpop.f32.mrf.mxu0
  %v3034 = vadd.f32 0.0, %v3033
  %v3035 = vpop.f32.mrf.mxu0
  %v3036 = vadd.f32 0.0, %v3035
  %3037 = vmatmul.bf16.gmra.mxu0 %v3004
  %v3038 = vpop.f32.mrf.mxu0
  %v3039 = vadd.f32 0.0, %v3038
  %v3040 = vpop.f32.mrf.mxu0
  %v3041 = vadd.f32 0.0, %v3040
  %3042 = vmatmul.bf16.gmra.mxu0 %v3007
  %v3043 = vpop.f32.mrf.mxu0
  %v3044 = vadd.f32 0.0, %v3043
  %v3045 = vpop.f32.mrf.mxu0
  %v3046 = vadd.f32 0.0, %v3045
  %3047 = vmatmul.bf16.gmra.mxu0 %v3010
  %v3048 = vpop.f32.mrf.mxu0
  %v3049 = vadd.f32 0.0, %v3048
  %v3050 = vpop.f32.mrf.mxu0
  %v3051 = vadd.f32 0.0, %v3050
  %3052 = vmatmul.bf16.gmra.mxu0 %v3013
  %v3053 = vpop.f32.mrf.mxu0
  %v3054 = vadd.f32 0.0, %v3053
  %v3055 = vpop.f32.mrf.mxu0
  %v3056 = vadd.f32 0.0, %v3055
  %3057 = vmatmul.bf16.gmra.mxu0 %v3016
  %v3058 = vpop.f32.mrf.mxu0
  %v3059 = vadd.f32 0.0, %v3058
  %v3060 = vpop.f32.mrf.mxu0
  %v3061 = vadd.f32 0.0, %v3060
  %3062 = vmatmul.bf16.gmra.mxu0 %v3019
  %v3063 = vpop.f32.mrf.mxu0
  %v3064 = vadd.f32 0.0, %v3063
  %v3065 = vpop.f32.mrf.mxu0
  %v3066 = vadd.f32 0.0, %v3065
  %3067 = vmatmul.bf16.gmra.mxu0 %v3022
  %v3068 = vpop.f32.mrf.mxu0
  %v3069 = vadd.f32 0.0, %v3068
  %v3070 = vpop.f32.mrf.mxu0
  %v3071 = vadd.f32 0.0, %v3070
  %3072 = vdwg.mxu0
  %v3073 = vadd.f32 %v2944, %v3034
  %v3074 = vadd.f32 %v2945, %v3036
  %v3075 = vadd.f32 %v2946, %v3039
  %v3076 = vadd.f32 %v2947, %v3041
  %v3077 = vadd.f32 %v2948, %v3044
  %v3078 = vadd.f32 %v2949, %v3046
  %v3079 = vadd.f32 %v2950, %v3049
  %v3080 = vadd.f32 %v2951, %v3051
  %v3081 = vadd.f32 %v2952, %v3054
  %v3082 = vadd.f32 %v2953, %v3056
  %v3083 = vadd.f32 %v2954, %v3059
  %v3084 = vadd.f32 %v2955, %v3061
  %v3085 = vadd.f32 %v2956, %v3064
  %v3086 = vadd.f32 %v2957, %v3066
  %v3087 = vadd.f32 %v2958, %v3069
  %v3088 = vadd.f32 %v2959, %v3071
  %v3089 = vxor.u32 %v3073, 2147483648
  %v3090 = vxor.u32 %v3074, 2147483648
  %v3091 = vxor.u32 %v3075, 2147483648
  %v3092 = vxor.u32 %v3076, 2147483648
  %v3093 = vxor.u32 %v3077, 2147483648
  %v3094 = vxor.u32 %v3078, 2147483648
  %v3095 = vxor.u32 %v3079, 2147483648
  %v3096 = vxor.u32 %v3080, 2147483648
  %v3097 = vxor.u32 %v3081, 2147483648
  %v3098 = vxor.u32 %v3082, 2147483648
  %v3099 = vxor.u32 %v3083, 2147483648
  %v3100 = vxor.u32 %v3084, 2147483648
  %v3101 = vxor.u32 %v3085, 2147483648
  %v3102 = vxor.u32 %v3086, 2147483648
  %v3103 = vxor.u32 %v3087, 2147483648
  %v3104 = vxor.u32 %v3088, 2147483648
  %v3105 = vmul.f32 %v3089, 1.442695
  %v3106 = vpow.pop %v3105
  %v3107 = vmul.f32 %v3090, 1.442695
  %v3108 = vpow.pop %v3107
  %v3109 = vmul.f32 %v3091, 1.442695
  %v3110 = vpow.pop %v3109
  %v3111 = vmul.f32 %v3092, 1.442695
  %v3112 = vpow.pop %v3111
  %v3113 = vmul.f32 %v3093, 1.442695
  %v3114 = vpow.pop %v3113
  %v3115 = vmul.f32 %v3094, 1.442695
  %v3116 = vpow.pop %v3115
  %v3117 = vmul.f32 %v3095, 1.442695
  %v3118 = vpow.pop %v3117
  %v3119 = vmul.f32 %v3096, 1.442695
  %v3120 = vpow.pop %v3119
  %v3121 = vmul.f32 %v3097, 1.442695
  %v3122 = vpow.pop %v3121
  %v3123 = vmul.f32 %v3098, 1.442695
  %v3124 = vpow.pop %v3123
  %v3125 = vmul.f32 %v3099, 1.442695
  %v3126 = vpow.pop %v3125
  %v3127 = vmul.f32 %v3100, 1.442695
  %v3128 = vpow.pop %v3127
  %v3129 = vmul.f32 %v3101, 1.442695
  %v3130 = vpow.pop %v3129
  %v3131 = vmul.f32 %v3102, 1.442695
  %v3132 = vpow.pop %v3131
  %v3133 = vmul.f32 %v3103, 1.442695
  %v3134 = vpow.pop %v3133
  %v3135 = vmul.f32 %v3104, 1.442695
  %v3136 = vpow.pop %v3135
  %v3137 = vadd.f32 %v3106, 1.0
  %v3138 = vadd.f32 %v3108, 1.0
  %v3139 = vadd.f32 %v3110, 1.0
  %v3140 = vadd.f32 %v3112, 1.0
  %v3141 = vadd.f32 %v3114, 1.0
  %v3142 = vadd.f32 %v3116, 1.0
  %v3143 = vadd.f32 %v3118, 1.0
  %v3144 = vadd.f32 %v3120, 1.0
  %v3145 = vadd.f32 %v3122, 1.0
  %v3146 = vadd.f32 %v3124, 1.0
  %v3147 = vadd.f32 %v3126, 1.0
  %v3148 = vadd.f32 %v3128, 1.0
  %v3149 = vadd.f32 %v3130, 1.0
  %v3150 = vadd.f32 %v3132, 1.0
  %v3151 = vadd.f32 %v3134, 1.0
  %v3152 = vadd.f32 %v3136, 1.0
  %v3153 = vrcp.pop %v3137
  %v3154 = vmul.f32 %v3137, %v3153
  %v3155 = vsub.f32 1.0, %v3154
  %v3156 = vmul.f32 %v3153, %v3155
  %v3157 = vadd.f32 %v3153, %v3156
  %vm3158 = vweird.f32 %v3137
  %vm3159 = vweird.f32 %v3153
  %vm3160 = vmor %vm3158, %vm3159
  %v3161 = vsel %vm3160, %v3153, %v3157
  %v3162 = vand.u32 2147483647, %v3137
  %vm3163 = vcmp.eq.f32.partialorder %v3162, 8.507059e+37
  %v3164 = vand.u32 %v3137, 2147483648
  %v3165 = vor.u32 1.1754944e-38, %v3164
  %v3166 = vsel %vm3163, %v3165, %v3161
  %v3167 = vmul.f32 1.0, %v3166
  %v3168 = vrcp.pop %v3138
  %v3169 = vmul.f32 %v3138, %v3168
  %v3170 = vsub.f32 1.0, %v3169
  %v3171 = vmul.f32 %v3168, %v3170
  %v3172 = vadd.f32 %v3168, %v3171
  %vm3173 = vweird.f32 %v3138
  %vm3174 = vweird.f32 %v3168
  %vm3175 = vmor %vm3173, %vm3174
  %v3176 = vsel %vm3175, %v3168, %v3172
  %v3177 = vand.u32 2147483647, %v3138
  %vm3178 = vcmp.eq.f32.partialorder %v3177, 8.507059e+37
  %v3179 = vand.u32 %v3138, 2147483648
  %v3180 = vor.u32 1.1754944e-38, %v3179
  %v3181 = vsel %vm3178, %v3180, %v3176
  %v3182 = vmul.f32 1.0, %v3181
  %v3183 = vrcp.pop %v3139
  %v3184 = vmul.f32 %v3139, %v3183
  %v3185 = vsub.f32 1.0, %v3184
  %v3186 = vmul.f32 %v3183, %v3185
  %v3187 = vadd.f32 %v3183, %v3186
  %vm3188 = vweird.f32 %v3139
  %vm3189 = vweird.f32 %v3183
  %vm3190 = vmor %vm3188, %vm3189
  %v3191 = vsel %vm3190, %v3183, %v3187
  %v3192 = vand.u32 2147483647, %v3139
  %vm3193 = vcmp.eq.f32.partialorder %v3192, 8.507059e+37
  %v3194 = vand.u32 %v3139, 2147483648
  %v3195 = vor.u32 1.1754944e-38, %v3194
  %v3196 = vsel %vm3193, %v3195, %v3191
  %v3197 = vmul.f32 1.0, %v3196
  %v3198 = vrcp.pop %v3140
  %v3199 = vmul.f32 %v3140, %v3198
  %v3200 = vsub.f32 1.0, %v3199
  %v3201 = vmul.f32 %v3198, %v3200
  %v3202 = vadd.f32 %v3198, %v3201
  %vm3203 = vweird.f32 %v3140
  %vm3204 = vweird.f32 %v3198
  %vm3205 = vmor %vm3203, %vm3204
  %v3206 = vsel %vm3205, %v3198, %v3202
  %v3207 = vand.u32 2147483647, %v3140
  %vm3208 = vcmp.eq.f32.partialorder %v3207, 8.507059e+37
  %v3209 = vand.u32 %v3140, 2147483648
  %v3210 = vor.u32 1.1754944e-38, %v3209
  %v3211 = vsel %vm3208, %v3210, %v3206
  %v3212 = vmul.f32 1.0, %v3211
  %v3213 = vrcp.pop %v3141
  %v3214 = vmul.f32 %v3141, %v3213
  %v3215 = vsub.f32 1.0, %v3214
  %v3216 = vmul.f32 %v3213, %v3215
  %v3217 = vadd.f32 %v3213, %v3216
  %vm3218 = vweird.f32 %v3141
  %vm3219 = vweird.f32 %v3213
  %vm3220 = vmor %vm3218, %vm3219
  %v3221 = vsel %vm3220, %v3213, %v3217
  %v3222 = vand.u32 2147483647, %v3141
  %vm3223 = vcmp.eq.f32.partialorder %v3222, 8.507059e+37
  %v3224 = vand.u32 %v3141, 2147483648
  %v3225 = vor.u32 1.1754944e-38, %v3224
  %v3226 = vsel %vm3223, %v3225, %v3221
  %v3227 = vmul.f32 1.0, %v3226
  %v3228 = vrcp.pop %v3142
  %v3229 = vmul.f32 %v3142, %v3228
  %v3230 = vsub.f32 1.0, %v3229
  %v3231 = vmul.f32 %v3228, %v3230
  %v3232 = vadd.f32 %v3228, %v3231
  %vm3233 = vweird.f32 %v3142
  %vm3234 = vweird.f32 %v3228
  %vm3235 = vmor %vm3233, %vm3234
  %v3236 = vsel %vm3235, %v3228, %v3232
  %v3237 = vand.u32 2147483647, %v3142
  %vm3238 = vcmp.eq.f32.partialorder %v3237, 8.507059e+37
  %v3239 = vand.u32 %v3142, 2147483648
  %v3240 = vor.u32 1.1754944e-38, %v3239
  %v3241 = vsel %vm3238, %v3240, %v3236
  %v3242 = vmul.f32 1.0, %v3241
  %v3243 = vrcp.pop %v3143
  %v3244 = vmul.f32 %v3143, %v3243
  %v3245 = vsub.f32 1.0, %v3244
  %v3246 = vmul.f32 %v3243, %v3245
  %v3247 = vadd.f32 %v3243, %v3246
  %vm3248 = vweird.f32 %v3143
  %vm3249 = vweird.f32 %v3243
  %vm3250 = vmor %vm3248, %vm3249
  %v3251 = vsel %vm3250, %v3243, %v3247
  %v3252 = vand.u32 2147483647, %v3143
  %vm3253 = vcmp.eq.f32.partialorder %v3252, 8.507059e+37
  %v3254 = vand.u32 %v3143, 2147483648
  %v3255 = vor.u32 1.1754944e-38, %v3254
  %v3256 = vsel %vm3253, %v3255, %v3251
  %v3257 = vmul.f32 1.0, %v3256
  %v3258 = vrcp.pop %v3144
  %v3259 = vmul.f32 %v3144, %v3258
  %v3260 = vsub.f32 1.0, %v3259
  %v3261 = vmul.f32 %v3258, %v3260
  %v3262 = vadd.f32 %v3258, %v3261
  %vm3263 = vweird.f32 %v3144
  %vm3264 = vweird.f32 %v3258
  %vm3265 = vmor %vm3263, %vm3264
  %v3266 = vsel %vm3265, %v3258, %v3262
  %v3267 = vand.u32 2147483647, %v3144
  %vm3268 = vcmp.eq.f32.partialorder %v3267, 8.507059e+37
  %v3269 = vand.u32 %v3144, 2147483648
  %v3270 = vor.u32 1.1754944e-38, %v3269
  %v3271 = vsel %vm3268, %v3270, %v3266
  %v3272 = vmul.f32 1.0, %v3271
  %v3273 = vrcp.pop %v3145
  %v3274 = vmul.f32 %v3145, %v3273
  %v3275 = vsub.f32 1.0, %v3274
  %v3276 = vmul.f32 %v3273, %v3275
  %v3277 = vadd.f32 %v3273, %v3276
  %vm3278 = vweird.f32 %v3145
  %vm3279 = vweird.f32 %v3273
  %vm3280 = vmor %vm3278, %vm3279
  %v3281 = vsel %vm3280, %v3273, %v3277
  %v3282 = vand.u32 2147483647, %v3145
  %vm3283 = vcmp.eq.f32.partialorder %v3282, 8.507059e+37
  %v3284 = vand.u32 %v3145, 2147483648
  %v3285 = vor.u32 1.1754944e-38, %v3284
  %v3286 = vsel %vm3283, %v3285, %v3281
  %v3287 = vmul.f32 1.0, %v3286
  %v3288 = vrcp.pop %v3146
  %v3289 = vmul.f32 %v3146, %v3288
  %v3290 = vsub.f32 1.0, %v3289
  %v3291 = vmul.f32 %v3288, %v3290
  %v3292 = vadd.f32 %v3288, %v3291
  %vm3293 = vweird.f32 %v3146
  %vm3294 = vweird.f32 %v3288
  %vm3295 = vmor %vm3293, %vm3294
  %v3296 = vsel %vm3295, %v3288, %v3292
  %v3297 = vand.u32 2147483647, %v3146
  %vm3298 = vcmp.eq.f32.partialorder %v3297, 8.507059e+37
  %v3299 = vand.u32 %v3146, 2147483648
  %v3300 = vor.u32 1.1754944e-38, %v3299
  %v3301 = vsel %vm3298, %v3300, %v3296
  %v3302 = vmul.f32 1.0, %v3301
  %v3303 = vrcp.pop %v3147
  %v3304 = vmul.f32 %v3147, %v3303
  %v3305 = vsub.f32 1.0, %v3304
  %v3306 = vmul.f32 %v3303, %v3305
  %v3307 = vadd.f32 %v3303, %v3306
  %vm3308 = vweird.f32 %v3147
  %vm3309 = vweird.f32 %v3303
  %vm3310 = vmor %vm3308, %vm3309
  %v3311 = vsel %vm3310, %v3303, %v3307
  %v3312 = vand.u32 2147483647, %v3147
  %vm3313 = vcmp.eq.f32.partialorder %v3312, 8.507059e+37
  %v3314 = vand.u32 %v3147, 2147483648
  %v3315 = vor.u32 1.1754944e-38, %v3314
  %v3316 = vsel %vm3313, %v3315, %v3311
  %v3317 = vmul.f32 1.0, %v3316
  %v3318 = vrcp.pop %v3148
  %v3319 = vmul.f32 %v3148, %v3318
  %v3320 = vsub.f32 1.0, %v3319
  %v3321 = vmul.f32 %v3318, %v3320
  %v3322 = vadd.f32 %v3318, %v3321
  %vm3323 = vweird.f32 %v3148
  %vm3324 = vweird.f32 %v3318
  %vm3325 = vmor %vm3323, %vm3324
  %v3326 = vsel %vm3325, %v3318, %v3322
  %v3327 = vand.u32 2147483647, %v3148
  %vm3328 = vcmp.eq.f32.partialorder %v3327, 8.507059e+37
  %v3329 = vand.u32 %v3148, 2147483648
  %v3330 = vor.u32 1.1754944e-38, %v3329
  %v3331 = vsel %vm3328, %v3330, %v3326
  %v3332 = vmul.f32 1.0, %v3331
  %v3333 = vrcp.pop %v3149
  %v3334 = vmul.f32 %v3149, %v3333
  %v3335 = vsub.f32 1.0, %v3334
  %v3336 = vmul.f32 %v3333, %v3335
  %v3337 = vadd.f32 %v3333, %v3336
  %vm3338 = vweird.f32 %v3149
  %vm3339 = vweird.f32 %v3333
  %vm3340 = vmor %vm3338, %vm3339
  %v3341 = vsel %vm3340, %v3333, %v3337
  %v3342 = vand.u32 2147483647, %v3149
  %vm3343 = vcmp.eq.f32.partialorder %v3342, 8.507059e+37
  %v3344 = vand.u32 %v3149, 2147483648
  %v3345 = vor.u32 1.1754944e-38, %v3344
  %v3346 = vsel %vm3343, %v3345, %v3341
  %v3347 = vmul.f32 1.0, %v3346
  %v3348 = vrcp.pop %v3150
  %v3349 = vmul.f32 %v3150, %v3348
  %v3350 = vsub.f32 1.0, %v3349
  %v3351 = vmul.f32 %v3348, %v3350
  %v3352 = vadd.f32 %v3348, %v3351
  %vm3353 = vweird.f32 %v3150
  %vm3354 = vweird.f32 %v3348
  %vm3355 = vmor %vm3353, %vm3354
  %v3356 = vsel %vm3355, %v3348, %v3352
  %v3357 = vand.u32 2147483647, %v3150
  %vm3358 = vcmp.eq.f32.partialorder %v3357, 8.507059e+37
  %v3359 = vand.u32 %v3150, 2147483648
  %v3360 = vor.u32 1.1754944e-38, %v3359
  %v3361 = vsel %vm3358, %v3360, %v3356
  %v3362 = vmul.f32 1.0, %v3361
  %v3363 = vrcp.pop %v3151
  %v3364 = vmul.f32 %v3151, %v3363
  %v3365 = vsub.f32 1.0, %v3364
  %v3366 = vmul.f32 %v3363, %v3365
  %v3367 = vadd.f32 %v3363, %v3366
  %vm3368 = vweird.f32 %v3151
  %vm3369 = vweird.f32 %v3363
  %vm3370 = vmor %vm3368, %vm3369
  %v3371 = vsel %vm3370, %v3363, %v3367
  %v3372 = vand.u32 2147483647, %v3151
  %vm3373 = vcmp.eq.f32.partialorder %v3372, 8.507059e+37
  %v3374 = vand.u32 %v3151, 2147483648
  %v3375 = vor.u32 1.1754944e-38, %v3374
  %v3376 = vsel %vm3373, %v3375, %v3371
  %v3377 = vmul.f32 1.0, %v3376
  %v3378 = vrcp.pop %v3152
  %v3379 = vmul.f32 %v3152, %v3378
  %v3380 = vsub.f32 1.0, %v3379
  %v3381 = vmul.f32 %v3378, %v3380
  %v3382 = vadd.f32 %v3378, %v3381
  %vm3383 = vweird.f32 %v3152
  %vm3384 = vweird.f32 %v3378
  %vm3385 = vmor %vm3383, %vm3384
  %v3386 = vsel %vm3385, %v3378, %v3382
  %v3387 = vand.u32 2147483647, %v3152
  %vm3388 = vcmp.eq.f32.partialorder %v3387, 8.507059e+37
  %v3389 = vand.u32 %v3152, 2147483648
  %v3390 = vor.u32 1.1754944e-38, %v3389
  %v3391 = vsel %vm3388, %v3390, %v3386
  %v3392 = vmul.f32 1.0, %v3391
  %v3393 = vtanh.pop %v3073
  %v3394 = vtanh.pop %v3074
  %v3395 = vtanh.pop %v3075
  %v3396 = vtanh.pop %v3076
  %v3397 = vtanh.pop %v3077
  %v3398 = vtanh.pop %v3078
  %v3399 = vtanh.pop %v3079
  %v3400 = vtanh.pop %v3080
  %v3401 = vtanh.pop %v3081
  %v3402 = vtanh.pop %v3082
  %v3403 = vtanh.pop %v3083
  %v3404 = vtanh.pop %v3084
  %v3405 = vtanh.pop %v3085
  %v3406 = vtanh.pop %v3086
  %v3407 = vtanh.pop %v3087
  %v3408 = vtanh.pop %v3088
  %v3409 = vmul.f32 %v3167, %v2718
  %v3410 = vmul.f32 %v3182, %v2719
  %v3411 = vmul.f32 %v3197, %v2720
  %v3412 = vmul.f32 %v3212, %v2721
  %v3413 = vmul.f32 %v3227, %v2722
  %v3414 = vmul.f32 %v3242, %v2723
  %v3415 = vmul.f32 %v3257, %v2724
  %v3416 = vmul.f32 %v3272, %v2725
  %v3417 = vmul.f32 %v3287, %v2726
  %v3418 = vmul.f32 %v3302, %v2727
  %v3419 = vmul.f32 %v3317, %v2728
  %v3420 = vmul.f32 %v3332, %v2729
  %v3421 = vmul.f32 %v3347, %v2730
  %v3422 = vmul.f32 %v3362, %v2731
  %v3423 = vmul.f32 %v3377, %v2732
  %v3424 = vmul.f32 %v3392, %v2733
  %3441 = vrot.lane.b32.xlu0 %v3393, 32
  %v3442 = vpop.permute.xlu0 %3441
  %3443 = vrot.lane.b32.xlu0 %v3394, 32
  %v3444 = vpop.permute.xlu0 %3443
  %3445 = vrot.lane.b32.xlu0 %v3395, 32
  %v3446 = vpop.permute.xlu0 %3445
  %3447 = vrot.lane.b32.xlu0 %v3396, 32
  %v3448 = vpop.permute.xlu0 %3447
  %3449 = vrot.lane.b32.xlu0 %v3397, 32
  %v3450 = vpop.permute.xlu0 %3449
  %3451 = vrot.lane.b32.xlu0 %v3398, 32
  %v3452 = vpop.permute.xlu0 %3451
  %3453 = vrot.lane.b32.xlu0 %v3399, 32
  %v3454 = vpop.permute.xlu0 %3453
  %3455 = vrot.lane.b32.xlu0 %v3400, 32
  %v3456 = vpop.permute.xlu0 %3455
  %3457 = vrot.lane.b32.xlu0 %v3401, 32
  %v3458 = vpop.permute.xlu0 %3457
  %3459 = vrot.lane.b32.xlu0 %v3402, 32
  %v3460 = vpop.permute.xlu0 %3459
  %3461 = vrot.lane.b32.xlu0 %v3403, 32
  %v3462 = vpop.permute.xlu0 %3461
  %3463 = vrot.lane.b32.xlu0 %v3404, 32
  %v3464 = vpop.permute.xlu0 %3463
  %3465 = vrot.lane.b32.xlu0 %v3405, 32
  %v3466 = vpop.permute.xlu0 %3465
  %3467 = vrot.lane.b32.xlu0 %v3406, 32
  %v3468 = vpop.permute.xlu0 %3467
  %3469 = vrot.lane.b32.xlu0 %v3407, 32
  %v3470 = vpop.permute.xlu0 %3469
  %3471 = vrot.lane.b32.xlu0 %v3408, 32
  %v3472 = vpop.permute.xlu0 %3471
  %v3489 = vmul.f32 %v3167, %v3442
  %v3490 = vmul.f32 %v3182, %v3444
  %v3491 = vmul.f32 %v3197, %v3446
  %v3492 = vmul.f32 %v3212, %v3448
  %v3493 = vmul.f32 %v3227, %v3450
  %v3494 = vmul.f32 %v3242, %v3452
  %v3495 = vmul.f32 %v3257, %v3454
  %v3496 = vmul.f32 %v3272, %v3456
  %v3497 = vmul.f32 %v3287, %v3458
  %v3498 = vmul.f32 %v3302, %v3460
  %v3499 = vmul.f32 %v3317, %v3462
  %v3500 = vmul.f32 %v3332, %v3464
  %v3501 = vmul.f32 %v3347, %v3466
  %v3502 = vmul.f32 %v3362, %v3468
  %v3503 = vmul.f32 %v3377, %v3470
  %v3504 = vmul.f32 %v3392, %v3472
  %3521 = vrot.lane.b32.xlu0 %v3489, 32
  %v3522 = vpop.permute.xlu0 %3521
  %3523 = vrot.lane.b32.xlu0 %v3490, 32
  %v3524 = vpop.permute.xlu0 %3523
  %3525 = vrot.lane.b32.xlu0 %v3491, 32
  %v3526 = vpop.permute.xlu0 %3525
  %3527 = vrot.lane.b32.xlu0 %v3492, 32
  %v3528 = vpop.permute.xlu0 %3527
  %3529 = vrot.lane.b32.xlu0 %v3493, 32
  %v3530 = vpop.permute.xlu0 %3529
  %3531 = vrot.lane.b32.xlu0 %v3494, 32
  %v3532 = vpop.permute.xlu0 %3531
  %3533 = vrot.lane.b32.xlu0 %v3495, 32
  %v3534 = vpop.permute.xlu0 %3533
  %3535 = vrot.lane.b32.xlu0 %v3496, 32
  %v3536 = vpop.permute.xlu0 %3535
  %3537 = vrot.lane.b32.xlu0 %v3497, 32
  %v3538 = vpop.permute.xlu0 %3537
  %3539 = vrot.lane.b32.xlu0 %v3498, 32
  %v3540 = vpop.permute.xlu0 %3539
  %3541 = vrot.lane.b32.xlu0 %v3499, 32
  %v3542 = vpop.permute.xlu0 %3541
  %3543 = vrot.lane.b32.xlu0 %v3500, 32
  %v3544 = vpop.permute.xlu0 %3543
  %3545 = vrot.lane.b32.xlu0 %v3501, 32
  %v3546 = vpop.permute.xlu0 %3545
  %3547 = vrot.lane.b32.xlu0 %v3502, 32
  %v3548 = vpop.permute.xlu0 %3547
  %3549 = vrot.lane.b32.xlu0 %v3503, 32
  %v3550 = vpop.permute.xlu0 %3549
  %3551 = vrot.lane.b32.xlu0 %v3504, 32
  %v3552 = vpop.permute.xlu0 %3551
  %v3569 = vadd.f32 %v3409, %v3522
  %v3570 = vadd.f32 %v3410, %v3524
  %v3571 = vadd.f32 %v3411, %v3526
  %v3572 = vadd.f32 %v3412, %v3528
  %v3573 = vadd.f32 %v3413, %v3530
  %v3574 = vadd.f32 %v3414, %v3532
  %v3575 = vadd.f32 %v3415, %v3534
  %v3576 = vadd.f32 %v3416, %v3536
  %v3577 = vadd.f32 %v3417, %v3538
  %v3578 = vadd.f32 %v3418, %v3540
  %v3579 = vadd.f32 %v3419, %v3542
  %v3580 = vadd.f32 %v3420, %v3544
  %v3581 = vadd.f32 %v3421, %v3546
  %v3582 = vadd.f32 %v3422, %v3548
  %v3583 = vadd.f32 %v3423, %v3550
  %v3584 = vadd.f32 %v3424, %v3552
  %v3585 = vtanh.pop %v3569
  %v3586 = vtanh.pop %v3570
  %v3587 = vtanh.pop %v3571
  %v3588 = vtanh.pop %v3572
  %v3589 = vtanh.pop %v3573
  %v3590 = vtanh.pop %v3574
  %v3591 = vtanh.pop %v3575
  %v3592 = vtanh.pop %v3576
  %v3593 = vtanh.pop %v3577
  %v3594 = vtanh.pop %v3578
  %v3595 = vtanh.pop %v3579
  %v3596 = vtanh.pop %v3580
  %v3597 = vtanh.pop %v3581
  %v3598 = vtanh.pop %v3582
  %v3599 = vtanh.pop %v3583
  %v3600 = vtanh.pop %v3584
  %3617 = vrot.lane.b32.xlu0 %v3585, 32
  %v3618 = vpop.permute.xlu0 %3617
  %3619 = vrot.lane.b32.xlu0 %v3586, 32
  %v3620 = vpop.permute.xlu0 %3619
  %3621 = vrot.lane.b32.xlu0 %v3587, 32
  %v3622 = vpop.permute.xlu0 %3621
  %3623 = vrot.lane.b32.xlu0 %v3588, 32
  %v3624 = vpop.permute.xlu0 %3623
  %3625 = vrot.lane.b32.xlu0 %v3589, 32
  %v3626 = vpop.permute.xlu0 %3625
  %3627 = vrot.lane.b32.xlu0 %v3590, 32
  %v3628 = vpop.permute.xlu0 %3627
  %3629 = vrot.lane.b32.xlu0 %v3591, 32
  %v3630 = vpop.permute.xlu0 %3629
  %3631 = vrot.lane.b32.xlu0 %v3592, 32
  %v3632 = vpop.permute.xlu0 %3631
  %3633 = vrot.lane.b32.xlu0 %v3593, 32
  %v3634 = vpop.permute.xlu0 %3633
  %3635 = vrot.lane.b32.xlu0 %v3594, 32
  %v3636 = vpop.permute.xlu0 %3635
  %3637 = vrot.lane.b32.xlu0 %v3595, 32
  %v3638 = vpop.permute.xlu0 %3637
  %3639 = vrot.lane.b32.xlu0 %v3596, 32
  %v3640 = vpop.permute.xlu0 %3639
  %3641 = vrot.lane.b32.xlu0 %v3597, 32
  %v3642 = vpop.permute.xlu0 %3641
  %3643 = vrot.lane.b32.xlu0 %v3598, 32
  %v3644 = vpop.permute.xlu0 %3643
  %3645 = vrot.lane.b32.xlu0 %v3599, 32
  %v3646 = vpop.permute.xlu0 %3645
  %3647 = vrot.lane.b32.xlu0 %v3600, 32
  %v3648 = vpop.permute.xlu0 %3647
  %v3665 = vmul.f32 %v3167, %v3618
  %v3666 = vmul.f32 %v3182, %v3620
  %v3667 = vmul.f32 %v3197, %v3622
  %v3668 = vmul.f32 %v3212, %v3624
  %v3669 = vmul.f32 %v3227, %v3626
  %v3670 = vmul.f32 %v3242, %v3628
  %v3671 = vmul.f32 %v3257, %v3630
  %v3672 = vmul.f32 %v3272, %v3632
  %v3673 = vmul.f32 %v3287, %v3634
  %v3674 = vmul.f32 %v3302, %v3636
  %v3675 = vmul.f32 %v3317, %v3638
  %v3676 = vmul.f32 %v3332, %v3640
  %v3677 = vmul.f32 %v3347, %v3642
  %v3678 = vmul.f32 %v3362, %v3644
  %v3679 = vmul.f32 %v3377, %v3646
  %v3680 = vmul.f32 %v3392, %v3648
  %v3681 = vpack.c.bf16 %v3665, %v3665
  %v3682 = vpack.c.bf16 %v3666, %v3666
  %v3683 = vpack.c.bf16 %v3667, %v3667
  %v3684 = vpack.c.bf16 %v3668, %v3668
  %v3685 = vpack.c.bf16 %v3669, %v3669
  %v3686 = vpack.c.bf16 %v3670, %v3670
  %v3687 = vpack.c.bf16 %v3671, %v3671
  %v3688 = vpack.c.bf16 %v3672, %v3672
  %v3689 = vpack.c.bf16 %v3673, %v3673
  %v3690 = vpack.c.bf16 %v3674, %v3674
  %v3691 = vpack.c.bf16 %v3675, %v3675
  %v3692 = vpack.c.bf16 %v3676, %v3676
  %v3693 = vpack.c.bf16 %v3677, %v3677
  %v3694 = vpack.c.bf16 %v3678, %v3678
  %v3695 = vpack.c.bf16 %v3679, %v3679
  %v3696 = vpack.c.bf16 %v3680, %v3680
  %3713 = vrot.lane.b32.xlu0 %v3681, 64
  %v3714 = vpop.permute.xlu0 %3713
  %3715 = vrot.lane.b32.xlu0 %v3682, 64
  %v3716 = vpop.permute.xlu0 %3715
  %3717 = vrot.lane.b32.xlu0 %v3683, 64
  %v3718 = vpop.permute.xlu0 %3717
  %3719 = vrot.lane.b32.xlu0 %v3684, 64
  %v3720 = vpop.permute.xlu0 %3719
  %3721 = vrot.lane.b32.xlu0 %v3685, 64
  %v3722 = vpop.permute.xlu0 %3721
  %3723 = vrot.lane.b32.xlu0 %v3686, 64
  %v3724 = vpop.permute.xlu0 %3723
  %3725 = vrot.lane.b32.xlu0 %v3687, 64
  %v3726 = vpop.permute.xlu0 %3725
  %3727 = vrot.lane.b32.xlu0 %v3688, 64
  %v3728 = vpop.permute.xlu0 %3727
  %3729 = vrot.lane.b32.xlu0 %v3689, 64
  %v3730 = vpop.permute.xlu0 %3729
  %3731 = vrot.lane.b32.xlu0 %v3690, 64
  %v3732 = vpop.permute.xlu0 %3731
  %3733 = vrot.lane.b32.xlu0 %v3691, 64
  %v3734 = vpop.permute.xlu0 %3733
  %3735 = vrot.lane.b32.xlu0 %v3692, 64
  %v3736 = vpop.permute.xlu0 %3735
  %3737 = vrot.lane.b32.xlu0 %v3693, 64
  %v3738 = vpop.permute.xlu0 %3737
  %3739 = vrot.lane.b32.xlu0 %v3694, 64
  %v3740 = vpop.permute.xlu0 %3739
  %3741 = vrot.lane.b32.xlu0 %v3695, 64
  %v3742 = vpop.permute.xlu0 %3741
  %3743 = vrot.lane.b32.xlu0 %v3696, 64
  %v3744 = vpop.permute.xlu0 %3743
  %s3761 = scalar_lea.vmem [#allocation2], 128
  %3762 = vst.msk [vmem:[%s3761] sm:$0xf] %vm2059, %v3714
  %3763 = vst.msk [vmem:[%s3761 + $0x4] sm:$0xf] %vm2059, %v3716
  %3764 = vst.msk [vmem:[%s3761 + $0x8] sm:$0xf] %vm2059, %v3718
  %3765 = vst.msk [vmem:[%s3761 + $0xc] sm:$0xf] %vm2059, %v3720
  %3766 = vst.msk [vmem:[%s3761 + $0x10] sm:$0xf] %vm2059, %v3722
  %3767 = vst.msk [vmem:[%s3761 + $0x14] sm:$0xf] %vm2059, %v3724
  %3768 = vst.msk [vmem:[%s3761 + $0x18] sm:$0xf] %vm2059, %v3726
  %3769 = vst.msk [vmem:[%s3761 + $0x1c] sm:$0xf] %vm2059, %v3728
  %3770 = vst.msk [vmem:[%s3761 + $0x20] sm:$0xf] %vm2059, %v3730
  %3771 = vst.msk [vmem:[%s3761 + $0x24] sm:$0xf] %vm2059, %v3732
  %3772 = vst.msk [vmem:[%s3761 + $0x28] sm:$0xf] %vm2059, %v3734
  %3773 = vst.msk [vmem:[%s3761 + $0x2c] sm:$0xf] %vm2059, %v3736
  %3774 = vst.msk [vmem:[%s3761 + $0x30] sm:$0xf] %vm2059, %v3738
  %3775 = vst.msk [vmem:[%s3761 + $0x34] sm:$0xf] %vm2059, %v3740
  %3776 = vst.msk [vmem:[%s3761 + $0x38] sm:$0xf] %vm2059, %v3742
  %3777 = vst.msk [vmem:[%s3761 + $0x3c] sm:$0xf] %vm2059, %v3744
  %s3778 = scalar_lea.vmem [#allocation3], 192
  %v3779 = vld [vmem:[%s3778] sm:$0xf]
  %v3780 = vld [vmem:[%s3778 + $0x4] sm:$0xf]
  %v3781 = vld [vmem:[%s3778 + $0x8] sm:$0xf]
  %v3782 = vld [vmem:[%s3778 + $0xc] sm:$0xf]
  %v3783 = vld [vmem:[%s3778 + $0x10] sm:$0xf]
  %v3784 = vld [vmem:[%s3778 + $0x14] sm:$0xf]
  %v3785 = vld [vmem:[%s3778 + $0x18] sm:$0xf]
  %v3786 = vld [vmem:[%s3778 + $0x1c] sm:$0xf]
  %v3787 = vld [vmem:[%s3778 + $0x20] sm:$0xf]
  %v3788 = vld [vmem:[%s3778 + $0x24] sm:$0xf]
  %v3789 = vld [vmem:[%s3778 + $0x28] sm:$0xf]
  %v3790 = vld [vmem:[%s3778 + $0x2c] sm:$0xf]
  %v3791 = vld [vmem:[%s3778 + $0x30] sm:$0xf]
  %v3792 = vld [vmem:[%s3778 + $0x34] sm:$0xf]
  %v3793 = vld [vmem:[%s3778 + $0x38] sm:$0xf]
  %v3794 = vld [vmem:[%s3778 + $0x3c] sm:$0xf]
  %v3795 = vunpack.c.l.bf16 %v3779
  %v3796 = vunpack.c.l.bf16 %v3780
  %v3797 = vunpack.c.l.bf16 %v3781
  %v3798 = vunpack.c.l.bf16 %v3782
  %v3799 = vunpack.c.l.bf16 %v3783
  %v3800 = vunpack.c.l.bf16 %v3784
  %v3801 = vunpack.c.l.bf16 %v3785
  %v3802 = vunpack.c.l.bf16 %v3786
  %v3803 = vunpack.c.l.bf16 %v3787
  %v3804 = vunpack.c.l.bf16 %v3788
  %v3805 = vunpack.c.l.bf16 %v3789
  %v3806 = vunpack.c.l.bf16 %v3790
  %v3807 = vunpack.c.l.bf16 %v3791
  %v3808 = vunpack.c.l.bf16 %v3792
  %v3809 = vunpack.c.l.bf16 %v3793
  %v3810 = vunpack.c.l.bf16 %v3794
  %v3811 = vunpack.c.l.b16 %v3681
  %v3812 = vunpack.c.l.b16 %v3682
  %v3813 = vunpack.c.l.b16 %v3683
  %v3814 = vunpack.c.l.b16 %v3684
  %v3815 = vunpack.c.l.b16 %v3685
  %v3816 = vunpack.c.l.b16 %v3686
  %v3817 = vunpack.c.l.b16 %v3687
  %v3818 = vunpack.c.l.b16 %v3688
  %v3819 = vunpack.c.l.b16 %v3689
  %v3820 = vunpack.c.l.b16 %v3690
  %v3821 = vunpack.c.l.b16 %v3691
  %v3822 = vunpack.c.l.b16 %v3692
  %v3823 = vunpack.c.l.b16 %v3693
  %v3824 = vunpack.c.l.b16 %v3694
  %v3825 = vunpack.c.l.b16 %v3695
  %v3826 = vunpack.c.l.b16 %v3696
  %v3827 = vpack.c.b16 %v3812, %v3811
  %v3828 = vpack.c.b16 %v3814, %v3813
  %v3829 = vpack.c.b16 %v3816, %v3815
  %v3830 = vpack.c.b16 %v3818, %v3817
  %v3831 = vpack.c.b16 %v3820, %v3819
  %v3832 = vpack.c.b16 %v3822, %v3821
  %v3833 = vpack.c.b16 %v3824, %v3823
  %v3834 = vpack.c.b16 %v3826, %v3825
  %3835 = vrot.lane.b32.xlu0 %v3827, 64
  %v3836 = vpop.permute.xlu0 %3835
  %3837 = vrot.lane.b32.xlu0 %v3828, 64
  %v3838 = vpop.permute.xlu0 %3837
  %3839 = vrot.lane.b32.xlu0 %v3829, 64
  %v3840 = vpop.permute.xlu0 %3839
  %3841 = vrot.lane.b32.xlu0 %v3830, 64
  %v3842 = vpop.permute.xlu0 %3841
  %3843 = vrot.lane.b32.xlu0 %v3831, 64
  %v3844 = vpop.permute.xlu0 %3843
  %3845 = vrot.lane.b32.xlu0 %v3832, 64
  %v3846 = vpop.permute.xlu0 %3845
  %3847 = vrot.lane.b32.xlu0 %v3833, 64
  %v3848 = vpop.permute.xlu0 %3847
  %3849 = vrot.lane.b32.xlu0 %v3834, 64
  %v3850 = vpop.permute.xlu0 %3849
  %v3852 = vsel %vm1318, %v3836, 0
  %v3855 = vsel %vm1318, %v3838, 0
  %v3858 = vsel %vm1318, %v3840, 0
  %v3861 = vsel %vm1318, %v3842, 0
  %v3864 = vsel %vm1318, %v3844, 0
  %v3867 = vsel %vm1318, %v3846, 0
  %v3870 = vsel %vm1318, %v3848, 0
  %v3873 = vsel %vm1318, %v3850, 0
  %3875 = vmatpush.bf16.msra.mxu0 0
  %3876 = vmatpush.bf16.msra.mxu0 0
  %3877 = vmatpush.bf16.msra.mxu0 0
  %3878 = vmatpush.bf16.msra.mxu0 0
  %3879 = vmatpush.bf16.msra.mxu0 0
  %3880 = vmatpush.bf16.msra.mxu0 0
  %3881 = vmatpush.bf16.msra.mxu0 %v1315
  %3882 = vmatpush.bf16.msra.mxu0 %v1314
  %3883 = vmatmul.bf16.gmra.mxu0 %v3852
  %v3884 = vpop.f32.mrf.mxu0
  %v3885 = vadd.f32 0.0, %v3884
  %v3886 = vpop.f32.mrf.mxu0
  %v3887 = vadd.f32 0.0, %v3886
  %3888 = vmatmul.bf16.gmra.mxu0 %v3855
  %v3889 = vpop.f32.mrf.mxu0
  %v3890 = vadd.f32 0.0, %v3889
  %v3891 = vpop.f32.mrf.mxu0
  %v3892 = vadd.f32 0.0, %v3891
  %3893 = vmatmul.bf16.gmra.mxu0 %v3858
  %v3894 = vpop.f32.mrf.mxu0
  %v3895 = vadd.f32 0.0, %v3894
  %v3896 = vpop.f32.mrf.mxu0
  %v3897 = vadd.f32 0.0, %v3896
  %3898 = vmatmul.bf16.gmra.mxu0 %v3861
  %v3899 = vpop.f32.mrf.mxu0
  %v3900 = vadd.f32 0.0, %v3899
  %v3901 = vpop.f32.mrf.mxu0
  %v3902 = vadd.f32 0.0, %v3901
  %3903 = vmatmul.bf16.gmra.mxu0 %v3864
  %v3904 = vpop.f32.mrf.mxu0
  %v3905 = vadd.f32 0.0, %v3904
  %v3906 = vpop.f32.mrf.mxu0
  %v3907 = vadd.f32 0.0, %v3906
  %3908 = vmatmul.bf16.gmra.mxu0 %v3867
  %v3909 = vpop.f32.mrf.mxu0
  %v3910 = vadd.f32 0.0, %v3909
  %v3911 = vpop.f32.mrf.mxu0
  %v3912 = vadd.f32 0.0, %v3911
  %3913 = vmatmul.bf16.gmra.mxu0 %v3870
  %v3914 = vpop.f32.mrf.mxu0
  %v3915 = vadd.f32 0.0, %v3914
  %v3916 = vpop.f32.mrf.mxu0
  %v3917 = vadd.f32 0.0, %v3916
  %3918 = vmatmul.bf16.gmra.mxu0 %v3873
  %v3919 = vpop.f32.mrf.mxu0
  %v3920 = vadd.f32 0.0, %v3919
  %v3921 = vpop.f32.mrf.mxu0
  %v3922 = vadd.f32 0.0, %v3921
  %3923 = vdwg.mxu0
  %v3924 = vadd.f32 %v3795, %v3885
  %v3925 = vadd.f32 %v3796, %v3887
  %v3926 = vadd.f32 %v3797, %v3890
  %v3927 = vadd.f32 %v3798, %v3892
  %v3928 = vadd.f32 %v3799, %v3895
  %v3929 = vadd.f32 %v3800, %v3897
  %v3930 = vadd.f32 %v3801, %v3900
  %v3931 = vadd.f32 %v3802, %v3902
  %v3932 = vadd.f32 %v3803, %v3905
  %v3933 = vadd.f32 %v3804, %v3907
  %v3934 = vadd.f32 %v3805, %v3910
  %v3935 = vadd.f32 %v3806, %v3912
  %v3936 = vadd.f32 %v3807, %v3915
  %v3937 = vadd.f32 %v3808, %v3917
  %v3938 = vadd.f32 %v3809, %v3920
  %v3939 = vadd.f32 %v3810, %v3922
  %v3940 = vxor.u32 %v3924, 2147483648
  %v3941 = vxor.u32 %v3925, 2147483648
  %v3942 = vxor.u32 %v3926, 2147483648
  %v3943 = vxor.u32 %v3927, 2147483648
  %v3944 = vxor.u32 %v3928, 2147483648
  %v3945 = vxor.u32 %v3929, 2147483648
  %v3946 = vxor.u32 %v3930, 2147483648
  %v3947 = vxor.u32 %v3931, 2147483648
  %v3948 = vxor.u32 %v3932, 2147483648
  %v3949 = vxor.u32 %v3933, 2147483648
  %v3950 = vxor.u32 %v3934, 2147483648
  %v3951 = vxor.u32 %v3935, 2147483648
  %v3952 = vxor.u32 %v3936, 2147483648
  %v3953 = vxor.u32 %v3937, 2147483648
  %v3954 = vxor.u32 %v3938, 2147483648
  %v3955 = vxor.u32 %v3939, 2147483648
  %v3956 = vmul.f32 %v3940, 1.442695
  %v3957 = vpow.pop %v3956
  %v3958 = vmul.f32 %v3941, 1.442695
  %v3959 = vpow.pop %v3958
  %v3960 = vmul.f32 %v3942, 1.442695
  %v3961 = vpow.pop %v3960
  %v3962 = vmul.f32 %v3943, 1.442695
  %v3963 = vpow.pop %v3962
  %v3964 = vmul.f32 %v3944, 1.442695
  %v3965 = vpow.pop %v3964
  %v3966 = vmul.f32 %v3945, 1.442695
  %v3967 = vpow.pop %v3966
  %v3968 = vmul.f32 %v3946, 1.442695
  %v3969 = vpow.pop %v3968
  %v3970 = vmul.f32 %v3947, 1.442695
  %v3971 = vpow.pop %v3970
  %v3972 = vmul.f32 %v3948, 1.442695
  %v3973 = vpow.pop %v3972
  %v3974 = vmul.f32 %v3949, 1.442695
  %v3975 = vpow.pop %v3974
  %v3976 = vmul.f32 %v3950, 1.442695
  %v3977 = vpow.pop %v3976
  %v3978 = vmul.f32 %v3951, 1.442695
  %v3979 = vpow.pop %v3978
  %v3980 = vmul.f32 %v3952, 1.442695
  %v3981 = vpow.pop %v3980
  %v3982 = vmul.f32 %v3953, 1.442695
  %v3983 = vpow.pop %v3982
  %v3984 = vmul.f32 %v3954, 1.442695
  %v3985 = vpow.pop %v3984
  %v3986 = vmul.f32 %v3955, 1.442695
  %v3987 = vpow.pop %v3986
  %v3988 = vadd.f32 %v3957, 1.0
  %v3989 = vadd.f32 %v3959, 1.0
  %v3990 = vadd.f32 %v3961, 1.0
  %v3991 = vadd.f32 %v3963, 1.0
  %v3992 = vadd.f32 %v3965, 1.0
  %v3993 = vadd.f32 %v3967, 1.0
  %v3994 = vadd.f32 %v3969, 1.0
  %v3995 = vadd.f32 %v3971, 1.0
  %v3996 = vadd.f32 %v3973, 1.0
  %v3997 = vadd.f32 %v3975, 1.0
  %v3998 = vadd.f32 %v3977, 1.0
  %v3999 = vadd.f32 %v3979, 1.0
  %v4000 = vadd.f32 %v3981, 1.0
  %v4001 = vadd.f32 %v3983, 1.0
  %v4002 = vadd.f32 %v3985, 1.0
  %v4003 = vadd.f32 %v3987, 1.0
  %v4004 = vrcp.pop %v3988
  %v4005 = vmul.f32 %v3988, %v4004
  %v4006 = vsub.f32 1.0, %v4005
  %v4007 = vmul.f32 %v4004, %v4006
  %v4008 = vadd.f32 %v4004, %v4007
  %vm4009 = vweird.f32 %v3988
  %vm4010 = vweird.f32 %v4004
  %vm4011 = vmor %vm4009, %vm4010
  %v4012 = vsel %vm4011, %v4004, %v4008
  %v4013 = vand.u32 2147483647, %v3988
  %vm4014 = vcmp.eq.f32.partialorder %v4013, 8.507059e+37
  %v4015 = vand.u32 %v3988, 2147483648
  %v4016 = vor.u32 1.1754944e-38, %v4015
  %v4017 = vsel %vm4014, %v4016, %v4012
  %v4018 = vmul.f32 1.0, %v4017
  %v4019 = vrcp.pop %v3989
  %v4020 = vmul.f32 %v3989, %v4019
  %v4021 = vsub.f32 1.0, %v4020
  %v4022 = vmul.f32 %v4019, %v4021
  %v4023 = vadd.f32 %v4019, %v4022
  %vm4024 = vweird.f32 %v3989
  %vm4025 = vweird.f32 %v4019
  %vm4026 = vmor %vm4024, %vm4025
  %v4027 = vsel %vm4026, %v4019, %v4023
  %v4028 = vand.u32 2147483647, %v3989
  %vm4029 = vcmp.eq.f32.partialorder %v4028, 8.507059e+37
  %v4030 = vand.u32 %v3989, 2147483648
  %v4031 = vor.u32 1.1754944e-38, %v4030
  %v4032 = vsel %vm4029, %v4031, %v4027
  %v4033 = vmul.f32 1.0, %v4032
  %v4034 = vrcp.pop %v3990
  %v4035 = vmul.f32 %v3990, %v4034
  %v4036 = vsub.f32 1.0, %v4035
  %v4037 = vmul.f32 %v4034, %v4036
  %v4038 = vadd.f32 %v4034, %v4037
  %vm4039 = vweird.f32 %v3990
  %vm4040 = vweird.f32 %v4034
  %vm4041 = vmor %vm4039, %vm4040
  %v4042 = vsel %vm4041, %v4034, %v4038
  %v4043 = vand.u32 2147483647, %v3990
  %vm4044 = vcmp.eq.f32.partialorder %v4043, 8.507059e+37
  %v4045 = vand.u32 %v3990, 2147483648
  %v4046 = vor.u32 1.1754944e-38, %v4045
  %v4047 = vsel %vm4044, %v4046, %v4042
  %v4048 = vmul.f32 1.0, %v4047
  %v4049 = vrcp.pop %v3991
  %v4050 = vmul.f32 %v3991, %v4049
  %v4051 = vsub.f32 1.0, %v4050
  %v4052 = vmul.f32 %v4049, %v4051
  %v4053 = vadd.f32 %v4049, %v4052
  %vm4054 = vweird.f32 %v3991
  %vm4055 = vweird.f32 %v4049
  %vm4056 = vmor %vm4054, %vm4055
  %v4057 = vsel %vm4056, %v4049, %v4053
  %v4058 = vand.u32 2147483647, %v3991
  %vm4059 = vcmp.eq.f32.partialorder %v4058, 8.507059e+37
  %v4060 = vand.u32 %v3991, 2147483648
  %v4061 = vor.u32 1.1754944e-38, %v4060
  %v4062 = vsel %vm4059, %v4061, %v4057
  %v4063 = vmul.f32 1.0, %v4062
  %v4064 = vrcp.pop %v3992
  %v4065 = vmul.f32 %v3992, %v4064
  %v4066 = vsub.f32 1.0, %v4065
  %v4067 = vmul.f32 %v4064, %v4066
  %v4068 = vadd.f32 %v4064, %v4067
  %vm4069 = vweird.f32 %v3992
  %vm4070 = vweird.f32 %v4064
  %vm4071 = vmor %vm4069, %vm4070
  %v4072 = vsel %vm4071, %v4064, %v4068
  %v4073 = vand.u32 2147483647, %v3992
  %vm4074 = vcmp.eq.f32.partialorder %v4073, 8.507059e+37
  %v4075 = vand.u32 %v3992, 2147483648
  %v4076 = vor.u32 1.1754944e-38, %v4075
  %v4077 = vsel %vm4074, %v4076, %v4072
  %v4078 = vmul.f32 1.0, %v4077
  %v4079 = vrcp.pop %v3993
  %v4080 = vmul.f32 %v3993, %v4079
  %v4081 = vsub.f32 1.0, %v4080
  %v4082 = vmul.f32 %v4079, %v4081
  %v4083 = vadd.f32 %v4079, %v4082
  %vm4084 = vweird.f32 %v3993
  %vm4085 = vweird.f32 %v4079
  %vm4086 = vmor %vm4084, %vm4085
  %v4087 = vsel %vm4086, %v4079, %v4083
  %v4088 = vand.u32 2147483647, %v3993
  %vm4089 = vcmp.eq.f32.partialorder %v4088, 8.507059e+37
  %v4090 = vand.u32 %v3993, 2147483648
  %v4091 = vor.u32 1.1754944e-38, %v4090
  %v4092 = vsel %vm4089, %v4091, %v4087
  %v4093 = vmul.f32 1.0, %v4092
  %v4094 = vrcp.pop %v3994
  %v4095 = vmul.f32 %v3994, %v4094
  %v4096 = vsub.f32 1.0, %v4095
  %v4097 = vmul.f32 %v4094, %v4096
  %v4098 = vadd.f32 %v4094, %v4097
  %vm4099 = vweird.f32 %v3994
  %vm4100 = vweird.f32 %v4094
  %vm4101 = vmor %vm4099, %vm4100
  %v4102 = vsel %vm4101, %v4094, %v4098
  %v4103 = vand.u32 2147483647, %v3994
  %vm4104 = vcmp.eq.f32.partialorder %v4103, 8.507059e+37
  %v4105 = vand.u32 %v3994, 2147483648
  %v4106 = vor.u32 1.1754944e-38, %v4105
  %v4107 = vsel %vm4104, %v4106, %v4102
  %v4108 = vmul.f32 1.0, %v4107
  %v4109 = vrcp.pop %v3995
  %v4110 = vmul.f32 %v3995, %v4109
  %v4111 = vsub.f32 1.0, %v4110
  %v4112 = vmul.f32 %v4109, %v4111
  %v4113 = vadd.f32 %v4109, %v4112
  %vm4114 = vweird.f32 %v3995
  %vm4115 = vweird.f32 %v4109
  %vm4116 = vmor %vm4114, %vm4115
  %v4117 = vsel %vm4116, %v4109, %v4113
  %v4118 = vand.u32 2147483647, %v3995
  %vm4119 = vcmp.eq.f32.partialorder %v4118, 8.507059e+37
  %v4120 = vand.u32 %v3995, 2147483648
  %v4121 = vor.u32 1.1754944e-38, %v4120
  %v4122 = vsel %vm4119, %v4121, %v4117
  %v4123 = vmul.f32 1.0, %v4122
  %v4124 = vrcp.pop %v3996
  %v4125 = vmul.f32 %v3996, %v4124
  %v4126 = vsub.f32 1.0, %v4125
  %v4127 = vmul.f32 %v4124, %v4126
  %v4128 = vadd.f32 %v4124, %v4127
  %vm4129 = vweird.f32 %v3996
  %vm4130 = vweird.f32 %v4124
  %vm4131 = vmor %vm4129, %vm4130
  %v4132 = vsel %vm4131, %v4124, %v4128
  %v4133 = vand.u32 2147483647, %v3996
  %vm4134 = vcmp.eq.f32.partialorder %v4133, 8.507059e+37
  %v4135 = vand.u32 %v3996, 2147483648
  %v4136 = vor.u32 1.1754944e-38, %v4135
  %v4137 = vsel %vm4134, %v4136, %v4132
  %v4138 = vmul.f32 1.0, %v4137
  %v4139 = vrcp.pop %v3997
  %v4140 = vmul.f32 %v3997, %v4139
  %v4141 = vsub.f32 1.0, %v4140
  %v4142 = vmul.f32 %v4139, %v4141
  %v4143 = vadd.f32 %v4139, %v4142
  %vm4144 = vweird.f32 %v3997
  %vm4145 = vweird.f32 %v4139
  %vm4146 = vmor %vm4144, %vm4145
  %v4147 = vsel %vm4146, %v4139, %v4143
  %v4148 = vand.u32 2147483647, %v3997
  %vm4149 = vcmp.eq.f32.partialorder %v4148, 8.507059e+37
  %v4150 = vand.u32 %v3997, 2147483648
  %v4151 = vor.u32 1.1754944e-38, %v4150
  %v4152 = vsel %vm4149, %v4151, %v4147
  %v4153 = vmul.f32 1.0, %v4152
  %v4154 = vrcp.pop %v3998
  %v4155 = vmul.f32 %v3998, %v4154
  %v4156 = vsub.f32 1.0, %v4155
  %v4157 = vmul.f32 %v4154, %v4156
  %v4158 = vadd.f32 %v4154, %v4157
  %vm4159 = vweird.f32 %v3998
  %vm4160 = vweird.f32 %v4154
  %vm4161 = vmor %vm4159, %vm4160
  %v4162 = vsel %vm4161, %v4154, %v4158
  %v4163 = vand.u32 2147483647, %v3998
  %vm4164 = vcmp.eq.f32.partialorder %v4163, 8.507059e+37
  %v4165 = vand.u32 %v3998, 2147483648
  %v4166 = vor.u32 1.1754944e-38, %v4165
  %v4167 = vsel %vm4164, %v4166, %v4162
  %v4168 = vmul.f32 1.0, %v4167
  %v4169 = vrcp.pop %v3999
  %v4170 = vmul.f32 %v3999, %v4169
  %v4171 = vsub.f32 1.0, %v4170
  %v4172 = vmul.f32 %v4169, %v4171
  %v4173 = vadd.f32 %v4169, %v4172
  %vm4174 = vweird.f32 %v3999
  %vm4175 = vweird.f32 %v4169
  %vm4176 = vmor %vm4174, %vm4175
  %v4177 = vsel %vm4176, %v4169, %v4173
  %v4178 = vand.u32 2147483647, %v3999
  %vm4179 = vcmp.eq.f32.partialorder %v4178, 8.507059e+37
  %v4180 = vand.u32 %v3999, 2147483648
  %v4181 = vor.u32 1.1754944e-38, %v4180
  %v4182 = vsel %vm4179, %v4181, %v4177
  %v4183 = vmul.f32 1.0, %v4182
  %v4184 = vrcp.pop %v4000
  %v4185 = vmul.f32 %v4000, %v4184
  %v4186 = vsub.f32 1.0, %v4185
  %v4187 = vmul.f32 %v4184, %v4186
  %v4188 = vadd.f32 %v4184, %v4187
  %vm4189 = vweird.f32 %v4000
  %vm4190 = vweird.f32 %v4184
  %vm4191 = vmor %vm4189, %vm4190
  %v4192 = vsel %vm4191, %v4184, %v4188
  %v4193 = vand.u32 2147483647, %v4000
  %vm4194 = vcmp.eq.f32.partialorder %v4193, 8.507059e+37
  %v4195 = vand.u32 %v4000, 2147483648
  %v4196 = vor.u32 1.1754944e-38, %v4195
  %v4197 = vsel %vm4194, %v4196, %v4192
  %v4198 = vmul.f32 1.0, %v4197
  %v4199 = vrcp.pop %v4001
  %v4200 = vmul.f32 %v4001, %v4199
  %v4201 = vsub.f32 1.0, %v4200
  %v4202 = vmul.f32 %v4199, %v4201
  %v4203 = vadd.f32 %v4199, %v4202
  %vm4204 = vweird.f32 %v4001
  %vm4205 = vweird.f32 %v4199
  %vm4206 = vmor %vm4204, %vm4205
  %v4207 = vsel %vm4206, %v4199, %v4203
  %v4208 = vand.u32 2147483647, %v4001
  %vm4209 = vcmp.eq.f32.partialorder %v4208, 8.507059e+37
  %v4210 = vand.u32 %v4001, 2147483648
  %v4211 = vor.u32 1.1754944e-38, %v4210
  %v4212 = vsel %vm4209, %v4211, %v4207
  %v4213 = vmul.f32 1.0, %v4212
  %v4214 = vrcp.pop %v4002
  %v4215 = vmul.f32 %v4002, %v4214
  %v4216 = vsub.f32 1.0, %v4215
  %v4217 = vmul.f32 %v4214, %v4216
  %v4218 = vadd.f32 %v4214, %v4217
  %vm4219 = vweird.f32 %v4002
  %vm4220 = vweird.f32 %v4214
  %vm4221 = vmor %vm4219, %vm4220
  %v4222 = vsel %vm4221, %v4214, %v4218
  %v4223 = vand.u32 2147483647, %v4002
  %vm4224 = vcmp.eq.f32.partialorder %v4223, 8.507059e+37
  %v4225 = vand.u32 %v4002, 2147483648
  %v4226 = vor.u32 1.1754944e-38, %v4225
  %v4227 = vsel %vm4224, %v4226, %v4222
  %v4228 = vmul.f32 1.0, %v4227
  %v4229 = vrcp.pop %v4003
  %v4230 = vmul.f32 %v4003, %v4229
  %v4231 = vsub.f32 1.0, %v4230
  %v4232 = vmul.f32 %v4229, %v4231
  %v4233 = vadd.f32 %v4229, %v4232
  %vm4234 = vweird.f32 %v4003
  %vm4235 = vweird.f32 %v4229
  %vm4236 = vmor %vm4234, %vm4235
  %v4237 = vsel %vm4236, %v4229, %v4233
  %v4238 = vand.u32 2147483647, %v4003
  %vm4239 = vcmp.eq.f32.partialorder %v4238, 8.507059e+37
  %v4240 = vand.u32 %v4003, 2147483648
  %v4241 = vor.u32 1.1754944e-38, %v4240
  %v4242 = vsel %vm4239, %v4241, %v4237
  %v4243 = vmul.f32 1.0, %v4242
  %v4244 = vtanh.pop %v3924
  %v4245 = vtanh.pop %v3925
  %v4246 = vtanh.pop %v3926
  %v4247 = vtanh.pop %v3927
  %v4248 = vtanh.pop %v3928
  %v4249 = vtanh.pop %v3929
  %v4250 = vtanh.pop %v3930
  %v4251 = vtanh.pop %v3931
  %v4252 = vtanh.pop %v3932
  %v4253 = vtanh.pop %v3933
  %v4254 = vtanh.pop %v3934
  %v4255 = vtanh.pop %v3935
  %v4256 = vtanh.pop %v3936
  %v4257 = vtanh.pop %v3937
  %v4258 = vtanh.pop %v3938
  %v4259 = vtanh.pop %v3939
  %v4260 = vmul.f32 %v4018, %v3569
  %v4261 = vmul.f32 %v4033, %v3570
  %v4262 = vmul.f32 %v4048, %v3571
  %v4263 = vmul.f32 %v4063, %v3572
  %v4264 = vmul.f32 %v4078, %v3573
  %v4265 = vmul.f32 %v4093, %v3574
  %v4266 = vmul.f32 %v4108, %v3575
  %v4267 = vmul.f32 %v4123, %v3576
  %v4268 = vmul.f32 %v4138, %v3577
  %v4269 = vmul.f32 %v4153, %v3578
  %v4270 = vmul.f32 %v4168, %v3579
  %v4271 = vmul.f32 %v4183, %v3580
  %v4272 = vmul.f32 %v4198, %v3581
  %v4273 = vmul.f32 %v4213, %v3582
  %v4274 = vmul.f32 %v4228, %v3583
  %v4275 = vmul.f32 %v4243, %v3584
  %4292 = vrot.lane.b32.xlu0 %v4244, 32
  %v4293 = vpop.permute.xlu0 %4292
  %4294 = vrot.lane.b32.xlu0 %v4245, 32
  %v4295 = vpop.permute.xlu0 %4294
  %4296 = vrot.lane.b32.xlu0 %v4246, 32
  %v4297 = vpop.permute.xlu0 %4296
  %4298 = vrot.lane.b32.xlu0 %v4247, 32
  %v4299 = vpop.permute.xlu0 %4298
  %4300 = vrot.lane.b32.xlu0 %v4248, 32
  %v4301 = vpop.permute.xlu0 %4300
  %4302 = vrot.lane.b32.xlu0 %v4249, 32
  %v4303 = vpop.permute.xlu0 %4302
  %4304 = vrot.lane.b32.xlu0 %v4250, 32
  %v4305 = vpop.permute.xlu0 %4304
  %4306 = vrot.lane.b32.xlu0 %v4251, 32
  %v4307 = vpop.permute.xlu0 %4306
  %4308 = vrot.lane.b32.xlu0 %v4252, 32
  %v4309 = vpop.permute.xlu0 %4308
  %4310 = vrot.lane.b32.xlu0 %v4253, 32
  %v4311 = vpop.permute.xlu0 %4310
  %4312 = vrot.lane.b32.xlu0 %v4254, 32
  %v4313 = vpop.permute.xlu0 %4312
  %4314 = vrot.lane.b32.xlu0 %v4255, 32
  %v4315 = vpop.permute.xlu0 %4314
  %4316 = vrot.lane.b32.xlu0 %v4256, 32
  %v4317 = vpop.permute.xlu0 %4316
  %4318 = vrot.lane.b32.xlu0 %v4257, 32
  %v4319 = vpop.permute.xlu0 %4318
  %4320 = vrot.lane.b32.xlu0 %v4258, 32
  %v4321 = vpop.permute.xlu0 %4320
  %4322 = vrot.lane.b32.xlu0 %v4259, 32
  %v4323 = vpop.permute.xlu0 %4322
  %v4340 = vmul.f32 %v4018, %v4293
  %v4341 = vmul.f32 %v4033, %v4295
  %v4342 = vmul.f32 %v4048, %v4297
  %v4343 = vmul.f32 %v4063, %v4299
  %v4344 = vmul.f32 %v4078, %v4301
  %v4345 = vmul.f32 %v4093, %v4303
  %v4346 = vmul.f32 %v4108, %v4305
  %v4347 = vmul.f32 %v4123, %v4307
  %v4348 = vmul.f32 %v4138, %v4309
  %v4349 = vmul.f32 %v4153, %v4311
  %v4350 = vmul.f32 %v4168, %v4313
  %v4351 = vmul.f32 %v4183, %v4315
  %v4352 = vmul.f32 %v4198, %v4317
  %v4353 = vmul.f32 %v4213, %v4319
  %v4354 = vmul.f32 %v4228, %v4321
  %v4355 = vmul.f32 %v4243, %v4323
  %4372 = vrot.lane.b32.xlu0 %v4340, 32
  %v4373 = vpop.permute.xlu0 %4372
  %4374 = vrot.lane.b32.xlu0 %v4341, 32
  %v4375 = vpop.permute.xlu0 %4374
  %4376 = vrot.lane.b32.xlu0 %v4342, 32
  %v4377 = vpop.permute.xlu0 %4376
  %4378 = vrot.lane.b32.xlu0 %v4343, 32
  %v4379 = vpop.permute.xlu0 %4378
  %4380 = vrot.lane.b32.xlu0 %v4344, 32
  %v4381 = vpop.permute.xlu0 %4380
  %4382 = vrot.lane.b32.xlu0 %v4345, 32
  %v4383 = vpop.permute.xlu0 %4382
  %4384 = vrot.lane.b32.xlu0 %v4346, 32
  %v4385 = vpop.permute.xlu0 %4384
  %4386 = vrot.lane.b32.xlu0 %v4347, 32
  %v4387 = vpop.permute.xlu0 %4386
  %4388 = vrot.lane.b32.xlu0 %v4348, 32
  %v4389 = vpop.permute.xlu0 %4388
  %4390 = vrot.lane.b32.xlu0 %v4349, 32
  %v4391 = vpop.permute.xlu0 %4390
  %4392 = vrot.lane.b32.xlu0 %v4350, 32
  %v4393 = vpop.permute.xlu0 %4392
  %4394 = vrot.lane.b32.xlu0 %v4351, 32
  %v4395 = vpop.permute.xlu0 %4394
  %4396 = vrot.lane.b32.xlu0 %v4352, 32
  %v4397 = vpop.permute.xlu0 %4396
  %4398 = vrot.lane.b32.xlu0 %v4353, 32
  %v4399 = vpop.permute.xlu0 %4398
  %4400 = vrot.lane.b32.xlu0 %v4354, 32
  %v4401 = vpop.permute.xlu0 %4400
  %4402 = vrot.lane.b32.xlu0 %v4355, 32
  %v4403 = vpop.permute.xlu0 %4402
  %v4420 = vadd.f32 %v4260, %v4373
  %v4421 = vadd.f32 %v4261, %v4375
  %v4422 = vadd.f32 %v4262, %v4377
  %v4423 = vadd.f32 %v4263, %v4379
  %v4424 = vadd.f32 %v4264, %v4381
  %v4425 = vadd.f32 %v4265, %v4383
  %v4426 = vadd.f32 %v4266, %v4385
  %v4427 = vadd.f32 %v4267, %v4387
  %v4428 = vadd.f32 %v4268, %v4389
  %v4429 = vadd.f32 %v4269, %v4391
  %v4430 = vadd.f32 %v4270, %v4393
  %v4431 = vadd.f32 %v4271, %v4395
  %v4432 = vadd.f32 %v4272, %v4397
  %v4433 = vadd.f32 %v4273, %v4399
  %v4434 = vadd.f32 %v4274, %v4401
  %v4435 = vadd.f32 %v4275, %v4403
  %v4436 = vtanh.pop %v4420
  %v4437 = vtanh.pop %v4421
  %v4438 = vtanh.pop %v4422
  %v4439 = vtanh.pop %v4423
  %v4440 = vtanh.pop %v4424
  %v4441 = vtanh.pop %v4425
  %v4442 = vtanh.pop %v4426
  %v4443 = vtanh.pop %v4427
  %v4444 = vtanh.pop %v4428
  %v4445 = vtanh.pop %v4429
  %v4446 = vtanh.pop %v4430
  %v4447 = vtanh.pop %v4431
  %v4448 = vtanh.pop %v4432
  %v4449 = vtanh.pop %v4433
  %v4450 = vtanh.pop %v4434
  %v4451 = vtanh.pop %v4435
  %4468 = vrot.lane.b32.xlu0 %v4436, 32
  %v4469 = vpop.permute.xlu0 %4468
  %4470 = vrot.lane.b32.xlu0 %v4437, 32
  %v4471 = vpop.permute.xlu0 %4470
  %4472 = vrot.lane.b32.xlu0 %v4438, 32
  %v4473 = vpop.permute.xlu0 %4472
  %4474 = vrot.lane.b32.xlu0 %v4439, 32
  %v4475 = vpop.permute.xlu0 %4474
  %4476 = vrot.lane.b32.xlu0 %v4440, 32
  %v4477 = vpop.permute.xlu0 %4476
  %4478 = vrot.lane.b32.xlu0 %v4441, 32
  %v4479 = vpop.permute.xlu0 %4478
  %4480 = vrot.lane.b32.xlu0 %v4442, 32
  %v4481 = vpop.permute.xlu0 %4480
  %4482 = vrot.lane.b32.xlu0 %v4443, 32
  %v4483 = vpop.permute.xlu0 %4482
  %4484 = vrot.lane.b32.xlu0 %v4444, 32
  %v4485 = vpop.permute.xlu0 %4484
  %4486 = vrot.lane.b32.xlu0 %v4445, 32
  %v4487 = vpop.permute.xlu0 %4486
  %4488 = vrot.lane.b32.xlu0 %v4446, 32
  %v4489 = vpop.permute.xlu0 %4488
  %4490 = vrot.lane.b32.xlu0 %v4447, 32
  %v4491 = vpop.permute.xlu0 %4490
  %4492 = vrot.lane.b32.xlu0 %v4448, 32
  %v4493 = vpop.permute.xlu0 %4492
  %4494 = vrot.lane.b32.xlu0 %v4449, 32
  %v4495 = vpop.permute.xlu0 %4494
  %4496 = vrot.lane.b32.xlu0 %v4450, 32
  %v4497 = vpop.permute.xlu0 %4496
  %4498 = vrot.lane.b32.xlu0 %v4451, 32
  %v4499 = vpop.permute.xlu0 %4498
  %v4516 = vmul.f32 %v4018, %v4469
  %v4517 = vmul.f32 %v4033, %v4471
  %v4518 = vmul.f32 %v4048, %v4473
  %v4519 = vmul.f32 %v4063, %v4475
  %v4520 = vmul.f32 %v4078, %v4477
  %v4521 = vmul.f32 %v4093, %v4479
  %v4522 = vmul.f32 %v4108, %v4481
  %v4523 = vmul.f32 %v4123, %v4483
  %v4524 = vmul.f32 %v4138, %v4485
  %v4525 = vmul.f32 %v4153, %v4487
  %v4526 = vmul.f32 %v4168, %v4489
  %v4527 = vmul.f32 %v4183, %v4491
  %v4528 = vmul.f32 %v4198, %v4493
  %v4529 = vmul.f32 %v4213, %v4495
  %v4530 = vmul.f32 %v4228, %v4497
  %v4531 = vmul.f32 %v4243, %v4499
  %v4532 = vpack.c.bf16 %v4516, %v4516
  %v4533 = vpack.c.bf16 %v4517, %v4517
  %v4534 = vpack.c.bf16 %v4518, %v4518
  %v4535 = vpack.c.bf16 %v4519, %v4519
  %v4536 = vpack.c.bf16 %v4520, %v4520
  %v4537 = vpack.c.bf16 %v4521, %v4521
  %v4538 = vpack.c.bf16 %v4522, %v4522
  %v4539 = vpack.c.bf16 %v4523, %v4523
  %v4540 = vpack.c.bf16 %v4524, %v4524
  %v4541 = vpack.c.bf16 %v4525, %v4525
  %v4542 = vpack.c.bf16 %v4526, %v4526
  %v4543 = vpack.c.bf16 %v4527, %v4527
  %v4544 = vpack.c.bf16 %v4528, %v4528
  %v4545 = vpack.c.bf16 %v4529, %v4529
  %v4546 = vpack.c.bf16 %v4530, %v4530
  %v4547 = vpack.c.bf16 %v4531, %v4531
  %4564 = vrot.lane.b32.xlu0 %v4532, 64
  %v4565 = vpop.permute.xlu0 %4564
  %4566 = vrot.lane.b32.xlu0 %v4533, 64
  %v4567 = vpop.permute.xlu0 %4566
  %4568 = vrot.lane.b32.xlu0 %v4534, 64
  %v4569 = vpop.permute.xlu0 %4568
  %4570 = vrot.lane.b32.xlu0 %v4535, 64
  %v4571 = vpop.permute.xlu0 %4570
  %4572 = vrot.lane.b32.xlu0 %v4536, 64
  %v4573 = vpop.permute.xlu0 %4572
  %4574 = vrot.lane.b32.xlu0 %v4537, 64
  %v4575 = vpop.permute.xlu0 %4574
  %4576 = vrot.lane.b32.xlu0 %v4538, 64
  %v4577 = vpop.permute.xlu0 %4576
  %4578 = vrot.lane.b32.xlu0 %v4539, 64
  %v4579 = vpop.permute.xlu0 %4578
  %4580 = vrot.lane.b32.xlu0 %v4540, 64
  %v4581 = vpop.permute.xlu0 %4580
  %4582 = vrot.lane.b32.xlu0 %v4541, 64
  %v4583 = vpop.permute.xlu0 %4582
  %4584 = vrot.lane.b32.xlu0 %v4542, 64
  %v4585 = vpop.permute.xlu0 %4584
  %4586 = vrot.lane.b32.xlu0 %v4543, 64
  %v4587 = vpop.permute.xlu0 %4586
  %4588 = vrot.lane.b32.xlu0 %v4544, 64
  %v4589 = vpop.permute.xlu0 %4588
  %4590 = vrot.lane.b32.xlu0 %v4545, 64
  %v4591 = vpop.permute.xlu0 %4590
  %4592 = vrot.lane.b32.xlu0 %v4546, 64
  %v4593 = vpop.permute.xlu0 %4592
  %4594 = vrot.lane.b32.xlu0 %v4547, 64
  %v4595 = vpop.permute.xlu0 %4594
  %s4612 = scalar_lea.vmem [#allocation2], 192
  %4613 = vst.msk [vmem:[%s4612] sm:$0xf] %vm2059, %v4565
  %4614 = vst.msk [vmem:[%s4612 + $0x4] sm:$0xf] %vm2059, %v4567
  %4615 = vst.msk [vmem:[%s4612 + $0x8] sm:$0xf] %vm2059, %v4569
  %4616 = vst.msk [vmem:[%s4612 + $0xc] sm:$0xf] %vm2059, %v4571
  %4617 = vst.msk [vmem:[%s4612 + $0x10] sm:$0xf] %vm2059, %v4573
  %4618 = vst.msk [vmem:[%s4612 + $0x14] sm:$0xf] %vm2059, %v4575
  %4619 = vst.msk [vmem:[%s4612 + $0x18] sm:$0xf] %vm2059, %v4577
  %4620 = vst.msk [vmem:[%s4612 + $0x1c] sm:$0xf] %vm2059, %v4579
  %4621 = vst.msk [vmem:[%s4612 + $0x20] sm:$0xf] %vm2059, %v4581
  %4622 = vst.msk [vmem:[%s4612 + $0x24] sm:$0xf] %vm2059, %v4583
  %4623 = vst.msk [vmem:[%s4612 + $0x28] sm:$0xf] %vm2059, %v4585
  %4624 = vst.msk [vmem:[%s4612 + $0x2c] sm:$0xf] %vm2059, %v4587
  %4625 = vst.msk [vmem:[%s4612 + $0x30] sm:$0xf] %vm2059, %v4589
  %4626 = vst.msk [vmem:[%s4612 + $0x34] sm:$0xf] %vm2059, %v4591
  %4627 = vst.msk [vmem:[%s4612 + $0x38] sm:$0xf] %vm2059, %v4593
  %4628 = vst.msk [vmem:[%s4612 + $0x3c] sm:$0xf] %vm2059, %v4595
  %s4629 = scalar_lea.vmem [#allocation3], 256
  %v4630 = vld [vmem:[%s4629] sm:$0xf]
  %v4631 = vld [vmem:[%s4629 + $0x4] sm:$0xf]
  %v4632 = vld [vmem:[%s4629 + $0x8] sm:$0xf]
  %v4633 = vld [vmem:[%s4629 + $0xc] sm:$0xf]
  %v4634 = vld [vmem:[%s4629 + $0x10] sm:$0xf]
  %v4635 = vld [vmem:[%s4629 + $0x14] sm:$0xf]
  %v4636 = vld [vmem:[%s4629 + $0x18] sm:$0xf]
  %v4637 = vld [vmem:[%s4629 + $0x1c] sm:$0xf]
  %v4638 = vld [vmem:[%s4629 + $0x20] sm:$0xf]
  %v4639 = vld [vmem:[%s4629 + $0x24] sm:$0xf]
  %v4640 = vld [vmem:[%s4629 + $0x28] sm:$0xf]
  %v4641 = vld [vmem:[%s4629 + $0x2c] sm:$0xf]
  %v4642 = vld [vmem:[%s4629 + $0x30] sm:$0xf]
  %v4643 = vld [vmem:[%s4629 + $0x34] sm:$0xf]
  %v4644 = vld [vmem:[%s4629 + $0x38] sm:$0xf]
  %v4645 = vld [vmem:[%s4629 + $0x3c] sm:$0xf]
  %v4646 = vunpack.c.l.bf16 %v4630
  %v4647 = vunpack.c.l.bf16 %v4631
  %v4648 = vunpack.c.l.bf16 %v4632
  %v4649 = vunpack.c.l.bf16 %v4633
  %v4650 = vunpack.c.l.bf16 %v4634
  %v4651 = vunpack.c.l.bf16 %v4635
  %v4652 = vunpack.c.l.bf16 %v4636
  %v4653 = vunpack.c.l.bf16 %v4637
  %v4654 = vunpack.c.l.bf16 %v4638
  %v4655 = vunpack.c.l.bf16 %v4639
  %v4656 = vunpack.c.l.bf16 %v4640
  %v4657 = vunpack.c.l.bf16 %v4641
  %v4658 = vunpack.c.l.bf16 %v4642
  %v4659 = vunpack.c.l.bf16 %v4643
  %v4660 = vunpack.c.l.bf16 %v4644
  %v4661 = vunpack.c.l.bf16 %v4645
  %v4662 = vunpack.c.l.b16 %v4532
  %v4663 = vunpack.c.l.b16 %v4533
  %v4664 = vunpack.c.l.b16 %v4534
  %v4665 = vunpack.c.l.b16 %v4535
  %v4666 = vunpack.c.l.b16 %v4536
  %v4667 = vunpack.c.l.b16 %v4537
  %v4668 = vunpack.c.l.b16 %v4538
  %v4669 = vunpack.c.l.b16 %v4539
  %v4670 = vunpack.c.l.b16 %v4540
  %v4671 = vunpack.c.l.b16 %v4541
  %v4672 = vunpack.c.l.b16 %v4542
  %v4673 = vunpack.c.l.b16 %v4543
  %v4674 = vunpack.c.l.b16 %v4544
  %v4675 = vunpack.c.l.b16 %v4545
  %v4676 = vunpack.c.l.b16 %v4546
  %v4677 = vunpack.c.l.b16 %v4547
  %v4678 = vpack.c.b16 %v4663, %v4662
  %v4679 = vpack.c.b16 %v4665, %v4664
  %v4680 = vpack.c.b16 %v4667, %v4666
  %v4681 = vpack.c.b16 %v4669, %v4668
  %v4682 = vpack.c.b16 %v4671, %v4670
  %v4683 = vpack.c.b16 %v4673, %v4672
  %v4684 = vpack.c.b16 %v4675, %v4674
  %v4685 = vpack.c.b16 %v4677, %v4676
  %4686 = vrot.lane.b32.xlu0 %v4678, 64
  %v4687 = vpop.permute.xlu0 %4686
  %4688 = vrot.lane.b32.xlu0 %v4679, 64
  %v4689 = vpop.permute.xlu0 %4688
  %4690 = vrot.lane.b32.xlu0 %v4680, 64
  %v4691 = vpop.permute.xlu0 %4690
  %4692 = vrot.lane.b32.xlu0 %v4681, 64
  %v4693 = vpop.permute.xlu0 %4692
  %4694 = vrot.lane.b32.xlu0 %v4682, 64
  %v4695 = vpop.permute.xlu0 %4694
  %4696 = vrot.lane.b32.xlu0 %v4683, 64
  %v4697 = vpop.permute.xlu0 %4696
  %4698 = vrot.lane.b32.xlu0 %v4684, 64
  %v4699 = vpop.permute.xlu0 %4698
  %4700 = vrot.lane.b32.xlu0 %v4685, 64
  %v4701 = vpop.permute.xlu0 %4700
  %v4703 = vsel %vm1318, %v4687, 0
  %v4706 = vsel %vm1318, %v4689, 0
  %v4709 = vsel %vm1318, %v4691, 0
  %v4712 = vsel %vm1318, %v4693, 0
  %v4715 = vsel %vm1318, %v4695, 0
  %v4718 = vsel %vm1318, %v4697, 0
  %v4721 = vsel %vm1318, %v4699, 0
  %v4724 = vsel %vm1318, %v4701, 0
  %4726 = vmatpush.bf16.msra.mxu0 0
  %4727 = vmatpush.bf16.msra.mxu0 0
  %4728 = vmatpush.bf16.msra.mxu0 0
  %4729 = vmatpush.bf16.msra.mxu0 0
  %4730 = vmatpush.bf16.msra.mxu0 0
  %4731 = vmatpush.bf16.msra.mxu0 0
  %4732 = vmatpush.bf16.msra.mxu0 %v1315
  %4733 = vmatpush.bf16.msra.mxu0 %v1314
  %4734 = vmatmul.bf16.gmra.mxu0 %v4703
  %v4735 = vpop.f32.mrf.mxu0
  %v4736 = vadd.f32 0.0, %v4735
  %v4737 = vpop.f32.mrf.mxu0
  %v4738 = vadd.f32 0.0, %v4737
  %4739 = vmatmul.bf16.gmra.mxu0 %v4706
  %v4740 = vpop.f32.mrf.mxu0
  %v4741 = vadd.f32 0.0, %v4740
  %v4742 = vpop.f32.mrf.mxu0
  %v4743 = vadd.f32 0.0, %v4742
  %4744 = vmatmul.bf16.gmra.mxu0 %v4709
  %v4745 = vpop.f32.mrf.mxu0
  %v4746 = vadd.f32 0.0, %v4745
  %v4747 = vpop.f32.mrf.mxu0
  %v4748 = vadd.f32 0.0, %v4747
  %4749 = vmatmul.bf16.gmra.mxu0 %v4712
  %v4750 = vpop.f32.mrf.mxu0
  %v4751 = vadd.f32 0.0, %v4750
  %v4752 = vpop.f32.mrf.mxu0
  %v4753 = vadd.f32 0.0, %v4752
  %4754 = vmatmul.bf16.gmra.mxu0 %v4715
  %v4755 = vpop.f32.mrf.mxu0
  %v4756 = vadd.f32 0.0, %v4755
  %v4757 = vpop.f32.mrf.mxu0
  %v4758 = vadd.f32 0.0, %v4757
  %4759 = vmatmul.bf16.gmra.mxu0 %v4718
  %v4760 = vpop.f32.mrf.mxu0
  %v4761 = vadd.f32 0.0, %v4760
  %v4762 = vpop.f32.mrf.mxu0
  %v4763 = vadd.f32 0.0, %v4762
  %4764 = vmatmul.bf16.gmra.mxu0 %v4721
  %v4765 = vpop.f32.mrf.mxu0
  %v4766 = vadd.f32 0.0, %v4765
  %v4767 = vpop.f32.mrf.mxu0
  %v4768 = vadd.f32 0.0, %v4767
  %4769 = vmatmul.bf16.gmra.mxu0 %v4724
  %v4770 = vpop.f32.mrf.mxu0
  %v4771 = vadd.f32 0.0, %v4770
  %v4772 = vpop.f32.mrf.mxu0
  %v4773 = vadd.f32 0.0, %v4772
  %4774 = vdwg.mxu0
  %v4775 = vadd.f32 %v4646, %v4736
  %v4776 = vadd.f32 %v4647, %v4738
  %v4777 = vadd.f32 %v4648, %v4741
  %v4778 = vadd.f32 %v4649, %v4743
  %v4779 = vadd.f32 %v4650, %v4746
  %v4780 = vadd.f32 %v4651, %v4748
  %v4781 = vadd.f32 %v4652, %v4751
  %v4782 = vadd.f32 %v4653, %v4753
  %v4783 = vadd.f32 %v4654, %v4756
  %v4784 = vadd.f32 %v4655, %v4758
  %v4785 = vadd.f32 %v4656, %v4761
  %v4786 = vadd.f32 %v4657, %v4763
  %v4787 = vadd.f32 %v4658, %v4766
  %v4788 = vadd.f32 %v4659, %v4768
  %v4789 = vadd.f32 %v4660, %v4771
  %v4790 = vadd.f32 %v4661, %v4773
  %v4791 = vxor.u32 %v4775, 2147483648
  %v4792 = vxor.u32 %v4776, 2147483648
  %v4793 = vxor.u32 %v4777, 2147483648
  %v4794 = vxor.u32 %v4778, 2147483648
  %v4795 = vxor.u32 %v4779, 2147483648
  %v4796 = vxor.u32 %v4780, 2147483648
  %v4797 = vxor.u32 %v4781, 2147483648
  %v4798 = vxor.u32 %v4782, 2147483648
  %v4799 = vxor.u32 %v4783, 2147483648
  %v4800 = vxor.u32 %v4784, 2147483648
  %v4801 = vxor.u32 %v4785, 2147483648
  %v4802 = vxor.u32 %v4786, 2147483648
  %v4803 = vxor.u32 %v4787, 2147483648
  %v4804 = vxor.u32 %v4788, 2147483648
  %v4805 = vxor.u32 %v4789, 2147483648
  %v4806 = vxor.u32 %v4790, 2147483648
  %v4807 = vmul.f32 %v4791, 1.442695
  %v4808 = vpow.pop %v4807
  %v4809 = vmul.f32 %v4792, 1.442695
  %v4810 = vpow.pop %v4809
  %v4811 = vmul.f32 %v4793, 1.442695
  %v4812 = vpow.pop %v4811
  %v4813 = vmul.f32 %v4794, 1.442695
  %v4814 = vpow.pop %v4813
  %v4815 = vmul.f32 %v4795, 1.442695
  %v4816 = vpow.pop %v4815
  %v4817 = vmul.f32 %v4796, 1.442695
  %v4818 = vpow.pop %v4817
  %v4819 = vmul.f32 %v4797, 1.442695
  %v4820 = vpow.pop %v4819
  %v4821 = vmul.f32 %v4798, 1.442695
  %v4822 = vpow.pop %v4821
  %v4823 = vmul.f32 %v4799, 1.442695
  %v4824 = vpow.pop %v4823
  %v4825 = vmul.f32 %v4800, 1.442695
  %v4826 = vpow.pop %v4825
  %v4827 = vmul.f32 %v4801, 1.442695
  %v4828 = vpow.pop %v4827
  %v4829 = vmul.f32 %v4802, 1.442695
  %v4830 = vpow.pop %v4829
  %v4831 = vmul.f32 %v4803, 1.442695
  %v4832 = vpow.pop %v4831
  %v4833 = vmul.f32 %v4804, 1.442695
  %v4834 = vpow.pop %v4833
  %v4835 = vmul.f32 %v4805, 1.442695
  %v4836 = vpow.pop %v4835
  %v4837 = vmul.f32 %v4806, 1.442695
  %v4838 = vpow.pop %v4837
  %v4839 = vadd.f32 %v4808, 1.0
  %v4840 = vadd.f32 %v4810, 1.0
  %v4841 = vadd.f32 %v4812, 1.0
  %v4842 = vadd.f32 %v4814, 1.0
  %v4843 = vadd.f32 %v4816, 1.0
  %v4844 = vadd.f32 %v4818, 1.0
  %v4845 = vadd.f32 %v4820, 1.0
  %v4846 = vadd.f32 %v4822, 1.0
  %v4847 = vadd.f32 %v4824, 1.0
  %v4848 = vadd.f32 %v4826, 1.0
  %v4849 = vadd.f32 %v4828, 1.0
  %v4850 = vadd.f32 %v4830, 1.0
  %v4851 = vadd.f32 %v4832, 1.0
  %v4852 = vadd.f32 %v4834, 1.0
  %v4853 = vadd.f32 %v4836, 1.0
  %v4854 = vadd.f32 %v4838, 1.0
  %v4855 = vrcp.pop %v4839
  %v4856 = vmul.f32 %v4839, %v4855
  %v4857 = vsub.f32 1.0, %v4856
  %v4858 = vmul.f32 %v4855, %v4857
  %v4859 = vadd.f32 %v4855, %v4858
  %vm4860 = vweird.f32 %v4839
  %vm4861 = vweird.f32 %v4855
  %vm4862 = vmor %vm4860, %vm4861
  %v4863 = vsel %vm4862, %v4855, %v4859
  %v4864 = vand.u32 2147483647, %v4839
  %vm4865 = vcmp.eq.f32.partialorder %v4864, 8.507059e+37
  %v4866 = vand.u32 %v4839, 2147483648
  %v4867 = vor.u32 1.1754944e-38, %v4866
  %v4868 = vsel %vm4865, %v4867, %v4863
  %v4869 = vmul.f32 1.0, %v4868
  %v4870 = vrcp.pop %v4840
  %v4871 = vmul.f32 %v4840, %v4870
  %v4872 = vsub.f32 1.0, %v4871
  %v4873 = vmul.f32 %v4870, %v4872
  %v4874 = vadd.f32 %v4870, %v4873
  %vm4875 = vweird.f32 %v4840
  %vm4876 = vweird.f32 %v4870
  %vm4877 = vmor %vm4875, %vm4876
  %v4878 = vsel %vm4877, %v4870, %v4874
  %v4879 = vand.u32 2147483647, %v4840
  %vm4880 = vcmp.eq.f32.partialorder %v4879, 8.507059e+37
  %v4881 = vand.u32 %v4840, 2147483648
  %v4882 = vor.u32 1.1754944e-38, %v4881
  %v4883 = vsel %vm4880, %v4882, %v4878
  %v4884 = vmul.f32 1.0, %v4883
  %v4885 = vrcp.pop %v4841
  %v4886 = vmul.f32 %v4841, %v4885
  %v4887 = vsub.f32 1.0, %v4886
  %v4888 = vmul.f32 %v4885, %v4887
  %v4889 = vadd.f32 %v4885, %v4888
  %vm4890 = vweird.f32 %v4841
  %vm4891 = vweird.f32 %v4885
  %vm4892 = vmor %vm4890, %vm4891
  %v4893 = vsel %vm4892, %v4885, %v4889
  %v4894 = vand.u32 2147483647, %v4841
  %vm4895 = vcmp.eq.f32.partialorder %v4894, 8.507059e+37
  %v4896 = vand.u32 %v4841, 2147483648
  %v4897 = vor.u32 1.1754944e-38, %v4896
  %v4898 = vsel %vm4895, %v4897, %v4893
  %v4899 = vmul.f32 1.0, %v4898
  %v4900 = vrcp.pop %v4842
  %v4901 = vmul.f32 %v4842, %v4900
  %v4902 = vsub.f32 1.0, %v4901
  %v4903 = vmul.f32 %v4900, %v4902
  %v4904 = vadd.f32 %v4900, %v4903
  %vm4905 = vweird.f32 %v4842
  %vm4906 = vweird.f32 %v4900
  %vm4907 = vmor %vm4905, %vm4906
  %v4908 = vsel %vm4907, %v4900, %v4904
  %v4909 = vand.u32 2147483647, %v4842
  %vm4910 = vcmp.eq.f32.partialorder %v4909, 8.507059e+37
  %v4911 = vand.u32 %v4842, 2147483648
  %v4912 = vor.u32 1.1754944e-38, %v4911
  %v4913 = vsel %vm4910, %v4912, %v4908
  %v4914 = vmul.f32 1.0, %v4913
  %v4915 = vrcp.pop %v4843
  %v4916 = vmul.f32 %v4843, %v4915
  %v4917 = vsub.f32 1.0, %v4916
  %v4918 = vmul.f32 %v4915, %v4917
  %v4919 = vadd.f32 %v4915, %v4918
  %vm4920 = vweird.f32 %v4843
  %vm4921 = vweird.f32 %v4915
  %vm4922 = vmor %vm4920, %vm4921
  %v4923 = vsel %vm4922, %v4915, %v4919
  %v4924 = vand.u32 2147483647, %v4843
  %vm4925 = vcmp.eq.f32.partialorder %v4924, 8.507059e+37
  %v4926 = vand.u32 %v4843, 2147483648
  %v4927 = vor.u32 1.1754944e-38, %v4926
  %v4928 = vsel %vm4925, %v4927, %v4923
  %v4929 = vmul.f32 1.0, %v4928
  %v4930 = vrcp.pop %v4844
  %v4931 = vmul.f32 %v4844, %v4930
  %v4932 = vsub.f32 1.0, %v4931
  %v4933 = vmul.f32 %v4930, %v4932
  %v4934 = vadd.f32 %v4930, %v4933
  %vm4935 = vweird.f32 %v4844
  %vm4936 = vweird.f32 %v4930
  %vm4937 = vmor %vm4935, %vm4936
  %v4938 = vsel %vm4937, %v4930, %v4934
  %v4939 = vand.u32 2147483647, %v4844
  %vm4940 = vcmp.eq.f32.partialorder %v4939, 8.507059e+37
  %v4941 = vand.u32 %v4844, 2147483648
  %v4942 = vor.u32 1.1754944e-38, %v4941
  %v4943 = vsel %vm4940, %v4942, %v4938
  %v4944 = vmul.f32 1.0, %v4943
  %v4945 = vrcp.pop %v4845
  %v4946 = vmul.f32 %v4845, %v4945
  %v4947 = vsub.f32 1.0, %v4946
  %v4948 = vmul.f32 %v4945, %v4947
  %v4949 = vadd.f32 %v4945, %v4948
  %vm4950 = vweird.f32 %v4845
  %vm4951 = vweird.f32 %v4945
  %vm4952 = vmor %vm4950, %vm4951
  %v4953 = vsel %vm4952, %v4945, %v4949
  %v4954 = vand.u32 2147483647, %v4845
  %vm4955 = vcmp.eq.f32.partialorder %v4954, 8.507059e+37
  %v4956 = vand.u32 %v4845, 2147483648
  %v4957 = vor.u32 1.1754944e-38, %v4956
  %v4958 = vsel %vm4955, %v4957, %v4953
  %v4959 = vmul.f32 1.0, %v4958
  %v4960 = vrcp.pop %v4846
  %v4961 = vmul.f32 %v4846, %v4960
  %v4962 = vsub.f32 1.0, %v4961
  %v4963 = vmul.f32 %v4960, %v4962
  %v4964 = vadd.f32 %v4960, %v4963
  %vm4965 = vweird.f32 %v4846
  %vm4966 = vweird.f32 %v4960
  %vm4967 = vmor %vm4965, %vm4966
  %v4968 = vsel %vm4967, %v4960, %v4964
  %v4969 = vand.u32 2147483647, %v4846
  %vm4970 = vcmp.eq.f32.partialorder %v4969, 8.507059e+37
  %v4971 = vand.u32 %v4846, 2147483648
  %v4972 = vor.u32 1.1754944e-38, %v4971
  %v4973 = vsel %vm4970, %v4972, %v4968
  %v4974 = vmul.f32 1.0, %v4973
  %v4975 = vrcp.pop %v4847
  %v4976 = vmul.f32 %v4847, %v4975
  %v4977 = vsub.f32 1.0, %v4976
  %v4978 = vmul.f32 %v4975, %v4977
  %v4979 = vadd.f32 %v4975, %v4978
  %vm4980 = vweird.f32 %v4847
  %vm4981 = vweird.f32 %v4975
  %vm4982 = vmor %vm4980, %vm4981
  %v4983 = vsel %vm4982, %v4975, %v4979
  %v4984 = vand.u32 2147483647, %v4847
  %vm4985 = vcmp.eq.f32.partialorder %v4984, 8.507059e+37
  %v4986 = vand.u32 %v4847, 2147483648
  %v4987 = vor.u32 1.1754944e-38, %v4986
  %v4988 = vsel %vm4985, %v4987, %v4983
  %v4989 = vmul.f32 1.0, %v4988
  %v4990 = vrcp.pop %v4848
  %v4991 = vmul.f32 %v4848, %v4990
  %v4992 = vsub.f32 1.0, %v4991
  %v4993 = vmul.f32 %v4990, %v4992
  %v4994 = vadd.f32 %v4990, %v4993
  %vm4995 = vweird.f32 %v4848
  %vm4996 = vweird.f32 %v4990
  %vm4997 = vmor %vm4995, %vm4996
  %v4998 = vsel %vm4997, %v4990, %v4994
  %v4999 = vand.u32 2147483647, %v4848
  %vm5000 = vcmp.eq.f32.partialorder %v4999, 8.507059e+37
  %v5001 = vand.u32 %v4848, 2147483648
  %v5002 = vor.u32 1.1754944e-38, %v5001
  %v5003 = vsel %vm5000, %v5002, %v4998
  %v5004 = vmul.f32 1.0, %v5003
  %v5005 = vrcp.pop %v4849
  %v5006 = vmul.f32 %v4849, %v5005
  %v5007 = vsub.f32 1.0, %v5006
  %v5008 = vmul.f32 %v5005, %v5007
  %v5009 = vadd.f32 %v5005, %v5008
  %vm5010 = vweird.f32 %v4849
  %vm5011 = vweird.f32 %v5005
  %vm5012 = vmor %vm5010, %vm5011
  %v5013 = vsel %vm5012, %v5005, %v5009
  %v5014 = vand.u32 2147483647, %v4849
  %vm5015 = vcmp.eq.f32.partialorder %v5014, 8.507059e+37
  %v5016 = vand.u32 %v4849, 2147483648
  %v5017 = vor.u32 1.1754944e-38, %v5016
  %v5018 = vsel %vm5015, %v5017, %v5013
  %v5019 = vmul.f32 1.0, %v5018
  %v5020 = vrcp.pop %v4850
  %v5021 = vmul.f32 %v4850, %v5020
  %v5022 = vsub.f32 1.0, %v5021
  %v5023 = vmul.f32 %v5020, %v5022
  %v5024 = vadd.f32 %v5020, %v5023
  %vm5025 = vweird.f32 %v4850
  %vm5026 = vweird.f32 %v5020
  %vm5027 = vmor %vm5025, %vm5026
  %v5028 = vsel %vm5027, %v5020, %v5024
  %v5029 = vand.u32 2147483647, %v4850
  %vm5030 = vcmp.eq.f32.partialorder %v5029, 8.507059e+37
  %v5031 = vand.u32 %v4850, 2147483648
  %v5032 = vor.u32 1.1754944e-38, %v5031
  %v5033 = vsel %vm5030, %v5032, %v5028
  %v5034 = vmul.f32 1.0, %v5033
  %v5035 = vrcp.pop %v4851
  %v5036 = vmul.f32 %v4851, %v5035
  %v5037 = vsub.f32 1.0, %v5036
  %v5038 = vmul.f32 %v5035, %v5037
  %v5039 = vadd.f32 %v5035, %v5038
  %vm5040 = vweird.f32 %v4851
  %vm5041 = vweird.f32 %v5035
  %vm5042 = vmor %vm5040, %vm5041
  %v5043 = vsel %vm5042, %v5035, %v5039
  %v5044 = vand.u32 2147483647, %v4851
  %vm5045 = vcmp.eq.f32.partialorder %v5044, 8.507059e+37
  %v5046 = vand.u32 %v4851, 2147483648
  %v5047 = vor.u32 1.1754944e-38, %v5046
  %v5048 = vsel %vm5045, %v5047, %v5043
  %v5049 = vmul.f32 1.0, %v5048
  %v5050 = vrcp.pop %v4852
  %v5051 = vmul.f32 %v4852, %v5050
  %v5052 = vsub.f32 1.0, %v5051
  %v5053 = vmul.f32 %v5050, %v5052
  %v5054 = vadd.f32 %v5050, %v5053
  %vm5055 = vweird.f32 %v4852
  %vm5056 = vweird.f32 %v5050
  %vm5057 = vmor %vm5055, %vm5056
  %v5058 = vsel %vm5057, %v5050, %v5054
  %v5059 = vand.u32 2147483647, %v4852
  %vm5060 = vcmp.eq.f32.partialorder %v5059, 8.507059e+37
  %v5061 = vand.u32 %v4852, 2147483648
  %v5062 = vor.u32 1.1754944e-38, %v5061
  %v5063 = vsel %vm5060, %v5062, %v5058
  %v5064 = vmul.f32 1.0, %v5063
  %v5065 = vrcp.pop %v4853
  %v5066 = vmul.f32 %v4853, %v5065
  %v5067 = vsub.f32 1.0, %v5066
  %v5068 = vmul.f32 %v5065, %v5067
  %v5069 = vadd.f32 %v5065, %v5068
  %vm5070 = vweird.f32 %v4853
  %vm5071 = vweird.f32 %v5065
  %vm5072 = vmor %vm5070, %vm5071
  %v5073 = vsel %vm5072, %v5065, %v5069
  %v5074 = vand.u32 2147483647, %v4853
  %vm5075 = vcmp.eq.f32.partialorder %v5074, 8.507059e+37
  %v5076 = vand.u32 %v4853, 2147483648
  %v5077 = vor.u32 1.1754944e-38, %v5076
  %v5078 = vsel %vm5075, %v5077, %v5073
  %v5079 = vmul.f32 1.0, %v5078
  %v5080 = vrcp.pop %v4854
  %v5081 = vmul.f32 %v4854, %v5080
  %v5082 = vsub.f32 1.0, %v5081
  %v5083 = vmul.f32 %v5080, %v5082
  %v5084 = vadd.f32 %v5080, %v5083
  %vm5085 = vweird.f32 %v4854
  %vm5086 = vweird.f32 %v5080
  %vm5087 = vmor %vm5085, %vm5086
  %v5088 = vsel %vm5087, %v5080, %v5084
  %v5089 = vand.u32 2147483647, %v4854
  %vm5090 = vcmp.eq.f32.partialorder %v5089, 8.507059e+37
  %v5091 = vand.u32 %v4854, 2147483648
  %v5092 = vor.u32 1.1754944e-38, %v5091
  %v5093 = vsel %vm5090, %v5092, %v5088
  %v5094 = vmul.f32 1.0, %v5093
  %v5095 = vtanh.pop %v4775
  %v5096 = vtanh.pop %v4776
  %v5097 = vtanh.pop %v4777
  %v5098 = vtanh.pop %v4778
  %v5099 = vtanh.pop %v4779
  %v5100 = vtanh.pop %v4780
  %v5101 = vtanh.pop %v4781
  %v5102 = vtanh.pop %v4782
  %v5103 = vtanh.pop %v4783
  %v5104 = vtanh.pop %v4784
  %v5105 = vtanh.pop %v4785
  %v5106 = vtanh.pop %v4786
  %v5107 = vtanh.pop %v4787
  %v5108 = vtanh.pop %v4788
  %v5109 = vtanh.pop %v4789
  %v5110 = vtanh.pop %v4790
  %v5111 = vmul.f32 %v4869, %v4420
  %v5112 = vmul.f32 %v4884, %v4421
  %v5113 = vmul.f32 %v4899, %v4422
  %v5114 = vmul.f32 %v4914, %v4423
  %v5115 = vmul.f32 %v4929, %v4424
  %v5116 = vmul.f32 %v4944, %v4425
  %v5117 = vmul.f32 %v4959, %v4426
  %v5118 = vmul.f32 %v4974, %v4427
  %v5119 = vmul.f32 %v4989, %v4428
  %v5120 = vmul.f32 %v5004, %v4429
  %v5121 = vmul.f32 %v5019, %v4430
  %v5122 = vmul.f32 %v5034, %v4431
  %v5123 = vmul.f32 %v5049, %v4432
  %v5124 = vmul.f32 %v5064, %v4433
  %v5125 = vmul.f32 %v5079, %v4434
  %v5126 = vmul.f32 %v5094, %v4435
  %5143 = vrot.lane.b32.xlu0 %v5095, 32
  %v5144 = vpop.permute.xlu0 %5143
  %5145 = vrot.lane.b32.xlu0 %v5096, 32
  %v5146 = vpop.permute.xlu0 %5145
  %5147 = vrot.lane.b32.xlu0 %v5097, 32
  %v5148 = vpop.permute.xlu0 %5147
  %5149 = vrot.lane.b32.xlu0 %v5098, 32
  %v5150 = vpop.permute.xlu0 %5149
  %5151 = vrot.lane.b32.xlu0 %v5099, 32
  %v5152 = vpop.permute.xlu0 %5151
  %5153 = vrot.lane.b32.xlu0 %v5100, 32
  %v5154 = vpop.permute.xlu0 %5153
  %5155 = vrot.lane.b32.xlu0 %v5101, 32
  %v5156 = vpop.permute.xlu0 %5155
  %5157 = vrot.lane.b32.xlu0 %v5102, 32
  %v5158 = vpop.permute.xlu0 %5157
  %5159 = vrot.lane.b32.xlu0 %v5103, 32
  %v5160 = vpop.permute.xlu0 %5159
  %5161 = vrot.lane.b32.xlu0 %v5104, 32
  %v5162 = vpop.permute.xlu0 %5161
  %5163 = vrot.lane.b32.xlu0 %v5105, 32
  %v5164 = vpop.permute.xlu0 %5163
  %5165 = vrot.lane.b32.xlu0 %v5106, 32
  %v5166 = vpop.permute.xlu0 %5165
  %5167 = vrot.lane.b32.xlu0 %v5107, 32
  %v5168 = vpop.permute.xlu0 %5167
  %5169 = vrot.lane.b32.xlu0 %v5108, 32
  %v5170 = vpop.permute.xlu0 %5169
  %5171 = vrot.lane.b32.xlu0 %v5109, 32
  %v5172 = vpop.permute.xlu0 %5171
  %5173 = vrot.lane.b32.xlu0 %v5110, 32
  %v5174 = vpop.permute.xlu0 %5173
  %v5191 = vmul.f32 %v4869, %v5144
  %v5192 = vmul.f32 %v4884, %v5146
  %v5193 = vmul.f32 %v4899, %v5148
  %v5194 = vmul.f32 %v4914, %v5150
  %v5195 = vmul.f32 %v4929, %v5152
  %v5196 = vmul.f32 %v4944, %v5154
  %v5197 = vmul.f32 %v4959, %v5156
  %v5198 = vmul.f32 %v4974, %v5158
  %v5199 = vmul.f32 %v4989, %v5160
  %v5200 = vmul.f32 %v5004, %v5162
  %v5201 = vmul.f32 %v5019, %v5164
  %v5202 = vmul.f32 %v5034, %v5166
  %v5203 = vmul.f32 %v5049, %v5168
  %v5204 = vmul.f32 %v5064, %v5170
  %v5205 = vmul.f32 %v5079, %v5172
  %v5206 = vmul.f32 %v5094, %v5174
  %5223 = vrot.lane.b32.xlu0 %v5191, 32
  %v5224 = vpop.permute.xlu0 %5223
  %5225 = vrot.lane.b32.xlu0 %v5192, 32
  %v5226 = vpop.permute.xlu0 %5225
  %5227 = vrot.lane.b32.xlu0 %v5193, 32
  %v5228 = vpop.permute.xlu0 %5227
  %5229 = vrot.lane.b32.xlu0 %v5194, 32
  %v5230 = vpop.permute.xlu0 %5229
  %5231 = vrot.lane.b32.xlu0 %v5195, 32
  %v5232 = vpop.permute.xlu0 %5231
  %5233 = vrot.lane.b32.xlu0 %v5196, 32
  %v5234 = vpop.permute.xlu0 %5233
  %5235 = vrot.lane.b32.xlu0 %v5197, 32
  %v5236 = vpop.permute.xlu0 %5235
  %5237 = vrot.lane.b32.xlu0 %v5198, 32
  %v5238 = vpop.permute.xlu0 %5237
  %5239 = vrot.lane.b32.xlu0 %v5199, 32
  %v5240 = vpop.permute.xlu0 %5239
  %5241 = vrot.lane.b32.xlu0 %v5200, 32
  %v5242 = vpop.permute.xlu0 %5241
  %5243 = vrot.lane.b32.xlu0 %v5201, 32
  %v5244 = vpop.permute.xlu0 %5243
  %5245 = vrot.lane.b32.xlu0 %v5202, 32
  %v5246 = vpop.permute.xlu0 %5245
  %5247 = vrot.lane.b32.xlu0 %v5203, 32
  %v5248 = vpop.permute.xlu0 %5247
  %5249 = vrot.lane.b32.xlu0 %v5204, 32
  %v5250 = vpop.permute.xlu0 %5249
  %5251 = vrot.lane.b32.xlu0 %v5205, 32
  %v5252 = vpop.permute.xlu0 %5251
  %5253 = vrot.lane.b32.xlu0 %v5206, 32
  %v5254 = vpop.permute.xlu0 %5253
  %v5271 = vadd.f32 %v5111, %v5224
  %v5272 = vadd.f32 %v5112, %v5226
  %v5273 = vadd.f32 %v5113, %v5228
  %v5274 = vadd.f32 %v5114, %v5230
  %v5275 = vadd.f32 %v5115, %v5232
  %v5276 = vadd.f32 %v5116, %v5234
  %v5277 = vadd.f32 %v5117, %v5236
  %v5278 = vadd.f32 %v5118, %v5238
  %v5279 = vadd.f32 %v5119, %v5240
  %v5280 = vadd.f32 %v5120, %v5242
  %v5281 = vadd.f32 %v5121, %v5244
  %v5282 = vadd.f32 %v5122, %v5246
  %v5283 = vadd.f32 %v5123, %v5248
  %v5284 = vadd.f32 %v5124, %v5250
  %v5285 = vadd.f32 %v5125, %v5252
  %v5286 = vadd.f32 %v5126, %v5254
  %v5287 = vtanh.pop %v5271
  %v5288 = vtanh.pop %v5272
  %v5289 = vtanh.pop %v5273
  %v5290 = vtanh.pop %v5274
  %v5291 = vtanh.pop %v5275
  %v5292 = vtanh.pop %v5276
  %v5293 = vtanh.pop %v5277
  %v5294 = vtanh.pop %v5278
  %v5295 = vtanh.pop %v5279
  %v5296 = vtanh.pop %v5280
  %v5297 = vtanh.pop %v5281
  %v5298 = vtanh.pop %v5282
  %v5299 = vtanh.pop %v5283
  %v5300 = vtanh.pop %v5284
  %v5301 = vtanh.pop %v5285
  %v5302 = vtanh.pop %v5286
  %5319 = vrot.lane.b32.xlu0 %v5287, 32
  %v5320 = vpop.permute.xlu0 %5319
  %5321 = vrot.lane.b32.xlu0 %v5288, 32
  %v5322 = vpop.permute.xlu0 %5321
  %5323 = vrot.lane.b32.xlu0 %v5289, 32
  %v5324 = vpop.permute.xlu0 %5323
  %5325 = vrot.lane.b32.xlu0 %v5290, 32
  %v5326 = vpop.permute.xlu0 %5325
  %5327 = vrot.lane.b32.xlu0 %v5291, 32
  %v5328 = vpop.permute.xlu0 %5327
  %5329 = vrot.lane.b32.xlu0 %v5292, 32
  %v5330 = vpop.permute.xlu0 %5329
  %5331 = vrot.lane.b32.xlu0 %v5293, 32
  %v5332 = vpop.permute.xlu0 %5331
  %5333 = vrot.lane.b32.xlu0 %v5294, 32
  %v5334 = vpop.permute.xlu0 %5333
  %5335 = vrot.lane.b32.xlu0 %v5295, 32
  %v5336 = vpop.permute.xlu0 %5335
  %5337 = vrot.lane.b32.xlu0 %v5296, 32
  %v5338 = vpop.permute.xlu0 %5337
  %5339 = vrot.lane.b32.xlu0 %v5297, 32
  %v5340 = vpop.permute.xlu0 %5339
  %5341 = vrot.lane.b32.xlu0 %v5298, 32
  %v5342 = vpop.permute.xlu0 %5341
  %5343 = vrot.lane.b32.xlu0 %v5299, 32
  %v5344 = vpop.permute.xlu0 %5343
  %5345 = vrot.lane.b32.xlu0 %v5300, 32
  %v5346 = vpop.permute.xlu0 %5345
  %5347 = vrot.lane.b32.xlu0 %v5301, 32
  %v5348 = vpop.permute.xlu0 %5347
  %5349 = vrot.lane.b32.xlu0 %v5302, 32
  %v5350 = vpop.permute.xlu0 %5349
  %v5367 = vmul.f32 %v4869, %v5320
  %v5368 = vmul.f32 %v4884, %v5322
  %v5369 = vmul.f32 %v4899, %v5324
  %v5370 = vmul.f32 %v4914, %v5326
  %v5371 = vmul.f32 %v4929, %v5328
  %v5372 = vmul.f32 %v4944, %v5330
  %v5373 = vmul.f32 %v4959, %v5332
  %v5374 = vmul.f32 %v4974, %v5334
  %v5375 = vmul.f32 %v4989, %v5336
  %v5376 = vmul.f32 %v5004, %v5338
  %v5377 = vmul.f32 %v5019, %v5340
  %v5378 = vmul.f32 %v5034, %v5342
  %v5379 = vmul.f32 %v5049, %v5344
  %v5380 = vmul.f32 %v5064, %v5346
  %v5381 = vmul.f32 %v5079, %v5348
  %v5382 = vmul.f32 %v5094, %v5350
  %v5383 = vpack.c.bf16 %v5367, %v5367
  %v5384 = vpack.c.bf16 %v5368, %v5368
  %v5385 = vpack.c.bf16 %v5369, %v5369
  %v5386 = vpack.c.bf16 %v5370, %v5370
  %v5387 = vpack.c.bf16 %v5371, %v5371
  %v5388 = vpack.c.bf16 %v5372, %v5372
  %v5389 = vpack.c.bf16 %v5373, %v5373
  %v5390 = vpack.c.bf16 %v5374, %v5374
  %v5391 = vpack.c.bf16 %v5375, %v5375
  %v5392 = vpack.c.bf16 %v5376, %v5376
  %v5393 = vpack.c.bf16 %v5377, %v5377
  %v5394 = vpack.c.bf16 %v5378, %v5378
  %v5395 = vpack.c.bf16 %v5379, %v5379
  %v5396 = vpack.c.bf16 %v5380, %v5380
  %v5397 = vpack.c.bf16 %v5381, %v5381
  %v5398 = vpack.c.bf16 %v5382, %v5382
  %5415 = vrot.lane.b32.xlu0 %v5383, 64
  %v5416 = vpop.permute.xlu0 %5415
  %5417 = vrot.lane.b32.xlu0 %v5384, 64
  %v5418 = vpop.permute.xlu0 %5417
  %5419 = vrot.lane.b32.xlu0 %v5385, 64
  %v5420 = vpop.permute.xlu0 %5419
  %5421 = vrot.lane.b32.xlu0 %v5386, 64
  %v5422 = vpop.permute.xlu0 %5421
  %5423 = vrot.lane.b32.xlu0 %v5387, 64
  %v5424 = vpop.permute.xlu0 %5423
  %5425 = vrot.lane.b32.xlu0 %v5388, 64
  %v5426 = vpop.permute.xlu0 %5425
  %5427 = vrot.lane.b32.xlu0 %v5389, 64
  %v5428 = vpop.permute.xlu0 %5427
  %5429 = vrot.lane.b32.xlu0 %v5390, 64
  %v5430 = vpop.permute.xlu0 %5429
  %5431 = vrot.lane.b32.xlu0 %v5391, 64
  %v5432 = vpop.permute.xlu0 %5431
  %5433 = vrot.lane.b32.xlu0 %v5392, 64
  %v5434 = vpop.permute.xlu0 %5433
  %5435 = vrot.lane.b32.xlu0 %v5393, 64
  %v5436 = vpop.permute.xlu0 %5435
  %5437 = vrot.lane.b32.xlu0 %v5394, 64
  %v5438 = vpop.permute.xlu0 %5437
  %5439 = vrot.lane.b32.xlu0 %v5395, 64
  %v5440 = vpop.permute.xlu0 %5439
  %5441 = vrot.lane.b32.xlu0 %v5396, 64
  %v5442 = vpop.permute.xlu0 %5441
  %5443 = vrot.lane.b32.xlu0 %v5397, 64
  %v5444 = vpop.permute.xlu0 %5443
  %5445 = vrot.lane.b32.xlu0 %v5398, 64
  %v5446 = vpop.permute.xlu0 %5445
  %s5463 = scalar_lea.vmem [#allocation2], 256
  %5464 = vst.msk [vmem:[%s5463] sm:$0xf] %vm2059, %v5416
  %5465 = vst.msk [vmem:[%s5463 + $0x4] sm:$0xf] %vm2059, %v5418
  %5466 = vst.msk [vmem:[%s5463 + $0x8] sm:$0xf] %vm2059, %v5420
  %5467 = vst.msk [vmem:[%s5463 + $0xc] sm:$0xf] %vm2059, %v5422
  %5468 = vst.msk [vmem:[%s5463 + $0x10] sm:$0xf] %vm2059, %v5424
  %5469 = vst.msk [vmem:[%s5463 + $0x14] sm:$0xf] %vm2059, %v5426
  %5470 = vst.msk [vmem:[%s5463 + $0x18] sm:$0xf] %vm2059, %v5428
  %5471 = vst.msk [vmem:[%s5463 + $0x1c] sm:$0xf] %vm2059, %v5430
  %5472 = vst.msk [vmem:[%s5463 + $0x20] sm:$0xf] %vm2059, %v5432
  %5473 = vst.msk [vmem:[%s5463 + $0x24] sm:$0xf] %vm2059, %v5434
  %5474 = vst.msk [vmem:[%s5463 + $0x28] sm:$0xf] %vm2059, %v5436
  %5475 = vst.msk [vmem:[%s5463 + $0x2c] sm:$0xf] %vm2059, %v5438
  %5476 = vst.msk [vmem:[%s5463 + $0x30] sm:$0xf] %vm2059, %v5440
  %5477 = vst.msk [vmem:[%s5463 + $0x34] sm:$0xf] %vm2059, %v5442
  %5478 = vst.msk [vmem:[%s5463 + $0x38] sm:$0xf] %vm2059, %v5444
  %5479 = vst.msk [vmem:[%s5463 + $0x3c] sm:$0xf] %vm2059, %v5446
  %s5480 = scalar_lea.vmem [#allocation3], 320
  %v5481 = vld [vmem:[%s5480] sm:$0xf]
  %v5482 = vld [vmem:[%s5480 + $0x4] sm:$0xf]
  %v5483 = vld [vmem:[%s5480 + $0x8] sm:$0xf]
  %v5484 = vld [vmem:[%s5480 + $0xc] sm:$0xf]
  %v5485 = vld [vmem:[%s5480 + $0x10] sm:$0xf]
  %v5486 = vld [vmem:[%s5480 + $0x14] sm:$0xf]
  %v5487 = vld [vmem:[%s5480 + $0x18] sm:$0xf]
  %v5488 = vld [vmem:[%s5480 + $0x1c] sm:$0xf]
  %v5489 = vld [vmem:[%s5480 + $0x20] sm:$0xf]
  %v5490 = vld [vmem:[%s5480 + $0x24] sm:$0xf]
  %v5491 = vld [vmem:[%s5480 + $0x28] sm:$0xf]
  %v5492 = vld [vmem:[%s5480 + $0x2c] sm:$0xf]
  %v5493 = vld [vmem:[%s5480 + $0x30] sm:$0xf]
  %v5494 = vld [vmem:[%s5480 + $0x34] sm:$0xf]
  %v5495 = vld [vmem:[%s5480 + $0x38] sm:$0xf]
  %v5496 = vld [vmem:[%s5480 + $0x3c] sm:$0xf]
  %v5497 = vunpack.c.l.bf16 %v5481
  %v5498 = vunpack.c.l.bf16 %v5482
  %v5499 = vunpack.c.l.bf16 %v5483
  %v5500 = vunpack.c.l.bf16 %v5484
  %v5501 = vunpack.c.l.bf16 %v5485
  %v5502 = vunpack.c.l.bf16 %v5486
  %v5503 = vunpack.c.l.bf16 %v5487
  %v5504 = vunpack.c.l.bf16 %v5488
  %v5505 = vunpack.c.l.bf16 %v5489
  %v5506 = vunpack.c.l.bf16 %v5490
  %v5507 = vunpack.c.l.bf16 %v5491
  %v5508 = vunpack.c.l.bf16 %v5492
  %v5509 = vunpack.c.l.bf16 %v5493
  %v5510 = vunpack.c.l.bf16 %v5494
  %v5511 = vunpack.c.l.bf16 %v5495
  %v5512 = vunpack.c.l.bf16 %v5496
  %v5513 = vunpack.c.l.b16 %v5383
  %v5514 = vunpack.c.l.b16 %v5384
  %v5515 = vunpack.c.l.b16 %v5385
  %v5516 = vunpack.c.l.b16 %v5386
  %v5517 = vunpack.c.l.b16 %v5387
  %v5518 = vunpack.c.l.b16 %v5388
  %v5519 = vunpack.c.l.b16 %v5389
  %v5520 = vunpack.c.l.b16 %v5390
  %v5521 = vunpack.c.l.b16 %v5391
  %v5522 = vunpack.c.l.b16 %v5392
  %v5523 = vunpack.c.l.b16 %v5393
  %v5524 = vunpack.c.l.b16 %v5394
  %v5525 = vunpack.c.l.b16 %v5395
  %v5526 = vunpack.c.l.b16 %v5396
  %v5527 = vunpack.c.l.b16 %v5397
  %v5528 = vunpack.c.l.b16 %v5398
  %v5529 = vpack.c.b16 %v5514, %v5513
  %v5530 = vpack.c.b16 %v5516, %v5515
  %v5531 = vpack.c.b16 %v5518, %v5517
  %v5532 = vpack.c.b16 %v5520, %v5519
  %v5533 = vpack.c.b16 %v5522, %v5521
  %v5534 = vpack.c.b16 %v5524, %v5523
  %v5535 = vpack.c.b16 %v5526, %v5525
  %v5536 = vpack.c.b16 %v5528, %v5527
  %5537 = vrot.lane.b32.xlu0 %v5529, 64
  %v5538 = vpop.permute.xlu0 %5537
  %5539 = vrot.lane.b32.xlu0 %v5530, 64
  %v5540 = vpop.permute.xlu0 %5539
  %5541 = vrot.lane.b32.xlu0 %v5531, 64
  %v5542 = vpop.permute.xlu0 %5541
  %5543 = vrot.lane.b32.xlu0 %v5532, 64
  %v5544 = vpop.permute.xlu0 %5543
  %5545 = vrot.lane.b32.xlu0 %v5533, 64
  %v5546 = vpop.permute.xlu0 %5545
  %5547 = vrot.lane.b32.xlu0 %v5534, 64
  %v5548 = vpop.permute.xlu0 %5547
  %5549 = vrot.lane.b32.xlu0 %v5535, 64
  %v5550 = vpop.permute.xlu0 %5549
  %5551 = vrot.lane.b32.xlu0 %v5536, 64
  %v5552 = vpop.permute.xlu0 %5551
  %v5554 = vsel %vm1318, %v5538, 0
  %v5557 = vsel %vm1318, %v5540, 0
  %v5560 = vsel %vm1318, %v5542, 0
  %v5563 = vsel %vm1318, %v5544, 0
  %v5566 = vsel %vm1318, %v5546, 0
  %v5569 = vsel %vm1318, %v5548, 0
  %v5572 = vsel %vm1318, %v5550, 0
  %v5575 = vsel %vm1318, %v5552, 0
  %5577 = vmatpush.bf16.msra.mxu0 0
  %5578 = vmatpush.bf16.msra.mxu0 0
  %5579 = vmatpush.bf16.msra.mxu0 0
  %5580 = vmatpush.bf16.msra.mxu0 0
  %5581 = vmatpush.bf16.msra.mxu0 0
  %5582 = vmatpush.bf16.msra.mxu0 0
  %5583 = vmatpush.bf16.msra.mxu0 %v1315
  %5584 = vmatpush.bf16.msra.mxu0 %v1314
  %5585 = vmatmul.bf16.gmra.mxu0 %v5554
  %v5586 = vpop.f32.mrf.mxu0
  %v5587 = vadd.f32 0.0, %v5586
  %v5588 = vpop.f32.mrf.mxu0
  %v5589 = vadd.f32 0.0, %v5588
  %5590 = vmatmul.bf16.gmra.mxu0 %v5557
  %v5591 = vpop.f32.mrf.mxu0
  %v5592 = vadd.f32 0.0, %v5591
  %v5593 = vpop.f32.mrf.mxu0
  %v5594 = vadd.f32 0.0, %v5593
  %5595 = vmatmul.bf16.gmra.mxu0 %v5560
  %v5596 = vpop.f32.mrf.mxu0
  %v5597 = vadd.f32 0.0, %v5596
  %v5598 = vpop.f32.mrf.mxu0
  %v5599 = vadd.f32 0.0, %v5598
  %5600 = vmatmul.bf16.gmra.mxu0 %v5563
  %v5601 = vpop.f32.mrf.mxu0
  %v5602 = vadd.f32 0.0, %v5601
  %v5603 = vpop.f32.mrf.mxu0
  %v5604 = vadd.f32 0.0, %v5603
  %5605 = vmatmul.bf16.gmra.mxu0 %v5566
  %v5606 = vpop.f32.mrf.mxu0
  %v5607 = vadd.f32 0.0, %v5606
  %v5608 = vpop.f32.mrf.mxu0
  %v5609 = vadd.f32 0.0, %v5608
  %5610 = vmatmul.bf16.gmra.mxu0 %v5569
  %v5611 = vpop.f32.mrf.mxu0
  %v5612 = vadd.f32 0.0, %v5611
  %v5613 = vpop.f32.mrf.mxu0
  %v5614 = vadd.f32 0.0, %v5613
  %5615 = vmatmul.bf16.gmra.mxu0 %v5572
  %v5616 = vpop.f32.mrf.mxu0
  %v5617 = vadd.f32 0.0, %v5616
  %v5618 = vpop.f32.mrf.mxu0
  %v5619 = vadd.f32 0.0, %v5618
  %5620 = vmatmul.bf16.gmra.mxu0 %v5575
  %v5621 = vpop.f32.mrf.mxu0
  %v5622 = vadd.f32 0.0, %v5621
  %v5623 = vpop.f32.mrf.mxu0
  %v5624 = vadd.f32 0.0, %v5623
  %5625 = vdwg.mxu0
  %v5626 = vadd.f32 %v5497, %v5587
  %v5627 = vadd.f32 %v5498, %v5589
  %v5628 = vadd.f32 %v5499, %v5592
  %v5629 = vadd.f32 %v5500, %v5594
  %v5630 = vadd.f32 %v5501, %v5597
  %v5631 = vadd.f32 %v5502, %v5599
  %v5632 = vadd.f32 %v5503, %v5602
  %v5633 = vadd.f32 %v5504, %v5604
  %v5634 = vadd.f32 %v5505, %v5607
  %v5635 = vadd.f32 %v5506, %v5609
  %v5636 = vadd.f32 %v5507, %v5612
  %v5637 = vadd.f32 %v5508, %v5614
  %v5638 = vadd.f32 %v5509, %v5617
  %v5639 = vadd.f32 %v5510, %v5619
  %v5640 = vadd.f32 %v5511, %v5622
  %v5641 = vadd.f32 %v5512, %v5624
  %v5642 = vxor.u32 %v5626, 2147483648
  %v5643 = vxor.u32 %v5627, 2147483648
  %v5644 = vxor.u32 %v5628, 2147483648
  %v5645 = vxor.u32 %v5629, 2147483648
  %v5646 = vxor.u32 %v5630, 2147483648
  %v5647 = vxor.u32 %v5631, 2147483648
  %v5648 = vxor.u32 %v5632, 2147483648
  %v5649 = vxor.u32 %v5633, 2147483648
  %v5650 = vxor.u32 %v5634, 2147483648
  %v5651 = vxor.u32 %v5635, 2147483648
  %v5652 = vxor.u32 %v5636, 2147483648
  %v5653 = vxor.u32 %v5637, 2147483648
  %v5654 = vxor.u32 %v5638, 2147483648
  %v5655 = vxor.u32 %v5639, 2147483648
  %v5656 = vxor.u32 %v5640, 2147483648
  %v5657 = vxor.u32 %v5641, 2147483648
  %v5658 = vmul.f32 %v5642, 1.442695
  %v5659 = vpow.pop %v5658
  %v5660 = vmul.f32 %v5643, 1.442695
  %v5661 = vpow.pop %v5660
  %v5662 = vmul.f32 %v5644, 1.442695
  %v5663 = vpow.pop %v5662
  %v5664 = vmul.f32 %v5645, 1.442695
  %v5665 = vpow.pop %v5664
  %v5666 = vmul.f32 %v5646, 1.442695
  %v5667 = vpow.pop %v5666
  %v5668 = vmul.f32 %v5647, 1.442695
  %v5669 = vpow.pop %v5668
  %v5670 = vmul.f32 %v5648, 1.442695
  %v5671 = vpow.pop %v5670
  %v5672 = vmul.f32 %v5649, 1.442695
  %v5673 = vpow.pop %v5672
  %v5674 = vmul.f32 %v5650, 1.442695
  %v5675 = vpow.pop %v5674
  %v5676 = vmul.f32 %v5651, 1.442695
  %v5677 = vpow.pop %v5676
  %v5678 = vmul.f32 %v5652, 1.442695
  %v5679 = vpow.pop %v5678
  %v5680 = vmul.f32 %v5653, 1.442695
  %v5681 = vpow.pop %v5680
  %v5682 = vmul.f32 %v5654, 1.442695
  %v5683 = vpow.pop %v5682
  %v5684 = vmul.f32 %v5655, 1.442695
  %v5685 = vpow.pop %v5684
  %v5686 = vmul.f32 %v5656, 1.442695
  %v5687 = vpow.pop %v5686
  %v5688 = vmul.f32 %v5657, 1.442695
  %v5689 = vpow.pop %v5688
  %v5690 = vadd.f32 %v5659, 1.0
  %v5691 = vadd.f32 %v5661, 1.0
  %v5692 = vadd.f32 %v5663, 1.0
  %v5693 = vadd.f32 %v5665, 1.0
  %v5694 = vadd.f32 %v5667, 1.0
  %v5695 = vadd.f32 %v5669, 1.0
  %v5696 = vadd.f32 %v5671, 1.0
  %v5697 = vadd.f32 %v5673, 1.0
  %v5698 = vadd.f32 %v5675, 1.0
  %v5699 = vadd.f32 %v5677, 1.0
  %v5700 = vadd.f32 %v5679, 1.0
  %v5701 = vadd.f32 %v5681, 1.0
  %v5702 = vadd.f32 %v5683, 1.0
  %v5703 = vadd.f32 %v5685, 1.0
  %v5704 = vadd.f32 %v5687, 1.0
  %v5705 = vadd.f32 %v5689, 1.0
  %v5706 = vrcp.pop %v5690
  %v5707 = vmul.f32 %v5690, %v5706
  %v5708 = vsub.f32 1.0, %v5707
  %v5709 = vmul.f32 %v5706, %v5708
  %v5710 = vadd.f32 %v5706, %v5709
  %vm5711 = vweird.f32 %v5690
  %vm5712 = vweird.f32 %v5706
  %vm5713 = vmor %vm5711, %vm5712
  %v5714 = vsel %vm5713, %v5706, %v5710
  %v5715 = vand.u32 2147483647, %v5690
  %vm5716 = vcmp.eq.f32.partialorder %v5715, 8.507059e+37
  %v5717 = vand.u32 %v5690, 2147483648
  %v5718 = vor.u32 1.1754944e-38, %v5717
  %v5719 = vsel %vm5716, %v5718, %v5714
  %v5720 = vmul.f32 1.0, %v5719
  %v5721 = vrcp.pop %v5691
  %v5722 = vmul.f32 %v5691, %v5721
  %v5723 = vsub.f32 1.0, %v5722
  %v5724 = vmul.f32 %v5721, %v5723
  %v5725 = vadd.f32 %v5721, %v5724
  %vm5726 = vweird.f32 %v5691
  %vm5727 = vweird.f32 %v5721
  %vm5728 = vmor %vm5726, %vm5727
  %v5729 = vsel %vm5728, %v5721, %v5725
  %v5730 = vand.u32 2147483647, %v5691
  %vm5731 = vcmp.eq.f32.partialorder %v5730, 8.507059e+37
  %v5732 = vand.u32 %v5691, 2147483648
  %v5733 = vor.u32 1.1754944e-38, %v5732
  %v5734 = vsel %vm5731, %v5733, %v5729
  %v5735 = vmul.f32 1.0, %v5734
  %v5736 = vrcp.pop %v5692
  %v5737 = vmul.f32 %v5692, %v5736
  %v5738 = vsub.f32 1.0, %v5737
  %v5739 = vmul.f32 %v5736, %v5738
  %v5740 = vadd.f32 %v5736, %v5739
  %vm5741 = vweird.f32 %v5692
  %vm5742 = vweird.f32 %v5736
  %vm5743 = vmor %vm5741, %vm5742
  %v5744 = vsel %vm5743, %v5736, %v5740
  %v5745 = vand.u32 2147483647, %v5692
  %vm5746 = vcmp.eq.f32.partialorder %v5745, 8.507059e+37
  %v5747 = vand.u32 %v5692, 2147483648
  %v5748 = vor.u32 1.1754944e-38, %v5747
  %v5749 = vsel %vm5746, %v5748, %v5744
  %v5750 = vmul.f32 1.0, %v5749
  %v5751 = vrcp.pop %v5693
  %v5752 = vmul.f32 %v5693, %v5751
  %v5753 = vsub.f32 1.0, %v5752
  %v5754 = vmul.f32 %v5751, %v5753
  %v5755 = vadd.f32 %v5751, %v5754
  %vm5756 = vweird.f32 %v5693
  %vm5757 = vweird.f32 %v5751
  %vm5758 = vmor %vm5756, %vm5757
  %v5759 = vsel %vm5758, %v5751, %v5755
  %v5760 = vand.u32 2147483647, %v5693
  %vm5761 = vcmp.eq.f32.partialorder %v5760, 8.507059e+37
  %v5762 = vand.u32 %v5693, 2147483648
  %v5763 = vor.u32 1.1754944e-38, %v5762
  %v5764 = vsel %vm5761, %v5763, %v5759
  %v5765 = vmul.f32 1.0, %v5764
  %v5766 = vrcp.pop %v5694
  %v5767 = vmul.f32 %v5694, %v5766
  %v5768 = vsub.f32 1.0, %v5767
  %v5769 = vmul.f32 %v5766, %v5768
  %v5770 = vadd.f32 %v5766, %v5769
  %vm5771 = vweird.f32 %v5694
  %vm5772 = vweird.f32 %v5766
  %vm5773 = vmor %vm5771, %vm5772
  %v5774 = vsel %vm5773, %v5766, %v5770
  %v5775 = vand.u32 2147483647, %v5694
  %vm5776 = vcmp.eq.f32.partialorder %v5775, 8.507059e+37
  %v5777 = vand.u32 %v5694, 2147483648
  %v5778 = vor.u32 1.1754944e-38, %v5777
  %v5779 = vsel %vm5776, %v5778, %v5774
  %v5780 = vmul.f32 1.0, %v5779
  %v5781 = vrcp.pop %v5695
  %v5782 = vmul.f32 %v5695, %v5781
  %v5783 = vsub.f32 1.0, %v5782
  %v5784 = vmul.f32 %v5781, %v5783
  %v5785 = vadd.f32 %v5781, %v5784
  %vm5786 = vweird.f32 %v5695
  %vm5787 = vweird.f32 %v5781
  %vm5788 = vmor %vm5786, %vm5787
  %v5789 = vsel %vm5788, %v5781, %v5785
  %v5790 = vand.u32 2147483647, %v5695
  %vm5791 = vcmp.eq.f32.partialorder %v5790, 8.507059e+37
  %v5792 = vand.u32 %v5695, 2147483648
  %v5793 = vor.u32 1.1754944e-38, %v5792
  %v5794 = vsel %vm5791, %v5793, %v5789
  %v5795 = vmul.f32 1.0, %v5794
  %v5796 = vrcp.pop %v5696
  %v5797 = vmul.f32 %v5696, %v5796
  %v5798 = vsub.f32 1.0, %v5797
  %v5799 = vmul.f32 %v5796, %v5798
  %v5800 = vadd.f32 %v5796, %v5799
  %vm5801 = vweird.f32 %v5696
  %vm5802 = vweird.f32 %v5796
  %vm5803 = vmor %vm5801, %vm5802
  %v5804 = vsel %vm5803, %v5796, %v5800
  %v5805 = vand.u32 2147483647, %v5696
  %vm5806 = vcmp.eq.f32.partialorder %v5805, 8.507059e+37
  %v5807 = vand.u32 %v5696, 2147483648
  %v5808 = vor.u32 1.1754944e-38, %v5807
  %v5809 = vsel %vm5806, %v5808, %v5804
  %v5810 = vmul.f32 1.0, %v5809
  %v5811 = vrcp.pop %v5697
  %v5812 = vmul.f32 %v5697, %v5811
  %v5813 = vsub.f32 1.0, %v5812
  %v5814 = vmul.f32 %v5811, %v5813
  %v5815 = vadd.f32 %v5811, %v5814
  %vm5816 = vweird.f32 %v5697
  %vm5817 = vweird.f32 %v5811
  %vm5818 = vmor %vm5816, %vm5817
  %v5819 = vsel %vm5818, %v5811, %v5815
  %v5820 = vand.u32 2147483647, %v5697
  %vm5821 = vcmp.eq.f32.partialorder %v5820, 8.507059e+37
  %v5822 = vand.u32 %v5697, 2147483648
  %v5823 = vor.u32 1.1754944e-38, %v5822
  %v5824 = vsel %vm5821, %v5823, %v5819
  %v5825 = vmul.f32 1.0, %v5824
  %v5826 = vrcp.pop %v5698
  %v5827 = vmul.f32 %v5698, %v5826
  %v5828 = vsub.f32 1.0, %v5827
  %v5829 = vmul.f32 %v5826, %v5828
  %v5830 = vadd.f32 %v5826, %v5829
  %vm5831 = vweird.f32 %v5698
  %vm5832 = vweird.f32 %v5826
  %vm5833 = vmor %vm5831, %vm5832
  %v5834 = vsel %vm5833, %v5826, %v5830
  %v5835 = vand.u32 2147483647, %v5698
  %vm5836 = vcmp.eq.f32.partialorder %v5835, 8.507059e+37
  %v5837 = vand.u32 %v5698, 2147483648
  %v5838 = vor.u32 1.1754944e-38, %v5837
  %v5839 = vsel %vm5836, %v5838, %v5834
  %v5840 = vmul.f32 1.0, %v5839
  %v5841 = vrcp.pop %v5699
  %v5842 = vmul.f32 %v5699, %v5841
  %v5843 = vsub.f32 1.0, %v5842
  %v5844 = vmul.f32 %v5841, %v5843
  %v5845 = vadd.f32 %v5841, %v5844
  %vm5846 = vweird.f32 %v5699
  %vm5847 = vweird.f32 %v5841
  %vm5848 = vmor %vm5846, %vm5847
  %v5849 = vsel %vm5848, %v5841, %v5845
  %v5850 = vand.u32 2147483647, %v5699
  %vm5851 = vcmp.eq.f32.partialorder %v5850, 8.507059e+37
  %v5852 = vand.u32 %v5699, 2147483648
  %v5853 = vor.u32 1.1754944e-38, %v5852
  %v5854 = vsel %vm5851, %v5853, %v5849
  %v5855 = vmul.f32 1.0, %v5854
  %v5856 = vrcp.pop %v5700
  %v5857 = vmul.f32 %v5700, %v5856
  %v5858 = vsub.f32 1.0, %v5857
  %v5859 = vmul.f32 %v5856, %v5858
  %v5860 = vadd.f32 %v5856, %v5859
  %vm5861 = vweird.f32 %v5700
  %vm5862 = vweird.f32 %v5856
  %vm5863 = vmor %vm5861, %vm5862
  %v5864 = vsel %vm5863, %v5856, %v5860
  %v5865 = vand.u32 2147483647, %v5700
  %vm5866 = vcmp.eq.f32.partialorder %v5865, 8.507059e+37
  %v5867 = vand.u32 %v5700, 2147483648
  %v5868 = vor.u32 1.1754944e-38, %v5867
  %v5869 = vsel %vm5866, %v5868, %v5864
  %v5870 = vmul.f32 1.0, %v5869
  %v5871 = vrcp.pop %v5701
  %v5872 = vmul.f32 %v5701, %v5871
  %v5873 = vsub.f32 1.0, %v5872
  %v5874 = vmul.f32 %v5871, %v5873
  %v5875 = vadd.f32 %v5871, %v5874
  %vm5876 = vweird.f32 %v5701
  %vm5877 = vweird.f32 %v5871
  %vm5878 = vmor %vm5876, %vm5877
  %v5879 = vsel %vm5878, %v5871, %v5875
  %v5880 = vand.u32 2147483647, %v5701
  %vm5881 = vcmp.eq.f32.partialorder %v5880, 8.507059e+37
  %v5882 = vand.u32 %v5701, 2147483648
  %v5883 = vor.u32 1.1754944e-38, %v5882
  %v5884 = vsel %vm5881, %v5883, %v5879
  %v5885 = vmul.f32 1.0, %v5884
  %v5886 = vrcp.pop %v5702
  %v5887 = vmul.f32 %v5702, %v5886
  %v5888 = vsub.f32 1.0, %v5887
  %v5889 = vmul.f32 %v5886, %v5888
  %v5890 = vadd.f32 %v5886, %v5889
  %vm5891 = vweird.f32 %v5702
  %vm5892 = vweird.f32 %v5886
  %vm5893 = vmor %vm5891, %vm5892
  %v5894 = vsel %vm5893, %v5886, %v5890
  %v5895 = vand.u32 2147483647, %v5702
  %vm5896 = vcmp.eq.f32.partialorder %v5895, 8.507059e+37
  %v5897 = vand.u32 %v5702, 2147483648
  %v5898 = vor.u32 1.1754944e-38, %v5897
  %v5899 = vsel %vm5896, %v5898, %v5894
  %v5900 = vmul.f32 1.0, %v5899
  %v5901 = vrcp.pop %v5703
  %v5902 = vmul.f32 %v5703, %v5901
  %v5903 = vsub.f32 1.0, %v5902
  %v5904 = vmul.f32 %v5901, %v5903
  %v5905 = vadd.f32 %v5901, %v5904
  %vm5906 = vweird.f32 %v5703
  %vm5907 = vweird.f32 %v5901
  %vm5908 = vmor %vm5906, %vm5907
  %v5909 = vsel %vm5908, %v5901, %v5905
  %v5910 = vand.u32 2147483647, %v5703
  %vm5911 = vcmp.eq.f32.partialorder %v5910, 8.507059e+37
  %v5912 = vand.u32 %v5703, 2147483648
  %v5913 = vor.u32 1.1754944e-38, %v5912
  %v5914 = vsel %vm5911, %v5913, %v5909
  %v5915 = vmul.f32 1.0, %v5914
  %v5916 = vrcp.pop %v5704
  %v5917 = vmul.f32 %v5704, %v5916
  %v5918 = vsub.f32 1.0, %v5917
  %v5919 = vmul.f32 %v5916, %v5918
  %v5920 = vadd.f32 %v5916, %v5919
  %vm5921 = vweird.f32 %v5704
  %vm5922 = vweird.f32 %v5916
  %vm5923 = vmor %vm5921, %vm5922
  %v5924 = vsel %vm5923, %v5916, %v5920
  %v5925 = vand.u32 2147483647, %v5704
  %vm5926 = vcmp.eq.f32.partialorder %v5925, 8.507059e+37
  %v5927 = vand.u32 %v5704, 2147483648
  %v5928 = vor.u32 1.1754944e-38, %v5927
  %v5929 = vsel %vm5926, %v5928, %v5924
  %v5930 = vmul.f32 1.0, %v5929
  %v5931 = vrcp.pop %v5705
  %v5932 = vmul.f32 %v5705, %v5931
  %v5933 = vsub.f32 1.0, %v5932
  %v5934 = vmul.f32 %v5931, %v5933
  %v5935 = vadd.f32 %v5931, %v5934
  %vm5936 = vweird.f32 %v5705
  %vm5937 = vweird.f32 %v5931
  %vm5938 = vmor %vm5936, %vm5937
  %v5939 = vsel %vm5938, %v5931, %v5935
  %v5940 = vand.u32 2147483647, %v5705
  %vm5941 = vcmp.eq.f32.partialorder %v5940, 8.507059e+37
  %v5942 = vand.u32 %v5705, 2147483648
  %v5943 = vor.u32 1.1754944e-38, %v5942
  %v5944 = vsel %vm5941, %v5943, %v5939
  %v5945 = vmul.f32 1.0, %v5944
  %v5946 = vtanh.pop %v5626
  %v5947 = vtanh.pop %v5627
  %v5948 = vtanh.pop %v5628
  %v5949 = vtanh.pop %v5629
  %v5950 = vtanh.pop %v5630
  %v5951 = vtanh.pop %v5631
  %v5952 = vtanh.pop %v5632
  %v5953 = vtanh.pop %v5633
  %v5954 = vtanh.pop %v5634
  %v5955 = vtanh.pop %v5635
  %v5956 = vtanh.pop %v5636
  %v5957 = vtanh.pop %v5637
  %v5958 = vtanh.pop %v5638
  %v5959 = vtanh.pop %v5639
  %v5960 = vtanh.pop %v5640
  %v5961 = vtanh.pop %v5641
  %v5962 = vmul.f32 %v5720, %v5271
  %v5963 = vmul.f32 %v5735, %v5272
  %v5964 = vmul.f32 %v5750, %v5273
  %v5965 = vmul.f32 %v5765, %v5274
  %v5966 = vmul.f32 %v5780, %v5275
  %v5967 = vmul.f32 %v5795, %v5276
  %v5968 = vmul.f32 %v5810, %v5277
  %v5969 = vmul.f32 %v5825, %v5278
  %v5970 = vmul.f32 %v5840, %v5279
  %v5971 = vmul.f32 %v5855, %v5280
  %v5972 = vmul.f32 %v5870, %v5281
  %v5973 = vmul.f32 %v5885, %v5282
  %v5974 = vmul.f32 %v5900, %v5283
  %v5975 = vmul.f32 %v5915, %v5284
  %v5976 = vmul.f32 %v5930, %v5285
  %v5977 = vmul.f32 %v5945, %v5286
  %5994 = vrot.lane.b32.xlu0 %v5946, 32
  %v5995 = vpop.permute.xlu0 %5994
  %5996 = vrot.lane.b32.xlu0 %v5947, 32
  %v5997 = vpop.permute.xlu0 %5996
  %5998 = vrot.lane.b32.xlu0 %v5948, 32
  %v5999 = vpop.permute.xlu0 %5998
  %6000 = vrot.lane.b32.xlu0 %v5949, 32
  %v6001 = vpop.permute.xlu0 %6000
  %6002 = vrot.lane.b32.xlu0 %v5950, 32
  %v6003 = vpop.permute.xlu0 %6002
  %6004 = vrot.lane.b32.xlu0 %v5951, 32
  %v6005 = vpop.permute.xlu0 %6004
  %6006 = vrot.lane.b32.xlu0 %v5952, 32
  %v6007 = vpop.permute.xlu0 %6006
  %6008 = vrot.lane.b32.xlu0 %v5953, 32
  %v6009 = vpop.permute.xlu0 %6008
  %6010 = vrot.lane.b32.xlu0 %v5954, 32
  %v6011 = vpop.permute.xlu0 %6010
  %6012 = vrot.lane.b32.xlu0 %v5955, 32
  %v6013 = vpop.permute.xlu0 %6012
  %6014 = vrot.lane.b32.xlu0 %v5956, 32
  %v6015 = vpop.permute.xlu0 %6014
  %6016 = vrot.lane.b32.xlu0 %v5957, 32
  %v6017 = vpop.permute.xlu0 %6016
  %6018 = vrot.lane.b32.xlu0 %v5958, 32
  %v6019 = vpop.permute.xlu0 %6018
  %6020 = vrot.lane.b32.xlu0 %v5959, 32
  %v6021 = vpop.permute.xlu0 %6020
  %6022 = vrot.lane.b32.xlu0 %v5960, 32
  %v6023 = vpop.permute.xlu0 %6022
  %6024 = vrot.lane.b32.xlu0 %v5961, 32
  %v6025 = vpop.permute.xlu0 %6024
  %v6042 = vmul.f32 %v5720, %v5995
  %v6043 = vmul.f32 %v5735, %v5997
  %v6044 = vmul.f32 %v5750, %v5999
  %v6045 = vmul.f32 %v5765, %v6001
  %v6046 = vmul.f32 %v5780, %v6003
  %v6047 = vmul.f32 %v5795, %v6005
  %v6048 = vmul.f32 %v5810, %v6007
  %v6049 = vmul.f32 %v5825, %v6009
  %v6050 = vmul.f32 %v5840, %v6011
  %v6051 = vmul.f32 %v5855, %v6013
  %v6052 = vmul.f32 %v5870, %v6015
  %v6053 = vmul.f32 %v5885, %v6017
  %v6054 = vmul.f32 %v5900, %v6019
  %v6055 = vmul.f32 %v5915, %v6021
  %v6056 = vmul.f32 %v5930, %v6023
  %v6057 = vmul.f32 %v5945, %v6025
  %6074 = vrot.lane.b32.xlu0 %v6042, 32
  %v6075 = vpop.permute.xlu0 %6074
  %6076 = vrot.lane.b32.xlu0 %v6043, 32
  %v6077 = vpop.permute.xlu0 %6076
  %6078 = vrot.lane.b32.xlu0 %v6044, 32
  %v6079 = vpop.permute.xlu0 %6078
  %6080 = vrot.lane.b32.xlu0 %v6045, 32
  %v6081 = vpop.permute.xlu0 %6080
  %6082 = vrot.lane.b32.xlu0 %v6046, 32
  %v6083 = vpop.permute.xlu0 %6082
  %6084 = vrot.lane.b32.xlu0 %v6047, 32
  %v6085 = vpop.permute.xlu0 %6084
  %6086 = vrot.lane.b32.xlu0 %v6048, 32
  %v6087 = vpop.permute.xlu0 %6086
  %6088 = vrot.lane.b32.xlu0 %v6049, 32
  %v6089 = vpop.permute.xlu0 %6088
  %6090 = vrot.lane.b32.xlu0 %v6050, 32
  %v6091 = vpop.permute.xlu0 %6090
  %6092 = vrot.lane.b32.xlu0 %v6051, 32
  %v6093 = vpop.permute.xlu0 %6092
  %6094 = vrot.lane.b32.xlu0 %v6052, 32
  %v6095 = vpop.permute.xlu0 %6094
  %6096 = vrot.lane.b32.xlu0 %v6053, 32
  %v6097 = vpop.permute.xlu0 %6096
  %6098 = vrot.lane.b32.xlu0 %v6054, 32
  %v6099 = vpop.permute.xlu0 %6098
  %6100 = vrot.lane.b32.xlu0 %v6055, 32
  %v6101 = vpop.permute.xlu0 %6100
  %6102 = vrot.lane.b32.xlu0 %v6056, 32
  %v6103 = vpop.permute.xlu0 %6102
  %6104 = vrot.lane.b32.xlu0 %v6057, 32
  %v6105 = vpop.permute.xlu0 %6104
  %v6122 = vadd.f32 %v5962, %v6075
  %v6123 = vadd.f32 %v5963, %v6077
  %v6124 = vadd.f32 %v5964, %v6079
  %v6125 = vadd.f32 %v5965, %v6081
  %v6126 = vadd.f32 %v5966, %v6083
  %v6127 = vadd.f32 %v5967, %v6085
  %v6128 = vadd.f32 %v5968, %v6087
  %v6129 = vadd.f32 %v5969, %v6089
  %v6130 = vadd.f32 %v5970, %v6091
  %v6131 = vadd.f32 %v5971, %v6093
  %v6132 = vadd.f32 %v5972, %v6095
  %v6133 = vadd.f32 %v5973, %v6097
  %v6134 = vadd.f32 %v5974, %v6099
  %v6135 = vadd.f32 %v5975, %v6101
  %v6136 = vadd.f32 %v5976, %v6103
  %v6137 = vadd.f32 %v5977, %v6105
  %v6138 = vtanh.pop %v6122
  %v6139 = vtanh.pop %v6123
  %v6140 = vtanh.pop %v6124
  %v6141 = vtanh.pop %v6125
  %v6142 = vtanh.pop %v6126
  %v6143 = vtanh.pop %v6127
  %v6144 = vtanh.pop %v6128
  %v6145 = vtanh.pop %v6129
  %v6146 = vtanh.pop %v6130
  %v6147 = vtanh.pop %v6131
  %v6148 = vtanh.pop %v6132
  %v6149 = vtanh.pop %v6133
  %v6150 = vtanh.pop %v6134
  %v6151 = vtanh.pop %v6135
  %v6152 = vtanh.pop %v6136
  %v6153 = vtanh.pop %v6137
  %6170 = vrot.lane.b32.xlu0 %v6138, 32
  %v6171 = vpop.permute.xlu0 %6170
  %6172 = vrot.lane.b32.xlu0 %v6139, 32
  %v6173 = vpop.permute.xlu0 %6172
  %6174 = vrot.lane.b32.xlu0 %v6140, 32
  %v6175 = vpop.permute.xlu0 %6174
  %6176 = vrot.lane.b32.xlu0 %v6141, 32
  %v6177 = vpop.permute.xlu0 %6176
  %6178 = vrot.lane.b32.xlu0 %v6142, 32
  %v6179 = vpop.permute.xlu0 %6178
  %6180 = vrot.lane.b32.xlu0 %v6143, 32
  %v6181 = vpop.permute.xlu0 %6180
  %6182 = vrot.lane.b32.xlu0 %v6144, 32
  %v6183 = vpop.permute.xlu0 %6182
  %6184 = vrot.lane.b32.xlu0 %v6145, 32
  %v6185 = vpop.permute.xlu0 %6184
  %6186 = vrot.lane.b32.xlu0 %v6146, 32
  %v6187 = vpop.permute.xlu0 %6186
  %6188 = vrot.lane.b32.xlu0 %v6147, 32
  %v6189 = vpop.permute.xlu0 %6188
  %6190 = vrot.lane.b32.xlu0 %v6148, 32
  %v6191 = vpop.permute.xlu0 %6190
  %6192 = vrot.lane.b32.xlu0 %v6149, 32
  %v6193 = vpop.permute.xlu0 %6192
  %6194 = vrot.lane.b32.xlu0 %v6150, 32
  %v6195 = vpop.permute.xlu0 %6194
  %6196 = vrot.lane.b32.xlu0 %v6151, 32
  %v6197 = vpop.permute.xlu0 %6196
  %6198 = vrot.lane.b32.xlu0 %v6152, 32
  %v6199 = vpop.permute.xlu0 %6198
  %6200 = vrot.lane.b32.xlu0 %v6153, 32
  %v6201 = vpop.permute.xlu0 %6200
  %v6218 = vmul.f32 %v5720, %v6171
  %v6219 = vmul.f32 %v5735, %v6173
  %v6220 = vmul.f32 %v5750, %v6175
  %v6221 = vmul.f32 %v5765, %v6177
  %v6222 = vmul.f32 %v5780, %v6179
  %v6223 = vmul.f32 %v5795, %v6181
  %v6224 = vmul.f32 %v5810, %v6183
  %v6225 = vmul.f32 %v5825, %v6185
  %v6226 = vmul.f32 %v5840, %v6187
  %v6227 = vmul.f32 %v5855, %v6189
  %v6228 = vmul.f32 %v5870, %v6191
  %v6229 = vmul.f32 %v5885, %v6193
  %v6230 = vmul.f32 %v5900, %v6195
  %v6231 = vmul.f32 %v5915, %v6197
  %v6232 = vmul.f32 %v5930, %v6199
  %v6233 = vmul.f32 %v5945, %v6201
  %v6234 = vpack.c.bf16 %v6218, %v6218
  %v6235 = vpack.c.bf16 %v6219, %v6219
  %v6236 = vpack.c.bf16 %v6220, %v6220
  %v6237 = vpack.c.bf16 %v6221, %v6221
  %v6238 = vpack.c.bf16 %v6222, %v6222
  %v6239 = vpack.c.bf16 %v6223, %v6223
  %v6240 = vpack.c.bf16 %v6224, %v6224
  %v6241 = vpack.c.bf16 %v6225, %v6225
  %v6242 = vpack.c.bf16 %v6226, %v6226
  %v6243 = vpack.c.bf16 %v6227, %v6227
  %v6244 = vpack.c.bf16 %v6228, %v6228
  %v6245 = vpack.c.bf16 %v6229, %v6229
  %v6246 = vpack.c.bf16 %v6230, %v6230
  %v6247 = vpack.c.bf16 %v6231, %v6231
  %v6248 = vpack.c.bf16 %v6232, %v6232
  %v6249 = vpack.c.bf16 %v6233, %v6233
  %6266 = vrot.lane.b32.xlu0 %v6234, 64
  %v6267 = vpop.permute.xlu0 %6266
  %6268 = vrot.lane.b32.xlu0 %v6235, 64
  %v6269 = vpop.permute.xlu0 %6268
  %6270 = vrot.lane.b32.xlu0 %v6236, 64
  %v6271 = vpop.permute.xlu0 %6270
  %6272 = vrot.lane.b32.xlu0 %v6237, 64
  %v6273 = vpop.permute.xlu0 %6272
  %6274 = vrot.lane.b32.xlu0 %v6238, 64
  %v6275 = vpop.permute.xlu0 %6274
  %6276 = vrot.lane.b32.xlu0 %v6239, 64
  %v6277 = vpop.permute.xlu0 %6276
  %6278 = vrot.lane.b32.xlu0 %v6240, 64
  %v6279 = vpop.permute.xlu0 %6278
  %6280 = vrot.lane.b32.xlu0 %v6241, 64
  %v6281 = vpop.permute.xlu0 %6280
  %6282 = vrot.lane.b32.xlu0 %v6242, 64
  %v6283 = vpop.permute.xlu0 %6282
  %6284 = vrot.lane.b32.xlu0 %v6243, 64
  %v6285 = vpop.permute.xlu0 %6284
  %6286 = vrot.lane.b32.xlu0 %v6244, 64
  %v6287 = vpop.permute.xlu0 %6286
  %6288 = vrot.lane.b32.xlu0 %v6245, 64
  %v6289 = vpop.permute.xlu0 %6288
  %6290 = vrot.lane.b32.xlu0 %v6246, 64
  %v6291 = vpop.permute.xlu0 %6290
  %6292 = vrot.lane.b32.xlu0 %v6247, 64
  %v6293 = vpop.permute.xlu0 %6292
  %6294 = vrot.lane.b32.xlu0 %v6248, 64
  %v6295 = vpop.permute.xlu0 %6294
  %6296 = vrot.lane.b32.xlu0 %v6249, 64
  %v6297 = vpop.permute.xlu0 %6296
  %s6314 = scalar_lea.vmem [#allocation2], 320
  %6315 = vst.msk [vmem:[%s6314] sm:$0xf] %vm2059, %v6267
  %6316 = vst.msk [vmem:[%s6314 + $0x4] sm:$0xf] %vm2059, %v6269
  %6317 = vst.msk [vmem:[%s6314 + $0x8] sm:$0xf] %vm2059, %v6271
  %6318 = vst.msk [vmem:[%s6314 + $0xc] sm:$0xf] %vm2059, %v6273
  %6319 = vst.msk [vmem:[%s6314 + $0x10] sm:$0xf] %vm2059, %v6275
  %6320 = vst.msk [vmem:[%s6314 + $0x14] sm:$0xf] %vm2059, %v6277
  %6321 = vst.msk [vmem:[%s6314 + $0x18] sm:$0xf] %vm2059, %v6279
  %6322 = vst.msk [vmem:[%s6314 + $0x1c] sm:$0xf] %vm2059, %v6281
  %6323 = vst.msk [vmem:[%s6314 + $0x20] sm:$0xf] %vm2059, %v6283
  %6324 = vst.msk [vmem:[%s6314 + $0x24] sm:$0xf] %vm2059, %v6285
  %6325 = vst.msk [vmem:[%s6314 + $0x28] sm:$0xf] %vm2059, %v6287
  %6326 = vst.msk [vmem:[%s6314 + $0x2c] sm:$0xf] %vm2059, %v6289
  %6327 = vst.msk [vmem:[%s6314 + $0x30] sm:$0xf] %vm2059, %v6291
  %6328 = vst.msk [vmem:[%s6314 + $0x34] sm:$0xf] %vm2059, %v6293
  %6329 = vst.msk [vmem:[%s6314 + $0x38] sm:$0xf] %vm2059, %v6295
  %6330 = vst.msk [vmem:[%s6314 + $0x3c] sm:$0xf] %vm2059, %v6297
  %s6331 = scalar_lea.vmem [#allocation3], 384
  %v6332 = vld [vmem:[%s6331] sm:$0xf]
  %v6333 = vld [vmem:[%s6331 + $0x4] sm:$0xf]
  %v6334 = vld [vmem:[%s6331 + $0x8] sm:$0xf]
  %v6335 = vld [vmem:[%s6331 + $0xc] sm:$0xf]
  %v6336 = vld [vmem:[%s6331 + $0x10] sm:$0xf]
  %v6337 = vld [vmem:[%s6331 + $0x14] sm:$0xf]
  %v6338 = vld [vmem:[%s6331 + $0x18] sm:$0xf]
  %v6339 = vld [vmem:[%s6331 + $0x1c] sm:$0xf]
  %v6340 = vld [vmem:[%s6331 + $0x20] sm:$0xf]
  %v6341 = vld [vmem:[%s6331 + $0x24] sm:$0xf]
  %v6342 = vld [vmem:[%s6331 + $0x28] sm:$0xf]
  %v6343 = vld [vmem:[%s6331 + $0x2c] sm:$0xf]
  %v6344 = vld [vmem:[%s6331 + $0x30] sm:$0xf]
  %v6345 = vld [vmem:[%s6331 + $0x34] sm:$0xf]
  %v6346 = vld [vmem:[%s6331 + $0x38] sm:$0xf]
  %v6347 = vld [vmem:[%s6331 + $0x3c] sm:$0xf]
  %v6348 = vunpack.c.l.bf16 %v6332
  %v6349 = vunpack.c.l.bf16 %v6333
  %v6350 = vunpack.c.l.bf16 %v6334
  %v6351 = vunpack.c.l.bf16 %v6335
  %v6352 = vunpack.c.l.bf16 %v6336
  %v6353 = vunpack.c.l.bf16 %v6337
  %v6354 = vunpack.c.l.bf16 %v6338
  %v6355 = vunpack.c.l.bf16 %v6339
  %v6356 = vunpack.c.l.bf16 %v6340
  %v6357 = vunpack.c.l.bf16 %v6341
  %v6358 = vunpack.c.l.bf16 %v6342
  %v6359 = vunpack.c.l.bf16 %v6343
  %v6360 = vunpack.c.l.bf16 %v6344
  %v6361 = vunpack.c.l.bf16 %v6345
  %v6362 = vunpack.c.l.bf16 %v6346
  %v6363 = vunpack.c.l.bf16 %v6347
  %v6364 = vunpack.c.l.b16 %v6234
  %v6365 = vunpack.c.l.b16 %v6235
  %v6366 = vunpack.c.l.b16 %v6236
  %v6367 = vunpack.c.l.b16 %v6237
  %v6368 = vunpack.c.l.b16 %v6238
  %v6369 = vunpack.c.l.b16 %v6239
  %v6370 = vunpack.c.l.b16 %v6240
  %v6371 = vunpack.c.l.b16 %v6241
  %v6372 = vunpack.c.l.b16 %v6242
  %v6373 = vunpack.c.l.b16 %v6243
  %v6374 = vunpack.c.l.b16 %v6244
  %v6375 = vunpack.c.l.b16 %v6245
  %v6376 = vunpack.c.l.b16 %v6246
  %v6377 = vunpack.c.l.b16 %v6247
  %v6378 = vunpack.c.l.b16 %v6248
  %v6379 = vunpack.c.l.b16 %v6249
  %v6380 = vpack.c.b16 %v6365, %v6364
  %v6381 = vpack.c.b16 %v6367, %v6366
  %v6382 = vpack.c.b16 %v6369, %v6368
  %v6383 = vpack.c.b16 %v6371, %v6370
  %v6384 = vpack.c.b16 %v6373, %v6372
  %v6385 = vpack.c.b16 %v6375, %v6374
  %v6386 = vpack.c.b16 %v6377, %v6376
  %v6387 = vpack.c.b16 %v6379, %v6378
  %6388 = vrot.lane.b32.xlu0 %v6380, 64
  %v6389 = vpop.permute.xlu0 %6388
  %6390 = vrot.lane.b32.xlu0 %v6381, 64
  %v6391 = vpop.permute.xlu0 %6390
  %6392 = vrot.lane.b32.xlu0 %v6382, 64
  %v6393 = vpop.permute.xlu0 %6392
  %6394 = vrot.lane.b32.xlu0 %v6383, 64
  %v6395 = vpop.permute.xlu0 %6394
  %6396 = vrot.lane.b32.xlu0 %v6384, 64
  %v6397 = vpop.permute.xlu0 %6396
  %6398 = vrot.lane.b32.xlu0 %v6385, 64
  %v6399 = vpop.permute.xlu0 %6398
  %6400 = vrot.lane.b32.xlu0 %v6386, 64
  %v6401 = vpop.permute.xlu0 %6400
  %6402 = vrot.lane.b32.xlu0 %v6387, 64
  %v6403 = vpop.permute.xlu0 %6402
  %v6405 = vsel %vm1318, %v6389, 0
  %v6408 = vsel %vm1318, %v6391, 0
  %v6411 = vsel %vm1318, %v6393, 0
  %v6414 = vsel %vm1318, %v6395, 0
  %v6417 = vsel %vm1318, %v6397, 0
  %v6420 = vsel %vm1318, %v6399, 0
  %v6423 = vsel %vm1318, %v6401, 0
  %v6426 = vsel %vm1318, %v6403, 0
  %6428 = vmatpush.bf16.msra.mxu0 0
  %6429 = vmatpush.bf16.msra.mxu0 0
  %6430 = vmatpush.bf16.msra.mxu0 0
  %6431 = vmatpush.bf16.msra.mxu0 0
  %6432 = vmatpush.bf16.msra.mxu0 0
  %6433 = vmatpush.bf16.msra.mxu0 0
  %6434 = vmatpush.bf16.msra.mxu0 %v1315
  %6435 = vmatpush.bf16.msra.mxu0 %v1314
  %6436 = vmatmul.bf16.gmra.mxu0 %v6405
  %v6437 = vpop.f32.mrf.mxu0
  %v6438 = vadd.f32 0.0, %v6437
  %v6439 = vpop.f32.mrf.mxu0
  %v6440 = vadd.f32 0.0, %v6439
  %6441 = vmatmul.bf16.gmra.mxu0 %v6408
  %v6442 = vpop.f32.mrf.mxu0
  %v6443 = vadd.f32 0.0, %v6442
  %v6444 = vpop.f32.mrf.mxu0
  %v6445 = vadd.f32 0.0, %v6444
  %6446 = vmatmul.bf16.gmra.mxu0 %v6411
  %v6447 = vpop.f32.mrf.mxu0
  %v6448 = vadd.f32 0.0, %v6447
  %v6449 = vpop.f32.mrf.mxu0
  %v6450 = vadd.f32 0.0, %v6449
  %6451 = vmatmul.bf16.gmra.mxu0 %v6414
  %v6452 = vpop.f32.mrf.mxu0
  %v6453 = vadd.f32 0.0, %v6452
  %v6454 = vpop.f32.mrf.mxu0
  %v6455 = vadd.f32 0.0, %v6454
  %6456 = vmatmul.bf16.gmra.mxu0 %v6417
  %v6457 = vpop.f32.mrf.mxu0
  %v6458 = vadd.f32 0.0, %v6457
  %v6459 = vpop.f32.mrf.mxu0
  %v6460 = vadd.f32 0.0, %v6459
  %6461 = vmatmul.bf16.gmra.mxu0 %v6420
  %v6462 = vpop.f32.mrf.mxu0
  %v6463 = vadd.f32 0.0, %v6462
  %v6464 = vpop.f32.mrf.mxu0
  %v6465 = vadd.f32 0.0, %v6464
  %6466 = vmatmul.bf16.gmra.mxu0 %v6423
  %v6467 = vpop.f32.mrf.mxu0
  %v6468 = vadd.f32 0.0, %v6467
  %v6469 = vpop.f32.mrf.mxu0
  %v6470 = vadd.f32 0.0, %v6469
  %6471 = vmatmul.bf16.gmra.mxu0 %v6426
  %v6472 = vpop.f32.mrf.mxu0
  %v6473 = vadd.f32 0.0, %v6472
  %v6474 = vpop.f32.mrf.mxu0
  %v6475 = vadd.f32 0.0, %v6474
  %6476 = vdwg.mxu0
  %v6477 = vadd.f32 %v6348, %v6438
  %v6478 = vadd.f32 %v6349, %v6440
  %v6479 = vadd.f32 %v6350, %v6443
  %v6480 = vadd.f32 %v6351, %v6445
  %v6481 = vadd.f32 %v6352, %v6448
  %v6482 = vadd.f32 %v6353, %v6450
  %v6483 = vadd.f32 %v6354, %v6453
  %v6484 = vadd.f32 %v6355, %v6455
  %v6485 = vadd.f32 %v6356, %v6458
  %v6486 = vadd.f32 %v6357, %v6460
  %v6487 = vadd.f32 %v6358, %v6463
  %v6488 = vadd.f32 %v6359, %v6465
  %v6489 = vadd.f32 %v6360, %v6468
  %v6490 = vadd.f32 %v6361, %v6470
  %v6491 = vadd.f32 %v6362, %v6473
  %v6492 = vadd.f32 %v6363, %v6475
  %v6493 = vxor.u32 %v6477, 2147483648
  %v6494 = vxor.u32 %v6478, 2147483648
  %v6495 = vxor.u32 %v6479, 2147483648
  %v6496 = vxor.u32 %v6480, 2147483648
  %v6497 = vxor.u32 %v6481, 2147483648
  %v6498 = vxor.u32 %v6482, 2147483648
  %v6499 = vxor.u32 %v6483, 2147483648
  %v6500 = vxor.u32 %v6484, 2147483648
  %v6501 = vxor.u32 %v6485, 2147483648
  %v6502 = vxor.u32 %v6486, 2147483648
  %v6503 = vxor.u32 %v6487, 2147483648
  %v6504 = vxor.u32 %v6488, 2147483648
  %v6505 = vxor.u32 %v6489, 2147483648
  %v6506 = vxor.u32 %v6490, 2147483648
  %v6507 = vxor.u32 %v6491, 2147483648
  %v6508 = vxor.u32 %v6492, 2147483648
  %v6509 = vmul.f32 %v6493, 1.442695
  %v6510 = vpow.pop %v6509
  %v6511 = vmul.f32 %v6494, 1.442695
  %v6512 = vpow.pop %v6511
  %v6513 = vmul.f32 %v6495, 1.442695
  %v6514 = vpow.pop %v6513
  %v6515 = vmul.f32 %v6496, 1.442695
  %v6516 = vpow.pop %v6515
  %v6517 = vmul.f32 %v6497, 1.442695
  %v6518 = vpow.pop %v6517
  %v6519 = vmul.f32 %v6498, 1.442695
  %v6520 = vpow.pop %v6519
  %v6521 = vmul.f32 %v6499, 1.442695
  %v6522 = vpow.pop %v6521
  %v6523 = vmul.f32 %v6500, 1.442695
  %v6524 = vpow.pop %v6523
  %v6525 = vmul.f32 %v6501, 1.442695
  %v6526 = vpow.pop %v6525
  %v6527 = vmul.f32 %v6502, 1.442695
  %v6528 = vpow.pop %v6527
  %v6529 = vmul.f32 %v6503, 1.442695
  %v6530 = vpow.pop %v6529
  %v6531 = vmul.f32 %v6504, 1.442695
  %v6532 = vpow.pop %v6531
  %v6533 = vmul.f32 %v6505, 1.442695
  %v6534 = vpow.pop %v6533
  %v6535 = vmul.f32 %v6506, 1.442695
  %v6536 = vpow.pop %v6535
  %v6537 = vmul.f32 %v6507, 1.442695
  %v6538 = vpow.pop %v6537
  %v6539 = vmul.f32 %v6508, 1.442695
  %v6540 = vpow.pop %v6539
  %v6541 = vadd.f32 %v6510, 1.0
  %v6542 = vadd.f32 %v6512, 1.0
  %v6543 = vadd.f32 %v6514, 1.0
  %v6544 = vadd.f32 %v6516, 1.0
  %v6545 = vadd.f32 %v6518, 1.0
  %v6546 = vadd.f32 %v6520, 1.0
  %v6547 = vadd.f32 %v6522, 1.0
  %v6548 = vadd.f32 %v6524, 1.0
  %v6549 = vadd.f32 %v6526, 1.0
  %v6550 = vadd.f32 %v6528, 1.0
  %v6551 = vadd.f32 %v6530, 1.0
  %v6552 = vadd.f32 %v6532, 1.0
  %v6553 = vadd.f32 %v6534, 1.0
  %v6554 = vadd.f32 %v6536, 1.0
  %v6555 = vadd.f32 %v6538, 1.0
  %v6556 = vadd.f32 %v6540, 1.0
  %v6557 = vrcp.pop %v6541
  %v6558 = vmul.f32 %v6541, %v6557
  %v6559 = vsub.f32 1.0, %v6558
  %v6560 = vmul.f32 %v6557, %v6559
  %v6561 = vadd.f32 %v6557, %v6560
  %vm6562 = vweird.f32 %v6541
  %vm6563 = vweird.f32 %v6557
  %vm6564 = vmor %vm6562, %vm6563
  %v6565 = vsel %vm6564, %v6557, %v6561
  %v6566 = vand.u32 2147483647, %v6541
  %vm6567 = vcmp.eq.f32.partialorder %v6566, 8.507059e+37
  %v6568 = vand.u32 %v6541, 2147483648
  %v6569 = vor.u32 1.1754944e-38, %v6568
  %v6570 = vsel %vm6567, %v6569, %v6565
  %v6571 = vmul.f32 1.0, %v6570
  %v6572 = vrcp.pop %v6542
  %v6573 = vmul.f32 %v6542, %v6572
  %v6574 = vsub.f32 1.0, %v6573
  %v6575 = vmul.f32 %v6572, %v6574
  %v6576 = vadd.f32 %v6572, %v6575
  %vm6577 = vweird.f32 %v6542
  %vm6578 = vweird.f32 %v6572
  %vm6579 = vmor %vm6577, %vm6578
  %v6580 = vsel %vm6579, %v6572, %v6576
  %v6581 = vand.u32 2147483647, %v6542
  %vm6582 = vcmp.eq.f32.partialorder %v6581, 8.507059e+37
  %v6583 = vand.u32 %v6542, 2147483648
  %v6584 = vor.u32 1.1754944e-38, %v6583
  %v6585 = vsel %vm6582, %v6584, %v6580
  %v6586 = vmul.f32 1.0, %v6585
  %v6587 = vrcp.pop %v6543
  %v6588 = vmul.f32 %v6543, %v6587
  %v6589 = vsub.f32 1.0, %v6588
  %v6590 = vmul.f32 %v6587, %v6589
  %v6591 = vadd.f32 %v6587, %v6590
  %vm6592 = vweird.f32 %v6543
  %vm6593 = vweird.f32 %v6587
  %vm6594 = vmor %vm6592, %vm6593
  %v6595 = vsel %vm6594, %v6587, %v6591
  %v6596 = vand.u32 2147483647, %v6543
  %vm6597 = vcmp.eq.f32.partialorder %v6596, 8.507059e+37
  %v6598 = vand.u32 %v6543, 2147483648
  %v6599 = vor.u32 1.1754944e-38, %v6598
  %v6600 = vsel %vm6597, %v6599, %v6595
  %v6601 = vmul.f32 1.0, %v6600
  %v6602 = vrcp.pop %v6544
  %v6603 = vmul.f32 %v6544, %v6602
  %v6604 = vsub.f32 1.0, %v6603
  %v6605 = vmul.f32 %v6602, %v6604
  %v6606 = vadd.f32 %v6602, %v6605
  %vm6607 = vweird.f32 %v6544
  %vm6608 = vweird.f32 %v6602
  %vm6609 = vmor %vm6607, %vm6608
  %v6610 = vsel %vm6609, %v6602, %v6606
  %v6611 = vand.u32 2147483647, %v6544
  %vm6612 = vcmp.eq.f32.partialorder %v6611, 8.507059e+37
  %v6613 = vand.u32 %v6544, 2147483648
  %v6614 = vor.u32 1.1754944e-38, %v6613
  %v6615 = vsel %vm6612, %v6614, %v6610
  %v6616 = vmul.f32 1.0, %v6615
  %v6617 = vrcp.pop %v6545
  %v6618 = vmul.f32 %v6545, %v6617
  %v6619 = vsub.f32 1.0, %v6618
  %v6620 = vmul.f32 %v6617, %v6619
  %v6621 = vadd.f32 %v6617, %v6620
  %vm6622 = vweird.f32 %v6545
  %vm6623 = vweird.f32 %v6617
  %vm6624 = vmor %vm6622, %vm6623
  %v6625 = vsel %vm6624, %v6617, %v6621
  %v6626 = vand.u32 2147483647, %v6545
  %vm6627 = vcmp.eq.f32.partialorder %v6626, 8.507059e+37
  %v6628 = vand.u32 %v6545, 2147483648
  %v6629 = vor.u32 1.1754944e-38, %v6628
  %v6630 = vsel %vm6627, %v6629, %v6625
  %v6631 = vmul.f32 1.0, %v6630
  %v6632 = vrcp.pop %v6546
  %v6633 = vmul.f32 %v6546, %v6632
  %v6634 = vsub.f32 1.0, %v6633
  %v6635 = vmul.f32 %v6632, %v6634
  %v6636 = vadd.f32 %v6632, %v6635
  %vm6637 = vweird.f32 %v6546
  %vm6638 = vweird.f32 %v6632
  %vm6639 = vmor %vm6637, %vm6638
  %v6640 = vsel %vm6639, %v6632, %v6636
  %v6641 = vand.u32 2147483647, %v6546
  %vm6642 = vcmp.eq.f32.partialorder %v6641, 8.507059e+37
  %v6643 = vand.u32 %v6546, 2147483648
  %v6644 = vor.u32 1.1754944e-38, %v6643
  %v6645 = vsel %vm6642, %v6644, %v6640
  %v6646 = vmul.f32 1.0, %v6645
  %v6647 = vrcp.pop %v6547
  %v6648 = vmul.f32 %v6547, %v6647
  %v6649 = vsub.f32 1.0, %v6648
  %v6650 = vmul.f32 %v6647, %v6649
  %v6651 = vadd.f32 %v6647, %v6650
  %vm6652 = vweird.f32 %v6547
  %vm6653 = vweird.f32 %v6647
  %vm6654 = vmor %vm6652, %vm6653
  %v6655 = vsel %vm6654, %v6647, %v6651
  %v6656 = vand.u32 2147483647, %v6547
  %vm6657 = vcmp.eq.f32.partialorder %v6656, 8.507059e+37
  %v6658 = vand.u32 %v6547, 2147483648
  %v6659 = vor.u32 1.1754944e-38, %v6658
  %v6660 = vsel %vm6657, %v6659, %v6655
  %v6661 = vmul.f32 1.0, %v6660
  %v6662 = vrcp.pop %v6548
  %v6663 = vmul.f32 %v6548, %v6662
  %v6664 = vsub.f32 1.0, %v6663
  %v6665 = vmul.f32 %v6662, %v6664
  %v6666 = vadd.f32 %v6662, %v6665
  %vm6667 = vweird.f32 %v6548
  %vm6668 = vweird.f32 %v6662
  %vm6669 = vmor %vm6667, %vm6668
  %v6670 = vsel %vm6669, %v6662, %v6666
  %v6671 = vand.u32 2147483647, %v6548
  %vm6672 = vcmp.eq.f32.partialorder %v6671, 8.507059e+37
  %v6673 = vand.u32 %v6548, 2147483648
  %v6674 = vor.u32 1.1754944e-38, %v6673
  %v6675 = vsel %vm6672, %v6674, %v6670
  %v6676 = vmul.f32 1.0, %v6675
  %v6677 = vrcp.pop %v6549
  %v6678 = vmul.f32 %v6549, %v6677
  %v6679 = vsub.f32 1.0, %v6678
  %v6680 = vmul.f32 %v6677, %v6679
  %v6681 = vadd.f32 %v6677, %v6680
  %vm6682 = vweird.f32 %v6549
  %vm6683 = vweird.f32 %v6677
  %vm6684 = vmor %vm6682, %vm6683
  %v6685 = vsel %vm6684, %v6677, %v6681
  %v6686 = vand.u32 2147483647, %v6549
  %vm6687 = vcmp.eq.f32.partialorder %v6686, 8.507059e+37
  %v6688 = vand.u32 %v6549, 2147483648
  %v6689 = vor.u32 1.1754944e-38, %v6688
  %v6690 = vsel %vm6687, %v6689, %v6685
  %v6691 = vmul.f32 1.0, %v6690
  %v6692 = vrcp.pop %v6550
  %v6693 = vmul.f32 %v6550, %v6692
  %v6694 = vsub.f32 1.0, %v6693
  %v6695 = vmul.f32 %v6692, %v6694
  %v6696 = vadd.f32 %v6692, %v6695
  %vm6697 = vweird.f32 %v6550
  %vm6698 = vweird.f32 %v6692
  %vm6699 = vmor %vm6697, %vm6698
  %v6700 = vsel %vm6699, %v6692, %v6696
  %v6701 = vand.u32 2147483647, %v6550
  %vm6702 = vcmp.eq.f32.partialorder %v6701, 8.507059e+37
  %v6703 = vand.u32 %v6550, 2147483648
  %v6704 = vor.u32 1.1754944e-38, %v6703
  %v6705 = vsel %vm6702, %v6704, %v6700
  %v6706 = vmul.f32 1.0, %v6705
  %v6707 = vrcp.pop %v6551
  %v6708 = vmul.f32 %v6551, %v6707
  %v6709 = vsub.f32 1.0, %v6708
  %v6710 = vmul.f32 %v6707, %v6709
  %v6711 = vadd.f32 %v6707, %v6710
  %vm6712 = vweird.f32 %v6551
  %vm6713 = vweird.f32 %v6707
  %vm6714 = vmor %vm6712, %vm6713
  %v6715 = vsel %vm6714, %v6707, %v6711
  %v6716 = vand.u32 2147483647, %v6551
  %vm6717 = vcmp.eq.f32.partialorder %v6716, 8.507059e+37
  %v6718 = vand.u32 %v6551, 2147483648
  %v6719 = vor.u32 1.1754944e-38, %v6718
  %v6720 = vsel %vm6717, %v6719, %v6715
  %v6721 = vmul.f32 1.0, %v6720
  %v6722 = vrcp.pop %v6552
  %v6723 = vmul.f32 %v6552, %v6722
  %v6724 = vsub.f32 1.0, %v6723
  %v6725 = vmul.f32 %v6722, %v6724
  %v6726 = vadd.f32 %v6722, %v6725
  %vm6727 = vweird.f32 %v6552
  %vm6728 = vweird.f32 %v6722
  %vm6729 = vmor %vm6727, %vm6728
  %v6730 = vsel %vm6729, %v6722, %v6726
  %v6731 = vand.u32 2147483647, %v6552
  %vm6732 = vcmp.eq.f32.partialorder %v6731, 8.507059e+37
  %v6733 = vand.u32 %v6552, 2147483648
  %v6734 = vor.u32 1.1754944e-38, %v6733
  %v6735 = vsel %vm6732, %v6734, %v6730
  %v6736 = vmul.f32 1.0, %v6735
  %v6737 = vrcp.pop %v6553
  %v6738 = vmul.f32 %v6553, %v6737
  %v6739 = vsub.f32 1.0, %v6738
  %v6740 = vmul.f32 %v6737, %v6739
  %v6741 = vadd.f32 %v6737, %v6740
  %vm6742 = vweird.f32 %v6553
  %vm6743 = vweird.f32 %v6737
  %vm6744 = vmor %vm6742, %vm6743
  %v6745 = vsel %vm6744, %v6737, %v6741
  %v6746 = vand.u32 2147483647, %v6553
  %vm6747 = vcmp.eq.f32.partialorder %v6746, 8.507059e+37
  %v6748 = vand.u32 %v6553, 2147483648
  %v6749 = vor.u32 1.1754944e-38, %v6748
  %v6750 = vsel %vm6747, %v6749, %v6745
  %v6751 = vmul.f32 1.0, %v6750
  %v6752 = vrcp.pop %v6554
  %v6753 = vmul.f32 %v6554, %v6752
  %v6754 = vsub.f32 1.0, %v6753
  %v6755 = vmul.f32 %v6752, %v6754
  %v6756 = vadd.f32 %v6752, %v6755
  %vm6757 = vweird.f32 %v6554
  %vm6758 = vweird.f32 %v6752
  %vm6759 = vmor %vm6757, %vm6758
  %v6760 = vsel %vm6759, %v6752, %v6756
  %v6761 = vand.u32 2147483647, %v6554
  %vm6762 = vcmp.eq.f32.partialorder %v6761, 8.507059e+37
  %v6763 = vand.u32 %v6554, 2147483648
  %v6764 = vor.u32 1.1754944e-38, %v6763
  %v6765 = vsel %vm6762, %v6764, %v6760
  %v6766 = vmul.f32 1.0, %v6765
  %v6767 = vrcp.pop %v6555
  %v6768 = vmul.f32 %v6555, %v6767
  %v6769 = vsub.f32 1.0, %v6768
  %v6770 = vmul.f32 %v6767, %v6769
  %v6771 = vadd.f32 %v6767, %v6770
  %vm6772 = vweird.f32 %v6555
  %vm6773 = vweird.f32 %v6767
  %vm6774 = vmor %vm6772, %vm6773
  %v6775 = vsel %vm6774, %v6767, %v6771
  %v6776 = vand.u32 2147483647, %v6555
  %vm6777 = vcmp.eq.f32.partialorder %v6776, 8.507059e+37
  %v6778 = vand.u32 %v6555, 2147483648
  %v6779 = vor.u32 1.1754944e-38, %v6778
  %v6780 = vsel %vm6777, %v6779, %v6775
  %v6781 = vmul.f32 1.0, %v6780
  %v6782 = vrcp.pop %v6556
  %v6783 = vmul.f32 %v6556, %v6782
  %v6784 = vsub.f32 1.0, %v6783
  %v6785 = vmul.f32 %v6782, %v6784
  %v6786 = vadd.f32 %v6782, %v6785
  %vm6787 = vweird.f32 %v6556
  %vm6788 = vweird.f32 %v6782
  %vm6789 = vmor %vm6787, %vm6788
  %v6790 = vsel %vm6789, %v6782, %v6786
  %v6791 = vand.u32 2147483647, %v6556
  %vm6792 = vcmp.eq.f32.partialorder %v6791, 8.507059e+37
  %v6793 = vand.u32 %v6556, 2147483648
  %v6794 = vor.u32 1.1754944e-38, %v6793
  %v6795 = vsel %vm6792, %v6794, %v6790
  %v6796 = vmul.f32 1.0, %v6795
  %v6797 = vtanh.pop %v6477
  %v6798 = vtanh.pop %v6478
  %v6799 = vtanh.pop %v6479
  %v6800 = vtanh.pop %v6480
  %v6801 = vtanh.pop %v6481
  %v6802 = vtanh.pop %v6482
  %v6803 = vtanh.pop %v6483
  %v6804 = vtanh.pop %v6484
  %v6805 = vtanh.pop %v6485
  %v6806 = vtanh.pop %v6486
  %v6807 = vtanh.pop %v6487
  %v6808 = vtanh.pop %v6488
  %v6809 = vtanh.pop %v6489
  %v6810 = vtanh.pop %v6490
  %v6811 = vtanh.pop %v6491
  %v6812 = vtanh.pop %v6492
  %v6813 = vmul.f32 %v6571, %v6122
  %v6814 = vmul.f32 %v6586, %v6123
  %v6815 = vmul.f32 %v6601, %v6124
  %v6816 = vmul.f32 %v6616, %v6125
  %v6817 = vmul.f32 %v6631, %v6126
  %v6818 = vmul.f32 %v6646, %v6127
  %v6819 = vmul.f32 %v6661, %v6128
  %v6820 = vmul.f32 %v6676, %v6129
  %v6821 = vmul.f32 %v6691, %v6130
  %v6822 = vmul.f32 %v6706, %v6131
  %v6823 = vmul.f32 %v6721, %v6132
  %v6824 = vmul.f32 %v6736, %v6133
  %v6825 = vmul.f32 %v6751, %v6134
  %v6826 = vmul.f32 %v6766, %v6135
  %v6827 = vmul.f32 %v6781, %v6136
  %v6828 = vmul.f32 %v6796, %v6137
  %6845 = vrot.lane.b32.xlu0 %v6797, 32
  %v6846 = vpop.permute.xlu0 %6845
  %6847 = vrot.lane.b32.xlu0 %v6798, 32
  %v6848 = vpop.permute.xlu0 %6847
  %6849 = vrot.lane.b32.xlu0 %v6799, 32
  %v6850 = vpop.permute.xlu0 %6849
  %6851 = vrot.lane.b32.xlu0 %v6800, 32
  %v6852 = vpop.permute.xlu0 %6851
  %6853 = vrot.lane.b32.xlu0 %v6801, 32
  %v6854 = vpop.permute.xlu0 %6853
  %6855 = vrot.lane.b32.xlu0 %v6802, 32
  %v6856 = vpop.permute.xlu0 %6855
  %6857 = vrot.lane.b32.xlu0 %v6803, 32
  %v6858 = vpop.permute.xlu0 %6857
  %6859 = vrot.lane.b32.xlu0 %v6804, 32
  %v6860 = vpop.permute.xlu0 %6859
  %6861 = vrot.lane.b32.xlu0 %v6805, 32
  %v6862 = vpop.permute.xlu0 %6861
  %6863 = vrot.lane.b32.xlu0 %v6806, 32
  %v6864 = vpop.permute.xlu0 %6863
  %6865 = vrot.lane.b32.xlu0 %v6807, 32
  %v6866 = vpop.permute.xlu0 %6865
  %6867 = vrot.lane.b32.xlu0 %v6808, 32
  %v6868 = vpop.permute.xlu0 %6867
  %6869 = vrot.lane.b32.xlu0 %v6809, 32
  %v6870 = vpop.permute.xlu0 %6869
  %6871 = vrot.lane.b32.xlu0 %v6810, 32
  %v6872 = vpop.permute.xlu0 %6871
  %6873 = vrot.lane.b32.xlu0 %v6811, 32
  %v6874 = vpop.permute.xlu0 %6873
  %6875 = vrot.lane.b32.xlu0 %v6812, 32
  %v6876 = vpop.permute.xlu0 %6875
  %v6893 = vmul.f32 %v6571, %v6846
  %v6894 = vmul.f32 %v6586, %v6848
  %v6895 = vmul.f32 %v6601, %v6850
  %v6896 = vmul.f32 %v6616, %v6852
  %v6897 = vmul.f32 %v6631, %v6854
  %v6898 = vmul.f32 %v6646, %v6856
  %v6899 = vmul.f32 %v6661, %v6858
  %v6900 = vmul.f32 %v6676, %v6860
  %v6901 = vmul.f32 %v6691, %v6862
  %v6902 = vmul.f32 %v6706, %v6864
  %v6903 = vmul.f32 %v6721, %v6866
  %v6904 = vmul.f32 %v6736, %v6868
  %v6905 = vmul.f32 %v6751, %v6870
  %v6906 = vmul.f32 %v6766, %v6872
  %v6907 = vmul.f32 %v6781, %v6874
  %v6908 = vmul.f32 %v6796, %v6876
  %6925 = vrot.lane.b32.xlu0 %v6893, 32
  %v6926 = vpop.permute.xlu0 %6925
  %6927 = vrot.lane.b32.xlu0 %v6894, 32
  %v6928 = vpop.permute.xlu0 %6927
  %6929 = vrot.lane.b32.xlu0 %v6895, 32
  %v6930 = vpop.permute.xlu0 %6929
  %6931 = vrot.lane.b32.xlu0 %v6896, 32
  %v6932 = vpop.permute.xlu0 %6931
  %6933 = vrot.lane.b32.xlu0 %v6897, 32
  %v6934 = vpop.permute.xlu0 %6933
  %6935 = vrot.lane.b32.xlu0 %v6898, 32
  %v6936 = vpop.permute.xlu0 %6935
  %6937 = vrot.lane.b32.xlu0 %v6899, 32
  %v6938 = vpop.permute.xlu0 %6937
  %6939 = vrot.lane.b32.xlu0 %v6900, 32
  %v6940 = vpop.permute.xlu0 %6939
  %6941 = vrot.lane.b32.xlu0 %v6901, 32
  %v6942 = vpop.permute.xlu0 %6941
  %6943 = vrot.lane.b32.xlu0 %v6902, 32
  %v6944 = vpop.permute.xlu0 %6943
  %6945 = vrot.lane.b32.xlu0 %v6903, 32
  %v6946 = vpop.permute.xlu0 %6945
  %6947 = vrot.lane.b32.xlu0 %v6904, 32
  %v6948 = vpop.permute.xlu0 %6947
  %6949 = vrot.lane.b32.xlu0 %v6905, 32
  %v6950 = vpop.permute.xlu0 %6949
  %6951 = vrot.lane.b32.xlu0 %v6906, 32
  %v6952 = vpop.permute.xlu0 %6951
  %6953 = vrot.lane.b32.xlu0 %v6907, 32
  %v6954 = vpop.permute.xlu0 %6953
  %6955 = vrot.lane.b32.xlu0 %v6908, 32
  %v6956 = vpop.permute.xlu0 %6955
  %v6973 = vadd.f32 %v6813, %v6926
  %v6974 = vadd.f32 %v6814, %v6928
  %v6975 = vadd.f32 %v6815, %v6930
  %v6976 = vadd.f32 %v6816, %v6932
  %v6977 = vadd.f32 %v6817, %v6934
  %v6978 = vadd.f32 %v6818, %v6936
  %v6979 = vadd.f32 %v6819, %v6938
  %v6980 = vadd.f32 %v6820, %v6940
  %v6981 = vadd.f32 %v6821, %v6942
  %v6982 = vadd.f32 %v6822, %v6944
  %v6983 = vadd.f32 %v6823, %v6946
  %v6984 = vadd.f32 %v6824, %v6948
  %v6985 = vadd.f32 %v6825, %v6950
  %v6986 = vadd.f32 %v6826, %v6952
  %v6987 = vadd.f32 %v6827, %v6954
  %v6988 = vadd.f32 %v6828, %v6956
  %v6989 = vtanh.pop %v6973
  %v6990 = vtanh.pop %v6974
  %v6991 = vtanh.pop %v6975
  %v6992 = vtanh.pop %v6976
  %v6993 = vtanh.pop %v6977
  %v6994 = vtanh.pop %v6978
  %v6995 = vtanh.pop %v6979
  %v6996 = vtanh.pop %v6980
  %v6997 = vtanh.pop %v6981
  %v6998 = vtanh.pop %v6982
  %v6999 = vtanh.pop %v6983
  %v7000 = vtanh.pop %v6984
  %v7001 = vtanh.pop %v6985
  %v7002 = vtanh.pop %v6986
  %v7003 = vtanh.pop %v6987
  %v7004 = vtanh.pop %v6988
  %7021 = vrot.lane.b32.xlu0 %v6989, 32
  %v7022 = vpop.permute.xlu0 %7021
  %7023 = vrot.lane.b32.xlu0 %v6990, 32
  %v7024 = vpop.permute.xlu0 %7023
  %7025 = vrot.lane.b32.xlu0 %v6991, 32
  %v7026 = vpop.permute.xlu0 %7025
  %7027 = vrot.lane.b32.xlu0 %v6992, 32
  %v7028 = vpop.permute.xlu0 %7027
  %7029 = vrot.lane.b32.xlu0 %v6993, 32
  %v7030 = vpop.permute.xlu0 %7029
  %7031 = vrot.lane.b32.xlu0 %v6994, 32
  %v7032 = vpop.permute.xlu0 %7031
  %7033 = vrot.lane.b32.xlu0 %v6995, 32
  %v7034 = vpop.permute.xlu0 %7033
  %7035 = vrot.lane.b32.xlu0 %v6996, 32
  %v7036 = vpop.permute.xlu0 %7035
  %7037 = vrot.lane.b32.xlu0 %v6997, 32
  %v7038 = vpop.permute.xlu0 %7037
  %7039 = vrot.lane.b32.xlu0 %v6998, 32
  %v7040 = vpop.permute.xlu0 %7039
  %7041 = vrot.lane.b32.xlu0 %v6999, 32
  %v7042 = vpop.permute.xlu0 %7041
  %7043 = vrot.lane.b32.xlu0 %v7000, 32
  %v7044 = vpop.permute.xlu0 %7043
  %7045 = vrot.lane.b32.xlu0 %v7001, 32
  %v7046 = vpop.permute.xlu0 %7045
  %7047 = vrot.lane.b32.xlu0 %v7002, 32
  %v7048 = vpop.permute.xlu0 %7047
  %7049 = vrot.lane.b32.xlu0 %v7003, 32
  %v7050 = vpop.permute.xlu0 %7049
  %7051 = vrot.lane.b32.xlu0 %v7004, 32
  %v7052 = vpop.permute.xlu0 %7051
  %v7069 = vmul.f32 %v6571, %v7022
  %v7070 = vmul.f32 %v6586, %v7024
  %v7071 = vmul.f32 %v6601, %v7026
  %v7072 = vmul.f32 %v6616, %v7028
  %v7073 = vmul.f32 %v6631, %v7030
  %v7074 = vmul.f32 %v6646, %v7032
  %v7075 = vmul.f32 %v6661, %v7034
  %v7076 = vmul.f32 %v6676, %v7036
  %v7077 = vmul.f32 %v6691, %v7038
  %v7078 = vmul.f32 %v6706, %v7040
  %v7079 = vmul.f32 %v6721, %v7042
  %v7080 = vmul.f32 %v6736, %v7044
  %v7081 = vmul.f32 %v6751, %v7046
  %v7082 = vmul.f32 %v6766, %v7048
  %v7083 = vmul.f32 %v6781, %v7050
  %v7084 = vmul.f32 %v6796, %v7052
  %v7085 = vpack.c.bf16 %v7069, %v7069
  %v7086 = vpack.c.bf16 %v7070, %v7070
  %v7087 = vpack.c.bf16 %v7071, %v7071
  %v7088 = vpack.c.bf16 %v7072, %v7072
  %v7089 = vpack.c.bf16 %v7073, %v7073
  %v7090 = vpack.c.bf16 %v7074, %v7074
  %v7091 = vpack.c.bf16 %v7075, %v7075
  %v7092 = vpack.c.bf16 %v7076, %v7076
  %v7093 = vpack.c.bf16 %v7077, %v7077
  %v7094 = vpack.c.bf16 %v7078, %v7078
  %v7095 = vpack.c.bf16 %v7079, %v7079
  %v7096 = vpack.c.bf16 %v7080, %v7080
  %v7097 = vpack.c.bf16 %v7081, %v7081
  %v7098 = vpack.c.bf16 %v7082, %v7082
  %v7099 = vpack.c.bf16 %v7083, %v7083
  %v7100 = vpack.c.bf16 %v7084, %v7084
  %7117 = vrot.lane.b32.xlu0 %v7085, 64
  %v7118 = vpop.permute.xlu0 %7117
  %7119 = vrot.lane.b32.xlu0 %v7086, 64
  %v7120 = vpop.permute.xlu0 %7119
  %7121 = vrot.lane.b32.xlu0 %v7087, 64
  %v7122 = vpop.permute.xlu0 %7121
  %7123 = vrot.lane.b32.xlu0 %v7088, 64
  %v7124 = vpop.permute.xlu0 %7123
  %7125 = vrot.lane.b32.xlu0 %v7089, 64
  %v7126 = vpop.permute.xlu0 %7125
  %7127 = vrot.lane.b32.xlu0 %v7090, 64
  %v7128 = vpop.permute.xlu0 %7127
  %7129 = vrot.lane.b32.xlu0 %v7091, 64
  %v7130 = vpop.permute.xlu0 %7129
  %7131 = vrot.lane.b32.xlu0 %v7092, 64
  %v7132 = vpop.permute.xlu0 %7131
  %7133 = vrot.lane.b32.xlu0 %v7093, 64
  %v7134 = vpop.permute.xlu0 %7133
  %7135 = vrot.lane.b32.xlu0 %v7094, 64
  %v7136 = vpop.permute.xlu0 %7135
  %7137 = vrot.lane.b32.xlu0 %v7095, 64
  %v7138 = vpop.permute.xlu0 %7137
  %7139 = vrot.lane.b32.xlu0 %v7096, 64
  %v7140 = vpop.permute.xlu0 %7139
  %7141 = vrot.lane.b32.xlu0 %v7097, 64
  %v7142 = vpop.permute.xlu0 %7141
  %7143 = vrot.lane.b32.xlu0 %v7098, 64
  %v7144 = vpop.permute.xlu0 %7143
  %7145 = vrot.lane.b32.xlu0 %v7099, 64
  %v7146 = vpop.permute.xlu0 %7145
  %7147 = vrot.lane.b32.xlu0 %v7100, 64
  %v7148 = vpop.permute.xlu0 %7147
  %s7165 = scalar_lea.vmem [#allocation2], 384
  %7166 = vst.msk [vmem:[%s7165] sm:$0xf] %vm2059, %v7118
  %7167 = vst.msk [vmem:[%s7165 + $0x4] sm:$0xf] %vm2059, %v7120
  %7168 = vst.msk [vmem:[%s7165 + $0x8] sm:$0xf] %vm2059, %v7122
  %7169 = vst.msk [vmem:[%s7165 + $0xc] sm:$0xf] %vm2059, %v7124
  %7170 = vst.msk [vmem:[%s7165 + $0x10] sm:$0xf] %vm2059, %v7126
  %7171 = vst.msk [vmem:[%s7165 + $0x14] sm:$0xf] %vm2059, %v7128
  %7172 = vst.msk [vmem:[%s7165 + $0x18] sm:$0xf] %vm2059, %v7130
  %7173 = vst.msk [vmem:[%s7165 + $0x1c] sm:$0xf] %vm2059, %v7132
  %7174 = vst.msk [vmem:[%s7165 + $0x20] sm:$0xf] %vm2059, %v7134
  %7175 = vst.msk [vmem:[%s7165 + $0x24] sm:$0xf] %vm2059, %v7136
  %7176 = vst.msk [vmem:[%s7165 + $0x28] sm:$0xf] %vm2059, %v7138
  %7177 = vst.msk [vmem:[%s7165 + $0x2c] sm:$0xf] %vm2059, %v7140
  %7178 = vst.msk [vmem:[%s7165 + $0x30] sm:$0xf] %vm2059, %v7142
  %7179 = vst.msk [vmem:[%s7165 + $0x34] sm:$0xf] %vm2059, %v7144
  %7180 = vst.msk [vmem:[%s7165 + $0x38] sm:$0xf] %vm2059, %v7146
  %7181 = vst.msk [vmem:[%s7165 + $0x3c] sm:$0xf] %vm2059, %v7148
  %s7182 = scalar_lea.vmem [#allocation3], 448
  %v7183 = vld [vmem:[%s7182] sm:$0xf]
  %v7184 = vld [vmem:[%s7182 + $0x4] sm:$0xf]
  %v7185 = vld [vmem:[%s7182 + $0x8] sm:$0xf]
  %v7186 = vld [vmem:[%s7182 + $0xc] sm:$0xf]
  %v7187 = vld [vmem:[%s7182 + $0x10] sm:$0xf]
  %v7188 = vld [vmem:[%s7182 + $0x14] sm:$0xf]
  %v7189 = vld [vmem:[%s7182 + $0x18] sm:$0xf]
  %v7190 = vld [vmem:[%s7182 + $0x1c] sm:$0xf]
  %v7191 = vld [vmem:[%s7182 + $0x20] sm:$0xf]
  %v7192 = vld [vmem:[%s7182 + $0x24] sm:$0xf]
  %v7193 = vld [vmem:[%s7182 + $0x28] sm:$0xf]
  %v7194 = vld [vmem:[%s7182 + $0x2c] sm:$0xf]
  %v7195 = vld [vmem:[%s7182 + $0x30] sm:$0xf]
  %v7196 = vld [vmem:[%s7182 + $0x34] sm:$0xf]
  %v7197 = vld [vmem:[%s7182 + $0x38] sm:$0xf]
  %v7198 = vld [vmem:[%s7182 + $0x3c] sm:$0xf]
  %v7199 = vunpack.c.l.bf16 %v7183
  %v7200 = vunpack.c.l.bf16 %v7184
  %v7201 = vunpack.c.l.bf16 %v7185
  %v7202 = vunpack.c.l.bf16 %v7186
  %v7203 = vunpack.c.l.bf16 %v7187
  %v7204 = vunpack.c.l.bf16 %v7188
  %v7205 = vunpack.c.l.bf16 %v7189
  %v7206 = vunpack.c.l.bf16 %v7190
  %v7207 = vunpack.c.l.bf16 %v7191
  %v7208 = vunpack.c.l.bf16 %v7192
  %v7209 = vunpack.c.l.bf16 %v7193
  %v7210 = vunpack.c.l.bf16 %v7194
  %v7211 = vunpack.c.l.bf16 %v7195
  %v7212 = vunpack.c.l.bf16 %v7196
  %v7213 = vunpack.c.l.bf16 %v7197
  %v7214 = vunpack.c.l.bf16 %v7198
  %v7215 = vunpack.c.l.b16 %v7085
  %v7216 = vunpack.c.l.b16 %v7086
  %v7217 = vunpack.c.l.b16 %v7087
  %v7218 = vunpack.c.l.b16 %v7088
  %v7219 = vunpack.c.l.b16 %v7089
  %v7220 = vunpack.c.l.b16 %v7090
  %v7221 = vunpack.c.l.b16 %v7091
  %v7222 = vunpack.c.l.b16 %v7092
  %v7223 = vunpack.c.l.b16 %v7093
  %v7224 = vunpack.c.l.b16 %v7094
  %v7225 = vunpack.c.l.b16 %v7095
  %v7226 = vunpack.c.l.b16 %v7096
  %v7227 = vunpack.c.l.b16 %v7097
  %v7228 = vunpack.c.l.b16 %v7098
  %v7229 = vunpack.c.l.b16 %v7099
  %v7230 = vunpack.c.l.b16 %v7100
  %v7231 = vpack.c.b16 %v7216, %v7215
  %v7232 = vpack.c.b16 %v7218, %v7217
  %v7233 = vpack.c.b16 %v7220, %v7219
  %v7234 = vpack.c.b16 %v7222, %v7221
  %v7235 = vpack.c.b16 %v7224, %v7223
  %v7236 = vpack.c.b16 %v7226, %v7225
  %v7237 = vpack.c.b16 %v7228, %v7227
  %v7238 = vpack.c.b16 %v7230, %v7229
  %7239 = vrot.lane.b32.xlu0 %v7231, 64
  %v7240 = vpop.permute.xlu0 %7239
  %7241 = vrot.lane.b32.xlu0 %v7232, 64
  %v7242 = vpop.permute.xlu0 %7241
  %7243 = vrot.lane.b32.xlu0 %v7233, 64
  %v7244 = vpop.permute.xlu0 %7243
  %7245 = vrot.lane.b32.xlu0 %v7234, 64
  %v7246 = vpop.permute.xlu0 %7245
  %7247 = vrot.lane.b32.xlu0 %v7235, 64
  %v7248 = vpop.permute.xlu0 %7247
  %7249 = vrot.lane.b32.xlu0 %v7236, 64
  %v7250 = vpop.permute.xlu0 %7249
  %7251 = vrot.lane.b32.xlu0 %v7237, 64
  %v7252 = vpop.permute.xlu0 %7251
  %7253 = vrot.lane.b32.xlu0 %v7238, 64
  %v7254 = vpop.permute.xlu0 %7253
  %v7256 = vsel %vm1318, %v7240, 0
  %v7259 = vsel %vm1318, %v7242, 0
  %v7262 = vsel %vm1318, %v7244, 0
  %v7265 = vsel %vm1318, %v7246, 0
  %v7268 = vsel %vm1318, %v7248, 0
  %v7271 = vsel %vm1318, %v7250, 0
  %v7274 = vsel %vm1318, %v7252, 0
  %v7277 = vsel %vm1318, %v7254, 0
  %7279 = vmatpush.bf16.msra.mxu0 0
  %7280 = vmatpush.bf16.msra.mxu0 0
  %7281 = vmatpush.bf16.msra.mxu0 0
  %7282 = vmatpush.bf16.msra.mxu0 0
  %7283 = vmatpush.bf16.msra.mxu0 0
  %7284 = vmatpush.bf16.msra.mxu0 0
  %7285 = vmatpush.bf16.msra.mxu0 %v1315
  %7286 = vmatpush.bf16.msra.mxu0 %v1314
  %7287 = vmatmul.bf16.gmra.mxu0 %v7256
  %v7288 = vpop.f32.mrf.mxu0
  %v7289 = vadd.f32 0.0, %v7288
  %v7290 = vpop.f32.mrf.mxu0
  %v7291 = vadd.f32 0.0, %v7290
  %7292 = vmatmul.bf16.gmra.mxu0 %v7259
  %v7293 = vpop.f32.mrf.mxu0
  %v7294 = vadd.f32 0.0, %v7293
  %v7295 = vpop.f32.mrf.mxu0
  %v7296 = vadd.f32 0.0, %v7295
  %7297 = vmatmul.bf16.gmra.mxu0 %v7262
  %v7298 = vpop.f32.mrf.mxu0
  %v7299 = vadd.f32 0.0, %v7298
  %v7300 = vpop.f32.mrf.mxu0
  %v7301 = vadd.f32 0.0, %v7300
  %7302 = vmatmul.bf16.gmra.mxu0 %v7265
  %v7303 = vpop.f32.mrf.mxu0
  %v7304 = vadd.f32 0.0, %v7303
  %v7305 = vpop.f32.mrf.mxu0
  %v7306 = vadd.f32 0.0, %v7305
  %7307 = vmatmul.bf16.gmra.mxu0 %v7268
  %v7308 = vpop.f32.mrf.mxu0
  %v7309 = vadd.f32 0.0, %v7308
  %v7310 = vpop.f32.mrf.mxu0
  %v7311 = vadd.f32 0.0, %v7310
  %7312 = vmatmul.bf16.gmra.mxu0 %v7271
  %v7313 = vpop.f32.mrf.mxu0
  %v7314 = vadd.f32 0.0, %v7313
  %v7315 = vpop.f32.mrf.mxu0
  %v7316 = vadd.f32 0.0, %v7315
  %7317 = vmatmul.bf16.gmra.mxu0 %v7274
  %v7318 = vpop.f32.mrf.mxu0
  %v7319 = vadd.f32 0.0, %v7318
  %v7320 = vpop.f32.mrf.mxu0
  %v7321 = vadd.f32 0.0, %v7320
  %7322 = vmatmul.bf16.gmra.mxu0 %v7277
  %v7323 = vpop.f32.mrf.mxu0
  %v7324 = vadd.f32 0.0, %v7323
  %v7325 = vpop.f32.mrf.mxu0
  %v7326 = vadd.f32 0.0, %v7325
  %7327 = vdwg.mxu0
  %v7328 = vadd.f32 %v7199, %v7289
  %v7329 = vadd.f32 %v7200, %v7291
  %v7330 = vadd.f32 %v7201, %v7294
  %v7331 = vadd.f32 %v7202, %v7296
  %v7332 = vadd.f32 %v7203, %v7299
  %v7333 = vadd.f32 %v7204, %v7301
  %v7334 = vadd.f32 %v7205, %v7304
  %v7335 = vadd.f32 %v7206, %v7306
  %v7336 = vadd.f32 %v7207, %v7309
  %v7337 = vadd.f32 %v7208, %v7311
  %v7338 = vadd.f32 %v7209, %v7314
  %v7339 = vadd.f32 %v7210, %v7316
  %v7340 = vadd.f32 %v7211, %v7319
  %v7341 = vadd.f32 %v7212, %v7321
  %v7342 = vadd.f32 %v7213, %v7324
  %v7343 = vadd.f32 %v7214, %v7326
  %v7344 = vxor.u32 %v7328, 2147483648
  %v7345 = vxor.u32 %v7329, 2147483648
  %v7346 = vxor.u32 %v7330, 2147483648
  %v7347 = vxor.u32 %v7331, 2147483648
  %v7348 = vxor.u32 %v7332, 2147483648
  %v7349 = vxor.u32 %v7333, 2147483648
  %v7350 = vxor.u32 %v7334, 2147483648
  %v7351 = vxor.u32 %v7335, 2147483648
  %v7352 = vxor.u32 %v7336, 2147483648
  %v7353 = vxor.u32 %v7337, 2147483648
  %v7354 = vxor.u32 %v7338, 2147483648
  %v7355 = vxor.u32 %v7339, 2147483648
  %v7356 = vxor.u32 %v7340, 2147483648
  %v7357 = vxor.u32 %v7341, 2147483648
  %v7358 = vxor.u32 %v7342, 2147483648
  %v7359 = vxor.u32 %v7343, 2147483648
  %v7360 = vmul.f32 %v7344, 1.442695
  %v7361 = vpow.pop %v7360
  %v7362 = vmul.f32 %v7345, 1.442695
  %v7363 = vpow.pop %v7362
  %v7364 = vmul.f32 %v7346, 1.442695
  %v7365 = vpow.pop %v7364
  %v7366 = vmul.f32 %v7347, 1.442695
  %v7367 = vpow.pop %v7366
  %v7368 = vmul.f32 %v7348, 1.442695
  %v7369 = vpow.pop %v7368
  %v7370 = vmul.f32 %v7349, 1.442695
  %v7371 = vpow.pop %v7370
  %v7372 = vmul.f32 %v7350, 1.442695
  %v7373 = vpow.pop %v7372
  %v7374 = vmul.f32 %v7351, 1.442695
  %v7375 = vpow.pop %v7374
  %v7376 = vmul.f32 %v7352, 1.442695
  %v7377 = vpow.pop %v7376
  %v7378 = vmul.f32 %v7353, 1.442695
  %v7379 = vpow.pop %v7378
  %v7380 = vmul.f32 %v7354, 1.442695
  %v7381 = vpow.pop %v7380
  %v7382 = vmul.f32 %v7355, 1.442695
  %v7383 = vpow.pop %v7382
  %v7384 = vmul.f32 %v7356, 1.442695
  %v7385 = vpow.pop %v7384
  %v7386 = vmul.f32 %v7357, 1.442695
  %v7387 = vpow.pop %v7386
  %v7388 = vmul.f32 %v7358, 1.442695
  %v7389 = vpow.pop %v7388
  %v7390 = vmul.f32 %v7359, 1.442695
  %v7391 = vpow.pop %v7390
  %v7392 = vadd.f32 %v7361, 1.0
  %v7393 = vadd.f32 %v7363, 1.0
  %v7394 = vadd.f32 %v7365, 1.0
  %v7395 = vadd.f32 %v7367, 1.0
  %v7396 = vadd.f32 %v7369, 1.0
  %v7397 = vadd.f32 %v7371, 1.0
  %v7398 = vadd.f32 %v7373, 1.0
  %v7399 = vadd.f32 %v7375, 1.0
  %v7400 = vadd.f32 %v7377, 1.0
  %v7401 = vadd.f32 %v7379, 1.0
  %v7402 = vadd.f32 %v7381, 1.0
  %v7403 = vadd.f32 %v7383, 1.0
  %v7404 = vadd.f32 %v7385, 1.0
  %v7405 = vadd.f32 %v7387, 1.0
  %v7406 = vadd.f32 %v7389, 1.0
  %v7407 = vadd.f32 %v7391, 1.0
  %v7408 = vrcp.pop %v7392
  %v7409 = vmul.f32 %v7392, %v7408
  %v7410 = vsub.f32 1.0, %v7409
  %v7411 = vmul.f32 %v7408, %v7410
  %v7412 = vadd.f32 %v7408, %v7411
  %vm7413 = vweird.f32 %v7392
  %vm7414 = vweird.f32 %v7408
  %vm7415 = vmor %vm7413, %vm7414
  %v7416 = vsel %vm7415, %v7408, %v7412
  %v7417 = vand.u32 2147483647, %v7392
  %vm7418 = vcmp.eq.f32.partialorder %v7417, 8.507059e+37
  %v7419 = vand.u32 %v7392, 2147483648
  %v7420 = vor.u32 1.1754944e-38, %v7419
  %v7421 = vsel %vm7418, %v7420, %v7416
  %v7422 = vmul.f32 1.0, %v7421
  %v7423 = vrcp.pop %v7393
  %v7424 = vmul.f32 %v7393, %v7423
  %v7425 = vsub.f32 1.0, %v7424
  %v7426 = vmul.f32 %v7423, %v7425
  %v7427 = vadd.f32 %v7423, %v7426
  %vm7428 = vweird.f32 %v7393
  %vm7429 = vweird.f32 %v7423
  %vm7430 = vmor %vm7428, %vm7429
  %v7431 = vsel %vm7430, %v7423, %v7427
  %v7432 = vand.u32 2147483647, %v7393
  %vm7433 = vcmp.eq.f32.partialorder %v7432, 8.507059e+37
  %v7434 = vand.u32 %v7393, 2147483648
  %v7435 = vor.u32 1.1754944e-38, %v7434
  %v7436 = vsel %vm7433, %v7435, %v7431
  %v7437 = vmul.f32 1.0, %v7436
  %v7438 = vrcp.pop %v7394
  %v7439 = vmul.f32 %v7394, %v7438
  %v7440 = vsub.f32 1.0, %v7439
  %v7441 = vmul.f32 %v7438, %v7440
  %v7442 = vadd.f32 %v7438, %v7441
  %vm7443 = vweird.f32 %v7394
  %vm7444 = vweird.f32 %v7438
  %vm7445 = vmor %vm7443, %vm7444
  %v7446 = vsel %vm7445, %v7438, %v7442
  %v7447 = vand.u32 2147483647, %v7394
  %vm7448 = vcmp.eq.f32.partialorder %v7447, 8.507059e+37
  %v7449 = vand.u32 %v7394, 2147483648
  %v7450 = vor.u32 1.1754944e-38, %v7449
  %v7451 = vsel %vm7448, %v7450, %v7446
  %v7452 = vmul.f32 1.0, %v7451
  %v7453 = vrcp.pop %v7395
  %v7454 = vmul.f32 %v7395, %v7453
  %v7455 = vsub.f32 1.0, %v7454
  %v7456 = vmul.f32 %v7453, %v7455
  %v7457 = vadd.f32 %v7453, %v7456
  %vm7458 = vweird.f32 %v7395
  %vm7459 = vweird.f32 %v7453
  %vm7460 = vmor %vm7458, %vm7459
  %v7461 = vsel %vm7460, %v7453, %v7457
  %v7462 = vand.u32 2147483647, %v7395
  %vm7463 = vcmp.eq.f32.partialorder %v7462, 8.507059e+37
  %v7464 = vand.u32 %v7395, 2147483648
  %v7465 = vor.u32 1.1754944e-38, %v7464
  %v7466 = vsel %vm7463, %v7465, %v7461
  %v7467 = vmul.f32 1.0, %v7466
  %v7468 = vrcp.pop %v7396
  %v7469 = vmul.f32 %v7396, %v7468
  %v7470 = vsub.f32 1.0, %v7469
  %v7471 = vmul.f32 %v7468, %v7470
  %v7472 = vadd.f32 %v7468, %v7471
  %vm7473 = vweird.f32 %v7396
  %vm7474 = vweird.f32 %v7468
  %vm7475 = vmor %vm7473, %vm7474
  %v7476 = vsel %vm7475, %v7468, %v7472
  %v7477 = vand.u32 2147483647, %v7396
  %vm7478 = vcmp.eq.f32.partialorder %v7477, 8.507059e+37
  %v7479 = vand.u32 %v7396, 2147483648
  %v7480 = vor.u32 1.1754944e-38, %v7479
  %v7481 = vsel %vm7478, %v7480, %v7476
  %v7482 = vmul.f32 1.0, %v7481
  %v7483 = vrcp.pop %v7397
  %v7484 = vmul.f32 %v7397, %v7483
  %v7485 = vsub.f32 1.0, %v7484
  %v7486 = vmul.f32 %v7483, %v7485
  %v7487 = vadd.f32 %v7483, %v7486
  %vm7488 = vweird.f32 %v7397
  %vm7489 = vweird.f32 %v7483
  %vm7490 = vmor %vm7488, %vm7489
  %v7491 = vsel %vm7490, %v7483, %v7487
  %v7492 = vand.u32 2147483647, %v7397
  %vm7493 = vcmp.eq.f32.partialorder %v7492, 8.507059e+37
  %v7494 = vand.u32 %v7397, 2147483648
  %v7495 = vor.u32 1.1754944e-38, %v7494
  %v7496 = vsel %vm7493, %v7495, %v7491
  %v7497 = vmul.f32 1.0, %v7496
  %v7498 = vrcp.pop %v7398
  %v7499 = vmul.f32 %v7398, %v7498
  %v7500 = vsub.f32 1.0, %v7499
  %v7501 = vmul.f32 %v7498, %v7500
  %v7502 = vadd.f32 %v7498, %v7501
  %vm7503 = vweird.f32 %v7398
  %vm7504 = vweird.f32 %v7498
  %vm7505 = vmor %vm7503, %vm7504
  %v7506 = vsel %vm7505, %v7498, %v7502
  %v7507 = vand.u32 2147483647, %v7398
  %vm7508 = vcmp.eq.f32.partialorder %v7507, 8.507059e+37
  %v7509 = vand.u32 %v7398, 2147483648
  %v7510 = vor.u32 1.1754944e-38, %v7509
  %v7511 = vsel %vm7508, %v7510, %v7506
  %v7512 = vmul.f32 1.0, %v7511
  %v7513 = vrcp.pop %v7399
  %v7514 = vmul.f32 %v7399, %v7513
  %v7515 = vsub.f32 1.0, %v7514
  %v7516 = vmul.f32 %v7513, %v7515
  %v7517 = vadd.f32 %v7513, %v7516
  %vm7518 = vweird.f32 %v7399
  %vm7519 = vweird.f32 %v7513
  %vm7520 = vmor %vm7518, %vm7519
  %v7521 = vsel %vm7520, %v7513, %v7517
  %v7522 = vand.u32 2147483647, %v7399
  %vm7523 = vcmp.eq.f32.partialorder %v7522, 8.507059e+37
  %v7524 = vand.u32 %v7399, 2147483648
  %v7525 = vor.u32 1.1754944e-38, %v7524
  %v7526 = vsel %vm7523, %v7525, %v7521
  %v7527 = vmul.f32 1.0, %v7526
  %v7528 = vrcp.pop %v7400
  %v7529 = vmul.f32 %v7400, %v7528
  %v7530 = vsub.f32 1.0, %v7529
  %v7531 = vmul.f32 %v7528, %v7530
  %v7532 = vadd.f32 %v7528, %v7531
  %vm7533 = vweird.f32 %v7400
  %vm7534 = vweird.f32 %v7528
  %vm7535 = vmor %vm7533, %vm7534
  %v7536 = vsel %vm7535, %v7528, %v7532
  %v7537 = vand.u32 2147483647, %v7400
  %vm7538 = vcmp.eq.f32.partialorder %v7537, 8.507059e+37
  %v7539 = vand.u32 %v7400, 2147483648
  %v7540 = vor.u32 1.1754944e-38, %v7539
  %v7541 = vsel %vm7538, %v7540, %v7536
  %v7542 = vmul.f32 1.0, %v7541
  %v7543 = vrcp.pop %v7401
  %v7544 = vmul.f32 %v7401, %v7543
  %v7545 = vsub.f32 1.0, %v7544
  %v7546 = vmul.f32 %v7543, %v7545
  %v7547 = vadd.f32 %v7543, %v7546
  %vm7548 = vweird.f32 %v7401
  %vm7549 = vweird.f32 %v7543
  %vm7550 = vmor %vm7548, %vm7549
  %v7551 = vsel %vm7550, %v7543, %v7547
  %v7552 = vand.u32 2147483647, %v7401
  %vm7553 = vcmp.eq.f32.partialorder %v7552, 8.507059e+37
  %v7554 = vand.u32 %v7401, 2147483648
  %v7555 = vor.u32 1.1754944e-38, %v7554
  %v7556 = vsel %vm7553, %v7555, %v7551
  %v7557 = vmul.f32 1.0, %v7556
  %v7558 = vrcp.pop %v7402
  %v7559 = vmul.f32 %v7402, %v7558
  %v7560 = vsub.f32 1.0, %v7559
  %v7561 = vmul.f32 %v7558, %v7560
  %v7562 = vadd.f32 %v7558, %v7561
  %vm7563 = vweird.f32 %v7402
  %vm7564 = vweird.f32 %v7558
  %vm7565 = vmor %vm7563, %vm7564
  %v7566 = vsel %vm7565, %v7558, %v7562
  %v7567 = vand.u32 2147483647, %v7402
  %vm7568 = vcmp.eq.f32.partialorder %v7567, 8.507059e+37
  %v7569 = vand.u32 %v7402, 2147483648
  %v7570 = vor.u32 1.1754944e-38, %v7569
  %v7571 = vsel %vm7568, %v7570, %v7566
  %v7572 = vmul.f32 1.0, %v7571
  %v7573 = vrcp.pop %v7403
  %v7574 = vmul.f32 %v7403, %v7573
  %v7575 = vsub.f32 1.0, %v7574
  %v7576 = vmul.f32 %v7573, %v7575
  %v7577 = vadd.f32 %v7573, %v7576
  %vm7578 = vweird.f32 %v7403
  %vm7579 = vweird.f32 %v7573
  %vm7580 = vmor %vm7578, %vm7579
  %v7581 = vsel %vm7580, %v7573, %v7577
  %v7582 = vand.u32 2147483647, %v7403
  %vm7583 = vcmp.eq.f32.partialorder %v7582, 8.507059e+37
  %v7584 = vand.u32 %v7403, 2147483648
  %v7585 = vor.u32 1.1754944e-38, %v7584
  %v7586 = vsel %vm7583, %v7585, %v7581
  %v7587 = vmul.f32 1.0, %v7586
  %v7588 = vrcp.pop %v7404
  %v7589 = vmul.f32 %v7404, %v7588
  %v7590 = vsub.f32 1.0, %v7589
  %v7591 = vmul.f32 %v7588, %v7590
  %v7592 = vadd.f32 %v7588, %v7591
  %vm7593 = vweird.f32 %v7404
  %vm7594 = vweird.f32 %v7588
  %vm7595 = vmor %vm7593, %vm7594
  %v7596 = vsel %vm7595, %v7588, %v7592
  %v7597 = vand.u32 2147483647, %v7404
  %vm7598 = vcmp.eq.f32.partialorder %v7597, 8.507059e+37
  %v7599 = vand.u32 %v7404, 2147483648
  %v7600 = vor.u32 1.1754944e-38, %v7599
  %v7601 = vsel %vm7598, %v7600, %v7596
  %v7602 = vmul.f32 1.0, %v7601
  %v7603 = vrcp.pop %v7405
  %v7604 = vmul.f32 %v7405, %v7603
  %v7605 = vsub.f32 1.0, %v7604
  %v7606 = vmul.f32 %v7603, %v7605
  %v7607 = vadd.f32 %v7603, %v7606
  %vm7608 = vweird.f32 %v7405
  %vm7609 = vweird.f32 %v7603
  %vm7610 = vmor %vm7608, %vm7609
  %v7611 = vsel %vm7610, %v7603, %v7607
  %v7612 = vand.u32 2147483647, %v7405
  %vm7613 = vcmp.eq.f32.partialorder %v7612, 8.507059e+37
  %v7614 = vand.u32 %v7405, 2147483648
  %v7615 = vor.u32 1.1754944e-38, %v7614
  %v7616 = vsel %vm7613, %v7615, %v7611
  %v7617 = vmul.f32 1.0, %v7616
  %v7618 = vrcp.pop %v7406
  %v7619 = vmul.f32 %v7406, %v7618
  %v7620 = vsub.f32 1.0, %v7619
  %v7621 = vmul.f32 %v7618, %v7620
  %v7622 = vadd.f32 %v7618, %v7621
  %vm7623 = vweird.f32 %v7406
  %vm7624 = vweird.f32 %v7618
  %vm7625 = vmor %vm7623, %vm7624
  %v7626 = vsel %vm7625, %v7618, %v7622
  %v7627 = vand.u32 2147483647, %v7406
  %vm7628 = vcmp.eq.f32.partialorder %v7627, 8.507059e+37
  %v7629 = vand.u32 %v7406, 2147483648
  %v7630 = vor.u32 1.1754944e-38, %v7629
  %v7631 = vsel %vm7628, %v7630, %v7626
  %v7632 = vmul.f32 1.0, %v7631
  %v7633 = vrcp.pop %v7407
  %v7634 = vmul.f32 %v7407, %v7633
  %v7635 = vsub.f32 1.0, %v7634
  %v7636 = vmul.f32 %v7633, %v7635
  %v7637 = vadd.f32 %v7633, %v7636
  %vm7638 = vweird.f32 %v7407
  %vm7639 = vweird.f32 %v7633
  %vm7640 = vmor %vm7638, %vm7639
  %v7641 = vsel %vm7640, %v7633, %v7637
  %v7642 = vand.u32 2147483647, %v7407
  %vm7643 = vcmp.eq.f32.partialorder %v7642, 8.507059e+37
  %v7644 = vand.u32 %v7407, 2147483648
  %v7645 = vor.u32 1.1754944e-38, %v7644
  %v7646 = vsel %vm7643, %v7645, %v7641
  %v7647 = vmul.f32 1.0, %v7646
  %v7648 = vtanh.pop %v7328
  %v7649 = vtanh.pop %v7329
  %v7650 = vtanh.pop %v7330
  %v7651 = vtanh.pop %v7331
  %v7652 = vtanh.pop %v7332
  %v7653 = vtanh.pop %v7333
  %v7654 = vtanh.pop %v7334
  %v7655 = vtanh.pop %v7335
  %v7656 = vtanh.pop %v7336
  %v7657 = vtanh.pop %v7337
  %v7658 = vtanh.pop %v7338
  %v7659 = vtanh.pop %v7339
  %v7660 = vtanh.pop %v7340
  %v7661 = vtanh.pop %v7341
  %v7662 = vtanh.pop %v7342
  %v7663 = vtanh.pop %v7343
  %v7664 = vmul.f32 %v7422, %v6973
  %v7665 = vmul.f32 %v7437, %v6974
  %v7666 = vmul.f32 %v7452, %v6975
  %v7667 = vmul.f32 %v7467, %v6976
  %v7668 = vmul.f32 %v7482, %v6977
  %v7669 = vmul.f32 %v7497, %v6978
  %v7670 = vmul.f32 %v7512, %v6979
  %v7671 = vmul.f32 %v7527, %v6980
  %v7672 = vmul.f32 %v7542, %v6981
  %v7673 = vmul.f32 %v7557, %v6982
  %v7674 = vmul.f32 %v7572, %v6983
  %v7675 = vmul.f32 %v7587, %v6984
  %v7676 = vmul.f32 %v7602, %v6985
  %v7677 = vmul.f32 %v7617, %v6986
  %v7678 = vmul.f32 %v7632, %v6987
  %v7679 = vmul.f32 %v7647, %v6988
  %7696 = vrot.lane.b32.xlu0 %v7648, 32
  %v7697 = vpop.permute.xlu0 %7696
  %7698 = vrot.lane.b32.xlu0 %v7649, 32
  %v7699 = vpop.permute.xlu0 %7698
  %7700 = vrot.lane.b32.xlu0 %v7650, 32
  %v7701 = vpop.permute.xlu0 %7700
  %7702 = vrot.lane.b32.xlu0 %v7651, 32
  %v7703 = vpop.permute.xlu0 %7702
  %7704 = vrot.lane.b32.xlu0 %v7652, 32
  %v7705 = vpop.permute.xlu0 %7704
  %7706 = vrot.lane.b32.xlu0 %v7653, 32
  %v7707 = vpop.permute.xlu0 %7706
  %7708 = vrot.lane.b32.xlu0 %v7654, 32
  %v7709 = vpop.permute.xlu0 %7708
  %7710 = vrot.lane.b32.xlu0 %v7655, 32
  %v7711 = vpop.permute.xlu0 %7710
  %7712 = vrot.lane.b32.xlu0 %v7656, 32
  %v7713 = vpop.permute.xlu0 %7712
  %7714 = vrot.lane.b32.xlu0 %v7657, 32
  %v7715 = vpop.permute.xlu0 %7714
  %7716 = vrot.lane.b32.xlu0 %v7658, 32
  %v7717 = vpop.permute.xlu0 %7716
  %7718 = vrot.lane.b32.xlu0 %v7659, 32
  %v7719 = vpop.permute.xlu0 %7718
  %7720 = vrot.lane.b32.xlu0 %v7660, 32
  %v7721 = vpop.permute.xlu0 %7720
  %7722 = vrot.lane.b32.xlu0 %v7661, 32
  %v7723 = vpop.permute.xlu0 %7722
  %7724 = vrot.lane.b32.xlu0 %v7662, 32
  %v7725 = vpop.permute.xlu0 %7724
  %7726 = vrot.lane.b32.xlu0 %v7663, 32
  %v7727 = vpop.permute.xlu0 %7726
  %v7744 = vmul.f32 %v7422, %v7697
  %v7745 = vmul.f32 %v7437, %v7699
  %v7746 = vmul.f32 %v7452, %v7701
  %v7747 = vmul.f32 %v7467, %v7703
  %v7748 = vmul.f32 %v7482, %v7705
  %v7749 = vmul.f32 %v7497, %v7707
  %v7750 = vmul.f32 %v7512, %v7709
  %v7751 = vmul.f32 %v7527, %v7711
  %v7752 = vmul.f32 %v7542, %v7713
  %v7753 = vmul.f32 %v7557, %v7715
  %v7754 = vmul.f32 %v7572, %v7717
  %v7755 = vmul.f32 %v7587, %v7719
  %v7756 = vmul.f32 %v7602, %v7721
  %v7757 = vmul.f32 %v7617, %v7723
  %v7758 = vmul.f32 %v7632, %v7725
  %v7759 = vmul.f32 %v7647, %v7727
  %7776 = vrot.lane.b32.xlu0 %v7744, 32
  %v7777 = vpop.permute.xlu0 %7776
  %7778 = vrot.lane.b32.xlu0 %v7745, 32
  %v7779 = vpop.permute.xlu0 %7778
  %7780 = vrot.lane.b32.xlu0 %v7746, 32
  %v7781 = vpop.permute.xlu0 %7780
  %7782 = vrot.lane.b32.xlu0 %v7747, 32
  %v7783 = vpop.permute.xlu0 %7782
  %7784 = vrot.lane.b32.xlu0 %v7748, 32
  %v7785 = vpop.permute.xlu0 %7784
  %7786 = vrot.lane.b32.xlu0 %v7749, 32
  %v7787 = vpop.permute.xlu0 %7786
  %7788 = vrot.lane.b32.xlu0 %v7750, 32
  %v7789 = vpop.permute.xlu0 %7788
  %7790 = vrot.lane.b32.xlu0 %v7751, 32
  %v7791 = vpop.permute.xlu0 %7790
  %7792 = vrot.lane.b32.xlu0 %v7752, 32
  %v7793 = vpop.permute.xlu0 %7792
  %7794 = vrot.lane.b32.xlu0 %v7753, 32
  %v7795 = vpop.permute.xlu0 %7794
  %7796 = vrot.lane.b32.xlu0 %v7754, 32
  %v7797 = vpop.permute.xlu0 %7796
  %7798 = vrot.lane.b32.xlu0 %v7755, 32
  %v7799 = vpop.permute.xlu0 %7798
  %7800 = vrot.lane.b32.xlu0 %v7756, 32
  %v7801 = vpop.permute.xlu0 %7800
  %7802 = vrot.lane.b32.xlu0 %v7757, 32
  %v7803 = vpop.permute.xlu0 %7802
  %7804 = vrot.lane.b32.xlu0 %v7758, 32
  %v7805 = vpop.permute.xlu0 %7804
  %7806 = vrot.lane.b32.xlu0 %v7759, 32
  %v7807 = vpop.permute.xlu0 %7806
  %v7824 = vadd.f32 %v7664, %v7777
  %v7825 = vadd.f32 %v7665, %v7779
  %v7826 = vadd.f32 %v7666, %v7781
  %v7827 = vadd.f32 %v7667, %v7783
  %v7828 = vadd.f32 %v7668, %v7785
  %v7829 = vadd.f32 %v7669, %v7787
  %v7830 = vadd.f32 %v7670, %v7789
  %v7831 = vadd.f32 %v7671, %v7791
  %v7832 = vadd.f32 %v7672, %v7793
  %v7833 = vadd.f32 %v7673, %v7795
  %v7834 = vadd.f32 %v7674, %v7797
  %v7835 = vadd.f32 %v7675, %v7799
  %v7836 = vadd.f32 %v7676, %v7801
  %v7837 = vadd.f32 %v7677, %v7803
  %v7838 = vadd.f32 %v7678, %v7805
  %v7839 = vadd.f32 %v7679, %v7807
  %v7840 = vtanh.pop %v7824
  %v7841 = vtanh.pop %v7825
  %v7842 = vtanh.pop %v7826
  %v7843 = vtanh.pop %v7827
  %v7844 = vtanh.pop %v7828
  %v7845 = vtanh.pop %v7829
  %v7846 = vtanh.pop %v7830
  %v7847 = vtanh.pop %v7831
  %v7848 = vtanh.pop %v7832
  %v7849 = vtanh.pop %v7833
  %v7850 = vtanh.pop %v7834
  %v7851 = vtanh.pop %v7835
  %v7852 = vtanh.pop %v7836
  %v7853 = vtanh.pop %v7837
  %v7854 = vtanh.pop %v7838
  %v7855 = vtanh.pop %v7839
  %7872 = vrot.lane.b32.xlu0 %v7840, 32
  %v7873 = vpop.permute.xlu0 %7872
  %7874 = vrot.lane.b32.xlu0 %v7841, 32
  %v7875 = vpop.permute.xlu0 %7874
  %7876 = vrot.lane.b32.xlu0 %v7842, 32
  %v7877 = vpop.permute.xlu0 %7876
  %7878 = vrot.lane.b32.xlu0 %v7843, 32
  %v7879 = vpop.permute.xlu0 %7878
  %7880 = vrot.lane.b32.xlu0 %v7844, 32
  %v7881 = vpop.permute.xlu0 %7880
  %7882 = vrot.lane.b32.xlu0 %v7845, 32
  %v7883 = vpop.permute.xlu0 %7882
  %7884 = vrot.lane.b32.xlu0 %v7846, 32
  %v7885 = vpop.permute.xlu0 %7884
  %7886 = vrot.lane.b32.xlu0 %v7847, 32
  %v7887 = vpop.permute.xlu0 %7886
  %7888 = vrot.lane.b32.xlu0 %v7848, 32
  %v7889 = vpop.permute.xlu0 %7888
  %7890 = vrot.lane.b32.xlu0 %v7849, 32
  %v7891 = vpop.permute.xlu0 %7890
  %7892 = vrot.lane.b32.xlu0 %v7850, 32
  %v7893 = vpop.permute.xlu0 %7892
  %7894 = vrot.lane.b32.xlu0 %v7851, 32
  %v7895 = vpop.permute.xlu0 %7894
  %7896 = vrot.lane.b32.xlu0 %v7852, 32
  %v7897 = vpop.permute.xlu0 %7896
  %7898 = vrot.lane.b32.xlu0 %v7853, 32
  %v7899 = vpop.permute.xlu0 %7898
  %7900 = vrot.lane.b32.xlu0 %v7854, 32
  %v7901 = vpop.permute.xlu0 %7900
  %7902 = vrot.lane.b32.xlu0 %v7855, 32
  %v7903 = vpop.permute.xlu0 %7902
  %v7920 = vmul.f32 %v7422, %v7873
  %v7921 = vmul.f32 %v7437, %v7875
  %v7922 = vmul.f32 %v7452, %v7877
  %v7923 = vmul.f32 %v7467, %v7879
  %v7924 = vmul.f32 %v7482, %v7881
  %v7925 = vmul.f32 %v7497, %v7883
  %v7926 = vmul.f32 %v7512, %v7885
  %v7927 = vmul.f32 %v7527, %v7887
  %v7928 = vmul.f32 %v7542, %v7889
  %v7929 = vmul.f32 %v7557, %v7891
  %v7930 = vmul.f32 %v7572, %v7893
  %v7931 = vmul.f32 %v7587, %v7895
  %v7932 = vmul.f32 %v7602, %v7897
  %v7933 = vmul.f32 %v7617, %v7899
  %v7934 = vmul.f32 %v7632, %v7901
  %v7935 = vmul.f32 %v7647, %v7903
  %v7936 = vpack.c.bf16 %v7920, %v7920
  %v7937 = vpack.c.bf16 %v7921, %v7921
  %v7938 = vpack.c.bf16 %v7922, %v7922
  %v7939 = vpack.c.bf16 %v7923, %v7923
  %v7940 = vpack.c.bf16 %v7924, %v7924
  %v7941 = vpack.c.bf16 %v7925, %v7925
  %v7942 = vpack.c.bf16 %v7926, %v7926
  %v7943 = vpack.c.bf16 %v7927, %v7927
  %v7944 = vpack.c.bf16 %v7928, %v7928
  %v7945 = vpack.c.bf16 %v7929, %v7929
  %v7946 = vpack.c.bf16 %v7930, %v7930
  %v7947 = vpack.c.bf16 %v7931, %v7931
  %v7948 = vpack.c.bf16 %v7932, %v7932
  %v7949 = vpack.c.bf16 %v7933, %v7933
  %v7950 = vpack.c.bf16 %v7934, %v7934
  %v7951 = vpack.c.bf16 %v7935, %v7935
  %7968 = vrot.lane.b32.xlu0 %v7936, 64
  %v7969 = vpop.permute.xlu0 %7968
  %7970 = vrot.lane.b32.xlu0 %v7937, 64
  %v7971 = vpop.permute.xlu0 %7970
  %7972 = vrot.lane.b32.xlu0 %v7938, 64
  %v7973 = vpop.permute.xlu0 %7972
  %7974 = vrot.lane.b32.xlu0 %v7939, 64
  %v7975 = vpop.permute.xlu0 %7974
  %7976 = vrot.lane.b32.xlu0 %v7940, 64
  %v7977 = vpop.permute.xlu0 %7976
  %7978 = vrot.lane.b32.xlu0 %v7941, 64
  %v7979 = vpop.permute.xlu0 %7978
  %7980 = vrot.lane.b32.xlu0 %v7942, 64
  %v7981 = vpop.permute.xlu0 %7980
  %7982 = vrot.lane.b32.xlu0 %v7943, 64
  %v7983 = vpop.permute.xlu0 %7982
  %7984 = vrot.lane.b32.xlu0 %v7944, 64
  %v7985 = vpop.permute.xlu0 %7984
  %7986 = vrot.lane.b32.xlu0 %v7945, 64
  %v7987 = vpop.permute.xlu0 %7986
  %7988 = vrot.lane.b32.xlu0 %v7946, 64
  %v7989 = vpop.permute.xlu0 %7988
  %7990 = vrot.lane.b32.xlu0 %v7947, 64
  %v7991 = vpop.permute.xlu0 %7990
  %7992 = vrot.lane.b32.xlu0 %v7948, 64
  %v7993 = vpop.permute.xlu0 %7992
  %7994 = vrot.lane.b32.xlu0 %v7949, 64
  %v7995 = vpop.permute.xlu0 %7994
  %7996 = vrot.lane.b32.xlu0 %v7950, 64
  %v7997 = vpop.permute.xlu0 %7996
  %7998 = vrot.lane.b32.xlu0 %v7951, 64
  %v7999 = vpop.permute.xlu0 %7998
  %s8016 = scalar_lea.vmem [#allocation2], 448
  %8017 = vst.msk [vmem:[%s8016] sm:$0xf] %vm2059, %v7969
  %8018 = vst.msk [vmem:[%s8016 + $0x4] sm:$0xf] %vm2059, %v7971
  %8019 = vst.msk [vmem:[%s8016 + $0x8] sm:$0xf] %vm2059, %v7973
  %8020 = vst.msk [vmem:[%s8016 + $0xc] sm:$0xf] %vm2059, %v7975
  %8021 = vst.msk [vmem:[%s8016 + $0x10] sm:$0xf] %vm2059, %v7977
  %8022 = vst.msk [vmem:[%s8016 + $0x14] sm:$0xf] %vm2059, %v7979
  %8023 = vst.msk [vmem:[%s8016 + $0x18] sm:$0xf] %vm2059, %v7981
  %8024 = vst.msk [vmem:[%s8016 + $0x1c] sm:$0xf] %vm2059, %v7983
  %8025 = vst.msk [vmem:[%s8016 + $0x20] sm:$0xf] %vm2059, %v7985
  %8026 = vst.msk [vmem:[%s8016 + $0x24] sm:$0xf] %vm2059, %v7987
  %8027 = vst.msk [vmem:[%s8016 + $0x28] sm:$0xf] %vm2059, %v7989
  %8028 = vst.msk [vmem:[%s8016 + $0x2c] sm:$0xf] %vm2059, %v7991
  %8029 = vst.msk [vmem:[%s8016 + $0x30] sm:$0xf] %vm2059, %v7993
  %8030 = vst.msk [vmem:[%s8016 + $0x34] sm:$0xf] %vm2059, %v7995
  %8031 = vst.msk [vmem:[%s8016 + $0x38] sm:$0xf] %vm2059, %v7997
  %8032 = vst.msk [vmem:[%s8016 + $0x3c] sm:$0xf] %vm2059, %v7999
  %v8033 = vld [vmem:[#allocation2] sm:$0xf]
  %v8034 = vld [vmem:[#allocation2 + $0x4] sm:$0xf]
  %v8035 = vld [vmem:[#allocation2 + $0x8] sm:$0xf]
  %v8036 = vld [vmem:[#allocation2 + $0xc] sm:$0xf]
  %v8037 = vld [vmem:[#allocation2 + $0x10] sm:$0xf]
  %v8038 = vld [vmem:[#allocation2 + $0x14] sm:$0xf]
  %v8039 = vld [vmem:[#allocation2 + $0x18] sm:$0xf]
  %v8040 = vld [vmem:[#allocation2 + $0x1c] sm:$0xf]
  %v8041 = vld [vmem:[#allocation2 + $0x20] sm:$0xf]
  %v8042 = vld [vmem:[#allocation2 + $0x24] sm:$0xf]
  %v8043 = vld [vmem:[#allocation2 + $0x28] sm:$0xf]
  %v8044 = vld [vmem:[#allocation2 + $0x2c] sm:$0xf]
  %v8045 = vld [vmem:[#allocation2 + $0x30] sm:$0xf]
  %v8046 = vld [vmem:[#allocation2 + $0x34] sm:$0xf]
  %v8047 = vld [vmem:[#allocation2 + $0x38] sm:$0xf]
  %v8048 = vld [vmem:[#allocation2 + $0x3c] sm:$0xf]
  %v8049 = vld [vmem:[#allocation2 + $0x40] sm:$0xf]
  %v8050 = vld [vmem:[#allocation2 + $0x44] sm:$0xf]
  %v8051 = vld [vmem:[#allocation2 + $0x48] sm:$0xf]
  %v8052 = vld [vmem:[#allocation2 + $0x4c] sm:$0xf]
  %v8053 = vld [vmem:[#allocation2 + $0x50] sm:$0xf]
  %v8054 = vld [vmem:[#allocation2 + $0x54] sm:$0xf]
  %v8055 = vld [vmem:[#allocation2 + $0x58] sm:$0xf]
  %v8056 = vld [vmem:[#allocation2 + $0x5c] sm:$0xf]
  %v8057 = vld [vmem:[#allocation2 + $0x60] sm:$0xf]
  %v8058 = vld [vmem:[#allocation2 + $0x64] sm:$0xf]
  %v8059 = vld [vmem:[#allocation2 + $0x68] sm:$0xf]
  %v8060 = vld [vmem:[#allocation2 + $0x6c] sm:$0xf]
  %v8061 = vld [vmem:[#allocation2 + $0x70] sm:$0xf]
  %v8062 = vld [vmem:[#allocation2 + $0x74] sm:$0xf]
  %v8063 = vld [vmem:[#allocation2 + $0x78] sm:$0xf]
  %v8064 = vld [vmem:[#allocation2 + $0x7c] sm:$0xf]
  %v8065 = vld [vmem:[#allocation2 + $0x80] sm:$0xf]
  %v8066 = vld [vmem:[#allocation2 + $0x84] sm:$0xf]
  %v8067 = vld [vmem:[#allocation2 + $0x88] sm:$0xf]
  %v8068 = vld [vmem:[#allocation2 + $0x8c] sm:$0xf]
  %v8069 = vld [vmem:[#allocation2 + $0x90] sm:$0xf]
  %v8070 = vld [vmem:[#allocation2 + $0x94] sm:$0xf]
  %v8071 = vld [vmem:[#allocation2 + $0x98] sm:$0xf]
  %v8072 = vld [vmem:[#allocation2 + $0x9c] sm:$0xf]
  %v8073 = vld [vmem:[#allocation2 + $0xa0] sm:$0xf]
  %v8074 = vld [vmem:[#allocation2 + $0xa4] sm:$0xf]
  %v8075 = vld [vmem:[#allocation2 + $0xa8] sm:$0xf]
  %v8076 = vld [vmem:[#allocation2 + $0xac] sm:$0xf]
  %v8077 = vld [vmem:[#allocation2 + $0xb0] sm:$0xf]
  %v8078 = vld [vmem:[#allocation2 + $0xb4] sm:$0xf]
  %v8079 = vld [vmem:[#allocation2 + $0xb8] sm:$0xf]
  %v8080 = vld [vmem:[#allocation2 + $0xbc] sm:$0xf]
  %v8081 = vld [vmem:[#allocation2 + $0xc0] sm:$0xf]
  %v8082 = vld [vmem:[#allocation2 + $0xc4] sm:$0xf]
  %v8083 = vld [vmem:[#allocation2 + $0xc8] sm:$0xf]
  %v8084 = vld [vmem:[#allocation2 + $0xcc] sm:$0xf]
  %v8085 = vld [vmem:[#allocation2 + $0xd0] sm:$0xf]
  %v8086 = vld [vmem:[#allocation2 + $0xd4] sm:$0xf]
  %v8087 = vld [vmem:[#allocation2 + $0xd8] sm:$0xf]
  %v8088 = vld [vmem:[#allocation2 + $0xdc] sm:$0xf]
  %v8089 = vld [vmem:[#allocation2 + $0xe0] sm:$0xf]
  %v8090 = vld [vmem:[#allocation2 + $0xe4] sm:$0xf]
  %v8091 = vld [vmem:[#allocation2 + $0xe8] sm:$0xf]
  %v8092 = vld [vmem:[#allocation2 + $0xec] sm:$0xf]
  %v8093 = vld [vmem:[#allocation2 + $0xf0] sm:$0xf]
  %v8094 = vld [vmem:[#allocation2 + $0xf4] sm:$0xf]
  %v8095 = vld [vmem:[#allocation2 + $0xf8] sm:$0xf]
  %v8096 = vld [vmem:[#allocation2 + $0xfc] sm:$0xf]
  %v8097 = vld [vmem:[#allocation2 + $0x100] sm:$0xf]
  %v8098 = vld [vmem:[#allocation2 + $0x104] sm:$0xf]
  %v8099 = vld [vmem:[#allocation2 + $0x108] sm:$0xf]
  %v8100 = vld [vmem:[#allocation2 + $0x10c] sm:$0xf]
  %v8101 = vld [vmem:[#allocation2 + $0x110] sm:$0xf]
  %v8102 = vld [vmem:[#allocation2 + $0x114] sm:$0xf]
  %v8103 = vld [vmem:[#allocation2 + $0x118] sm:$0xf]
  %v8104 = vld [vmem:[#allocation2 + $0x11c] sm:$0xf]
  %v8105 = vld [vmem:[#allocation2 + $0x120] sm:$0xf]
  %v8106 = vld [vmem:[#allocation2 + $0x124] sm:$0xf]
  %v8107 = vld [vmem:[#allocation2 + $0x128] sm:$0xf]
  %v8108 = vld [vmem:[#allocation2 + $0x12c] sm:$0xf]
  %v8109 = vld [vmem:[#allocation2 + $0x130] sm:$0xf]
  %v8110 = vld [vmem:[#allocation2 + $0x134] sm:$0xf]
  %v8111 = vld [vmem:[#allocation2 + $0x138] sm:$0xf]
  %v8112 = vld [vmem:[#allocation2 + $0x13c] sm:$0xf]
  %v8113 = vld [vmem:[#allocation2 + $0x140] sm:$0xf]
  %v8114 = vld [vmem:[#allocation2 + $0x144] sm:$0xf]
  %v8115 = vld [vmem:[#allocation2 + $0x148] sm:$0xf]
  %v8116 = vld [vmem:[#allocation2 + $0x14c] sm:$0xf]
  %v8117 = vld [vmem:[#allocation2 + $0x150] sm:$0xf]
  %v8118 = vld [vmem:[#allocation2 + $0x154] sm:$0xf]
  %v8119 = vld [vmem:[#allocation2 + $0x158] sm:$0xf]
  %v8120 = vld [vmem:[#allocation2 + $0x15c] sm:$0xf]
  %v8121 = vld [vmem:[#allocation2 + $0x160] sm:$0xf]
  %v8122 = vld [vmem:[#allocation2 + $0x164] sm:$0xf]
  %v8123 = vld [vmem:[#allocation2 + $0x168] sm:$0xf]
  %v8124 = vld [vmem:[#allocation2 + $0x16c] sm:$0xf]
  %v8125 = vld [vmem:[#allocation2 + $0x170] sm:$0xf]
  %v8126 = vld [vmem:[#allocation2 + $0x174] sm:$0xf]
  %v8127 = vld [vmem:[#allocation2 + $0x178] sm:$0xf]
  %v8128 = vld [vmem:[#allocation2 + $0x17c] sm:$0xf]
  %v8129 = vld [vmem:[#allocation2 + $0x180] sm:$0xf]
  %v8130 = vld [vmem:[#allocation2 + $0x184] sm:$0xf]
  %v8131 = vld [vmem:[#allocation2 + $0x188] sm:$0xf]
  %v8132 = vld [vmem:[#allocation2 + $0x18c] sm:$0xf]
  %v8133 = vld [vmem:[#allocation2 + $0x190] sm:$0xf]
  %v8134 = vld [vmem:[#allocation2 + $0x194] sm:$0xf]
  %v8135 = vld [vmem:[#allocation2 + $0x198] sm:$0xf]
  %v8136 = vld [vmem:[#allocation2 + $0x19c] sm:$0xf]
  %v8137 = vld [vmem:[#allocation2 + $0x1a0] sm:$0xf]
  %v8138 = vld [vmem:[#allocation2 + $0x1a4] sm:$0xf]
  %v8139 = vld [vmem:[#allocation2 + $0x1a8] sm:$0xf]
  %v8140 = vld [vmem:[#allocation2 + $0x1ac] sm:$0xf]
  %v8141 = vld [vmem:[#allocation2 + $0x1b0] sm:$0xf]
  %v8142 = vld [vmem:[#allocation2 + $0x1b4] sm:$0xf]
  %v8143 = vld [vmem:[#allocation2 + $0x1b8] sm:$0xf]
  %v8144 = vld [vmem:[#allocation2 + $0x1bc] sm:$0xf]
  %v8145 = vld [vmem:[#allocation2 + $0x1c0] sm:$0xf]
  %v8146 = vld [vmem:[#allocation2 + $0x1c4] sm:$0xf]
  %v8147 = vld [vmem:[#allocation2 + $0x1c8] sm:$0xf]
  %v8148 = vld [vmem:[#allocation2 + $0x1cc] sm:$0xf]
  %v8149 = vld [vmem:[#allocation2 + $0x1d0] sm:$0xf]
  %v8150 = vld [vmem:[#allocation2 + $0x1d4] sm:$0xf]
  %v8151 = vld [vmem:[#allocation2 + $0x1d8] sm:$0xf]
  %v8152 = vld [vmem:[#allocation2 + $0x1dc] sm:$0xf]
  %v8153 = vld [vmem:[#allocation2 + $0x1e0] sm:$0xf]
  %v8154 = vld [vmem:[#allocation2 + $0x1e4] sm:$0xf]
  %v8155 = vld [vmem:[#allocation2 + $0x1e8] sm:$0xf]
  %v8156 = vld [vmem:[#allocation2 + $0x1ec] sm:$0xf]
  %v8157 = vld [vmem:[#allocation2 + $0x1f0] sm:$0xf]
  %v8158 = vld [vmem:[#allocation2 + $0x1f4] sm:$0xf]
  %v8159 = vld [vmem:[#allocation2 + $0x1f8] sm:$0xf]
  %v8160 = vld [vmem:[#allocation2 + $0x1fc] sm:$0xf]
  %v8161 = vunpack.c.l.bf16 %v8033
  %v8162 = vunpack.c.l.bf16 %v8034
  %v8163 = vunpack.c.l.bf16 %v8035
  %v8164 = vunpack.c.l.bf16 %v8036
  %v8165 = vunpack.c.l.bf16 %v8037
  %v8166 = vunpack.c.l.bf16 %v8038
  %v8167 = vunpack.c.l.bf16 %v8039
  %v8168 = vunpack.c.l.bf16 %v8040
  %v8169 = vunpack.c.l.bf16 %v8041
  %v8170 = vunpack.c.l.bf16 %v8042
  %v8171 = vunpack.c.l.bf16 %v8043
  %v8172 = vunpack.c.l.bf16 %v8044
  %v8173 = vunpack.c.l.bf16 %v8045
  %v8174 = vunpack.c.l.bf16 %v8046
  %v8175 = vunpack.c.l.bf16 %v8047
  %v8176 = vunpack.c.l.bf16 %v8048
  %v8177 = vunpack.c.l.bf16 %v8049
  %v8178 = vunpack.c.l.bf16 %v8050
  %v8179 = vunpack.c.l.bf16 %v8051
  %v8180 = vunpack.c.l.bf16 %v8052
  %v8181 = vunpack.c.l.bf16 %v8053
  %v8182 = vunpack.c.l.bf16 %v8054
  %v8183 = vunpack.c.l.bf16 %v8055
  %v8184 = vunpack.c.l.bf16 %v8056
  %v8185 = vunpack.c.l.bf16 %v8057
  %v8186 = vunpack.c.l.bf16 %v8058
  %v8187 = vunpack.c.l.bf16 %v8059
  %v8188 = vunpack.c.l.bf16 %v8060
  %v8189 = vunpack.c.l.bf16 %v8061
  %v8190 = vunpack.c.l.bf16 %v8062
  %v8191 = vunpack.c.l.bf16 %v8063
  %v8192 = vunpack.c.l.bf16 %v8064
  %v8193 = vunpack.c.l.bf16 %v8065
  %v8194 = vunpack.c.l.bf16 %v8066
  %v8195 = vunpack.c.l.bf16 %v8067
  %v8196 = vunpack.c.l.bf16 %v8068
  %v8197 = vunpack.c.l.bf16 %v8069
  %v8198 = vunpack.c.l.bf16 %v8070
  %v8199 = vunpack.c.l.bf16 %v8071
  %v8200 = vunpack.c.l.bf16 %v8072
  %v8201 = vunpack.c.l.bf16 %v8073
  %v8202 = vunpack.c.l.bf16 %v8074
  %v8203 = vunpack.c.l.bf16 %v8075
  %v8204 = vunpack.c.l.bf16 %v8076
  %v8205 = vunpack.c.l.bf16 %v8077
  %v8206 = vunpack.c.l.bf16 %v8078
  %v8207 = vunpack.c.l.bf16 %v8079
  %v8208 = vunpack.c.l.bf16 %v8080
  %v8209 = vunpack.c.l.bf16 %v8081
  %v8210 = vunpack.c.l.bf16 %v8082
  %v8211 = vunpack.c.l.bf16 %v8083
  %v8212 = vunpack.c.l.bf16 %v8084
  %v8213 = vunpack.c.l.bf16 %v8085
  %v8214 = vunpack.c.l.bf16 %v8086
  %v8215 = vunpack.c.l.bf16 %v8087
  %v8216 = vunpack.c.l.bf16 %v8088
  %v8217 = vunpack.c.l.bf16 %v8089
  %v8218 = vunpack.c.l.bf16 %v8090
  %v8219 = vunpack.c.l.bf16 %v8091
  %v8220 = vunpack.c.l.bf16 %v8092
  %v8221 = vunpack.c.l.bf16 %v8093
  %v8222 = vunpack.c.l.bf16 %v8094
  %v8223 = vunpack.c.l.bf16 %v8095
  %v8224 = vunpack.c.l.bf16 %v8096
  %v8225 = vunpack.c.l.bf16 %v8097
  %v8226 = vunpack.c.l.bf16 %v8098
  %v8227 = vunpack.c.l.bf16 %v8099
  %v8228 = vunpack.c.l.bf16 %v8100
  %v8229 = vunpack.c.l.bf16 %v8101
  %v8230 = vunpack.c.l.bf16 %v8102
  %v8231 = vunpack.c.l.bf16 %v8103
  %v8232 = vunpack.c.l.bf16 %v8104
  %v8233 = vunpack.c.l.bf16 %v8105
  %v8234 = vunpack.c.l.bf16 %v8106
  %v8235 = vunpack.c.l.bf16 %v8107
  %v8236 = vunpack.c.l.bf16 %v8108
  %v8237 = vunpack.c.l.bf16 %v8109
  %v8238 = vunpack.c.l.bf16 %v8110
  %v8239 = vunpack.c.l.bf16 %v8111
  %v8240 = vunpack.c.l.bf16 %v8112
  %v8241 = vunpack.c.l.bf16 %v8113
  %v8242 = vunpack.c.l.bf16 %v8114
  %v8243 = vunpack.c.l.bf16 %v8115
  %v8244 = vunpack.c.l.bf16 %v8116
  %v8245 = vunpack.c.l.bf16 %v8117
  %v8246 = vunpack.c.l.bf16 %v8118
  %v8247 = vunpack.c.l.bf16 %v8119
  %v8248 = vunpack.c.l.bf16 %v8120
  %v8249 = vunpack.c.l.bf16 %v8121
  %v8250 = vunpack.c.l.bf16 %v8122
  %v8251 = vunpack.c.l.bf16 %v8123
  %v8252 = vunpack.c.l.bf16 %v8124
  %v8253 = vunpack.c.l.bf16 %v8125
  %v8254 = vunpack.c.l.bf16 %v8126
  %v8255 = vunpack.c.l.bf16 %v8127
  %v8256 = vunpack.c.l.bf16 %v8128
  %v8257 = vunpack.c.l.bf16 %v8129
  %v8258 = vunpack.c.l.bf16 %v8130
  %v8259 = vunpack.c.l.bf16 %v8131
  %v8260 = vunpack.c.l.bf16 %v8132
  %v8261 = vunpack.c.l.bf16 %v8133
  %v8262 = vunpack.c.l.bf16 %v8134
  %v8263 = vunpack.c.l.bf16 %v8135
  %v8264 = vunpack.c.l.bf16 %v8136
  %v8265 = vunpack.c.l.bf16 %v8137
  %v8266 = vunpack.c.l.bf16 %v8138
  %v8267 = vunpack.c.l.bf16 %v8139
  %v8268 = vunpack.c.l.bf16 %v8140
  %v8269 = vunpack.c.l.bf16 %v8141
  %v8270 = vunpack.c.l.bf16 %v8142
  %v8271 = vunpack.c.l.bf16 %v8143
  %v8272 = vunpack.c.l.bf16 %v8144
  %v8273 = vunpack.c.l.bf16 %v8145
  %v8274 = vunpack.c.l.bf16 %v8146
  %v8275 = vunpack.c.l.bf16 %v8147
  %v8276 = vunpack.c.l.bf16 %v8148
  %v8277 = vunpack.c.l.bf16 %v8149
  %v8278 = vunpack.c.l.bf16 %v8150
  %v8279 = vunpack.c.l.bf16 %v8151
  %v8280 = vunpack.c.l.bf16 %v8152
  %v8281 = vunpack.c.l.bf16 %v8153
  %v8282 = vunpack.c.l.bf16 %v8154
  %v8283 = vunpack.c.l.bf16 %v8155
  %v8284 = vunpack.c.l.bf16 %v8156
  %v8285 = vunpack.c.l.bf16 %v8157
  %v8286 = vunpack.c.l.bf16 %v8158
  %v8287 = vunpack.c.l.bf16 %v8159
  %v8288 = vunpack.c.l.bf16 %v8160
  %v8289 = vmul.f32 %v8161, 0.100097656
  %v8290 = vmul.f32 %v8162, 0.100097656
  %v8291 = vmul.f32 %v8163, 0.100097656
  %v8292 = vmul.f32 %v8164, 0.100097656
  %v8293 = vmul.f32 %v8165, 0.100097656
  %v8294 = vmul.f32 %v8166, 0.100097656
  %v8295 = vmul.f32 %v8167, 0.100097656
  %v8296 = vmul.f32 %v8168, 0.100097656
  %v8297 = vmul.f32 %v8169, 0.100097656
  %v8298 = vmul.f32 %v8170, 0.100097656
  %v8299 = vmul.f32 %v8171, 0.100097656
  %v8300 = vmul.f32 %v8172, 0.100097656
  %v8301 = vmul.f32 %v8173, 0.100097656
  %v8302 = vmul.f32 %v8174, 0.100097656
  %v8303 = vmul.f32 %v8175, 0.100097656
  %v8304 = vmul.f32 %v8176, 0.100097656
  %v8305 = vmul.f32 %v8177, 0.100097656
  %v8306 = vmul.f32 %v8178, 0.100097656
  %v8307 = vmul.f32 %v8179, 0.100097656
  %v8308 = vmul.f32 %v8180, 0.100097656
  %v8309 = vmul.f32 %v8181, 0.100097656
  %v8310 = vmul.f32 %v8182, 0.100097656
  %v8311 = vmul.f32 %v8183, 0.100097656
  %v8312 = vmul.f32 %v8184, 0.100097656
  %v8313 = vmul.f32 %v8185, 0.100097656
  %v8314 = vmul.f32 %v8186, 0.100097656
  %v8315 = vmul.f32 %v8187, 0.100097656
  %v8316 = vmul.f32 %v8188, 0.100097656
  %v8317 = vmul.f32 %v8189, 0.100097656
  %v8318 = vmul.f32 %v8190, 0.100097656
  %v8319 = vmul.f32 %v8191, 0.100097656
  %v8320 = vmul.f32 %v8192, 0.100097656
  %v8321 = vmul.f32 %v8193, 0.100097656
  %v8322 = vmul.f32 %v8194, 0.100097656
  %v8323 = vmul.f32 %v8195, 0.100097656
  %v8324 = vmul.f32 %v8196, 0.100097656
  %v8325 = vmul.f32 %v8197, 0.100097656
  %v8326 = vmul.f32 %v8198, 0.100097656
  %v8327 = vmul.f32 %v8199, 0.100097656
  %v8328 = vmul.f32 %v8200, 0.100097656
  %v8329 = vmul.f32 %v8201, 0.100097656
  %v8330 = vmul.f32 %v8202, 0.100097656
  %v8331 = vmul.f32 %v8203, 0.100097656
  %v8332 = vmul.f32 %v8204, 0.100097656
  %v8333 = vmul.f32 %v8205, 0.100097656
  %v8334 = vmul.f32 %v8206, 0.100097656
  %v8335 = vmul.f32 %v8207, 0.100097656
  %v8336 = vmul.f32 %v8208, 0.100097656
  %v8337 = vmul.f32 %v8209, 0.100097656
  %v8338 = vmul.f32 %v8210, 0.100097656
  %v8339 = vmul.f32 %v8211, 0.100097656
  %v8340 = vmul.f32 %v8212, 0.100097656
  %v8341 = vmul.f32 %v8213, 0.100097656
  %v8342 = vmul.f32 %v8214, 0.100097656
  %v8343 = vmul.f32 %v8215, 0.100097656
  %v8344 = vmul.f32 %v8216, 0.100097656
  %v8345 = vmul.f32 %v8217, 0.100097656
  %v8346 = vmul.f32 %v8218, 0.100097656
  %v8347 = vmul.f32 %v8219, 0.100097656
  %v8348 = vmul.f32 %v8220, 0.100097656
  %v8349 = vmul.f32 %v8221, 0.100097656
  %v8350 = vmul.f32 %v8222, 0.100097656
  %v8351 = vmul.f32 %v8223, 0.100097656
  %v8352 = vmul.f32 %v8224, 0.100097656
  %v8353 = vmul.f32 %v8225, 0.100097656
  %v8354 = vmul.f32 %v8226, 0.100097656
  %v8355 = vmul.f32 %v8227, 0.100097656
  %v8356 = vmul.f32 %v8228, 0.100097656
  %v8357 = vmul.f32 %v8229, 0.100097656
  %v8358 = vmul.f32 %v8230, 0.100097656
  %v8359 = vmul.f32 %v8231, 0.100097656
  %v8360 = vmul.f32 %v8232, 0.100097656
  %v8361 = vmul.f32 %v8233, 0.100097656
  %v8362 = vmul.f32 %v8234, 0.100097656
  %v8363 = vmul.f32 %v8235, 0.100097656
  %v8364 = vmul.f32 %v8236, 0.100097656
  %v8365 = vmul.f32 %v8237, 0.100097656
  %v8366 = vmul.f32 %v8238, 0.100097656
  %v8367 = vmul.f32 %v8239, 0.100097656
  %v8368 = vmul.f32 %v8240, 0.100097656
  %v8369 = vmul.f32 %v8241, 0.100097656
  %v8370 = vmul.f32 %v8242, 0.100097656
  %v8371 = vmul.f32 %v8243, 0.100097656
  %v8372 = vmul.f32 %v8244, 0.100097656
  %v8373 = vmul.f32 %v8245, 0.100097656
  %v8374 = vmul.f32 %v8246, 0.100097656
  %v8375 = vmul.f32 %v8247, 0.100097656
  %v8376 = vmul.f32 %v8248, 0.100097656
  %v8377 = vmul.f32 %v8249, 0.100097656
  %v8378 = vmul.f32 %v8250, 0.100097656
  %v8379 = vmul.f32 %v8251, 0.100097656
  %v8380 = vmul.f32 %v8252, 0.100097656
  %v8381 = vmul.f32 %v8253, 0.100097656
  %v8382 = vmul.f32 %v8254, 0.100097656
  %v8383 = vmul.f32 %v8255, 0.100097656
  %v8384 = vmul.f32 %v8256, 0.100097656
  %v8385 = vmul.f32 %v8257, 0.100097656
  %v8386 = vmul.f32 %v8258, 0.100097656
  %v8387 = vmul.f32 %v8259, 0.100097656
  %v8388 = vmul.f32 %v8260, 0.100097656
  %v8389 = vmul.f32 %v8261, 0.100097656
  %v8390 = vmul.f32 %v8262, 0.100097656
  %v8391 = vmul.f32 %v8263, 0.100097656
  %v8392 = vmul.f32 %v8264, 0.100097656
  %v8393 = vmul.f32 %v8265, 0.100097656
  %v8394 = vmul.f32 %v8266, 0.100097656
  %v8395 = vmul.f32 %v8267, 0.100097656
  %v8396 = vmul.f32 %v8268, 0.100097656
  %v8397 = vmul.f32 %v8269, 0.100097656
  %v8398 = vmul.f32 %v8270, 0.100097656
  %v8399 = vmul.f32 %v8271, 0.100097656
  %v8400 = vmul.f32 %v8272, 0.100097656
  %v8401 = vmul.f32 %v8273, 0.100097656
  %v8402 = vmul.f32 %v8274, 0.100097656
  %v8403 = vmul.f32 %v8275, 0.100097656
  %v8404 = vmul.f32 %v8276, 0.100097656
  %v8405 = vmul.f32 %v8277, 0.100097656
  %v8406 = vmul.f32 %v8278, 0.100097656
  %v8407 = vmul.f32 %v8279, 0.100097656
  %v8408 = vmul.f32 %v8280, 0.100097656
  %v8409 = vmul.f32 %v8281, 0.100097656
  %v8410 = vmul.f32 %v8282, 0.100097656
  %v8411 = vmul.f32 %v8283, 0.100097656
  %v8412 = vmul.f32 %v8284, 0.100097656
  %v8413 = vmul.f32 %v8285, 0.100097656
  %v8414 = vmul.f32 %v8286, 0.100097656
  %v8415 = vmul.f32 %v8287, 0.100097656
  %v8416 = vmul.f32 %v8288, 0.100097656
  %v8417 = vpack.c.bf16 %v8289, %v8289
  %v8418 = vpack.c.bf16 %v8290, %v8290
  %v8419 = vpack.c.bf16 %v8291, %v8291
  %v8420 = vpack.c.bf16 %v8292, %v8292
  %v8421 = vpack.c.bf16 %v8293, %v8293
  %v8422 = vpack.c.bf16 %v8294, %v8294
  %v8423 = vpack.c.bf16 %v8295, %v8295
  %v8424 = vpack.c.bf16 %v8296, %v8296
  %v8425 = vpack.c.bf16 %v8297, %v8297
  %v8426 = vpack.c.bf16 %v8298, %v8298
  %v8427 = vpack.c.bf16 %v8299, %v8299
  %v8428 = vpack.c.bf16 %v8300, %v8300
  %v8429 = vpack.c.bf16 %v8301, %v8301
  %v8430 = vpack.c.bf16 %v8302, %v8302
  %v8431 = vpack.c.bf16 %v8303, %v8303
  %v8432 = vpack.c.bf16 %v8304, %v8304
  %v8433 = vpack.c.bf16 %v8305, %v8305
  %v8434 = vpack.c.bf16 %v8306, %v8306
  %v8435 = vpack.c.bf16 %v8307, %v8307
  %v8436 = vpack.c.bf16 %v8308, %v8308
  %v8437 = vpack.c.bf16 %v8309, %v8309
  %v8438 = vpack.c.bf16 %v8310, %v8310
  %v8439 = vpack.c.bf16 %v8311, %v8311
  %v8440 = vpack.c.bf16 %v8312, %v8312
  %v8441 = vpack.c.bf16 %v8313, %v8313
  %v8442 = vpack.c.bf16 %v8314, %v8314
  %v8443 = vpack.c.bf16 %v8315, %v8315
  %v8444 = vpack.c.bf16 %v8316, %v8316
  %v8445 = vpack.c.bf16 %v8317, %v8317
  %v8446 = vpack.c.bf16 %v8318, %v8318
  %v8447 = vpack.c.bf16 %v8319, %v8319
  %v8448 = vpack.c.bf16 %v8320, %v8320
  %v8449 = vpack.c.bf16 %v8321, %v8321
  %v8450 = vpack.c.bf16 %v8322, %v8322
  %v8451 = vpack.c.bf16 %v8323, %v8323
  %v8452 = vpack.c.bf16 %v8324, %v8324
  %v8453 = vpack.c.bf16 %v8325, %v8325
  %v8454 = vpack.c.bf16 %v8326, %v8326
  %v8455 = vpack.c.bf16 %v8327, %v8327
  %v8456 = vpack.c.bf16 %v8328, %v8328
  %v8457 = vpack.c.bf16 %v8329, %v8329
  %v8458 = vpack.c.bf16 %v8330, %v8330
  %v8459 = vpack.c.bf16 %v8331, %v8331
  %v8460 = vpack.c.bf16 %v8332, %v8332
  %v8461 = vpack.c.bf16 %v8333, %v8333
  %v8462 = vpack.c.bf16 %v8334, %v8334
  %v8463 = vpack.c.bf16 %v8335, %v8335
  %v8464 = vpack.c.bf16 %v8336, %v8336
  %v8465 = vpack.c.bf16 %v8337, %v8337
  %v8466 = vpack.c.bf16 %v8338, %v8338
  %v8467 = vpack.c.bf16 %v8339, %v8339
  %v8468 = vpack.c.bf16 %v8340, %v8340
  %v8469 = vpack.c.bf16 %v8341, %v8341
  %v8470 = vpack.c.bf16 %v8342, %v8342
  %v8471 = vpack.c.bf16 %v8343, %v8343
  %v8472 = vpack.c.bf16 %v8344, %v8344
  %v8473 = vpack.c.bf16 %v8345, %v8345
  %v8474 = vpack.c.bf16 %v8346, %v8346
  %v8475 = vpack.c.bf16 %v8347, %v8347
  %v8476 = vpack.c.bf16 %v8348, %v8348
  %v8477 = vpack.c.bf16 %v8349, %v8349
  %v8478 = vpack.c.bf16 %v8350, %v8350
  %v8479 = vpack.c.bf16 %v8351, %v8351
  %v8480 = vpack.c.bf16 %v8352, %v8352
  %v8481 = vpack.c.bf16 %v8353, %v8353
  %v8482 = vpack.c.bf16 %v8354, %v8354
  %v8483 = vpack.c.bf16 %v8355, %v8355
  %v8484 = vpack.c.bf16 %v8356, %v8356
  %v8485 = vpack.c.bf16 %v8357, %v8357
  %v8486 = vpack.c.bf16 %v8358, %v8358
  %v8487 = vpack.c.bf16 %v8359, %v8359
  %v8488 = vpack.c.bf16 %v8360, %v8360
  %v8489 = vpack.c.bf16 %v8361, %v8361
  %v8490 = vpack.c.bf16 %v8362, %v8362
  %v8491 = vpack.c.bf16 %v8363, %v8363
  %v8492 = vpack.c.bf16 %v8364, %v8364
  %v8493 = vpack.c.bf16 %v8365, %v8365
  %v8494 = vpack.c.bf16 %v8366, %v8366
  %v8495 = vpack.c.bf16 %v8367, %v8367
  %v8496 = vpack.c.bf16 %v8368, %v8368
  %v8497 = vpack.c.bf16 %v8369, %v8369
  %v8498 = vpack.c.bf16 %v8370, %v8370
  %v8499 = vpack.c.bf16 %v8371, %v8371
  %v8500 = vpack.c.bf16 %v8372, %v8372
  %v8501 = vpack.c.bf16 %v8373, %v8373
  %v8502 = vpack.c.bf16 %v8374, %v8374
  %v8503 = vpack.c.bf16 %v8375, %v8375
  %v8504 = vpack.c.bf16 %v8376, %v8376
  %v8505 = vpack.c.bf16 %v8377, %v8377
  %v8506 = vpack.c.bf16 %v8378, %v8378
  %v8507 = vpack.c.bf16 %v8379, %v8379
  %v8508 = vpack.c.bf16 %v8380, %v8380
  %v8509 = vpack.c.bf16 %v8381, %v8381
  %v8510 = vpack.c.bf16 %v8382, %v8382
  %v8511 = vpack.c.bf16 %v8383, %v8383
  %v8512 = vpack.c.bf16 %v8384, %v8384
  %v8513 = vpack.c.bf16 %v8385, %v8385
  %v8514 = vpack.c.bf16 %v8386, %v8386
  %v8515 = vpack.c.bf16 %v8387, %v8387
  %v8516 = vpack.c.bf16 %v8388, %v8388
  %v8517 = vpack.c.bf16 %v8389, %v8389
  %v8518 = vpack.c.bf16 %v8390, %v8390
  %v8519 = vpack.c.bf16 %v8391, %v8391
  %v8520 = vpack.c.bf16 %v8392, %v8392
  %v8521 = vpack.c.bf16 %v8393, %v8393
  %v8522 = vpack.c.bf16 %v8394, %v8394
  %v8523 = vpack.c.bf16 %v8395, %v8395
  %v8524 = vpack.c.bf16 %v8396, %v8396
  %v8525 = vpack.c.bf16 %v8397, %v8397
  %v8526 = vpack.c.bf16 %v8398, %v8398
  %v8527 = vpack.c.bf16 %v8399, %v8399
  %v8528 = vpack.c.bf16 %v8400, %v8400
  %v8529 = vpack.c.bf16 %v8401, %v8401
  %v8530 = vpack.c.bf16 %v8402, %v8402
  %v8531 = vpack.c.bf16 %v8403, %v8403
  %v8532 = vpack.c.bf16 %v8404, %v8404
  %v8533 = vpack.c.bf16 %v8405, %v8405
  %v8534 = vpack.c.bf16 %v8406, %v8406
  %v8535 = vpack.c.bf16 %v8407, %v8407
  %v8536 = vpack.c.bf16 %v8408, %v8408
  %v8537 = vpack.c.bf16 %v8409, %v8409
  %v8538 = vpack.c.bf16 %v8410, %v8410
  %v8539 = vpack.c.bf16 %v8411, %v8411
  %v8540 = vpack.c.bf16 %v8412, %v8412
  %v8541 = vpack.c.bf16 %v8413, %v8413
  %v8542 = vpack.c.bf16 %v8414, %v8414
  %v8543 = vpack.c.bf16 %v8415, %v8415
  %v8544 = vpack.c.bf16 %v8416, %v8416
  %v8545 = vunpack.c.l.bf16 %v8417
  %v8546 = vunpack.c.l.bf16 %v8418
  %v8547 = vunpack.c.l.bf16 %v8419
  %v8548 = vunpack.c.l.bf16 %v8420
  %v8549 = vunpack.c.l.bf16 %v8421
  %v8550 = vunpack.c.l.bf16 %v8422
  %v8551 = vunpack.c.l.bf16 %v8423
  %v8552 = vunpack.c.l.bf16 %v8424
  %v8553 = vunpack.c.l.bf16 %v8425
  %v8554 = vunpack.c.l.bf16 %v8426
  %v8555 = vunpack.c.l.bf16 %v8427
  %v8556 = vunpack.c.l.bf16 %v8428
  %v8557 = vunpack.c.l.bf16 %v8429
  %v8558 = vunpack.c.l.bf16 %v8430
  %v8559 = vunpack.c.l.bf16 %v8431
  %v8560 = vunpack.c.l.bf16 %v8432
  %v8561 = vunpack.c.l.bf16 %v8433
  %v8562 = vunpack.c.l.bf16 %v8434
  %v8563 = vunpack.c.l.bf16 %v8435
  %v8564 = vunpack.c.l.bf16 %v8436
  %v8565 = vunpack.c.l.bf16 %v8437
  %v8566 = vunpack.c.l.bf16 %v8438
  %v8567 = vunpack.c.l.bf16 %v8439
  %v8568 = vunpack.c.l.bf16 %v8440
  %v8569 = vunpack.c.l.bf16 %v8441
  %v8570 = vunpack.c.l.bf16 %v8442
  %v8571 = vunpack.c.l.bf16 %v8443
  %v8572 = vunpack.c.l.bf16 %v8444
  %v8573 = vunpack.c.l.bf16 %v8445
  %v8574 = vunpack.c.l.bf16 %v8446
  %v8575 = vunpack.c.l.bf16 %v8447
  %v8576 = vunpack.c.l.bf16 %v8448
  %v8577 = vunpack.c.l.bf16 %v8449
  %v8578 = vunpack.c.l.bf16 %v8450
  %v8579 = vunpack.c.l.bf16 %v8451
  %v8580 = vunpack.c.l.bf16 %v8452
  %v8581 = vunpack.c.l.bf16 %v8453
  %v8582 = vunpack.c.l.bf16 %v8454
  %v8583 = vunpack.c.l.bf16 %v8455
  %v8584 = vunpack.c.l.bf16 %v8456
  %v8585 = vunpack.c.l.bf16 %v8457
  %v8586 = vunpack.c.l.bf16 %v8458
  %v8587 = vunpack.c.l.bf16 %v8459
  %v8588 = vunpack.c.l.bf16 %v8460
  %v8589 = vunpack.c.l.bf16 %v8461
  %v8590 = vunpack.c.l.bf16 %v8462
  %v8591 = vunpack.c.l.bf16 %v8463
  %v8592 = vunpack.c.l.bf16 %v8464
  %v8593 = vunpack.c.l.bf16 %v8465
  %v8594 = vunpack.c.l.bf16 %v8466
  %v8595 = vunpack.c.l.bf16 %v8467
  %v8596 = vunpack.c.l.bf16 %v8468
  %v8597 = vunpack.c.l.bf16 %v8469
  %v8598 = vunpack.c.l.bf16 %v8470
  %v8599 = vunpack.c.l.bf16 %v8471
  %v8600 = vunpack.c.l.bf16 %v8472
  %v8601 = vunpack.c.l.bf16 %v8473
  %v8602 = vunpack.c.l.bf16 %v8474
  %v8603 = vunpack.c.l.bf16 %v8475
  %v8604 = vunpack.c.l.bf16 %v8476
  %v8605 = vunpack.c.l.bf16 %v8477
  %v8606 = vunpack.c.l.bf16 %v8478
  %v8607 = vunpack.c.l.bf16 %v8479
  %v8608 = vunpack.c.l.bf16 %v8480
  %v8609 = vunpack.c.l.bf16 %v8481
  %v8610 = vunpack.c.l.bf16 %v8482
  %v8611 = vunpack.c.l.bf16 %v8483
  %v8612 = vunpack.c.l.bf16 %v8484
  %v8613 = vunpack.c.l.bf16 %v8485
  %v8614 = vunpack.c.l.bf16 %v8486
  %v8615 = vunpack.c.l.bf16 %v8487
  %v8616 = vunpack.c.l.bf16 %v8488
  %v8617 = vunpack.c.l.bf16 %v8489
  %v8618 = vunpack.c.l.bf16 %v8490
  %v8619 = vunpack.c.l.bf16 %v8491
  %v8620 = vunpack.c.l.bf16 %v8492
  %v8621 = vunpack.c.l.bf16 %v8493
  %v8622 = vunpack.c.l.bf16 %v8494
  %v8623 = vunpack.c.l.bf16 %v8495
  %v8624 = vunpack.c.l.bf16 %v8496
  %v8625 = vunpack.c.l.bf16 %v8497
  %v8626 = vunpack.c.l.bf16 %v8498
  %v8627 = vunpack.c.l.bf16 %v8499
  %v8628 = vunpack.c.l.bf16 %v8500
  %v8629 = vunpack.c.l.bf16 %v8501
  %v8630 = vunpack.c.l.bf16 %v8502
  %v8631 = vunpack.c.l.bf16 %v8503
  %v8632 = vunpack.c.l.bf16 %v8504
  %v8633 = vunpack.c.l.bf16 %v8505
  %v8634 = vunpack.c.l.bf16 %v8506
  %v8635 = vunpack.c.l.bf16 %v8507
  %v8636 = vunpack.c.l.bf16 %v8508
  %v8637 = vunpack.c.l.bf16 %v8509
  %v8638 = vunpack.c.l.bf16 %v8510
  %v8639 = vunpack.c.l.bf16 %v8511
  %v8640 = vunpack.c.l.bf16 %v8512
  %v8641 = vunpack.c.l.bf16 %v8513
  %v8642 = vunpack.c.l.bf16 %v8514
  %v8643 = vunpack.c.l.bf16 %v8515
  %v8644 = vunpack.c.l.bf16 %v8516
  %v8645 = vunpack.c.l.bf16 %v8517
  %v8646 = vunpack.c.l.bf16 %v8518
  %v8647 = vunpack.c.l.bf16 %v8519
  %v8648 = vunpack.c.l.bf16 %v8520
  %v8649 = vunpack.c.l.bf16 %v8521
  %v8650 = vunpack.c.l.bf16 %v8522
  %v8651 = vunpack.c.l.bf16 %v8523
  %v8652 = vunpack.c.l.bf16 %v8524
  %v8653 = vunpack.c.l.bf16 %v8525
  %v8654 = vunpack.c.l.bf16 %v8526
  %v8655 = vunpack.c.l.bf16 %v8527
  %v8656 = vunpack.c.l.bf16 %v8528
  %v8657 = vunpack.c.l.bf16 %v8529
  %v8658 = vunpack.c.l.bf16 %v8530
  %v8659 = vunpack.c.l.bf16 %v8531
  %v8660 = vunpack.c.l.bf16 %v8532
  %v8661 = vunpack.c.l.bf16 %v8533
  %v8662 = vunpack.c.l.bf16 %v8534
  %v8663 = vunpack.c.l.bf16 %v8535
  %v8664 = vunpack.c.l.bf16 %v8536
  %v8665 = vunpack.c.l.bf16 %v8537
  %v8666 = vunpack.c.l.bf16 %v8538
  %v8667 = vunpack.c.l.bf16 %v8539
  %v8668 = vunpack.c.l.bf16 %v8540
  %v8669 = vunpack.c.l.bf16 %v8541
  %v8670 = vunpack.c.l.bf16 %v8542
  %v8671 = vunpack.c.l.bf16 %v8543
  %v8672 = vunpack.c.l.bf16 %v8544
  %v8673 = vmax.f32 %v8161, %v8545
  %v8674 = vmax.f32 %v8162, %v8546
  %v8675 = vmax.f32 %v8163, %v8547
  %v8676 = vmax.f32 %v8164, %v8548
  %v8677 = vmax.f32 %v8165, %v8549
  %v8678 = vmax.f32 %v8166, %v8550
  %v8679 = vmax.f32 %v8167, %v8551
  %v8680 = vmax.f32 %v8168, %v8552
  %v8681 = vmax.f32 %v8169, %v8553
  %v8682 = vmax.f32 %v8170, %v8554
  %v8683 = vmax.f32 %v8171, %v8555
  %v8684 = vmax.f32 %v8172, %v8556
  %v8685 = vmax.f32 %v8173, %v8557
  %v8686 = vmax.f32 %v8174, %v8558
  %v8687 = vmax.f32 %v8175, %v8559
  %v8688 = vmax.f32 %v8176, %v8560
  %v8689 = vmax.f32 %v8177, %v8561
  %v8690 = vmax.f32 %v8178, %v8562
  %v8691 = vmax.f32 %v8179, %v8563
  %v8692 = vmax.f32 %v8180, %v8564
  %v8693 = vmax.f32 %v8181, %v8565
  %v8694 = vmax.f32 %v8182, %v8566
  %v8695 = vmax.f32 %v8183, %v8567
  %v8696 = vmax.f32 %v8184, %v8568
  %v8697 = vmax.f32 %v8185, %v8569
  %v8698 = vmax.f32 %v8186, %v8570
  %v8699 = vmax.f32 %v8187, %v8571
  %v8700 = vmax.f32 %v8188, %v8572
  %v8701 = vmax.f32 %v8189, %v8573
  %v8702 = vmax.f32 %v8190, %v8574
  %v8703 = vmax.f32 %v8191, %v8575
  %v8704 = vmax.f32 %v8192, %v8576
  %v8705 = vmax.f32 %v8193, %v8577
  %v8706 = vmax.f32 %v8194, %v8578
  %v8707 = vmax.f32 %v8195, %v8579
  %v8708 = vmax.f32 %v8196, %v8580
  %v8709 = vmax.f32 %v8197, %v8581
  %v8710 = vmax.f32 %v8198, %v8582
  %v8711 = vmax.f32 %v8199, %v8583
  %v8712 = vmax.f32 %v8200, %v8584
  %v8713 = vmax.f32 %v8201, %v8585
  %v8714 = vmax.f32 %v8202, %v8586
  %v8715 = vmax.f32 %v8203, %v8587
  %v8716 = vmax.f32 %v8204, %v8588
  %v8717 = vmax.f32 %v8205, %v8589
  %v8718 = vmax.f32 %v8206, %v8590
  %v8719 = vmax.f32 %v8207, %v8591
  %v8720 = vmax.f32 %v8208, %v8592
  %v8721 = vmax.f32 %v8209, %v8593
  %v8722 = vmax.f32 %v8210, %v8594
  %v8723 = vmax.f32 %v8211, %v8595
  %v8724 = vmax.f32 %v8212, %v8596
  %v8725 = vmax.f32 %v8213, %v8597
  %v8726 = vmax.f32 %v8214, %v8598
  %v8727 = vmax.f32 %v8215, %v8599
  %v8728 = vmax.f32 %v8216, %v8600
  %v8729 = vmax.f32 %v8217, %v8601
  %v8730 = vmax.f32 %v8218, %v8602
  %v8731 = vmax.f32 %v8219, %v8603
  %v8732 = vmax.f32 %v8220, %v8604
  %v8733 = vmax.f32 %v8221, %v8605
  %v8734 = vmax.f32 %v8222, %v8606
  %v8735 = vmax.f32 %v8223, %v8607
  %v8736 = vmax.f32 %v8224, %v8608
  %v8737 = vmax.f32 %v8225, %v8609
  %v8738 = vmax.f32 %v8226, %v8610
  %v8739 = vmax.f32 %v8227, %v8611
  %v8740 = vmax.f32 %v8228, %v8612
  %v8741 = vmax.f32 %v8229, %v8613
  %v8742 = vmax.f32 %v8230, %v8614
  %v8743 = vmax.f32 %v8231, %v8615
  %v8744 = vmax.f32 %v8232, %v8616
  %v8745 = vmax.f32 %v8233, %v8617
  %v8746 = vmax.f32 %v8234, %v8618
  %v8747 = vmax.f32 %v8235, %v8619
  %v8748 = vmax.f32 %v8236, %v8620
  %v8749 = vmax.f32 %v8237, %v8621
  %v8750 = vmax.f32 %v8238, %v8622
  %v8751 = vmax.f32 %v8239, %v8623
  %v8752 = vmax.f32 %v8240, %v8624
  %v8753 = vmax.f32 %v8241, %v8625
  %v8754 = vmax.f32 %v8242, %v8626
  %v8755 = vmax.f32 %v8243, %v8627
  %v8756 = vmax.f32 %v8244, %v8628
  %v8757 = vmax.f32 %v8245, %v8629
  %v8758 = vmax.f32 %v8246, %v8630
  %v8759 = vmax.f32 %v8247, %v8631
  %v8760 = vmax.f32 %v8248, %v8632
  %v8761 = vmax.f32 %v8249, %v8633
  %v8762 = vmax.f32 %v8250, %v8634
  %v8763 = vmax.f32 %v8251, %v8635
  %v8764 = vmax.f32 %v8252, %v8636
  %v8765 = vmax.f32 %v8253, %v8637
  %v8766 = vmax.f32 %v8254, %v8638
  %v8767 = vmax.f32 %v8255, %v8639
  %v8768 = vmax.f32 %v8256, %v8640
  %v8769 = vmax.f32 %v8257, %v8641
  %v8770 = vmax.f32 %v8258, %v8642
  %v8771 = vmax.f32 %v8259, %v8643
  %v8772 = vmax.f32 %v8260, %v8644
  %v8773 = vmax.f32 %v8261, %v8645
  %v8774 = vmax.f32 %v8262, %v8646
  %v8775 = vmax.f32 %v8263, %v8647
  %v8776 = vmax.f32 %v8264, %v8648
  %v8777 = vmax.f32 %v8265, %v8649
  %v8778 = vmax.f32 %v8266, %v8650
  %v8779 = vmax.f32 %v8267, %v8651
  %v8780 = vmax.f32 %v8268, %v8652
  %v8781 = vmax.f32 %v8269, %v8653
  %v8782 = vmax.f32 %v8270, %v8654
  %v8783 = vmax.f32 %v8271, %v8655
  %v8784 = vmax.f32 %v8272, %v8656
  %v8785 = vmax.f32 %v8273, %v8657
  %v8786 = vmax.f32 %v8274, %v8658
  %v8787 = vmax.f32 %v8275, %v8659
  %v8788 = vmax.f32 %v8276, %v8660
  %v8789 = vmax.f32 %v8277, %v8661
  %v8790 = vmax.f32 %v8278, %v8662
  %v8791 = vmax.f32 %v8279, %v8663
  %v8792 = vmax.f32 %v8280, %v8664
  %v8793 = vmax.f32 %v8281, %v8665
  %v8794 = vmax.f32 %v8282, %v8666
  %v8795 = vmax.f32 %v8283, %v8667
  %v8796 = vmax.f32 %v8284, %v8668
  %v8797 = vmax.f32 %v8285, %v8669
  %v8798 = vmax.f32 %v8286, %v8670
  %v8799 = vmax.f32 %v8287, %v8671
  %v8800 = vmax.f32 %v8288, %v8672
  %v8801 = vpack.c.bf16 %v8674, %v8673
  %v8802 = vpack.c.bf16 %v8676, %v8675
  %v8803 = vpack.c.bf16 %v8678, %v8677
  %v8804 = vpack.c.bf16 %v8680, %v8679
  %v8805 = vpack.c.bf16 %v8682, %v8681
  %v8806 = vpack.c.bf16 %v8684, %v8683
  %v8807 = vpack.c.bf16 %v8686, %v8685
  %v8808 = vpack.c.bf16 %v8688, %v8687
  %v8809 = vpack.c.bf16 %v8690, %v8689
  %v8810 = vpack.c.bf16 %v8692, %v8691
  %v8811 = vpack.c.bf16 %v8694, %v8693
  %v8812 = vpack.c.bf16 %v8696, %v8695
  %v8813 = vpack.c.bf16 %v8698, %v8697
  %v8814 = vpack.c.bf16 %v8700, %v8699
  %v8815 = vpack.c.bf16 %v8702, %v8701
  %v8816 = vpack.c.bf16 %v8704, %v8703
  %v8817 = vpack.c.bf16 %v8706, %v8705
  %v8818 = vpack.c.bf16 %v8708, %v8707
  %v8819 = vpack.c.bf16 %v8710, %v8709
  %v8820 = vpack.c.bf16 %v8712, %v8711
  %v8821 = vpack.c.bf16 %v8714, %v8713
  %v8822 = vpack.c.bf16 %v8716, %v8715
  %v8823 = vpack.c.bf16 %v8718, %v8717
  %v8824 = vpack.c.bf16 %v8720, %v8719
  %v8825 = vpack.c.bf16 %v8722, %v8721
  %v8826 = vpack.c.bf16 %v8724, %v8723
  %v8827 = vpack.c.bf16 %v8726, %v8725
  %v8828 = vpack.c.bf16 %v8728, %v8727
  %v8829 = vpack.c.bf16 %v8730, %v8729
  %v8830 = vpack.c.bf16 %v8732, %v8731
  %v8831 = vpack.c.bf16 %v8734, %v8733
  %v8832 = vpack.c.bf16 %v8736, %v8735
  %v8833 = vpack.c.bf16 %v8738, %v8737
  %v8834 = vpack.c.bf16 %v8740, %v8739
  %v8835 = vpack.c.bf16 %v8742, %v8741
  %v8836 = vpack.c.bf16 %v8744, %v8743
  %v8837 = vpack.c.bf16 %v8746, %v8745
  %v8838 = vpack.c.bf16 %v8748, %v8747
  %v8839 = vpack.c.bf16 %v8750, %v8749
  %v8840 = vpack.c.bf16 %v8752, %v8751
  %v8841 = vpack.c.bf16 %v8754, %v8753
  %v8842 = vpack.c.bf16 %v8756, %v8755
  %v8843 = vpack.c.bf16 %v8758, %v8757
  %v8844 = vpack.c.bf16 %v8760, %v8759
  %v8845 = vpack.c.bf16 %v8762, %v8761
  %v8846 = vpack.c.bf16 %v8764, %v8763
  %v8847 = vpack.c.bf16 %v8766, %v8765
  %v8848 = vpack.c.bf16 %v8768, %v8767
  %v8849 = vpack.c.bf16 %v8770, %v8769
  %v8850 = vpack.c.bf16 %v8772, %v8771
  %v8851 = vpack.c.bf16 %v8774, %v8773
  %v8852 = vpack.c.bf16 %v8776, %v8775
  %v8853 = vpack.c.bf16 %v8778, %v8777
  %v8854 = vpack.c.bf16 %v8780, %v8779
  %v8855 = vpack.c.bf16 %v8782, %v8781
  %v8856 = vpack.c.bf16 %v8784, %v8783
  %v8857 = vpack.c.bf16 %v8786, %v8785
  %v8858 = vpack.c.bf16 %v8788, %v8787
  %v8859 = vpack.c.bf16 %v8790, %v8789
  %v8860 = vpack.c.bf16 %v8792, %v8791
  %v8861 = vpack.c.bf16 %v8794, %v8793
  %v8862 = vpack.c.bf16 %v8796, %v8795
  %v8863 = vpack.c.bf16 %v8798, %v8797
  %v8864 = vpack.c.bf16 %v8800, %v8799
  %v8865 = vld [vmem:[%s4] sm:$0xf]
  %v8866 = vld [vmem:[%s4 + $0x4] sm:$0xf]
  %v8867 = vld [vmem:[%s4 + $0x8] sm:$0xf]
  %v8868 = vld [vmem:[%s4 + $0xc] sm:$0xf]
  %v8869 = vld [vmem:[%s5] sm:$0x1]
  %v8871 = vperm.slane %v8869, 0
  %v8877 = vunpack.c.l.b16 %v8865
  %v8878 = vunpack.c.l.b16 %v8866
  %v8879 = vunpack.c.l.b16 %v8867
  %v8880 = vunpack.c.l.b16 %v8868
  %v8881 = vpack.c.b16 %v8878, %v8877
  %v8882 = vpack.c.b16 %v8880, %v8879
  %v8886 = vsel %vm1318, %v8801, 0
  %v8889 = vsel %vm1318, %v8802, 0
  %v8892 = vsel %vm1318, %v8803, 0
  %v8895 = vsel %vm1318, %v8804, 0
  %v8898 = vsel %vm1318, %v8805, 0
  %v8901 = vsel %vm1318, %v8806, 0
  %v8904 = vsel %vm1318, %v8807, 0
  %v8907 = vsel %vm1318, %v8808, 0
  %v8910 = vsel %vm1318, %v8809, 0
  %v8913 = vsel %vm1318, %v8810, 0
  %v8916 = vsel %vm1318, %v8811, 0
  %v8919 = vsel %vm1318, %v8812, 0
  %v8922 = vsel %vm1318, %v8813, 0
  %v8925 = vsel %vm1318, %v8814, 0
  %v8928 = vsel %vm1318, %v8815, 0
  %v8931 = vsel %vm1318, %v8816, 0
  %v8934 = vsel %vm1318, %v8817, 0
  %v8937 = vsel %vm1318, %v8818, 0
  %v8940 = vsel %vm1318, %v8819, 0
  %v8943 = vsel %vm1318, %v8820, 0
  %v8946 = vsel %vm1318, %v8821, 0
  %v8949 = vsel %vm1318, %v8822, 0
  %v8952 = vsel %vm1318, %v8823, 0
  %v8955 = vsel %vm1318, %v8824, 0
  %v8958 = vsel %vm1318, %v8825, 0
  %v8961 = vsel %vm1318, %v8826, 0
  %v8964 = vsel %vm1318, %v8827, 0
  %v8967 = vsel %vm1318, %v8828, 0
  %v8970 = vsel %vm1318, %v8829, 0
  %v8973 = vsel %vm1318, %v8830, 0
  %v8976 = vsel %vm1318, %v8831, 0
  %v8979 = vsel %vm1318, %v8832, 0
  %v8982 = vsel %vm1318, %v8833, 0
  %v8985 = vsel %vm1318, %v8834, 0
  %v8988 = vsel %vm1318, %v8835, 0
  %v8991 = vsel %vm1318, %v8836, 0
  %v8994 = vsel %vm1318, %v8837, 0
  %v8997 = vsel %vm1318, %v8838, 0
  %v9000 = vsel %vm1318, %v8839, 0
  %v9003 = vsel %vm1318, %v8840, 0
  %v9006 = vsel %vm1318, %v8841, 0
  %v9009 = vsel %vm1318, %v8842, 0
  %v9012 = vsel %vm1318, %v8843, 0
  %v9015 = vsel %vm1318, %v8844, 0
  %v9018 = vsel %vm1318, %v8845, 0
  %v9021 = vsel %vm1318, %v8846, 0
  %v9024 = vsel %vm1318, %v8847, 0
  %v9027 = vsel %vm1318, %v8848, 0
  %v9030 = vsel %vm1318, %v8849, 0
  %v9033 = vsel %vm1318, %v8850, 0
  %v9036 = vsel %vm1318, %v8851, 0
  %v9039 = vsel %vm1318, %v8852, 0
  %v9042 = vsel %vm1318, %v8853, 0
  %v9045 = vsel %vm1318, %v8854, 0
  %v9048 = vsel %vm1318, %v8855, 0
  %v9051 = vsel %vm1318, %v8856, 0
  %v9054 = vsel %vm1318, %v8857, 0
  %v9057 = vsel %vm1318, %v8858, 0
  %v9060 = vsel %vm1318, %v8859, 0
  %v9063 = vsel %vm1318, %v8860, 0
  %v9066 = vsel %vm1318, %v8861, 0
  %v9069 = vsel %vm1318, %v8862, 0
  %v9072 = vsel %vm1318, %v8863, 0
  %v9075 = vsel %vm1318, %v8864, 0
  %9077 = vmatpush.bf16.msra.mxu0 0
  %9078 = vmatpush.bf16.msra.mxu0 0
  %9079 = vmatpush.bf16.msra.mxu0 0
  %9080 = vmatpush.bf16.msra.mxu0 0
  %9081 = vmatpush.bf16.msra.mxu0 0
  %9082 = vmatpush.bf16.msra.mxu0 0
  %9083 = vmatpush.bf16.msra.mxu0 %v8882
  %9084 = vmatpush.bf16.msra.mxu0 %v8881
  %9085 = vmatmul.bf16.gmra.mxu0 %v8886
  %v9086 = vpop.f32.mrf.mxu0
  %v9087 = vadd.f32 %v8871, %v9086
  %v9088 = vpop.f32.mrf.mxu0
  %v9089 = vadd.f32 %v8871, %v9088
  %9090 = vmatmul.bf16.gmra.mxu0 %v8889
  %v9091 = vpop.f32.mrf.mxu0
  %v9092 = vadd.f32 %v8871, %v9091
  %v9093 = vpop.f32.mrf.mxu0
  %v9094 = vadd.f32 %v8871, %v9093
  %9095 = vmatmul.bf16.gmra.mxu0 %v8892
  %v9096 = vpop.f32.mrf.mxu0
  %v9097 = vadd.f32 %v8871, %v9096
  %v9098 = vpop.f32.mrf.mxu0
  %v9099 = vadd.f32 %v8871, %v9098
  %9100 = vmatmul.bf16.gmra.mxu0 %v8895
  %v9101 = vpop.f32.mrf.mxu0
  %v9102 = vadd.f32 %v8871, %v9101
  %v9103 = vpop.f32.mrf.mxu0
  %v9104 = vadd.f32 %v8871, %v9103
  %9105 = vmatmul.bf16.gmra.mxu0 %v8898
  %v9106 = vpop.f32.mrf.mxu0
  %v9107 = vadd.f32 %v8871, %v9106
  %v9108 = vpop.f32.mrf.mxu0
  %v9109 = vadd.f32 %v8871, %v9108
  %9110 = vmatmul.bf16.gmra.mxu0 %v8901
  %v9111 = vpop.f32.mrf.mxu0
  %v9112 = vadd.f32 %v8871, %v9111
  %v9113 = vpop.f32.mrf.mxu0
  %v9114 = vadd.f32 %v8871, %v9113
  %9115 = vmatmul.bf16.gmra.mxu0 %v8904
  %v9116 = vpop.f32.mrf.mxu0
  %v9117 = vadd.f32 %v8871, %v9116
  %v9118 = vpop.f32.mrf.mxu0
  %v9119 = vadd.f32 %v8871, %v9118
  %9120 = vmatmul.bf16.gmra.mxu0 %v8907
  %v9121 = vpop.f32.mrf.mxu0
  %v9122 = vadd.f32 %v8871, %v9121
  %v9123 = vpop.f32.mrf.mxu0
  %v9124 = vadd.f32 %v8871, %v9123
  %9125 = vmatmul.bf16.gmra.mxu0 %v8910
  %v9126 = vpop.f32.mrf.mxu0
  %v9127 = vadd.f32 %v8871, %v9126
  %v9128 = vpop.f32.mrf.mxu0
  %v9129 = vadd.f32 %v8871, %v9128
  %9130 = vmatmul.bf16.gmra.mxu0 %v8913
  %v9131 = vpop.f32.mrf.mxu0
  %v9132 = vadd.f32 %v8871, %v9131
  %v9133 = vpop.f32.mrf.mxu0
  %v9134 = vadd.f32 %v8871, %v9133
  %9135 = vmatmul.bf16.gmra.mxu0 %v8916
  %v9136 = vpop.f32.mrf.mxu0
  %v9137 = vadd.f32 %v8871, %v9136
  %v9138 = vpop.f32.mrf.mxu0
  %v9139 = vadd.f32 %v8871, %v9138
  %9140 = vmatmul.bf16.gmra.mxu0 %v8919
  %v9141 = vpop.f32.mrf.mxu0
  %v9142 = vadd.f32 %v8871, %v9141
  %v9143 = vpop.f32.mrf.mxu0
  %v9144 = vadd.f32 %v8871, %v9143
  %9145 = vmatmul.bf16.gmra.mxu0 %v8922
  %v9146 = vpop.f32.mrf.mxu0
  %v9147 = vadd.f32 %v8871, %v9146
  %v9148 = vpop.f32.mrf.mxu0
  %v9149 = vadd.f32 %v8871, %v9148
  %9150 = vmatmul.bf16.gmra.mxu0 %v8925
  %v9151 = vpop.f32.mrf.mxu0
  %v9152 = vadd.f32 %v8871, %v9151
  %v9153 = vpop.f32.mrf.mxu0
  %v9154 = vadd.f32 %v8871, %v9153
  %9155 = vmatmul.bf16.gmra.mxu0 %v8928
  %v9156 = vpop.f32.mrf.mxu0
  %v9157 = vadd.f32 %v8871, %v9156
  %v9158 = vpop.f32.mrf.mxu0
  %v9159 = vadd.f32 %v8871, %v9158
  %9160 = vmatmul.bf16.gmra.mxu0 %v8931
  %v9161 = vpop.f32.mrf.mxu0
  %v9162 = vadd.f32 %v8871, %v9161
  %v9163 = vpop.f32.mrf.mxu0
  %v9164 = vadd.f32 %v8871, %v9163
  %9165 = vmatmul.bf16.gmra.mxu0 %v8934
  %v9166 = vpop.f32.mrf.mxu0
  %v9167 = vadd.f32 %v8871, %v9166
  %v9168 = vpop.f32.mrf.mxu0
  %v9169 = vadd.f32 %v8871, %v9168
  %9170 = vmatmul.bf16.gmra.mxu0 %v8937
  %v9171 = vpop.f32.mrf.mxu0
  %v9172 = vadd.f32 %v8871, %v9171
  %v9173 = vpop.f32.mrf.mxu0
  %v9174 = vadd.f32 %v8871, %v9173
  %9175 = vmatmul.bf16.gmra.mxu0 %v8940
  %v9176 = vpop.f32.mrf.mxu0
  %v9177 = vadd.f32 %v8871, %v9176
  %v9178 = vpop.f32.mrf.mxu0
  %v9179 = vadd.f32 %v8871, %v9178
  %9180 = vmatmul.bf16.gmra.mxu0 %v8943
  %v9181 = vpop.f32.mrf.mxu0
  %v9182 = vadd.f32 %v8871, %v9181
  %v9183 = vpop.f32.mrf.mxu0
  %v9184 = vadd.f32 %v8871, %v9183
  %9185 = vmatmul.bf16.gmra.mxu0 %v8946
  %v9186 = vpop.f32.mrf.mxu0
  %v9187 = vadd.f32 %v8871, %v9186
  %v9188 = vpop.f32.mrf.mxu0
  %v9189 = vadd.f32 %v8871, %v9188
  %9190 = vmatmul.bf16.gmra.mxu0 %v8949
  %v9191 = vpop.f32.mrf.mxu0
  %v9192 = vadd.f32 %v8871, %v9191
  %v9193 = vpop.f32.mrf.mxu0
  %v9194 = vadd.f32 %v8871, %v9193
  %9195 = vmatmul.bf16.gmra.mxu0 %v8952
  %v9196 = vpop.f32.mrf.mxu0
  %v9197 = vadd.f32 %v8871, %v9196
  %v9198 = vpop.f32.mrf.mxu0
  %v9199 = vadd.f32 %v8871, %v9198
  %9200 = vmatmul.bf16.gmra.mxu0 %v8955
  %v9201 = vpop.f32.mrf.mxu0
  %v9202 = vadd.f32 %v8871, %v9201
  %v9203 = vpop.f32.mrf.mxu0
  %v9204 = vadd.f32 %v8871, %v9203
  %9205 = vmatmul.bf16.gmra.mxu0 %v8958
  %v9206 = vpop.f32.mrf.mxu0
  %v9207 = vadd.f32 %v8871, %v9206
  %v9208 = vpop.f32.mrf.mxu0
  %v9209 = vadd.f32 %v8871, %v9208
  %9210 = vmatmul.bf16.gmra.mxu0 %v8961
  %v9211 = vpop.f32.mrf.mxu0
  %v9212 = vadd.f32 %v8871, %v9211
  %v9213 = vpop.f32.mrf.mxu0
  %v9214 = vadd.f32 %v8871, %v9213
  %9215 = vmatmul.bf16.gmra.mxu0 %v8964
  %v9216 = vpop.f32.mrf.mxu0
  %v9217 = vadd.f32 %v8871, %v9216
  %v9218 = vpop.f32.mrf.mxu0
  %v9219 = vadd.f32 %v8871, %v9218
  %9220 = vmatmul.bf16.gmra.mxu0 %v8967
  %v9221 = vpop.f32.mrf.mxu0
  %v9222 = vadd.f32 %v8871, %v9221
  %v9223 = vpop.f32.mrf.mxu0
  %v9224 = vadd.f32 %v8871, %v9223
  %9225 = vmatmul.bf16.gmra.mxu0 %v8970
  %v9226 = vpop.f32.mrf.mxu0
  %v9227 = vadd.f32 %v8871, %v9226
  %v9228 = vpop.f32.mrf.mxu0
  %v9229 = vadd.f32 %v8871, %v9228
  %9230 = vmatmul.bf16.gmra.mxu0 %v8973
  %v9231 = vpop.f32.mrf.mxu0
  %v9232 = vadd.f32 %v8871, %v9231
  %v9233 = vpop.f32.mrf.mxu0
  %v9234 = vadd.f32 %v8871, %v9233
  %9235 = vmatmul.bf16.gmra.mxu0 %v8976
  %v9236 = vpop.f32.mrf.mxu0
  %v9237 = vadd.f32 %v8871, %v9236
  %v9238 = vpop.f32.mrf.mxu0
  %v9239 = vadd.f32 %v8871, %v9238
  %9240 = vmatmul.bf16.gmra.mxu0 %v8979
  %v9241 = vpop.f32.mrf.mxu0
  %v9242 = vadd.f32 %v8871, %v9241
  %v9243 = vpop.f32.mrf.mxu0
  %v9244 = vadd.f32 %v8871, %v9243
  %9245 = vmatmul.bf16.gmra.mxu0 %v8982
  %v9246 = vpop.f32.mrf.mxu0
  %v9247 = vadd.f32 %v8871, %v9246
  %v9248 = vpop.f32.mrf.mxu0
  %v9249 = vadd.f32 %v8871, %v9248
  %9250 = vmatmul.bf16.gmra.mxu0 %v8985
  %v9251 = vpop.f32.mrf.mxu0
  %v9252 = vadd.f32 %v8871, %v9251
  %v9253 = vpop.f32.mrf.mxu0
  %v9254 = vadd.f32 %v8871, %v9253
  %9255 = vmatmul.bf16.gmra.mxu0 %v8988
  %v9256 = vpop.f32.mrf.mxu0
  %v9257 = vadd.f32 %v8871, %v9256
  %v9258 = vpop.f32.mrf.mxu0
  %v9259 = vadd.f32 %v8871, %v9258
  %9260 = vmatmul.bf16.gmra.mxu0 %v8991
  %v9261 = vpop.f32.mrf.mxu0
  %v9262 = vadd.f32 %v8871, %v9261
  %v9263 = vpop.f32.mrf.mxu0
  %v9264 = vadd.f32 %v8871, %v9263
  %9265 = vmatmul.bf16.gmra.mxu0 %v8994
  %v9266 = vpop.f32.mrf.mxu0
  %v9267 = vadd.f32 %v8871, %v9266
  %v9268 = vpop.f32.mrf.mxu0
  %v9269 = vadd.f32 %v8871, %v9268
  %9270 = vmatmul.bf16.gmra.mxu0 %v8997
  %v9271 = vpop.f32.mrf.mxu0
  %v9272 = vadd.f32 %v8871, %v9271
  %v9273 = vpop.f32.mrf.mxu0
  %v9274 = vadd.f32 %v8871, %v9273
  %9275 = vmatmul.bf16.gmra.mxu0 %v9000
  %v9276 = vpop.f32.mrf.mxu0
  %v9277 = vadd.f32 %v8871, %v9276
  %v9278 = vpop.f32.mrf.mxu0
  %v9279 = vadd.f32 %v8871, %v9278
  %9280 = vmatmul.bf16.gmra.mxu0 %v9003
  %v9281 = vpop.f32.mrf.mxu0
  %v9282 = vadd.f32 %v8871, %v9281
  %v9283 = vpop.f32.mrf.mxu0
  %v9284 = vadd.f32 %v8871, %v9283
  %9285 = vmatmul.bf16.gmra.mxu0 %v9006
  %v9286 = vpop.f32.mrf.mxu0
  %v9287 = vadd.f32 %v8871, %v9286
  %v9288 = vpop.f32.mrf.mxu0
  %v9289 = vadd.f32 %v8871, %v9288
  %9290 = vmatmul.bf16.gmra.mxu0 %v9009
  %v9291 = vpop.f32.mrf.mxu0
  %v9292 = vadd.f32 %v8871, %v9291
  %v9293 = vpop.f32.mrf.mxu0
  %v9294 = vadd.f32 %v8871, %v9293
  %9295 = vmatmul.bf16.gmra.mxu0 %v9012
  %v9296 = vpop.f32.mrf.mxu0
  %v9297 = vadd.f32 %v8871, %v9296
  %v9298 = vpop.f32.mrf.mxu0
  %v9299 = vadd.f32 %v8871, %v9298
  %9300 = vmatmul.bf16.gmra.mxu0 %v9015
  %v9301 = vpop.f32.mrf.mxu0
  %v9302 = vadd.f32 %v8871, %v9301
  %v9303 = vpop.f32.mrf.mxu0
  %v9304 = vadd.f32 %v8871, %v9303
  %9305 = vmatmul.bf16.gmra.mxu0 %v9018
  %v9306 = vpop.f32.mrf.mxu0
  %v9307 = vadd.f32 %v8871, %v9306
  %v9308 = vpop.f32.mrf.mxu0
  %v9309 = vadd.f32 %v8871, %v9308
  %9310 = vmatmul.bf16.gmra.mxu0 %v9021
  %v9311 = vpop.f32.mrf.mxu0
  %v9312 = vadd.f32 %v8871, %v9311
  %v9313 = vpop.f32.mrf.mxu0
  %v9314 = vadd.f32 %v8871, %v9313
  %9315 = vmatmul.bf16.gmra.mxu0 %v9024
  %v9316 = vpop.f32.mrf.mxu0
  %v9317 = vadd.f32 %v8871, %v9316
  %v9318 = vpop.f32.mrf.mxu0
  %v9319 = vadd.f32 %v8871, %v9318
  %9320 = vmatmul.bf16.gmra.mxu0 %v9027
  %v9321 = vpop.f32.mrf.mxu0
  %v9322 = vadd.f32 %v8871, %v9321
  %v9323 = vpop.f32.mrf.mxu0
  %v9324 = vadd.f32 %v8871, %v9323
  %9325 = vmatmul.bf16.gmra.mxu0 %v9030
  %v9326 = vpop.f32.mrf.mxu0
  %v9327 = vadd.f32 %v8871, %v9326
  %v9328 = vpop.f32.mrf.mxu0
  %v9329 = vadd.f32 %v8871, %v9328
  %9330 = vmatmul.bf16.gmra.mxu0 %v9033
  %v9331 = vpop.f32.mrf.mxu0
  %v9332 = vadd.f32 %v8871, %v9331
  %v9333 = vpop.f32.mrf.mxu0
  %v9334 = vadd.f32 %v8871, %v9333
  %9335 = vmatmul.bf16.gmra.mxu0 %v9036
  %v9336 = vpop.f32.mrf.mxu0
  %v9337 = vadd.f32 %v8871, %v9336
  %v9338 = vpop.f32.mrf.mxu0
  %v9339 = vadd.f32 %v8871, %v9338
  %9340 = vmatmul.bf16.gmra.mxu0 %v9039
  %v9341 = vpop.f32.mrf.mxu0
  %v9342 = vadd.f32 %v8871, %v9341
  %v9343 = vpop.f32.mrf.mxu0
  %v9344 = vadd.f32 %v8871, %v9343
  %9345 = vmatmul.bf16.gmra.mxu0 %v9042
  %v9346 = vpop.f32.mrf.mxu0
  %v9347 = vadd.f32 %v8871, %v9346
  %v9348 = vpop.f32.mrf.mxu0
  %v9349 = vadd.f32 %v8871, %v9348
  %9350 = vmatmul.bf16.gmra.mxu0 %v9045
  %v9351 = vpop.f32.mrf.mxu0
  %v9352 = vadd.f32 %v8871, %v9351
  %v9353 = vpop.f32.mrf.mxu0
  %v9354 = vadd.f32 %v8871, %v9353
  %9355 = vmatmul.bf16.gmra.mxu0 %v9048
  %v9356 = vpop.f32.mrf.mxu0
  %v9357 = vadd.f32 %v8871, %v9356
  %v9358 = vpop.f32.mrf.mxu0
  %v9359 = vadd.f32 %v8871, %v9358
  %9360 = vmatmul.bf16.gmra.mxu0 %v9051
  %v9361 = vpop.f32.mrf.mxu0
  %v9362 = vadd.f32 %v8871, %v9361
  %v9363 = vpop.f32.mrf.mxu0
  %v9364 = vadd.f32 %v8871, %v9363
  %9365 = vmatmul.bf16.gmra.mxu0 %v9054
  %v9366 = vpop.f32.mrf.mxu0
  %v9367 = vadd.f32 %v8871, %v9366
  %v9368 = vpop.f32.mrf.mxu0
  %v9369 = vadd.f32 %v8871, %v9368
  %9370 = vmatmul.bf16.gmra.mxu0 %v9057
  %v9371 = vpop.f32.mrf.mxu0
  %v9372 = vadd.f32 %v8871, %v9371
  %v9373 = vpop.f32.mrf.mxu0
  %v9374 = vadd.f32 %v8871, %v9373
  %9375 = vmatmul.bf16.gmra.mxu0 %v9060
  %v9376 = vpop.f32.mrf.mxu0
  %v9377 = vadd.f32 %v8871, %v9376
  %v9378 = vpop.f32.mrf.mxu0
  %v9379 = vadd.f32 %v8871, %v9378
  %9380 = vmatmul.bf16.gmra.mxu0 %v9063
  %v9381 = vpop.f32.mrf.mxu0
  %v9382 = vadd.f32 %v8871, %v9381
  %v9383 = vpop.f32.mrf.mxu0
  %v9384 = vadd.f32 %v8871, %v9383
  %9385 = vmatmul.bf16.gmra.mxu0 %v9066
  %v9386 = vpop.f32.mrf.mxu0
  %v9387 = vadd.f32 %v8871, %v9386
  %v9388 = vpop.f32.mrf.mxu0
  %v9389 = vadd.f32 %v8871, %v9388
  %9390 = vmatmul.bf16.gmra.mxu0 %v9069
  %v9391 = vpop.f32.mrf.mxu0
  %v9392 = vadd.f32 %v8871, %v9391
  %v9393 = vpop.f32.mrf.mxu0
  %v9394 = vadd.f32 %v8871, %v9393
  %9395 = vmatmul.bf16.gmra.mxu0 %v9072
  %v9396 = vpop.f32.mrf.mxu0
  %v9397 = vadd.f32 %v8871, %v9396
  %v9398 = vpop.f32.mrf.mxu0
  %v9399 = vadd.f32 %v8871, %v9398
  %9400 = vmatmul.bf16.gmra.mxu0 %v9075
  %v9401 = vpop.f32.mrf.mxu0
  %v9402 = vadd.f32 %v8871, %v9401
  %v9403 = vpop.f32.mrf.mxu0
  %v9404 = vadd.f32 %v8871, %v9403
  %9405 = vdwg.mxu0
  %v9406 = vmul.f32 %v9087, 0.1
  %v9407 = vmul.f32 %v9089, 0.1
  %v9408 = vmul.f32 %v9092, 0.1
  %v9409 = vmul.f32 %v9094, 0.1
  %v9410 = vmul.f32 %v9097, 0.1
  %v9411 = vmul.f32 %v9099, 0.1
  %v9412 = vmul.f32 %v9102, 0.1
  %v9413 = vmul.f32 %v9104, 0.1
  %v9414 = vmul.f32 %v9107, 0.1
  %v9415 = vmul.f32 %v9109, 0.1
  %v9416 = vmul.f32 %v9112, 0.1
  %v9417 = vmul.f32 %v9114, 0.1
  %v9418 = vmul.f32 %v9117, 0.1
  %v9419 = vmul.f32 %v9119, 0.1
  %v9420 = vmul.f32 %v9122, 0.1
  %v9421 = vmul.f32 %v9124, 0.1
  %v9422 = vmul.f32 %v9127, 0.1
  %v9423 = vmul.f32 %v9129, 0.1
  %v9424 = vmul.f32 %v9132, 0.1
  %v9425 = vmul.f32 %v9134, 0.1
  %v9426 = vmul.f32 %v9137, 0.1
  %v9427 = vmul.f32 %v9139, 0.1
  %v9428 = vmul.f32 %v9142, 0.1
  %v9429 = vmul.f32 %v9144, 0.1
  %v9430 = vmul.f32 %v9147, 0.1
  %v9431 = vmul.f32 %v9149, 0.1
  %v9432 = vmul.f32 %v9152, 0.1
  %v9433 = vmul.f32 %v9154, 0.1
  %v9434 = vmul.f32 %v9157, 0.1
  %v9435 = vmul.f32 %v9159, 0.1
  %v9436 = vmul.f32 %v9162, 0.1
  %v9437 = vmul.f32 %v9164, 0.1
  %v9438 = vmul.f32 %v9167, 0.1
  %v9439 = vmul.f32 %v9169, 0.1
  %v9440 = vmul.f32 %v9172, 0.1
  %v9441 = vmul.f32 %v9174, 0.1
  %v9442 = vmul.f32 %v9177, 0.1
  %v9443 = vmul.f32 %v9179, 0.1
  %v9444 = vmul.f32 %v9182, 0.1
  %v9445 = vmul.f32 %v9184, 0.1
  %v9446 = vmul.f32 %v9187, 0.1
  %v9447 = vmul.f32 %v9189, 0.1
  %v9448 = vmul.f32 %v9192, 0.1
  %v9449 = vmul.f32 %v9194, 0.1
  %v9450 = vmul.f32 %v9197, 0.1
  %v9451 = vmul.f32 %v9199, 0.1
  %v9452 = vmul.f32 %v9202, 0.1
  %v9453 = vmul.f32 %v9204, 0.1
  %v9454 = vmul.f32 %v9207, 0.1
  %v9455 = vmul.f32 %v9209, 0.1
  %v9456 = vmul.f32 %v9212, 0.1
  %v9457 = vmul.f32 %v9214, 0.1
  %v9458 = vmul.f32 %v9217, 0.1
  %v9459 = vmul.f32 %v9219, 0.1
  %v9460 = vmul.f32 %v9222, 0.1
  %v9461 = vmul.f32 %v9224, 0.1
  %v9462 = vmul.f32 %v9227, 0.1
  %v9463 = vmul.f32 %v9229, 0.1
  %v9464 = vmul.f32 %v9232, 0.1
  %v9465 = vmul.f32 %v9234, 0.1
  %v9466 = vmul.f32 %v9237, 0.1
  %v9467 = vmul.f32 %v9239, 0.1
  %v9468 = vmul.f32 %v9242, 0.1
  %v9469 = vmul.f32 %v9244, 0.1
  %v9470 = vmul.f32 %v9247, 0.1
  %v9471 = vmul.f32 %v9249, 0.1
  %v9472 = vmul.f32 %v9252, 0.1
  %v9473 = vmul.f32 %v9254, 0.1
  %v9474 = vmul.f32 %v9257, 0.1
  %v9475 = vmul.f32 %v9259, 0.1
  %v9476 = vmul.f32 %v9262, 0.1
  %v9477 = vmul.f32 %v9264, 0.1
  %v9478 = vmul.f32 %v9267, 0.1
  %v9479 = vmul.f32 %v9269, 0.1
  %v9480 = vmul.f32 %v9272, 0.1
  %v9481 = vmul.f32 %v9274, 0.1
  %v9482 = vmul.f32 %v9277, 0.1
  %v9483 = vmul.f32 %v9279, 0.1
  %v9484 = vmul.f32 %v9282, 0.1
  %v9485 = vmul.f32 %v9284, 0.1
  %v9486 = vmul.f32 %v9287, 0.1
  %v9487 = vmul.f32 %v9289, 0.1
  %v9488 = vmul.f32 %v9292, 0.1
  %v9489 = vmul.f32 %v9294, 0.1
  %v9490 = vmul.f32 %v9297, 0.1
  %v9491 = vmul.f32 %v9299, 0.1
  %v9492 = vmul.f32 %v9302, 0.1
  %v9493 = vmul.f32 %v9304, 0.1
  %v9494 = vmul.f32 %v9307, 0.1
  %v9495 = vmul.f32 %v9309, 0.1
  %v9496 = vmul.f32 %v9312, 0.1
  %v9497 = vmul.f32 %v9314, 0.1
  %v9498 = vmul.f32 %v9317, 0.1
  %v9499 = vmul.f32 %v9319, 0.1
  %v9500 = vmul.f32 %v9322, 0.1
  %v9501 = vmul.f32 %v9324, 0.1
  %v9502 = vmul.f32 %v9327, 0.1
  %v9503 = vmul.f32 %v9329, 0.1
  %v9504 = vmul.f32 %v9332, 0.1
  %v9505 = vmul.f32 %v9334, 0.1
  %v9506 = vmul.f32 %v9337, 0.1
  %v9507 = vmul.f32 %v9339, 0.1
  %v9508 = vmul.f32 %v9342, 0.1
  %v9509 = vmul.f32 %v9344, 0.1
  %v9510 = vmul.f32 %v9347, 0.1
  %v9511 = vmul.f32 %v9349, 0.1
  %v9512 = vmul.f32 %v9352, 0.1
  %v9513 = vmul.f32 %v9354, 0.1
  %v9514 = vmul.f32 %v9357, 0.1
  %v9515 = vmul.f32 %v9359, 0.1
  %v9516 = vmul.f32 %v9362, 0.1
  %v9517 = vmul.f32 %v9364, 0.1
  %v9518 = vmul.f32 %v9367, 0.1
  %v9519 = vmul.f32 %v9369, 0.1
  %v9520 = vmul.f32 %v9372, 0.1
  %v9521 = vmul.f32 %v9374, 0.1
  %v9522 = vmul.f32 %v9377, 0.1
  %v9523 = vmul.f32 %v9379, 0.1
  %v9524 = vmul.f32 %v9382, 0.1
  %v9525 = vmul.f32 %v9384, 0.1
  %v9526 = vmul.f32 %v9387, 0.1
  %v9527 = vmul.f32 %v9389, 0.1
  %v9528 = vmul.f32 %v9392, 0.1
  %v9529 = vmul.f32 %v9394, 0.1
  %v9530 = vmul.f32 %v9397, 0.1
  %v9531 = vmul.f32 %v9399, 0.1
  %v9532 = vmul.f32 %v9402, 0.1
  %v9533 = vmul.f32 %v9404, 0.1
  %v9534 = vmax.f32 %v9087, %v9406
  %v9535 = vmax.f32 %v9089, %v9407
  %v9536 = vmax.f32 %v9092, %v9408
  %v9537 = vmax.f32 %v9094, %v9409
  %v9538 = vmax.f32 %v9097, %v9410
  %v9539 = vmax.f32 %v9099, %v9411
  %v9540 = vmax.f32 %v9102, %v9412
  %v9541 = vmax.f32 %v9104, %v9413
  %v9542 = vmax.f32 %v9107, %v9414
  %v9543 = vmax.f32 %v9109, %v9415
  %v9544 = vmax.f32 %v9112, %v9416
  %v9545 = vmax.f32 %v9114, %v9417
  %v9546 = vmax.f32 %v9117, %v9418
  %v9547 = vmax.f32 %v9119, %v9419
  %v9548 = vmax.f32 %v9122, %v9420
  %v9549 = vmax.f32 %v9124, %v9421
  %v9550 = vmax.f32 %v9127, %v9422
  %v9551 = vmax.f32 %v9129, %v9423
  %v9552 = vmax.f32 %v9132, %v9424
  %v9553 = vmax.f32 %v9134, %v9425
  %v9554 = vmax.f32 %v9137, %v9426
  %v9555 = vmax.f32 %v9139, %v9427
  %v9556 = vmax.f32 %v9142, %v9428
  %v9557 = vmax.f32 %v9144, %v9429
  %v9558 = vmax.f32 %v9147, %v9430
  %v9559 = vmax.f32 %v9149, %v9431
  %v9560 = vmax.f32 %v9152, %v9432
  %v9561 = vmax.f32 %v9154, %v9433
  %v9562 = vmax.f32 %v9157, %v9434
  %v9563 = vmax.f32 %v9159, %v9435
  %v9564 = vmax.f32 %v9162, %v9436
  %v9565 = vmax.f32 %v9164, %v9437
  %v9566 = vmax.f32 %v9167, %v9438
  %v9567 = vmax.f32 %v9169, %v9439
  %v9568 = vmax.f32 %v9172, %v9440
  %v9569 = vmax.f32 %v9174, %v9441
  %v9570 = vmax.f32 %v9177, %v9442
  %v9571 = vmax.f32 %v9179, %v9443
  %v9572 = vmax.f32 %v9182, %v9444
  %v9573 = vmax.f32 %v9184, %v9445
  %v9574 = vmax.f32 %v9187, %v9446
  %v9575 = vmax.f32 %v9189, %v9447
  %v9576 = vmax.f32 %v9192, %v9448
  %v9577 = vmax.f32 %v9194, %v9449
  %v9578 = vmax.f32 %v9197, %v9450
  %v9579 = vmax.f32 %v9199, %v9451
  %v9580 = vmax.f32 %v9202, %v9452
  %v9581 = vmax.f32 %v9204, %v9453
  %v9582 = vmax.f32 %v9207, %v9454
  %v9583 = vmax.f32 %v9209, %v9455
  %v9584 = vmax.f32 %v9212, %v9456
  %v9585 = vmax.f32 %v9214, %v9457
  %v9586 = vmax.f32 %v9217, %v9458
  %v9587 = vmax.f32 %v9219, %v9459
  %v9588 = vmax.f32 %v9222, %v9460
  %v9589 = vmax.f32 %v9224, %v9461
  %v9590 = vmax.f32 %v9227, %v9462
  %v9591 = vmax.f32 %v9229, %v9463
  %v9592 = vmax.f32 %v9232, %v9464
  %v9593 = vmax.f32 %v9234, %v9465
  %v9594 = vmax.f32 %v9237, %v9466
  %v9595 = vmax.f32 %v9239, %v9467
  %v9596 = vmax.f32 %v9242, %v9468
  %v9597 = vmax.f32 %v9244, %v9469
  %v9598 = vmax.f32 %v9247, %v9470
  %v9599 = vmax.f32 %v9249, %v9471
  %v9600 = vmax.f32 %v9252, %v9472
  %v9601 = vmax.f32 %v9254, %v9473
  %v9602 = vmax.f32 %v9257, %v9474
  %v9603 = vmax.f32 %v9259, %v9475
  %v9604 = vmax.f32 %v9262, %v9476
  %v9605 = vmax.f32 %v9264, %v9477
  %v9606 = vmax.f32 %v9267, %v9478
  %v9607 = vmax.f32 %v9269, %v9479
  %v9608 = vmax.f32 %v9272, %v9480
  %v9609 = vmax.f32 %v9274, %v9481
  %v9610 = vmax.f32 %v9277, %v9482
  %v9611 = vmax.f32 %v9279, %v9483
  %v9612 = vmax.f32 %v9282, %v9484
  %v9613 = vmax.f32 %v9284, %v9485
  %v9614 = vmax.f32 %v9287, %v9486
  %v9615 = vmax.f32 %v9289, %v9487
  %v9616 = vmax.f32 %v9292, %v9488
  %v9617 = vmax.f32 %v9294, %v9489
  %v9618 = vmax.f32 %v9297, %v9490
  %v9619 = vmax.f32 %v9299, %v9491
  %v9620 = vmax.f32 %v9302, %v9492
  %v9621 = vmax.f32 %v9304, %v9493
  %v9622 = vmax.f32 %v9307, %v9494
  %v9623 = vmax.f32 %v9309, %v9495
  %v9624 = vmax.f32 %v9312, %v9496
  %v9625 = vmax.f32 %v9314, %v9497
  %v9626 = vmax.f32 %v9317, %v9498
  %v9627 = vmax.f32 %v9319, %v9499
  %v9628 = vmax.f32 %v9322, %v9500
  %v9629 = vmax.f32 %v9324, %v9501
  %v9630 = vmax.f32 %v9327, %v9502
  %v9631 = vmax.f32 %v9329, %v9503
  %v9632 = vmax.f32 %v9332, %v9504
  %v9633 = vmax.f32 %v9334, %v9505
  %v9634 = vmax.f32 %v9337, %v9506
  %v9635 = vmax.f32 %v9339, %v9507
  %v9636 = vmax.f32 %v9342, %v9508
  %v9637 = vmax.f32 %v9344, %v9509
  %v9638 = vmax.f32 %v9347, %v9510
  %v9639 = vmax.f32 %v9349, %v9511
  %v9640 = vmax.f32 %v9352, %v9512
  %v9641 = vmax.f32 %v9354, %v9513
  %v9642 = vmax.f32 %v9357, %v9514
  %v9643 = vmax.f32 %v9359, %v9515
  %v9644 = vmax.f32 %v9362, %v9516
  %v9645 = vmax.f32 %v9364, %v9517
  %v9646 = vmax.f32 %v9367, %v9518
  %v9647 = vmax.f32 %v9369, %v9519
  %v9648 = vmax.f32 %v9372, %v9520
  %v9649 = vmax.f32 %v9374, %v9521
  %v9650 = vmax.f32 %v9377, %v9522
  %v9651 = vmax.f32 %v9379, %v9523
  %v9652 = vmax.f32 %v9382, %v9524
  %v9653 = vmax.f32 %v9384, %v9525
  %v9654 = vmax.f32 %v9387, %v9526
  %v9655 = vmax.f32 %v9389, %v9527
  %v9656 = vmax.f32 %v9392, %v9528
  %v9657 = vmax.f32 %v9394, %v9529
  %v9658 = vmax.f32 %v9397, %v9530
  %v9659 = vmax.f32 %v9399, %v9531
  %v9660 = vmax.f32 %v9402, %v9532
  %v9661 = vmax.f32 %v9404, %v9533
  %v9662 = vld [vmem:[%s6] sm:$0x1]
  %v9664 = vperm.slane %v9662, 0
  %v9666 = vmul.f32 %v9534, %v9664
  %v9667 = vmul.f32 %v9535, %v9664
  %v9668 = vmul.f32 %v9536, %v9664
  %v9669 = vmul.f32 %v9537, %v9664
  %v9670 = vmul.f32 %v9538, %v9664
  %v9671 = vmul.f32 %v9539, %v9664
  %v9672 = vmul.f32 %v9540, %v9664
  %v9673 = vmul.f32 %v9541, %v9664
  %v9674 = vmul.f32 %v9542, %v9664
  %v9675 = vmul.f32 %v9543, %v9664
  %v9676 = vmul.f32 %v9544, %v9664
  %v9677 = vmul.f32 %v9545, %v9664
  %v9678 = vmul.f32 %v9546, %v9664
  %v9679 = vmul.f32 %v9547, %v9664
  %v9680 = vmul.f32 %v9548, %v9664
  %v9681 = vmul.f32 %v9549, %v9664
  %v9682 = vmul.f32 %v9550, %v9664
  %v9683 = vmul.f32 %v9551, %v9664
  %v9684 = vmul.f32 %v9552, %v9664
  %v9685 = vmul.f32 %v9553, %v9664
  %v9686 = vmul.f32 %v9554, %v9664
  %v9687 = vmul.f32 %v9555, %v9664
  %v9688 = vmul.f32 %v9556, %v9664
  %v9689 = vmul.f32 %v9557, %v9664
  %v9690 = vmul.f32 %v9558, %v9664
  %v9691 = vmul.f32 %v9559, %v9664
  %v9692 = vmul.f32 %v9560, %v9664
  %v9693 = vmul.f32 %v9561, %v9664
  %v9694 = vmul.f32 %v9562, %v9664
  %v9695 = vmul.f32 %v9563, %v9664
  %v9696 = vmul.f32 %v9564, %v9664
  %v9697 = vmul.f32 %v9565, %v9664
  %v9698 = vmul.f32 %v9566, %v9664
  %v9699 = vmul.f32 %v9567, %v9664
  %v9700 = vmul.f32 %v9568, %v9664
  %v9701 = vmul.f32 %v9569, %v9664
  %v9702 = vmul.f32 %v9570, %v9664
  %v9703 = vmul.f32 %v9571, %v9664
  %v9704 = vmul.f32 %v9572, %v9664
  %v9705 = vmul.f32 %v9573, %v9664
  %v9706 = vmul.f32 %v9574, %v9664
  %v9707 = vmul.f32 %v9575, %v9664
  %v9708 = vmul.f32 %v9576, %v9664
  %v9709 = vmul.f32 %v9577, %v9664
  %v9710 = vmul.f32 %v9578, %v9664
  %v9711 = vmul.f32 %v9579, %v9664
  %v9712 = vmul.f32 %v9580, %v9664
  %v9713 = vmul.f32 %v9581, %v9664
  %v9714 = vmul.f32 %v9582, %v9664
  %v9715 = vmul.f32 %v9583, %v9664
  %v9716 = vmul.f32 %v9584, %v9664
  %v9717 = vmul.f32 %v9585, %v9664
  %v9718 = vmul.f32 %v9586, %v9664
  %v9719 = vmul.f32 %v9587, %v9664
  %v9720 = vmul.f32 %v9588, %v9664
  %v9721 = vmul.f32 %v9589, %v9664
  %v9722 = vmul.f32 %v9590, %v9664
  %v9723 = vmul.f32 %v9591, %v9664
  %v9724 = vmul.f32 %v9592, %v9664
  %v9725 = vmul.f32 %v9593, %v9664
  %v9726 = vmul.f32 %v9594, %v9664
  %v9727 = vmul.f32 %v9595, %v9664
  %v9728 = vmul.f32 %v9596, %v9664
  %v9729 = vmul.f32 %v9597, %v9664
  %v9730 = vmul.f32 %v9598, %v9664
  %v9731 = vmul.f32 %v9599, %v9664
  %v9732 = vmul.f32 %v9600, %v9664
  %v9733 = vmul.f32 %v9601, %v9664
  %v9734 = vmul.f32 %v9602, %v9664
  %v9735 = vmul.f32 %v9603, %v9664
  %v9736 = vmul.f32 %v9604, %v9664
  %v9737 = vmul.f32 %v9605, %v9664
  %v9738 = vmul.f32 %v9606, %v9664
  %v9739 = vmul.f32 %v9607, %v9664
  %v9740 = vmul.f32 %v9608, %v9664
  %v9741 = vmul.f32 %v9609, %v9664
  %v9742 = vmul.f32 %v9610, %v9664
  %v9743 = vmul.f32 %v9611, %v9664
  %v9744 = vmul.f32 %v9612, %v9664
  %v9745 = vmul.f32 %v9613, %v9664
  %v9746 = vmul.f32 %v9614, %v9664
  %v9747 = vmul.f32 %v9615, %v9664
  %v9748 = vmul.f32 %v9616, %v9664
  %v9749 = vmul.f32 %v9617, %v9664
  %v9750 = vmul.f32 %v9618, %v9664
  %v9751 = vmul.f32 %v9619, %v9664
  %v9752 = vmul.f32 %v9620, %v9664
  %v9753 = vmul.f32 %v9621, %v9664
  %v9754 = vmul.f32 %v9622, %v9664
  %v9755 = vmul.f32 %v9623, %v9664
  %v9756 = vmul.f32 %v9624, %v9664
  %v9757 = vmul.f32 %v9625, %v9664
  %v9758 = vmul.f32 %v9626, %v9664
  %v9759 = vmul.f32 %v9627, %v9664
  %v9760 = vmul.f32 %v9628, %v9664
  %v9761 = vmul.f32 %v9629, %v9664
  %v9762 = vmul.f32 %v9630, %v9664
  %v9763 = vmul.f32 %v9631, %v9664
  %v9764 = vmul.f32 %v9632, %v9664
  %v9765 = vmul.f32 %v9633, %v9664
  %v9766 = vmul.f32 %v9634, %v9664
  %v9767 = vmul.f32 %v9635, %v9664
  %v9768 = vmul.f32 %v9636, %v9664
  %v9769 = vmul.f32 %v9637, %v9664
  %v9770 = vmul.f32 %v9638, %v9664
  %v9771 = vmul.f32 %v9639, %v9664
  %v9772 = vmul.f32 %v9640, %v9664
  %v9773 = vmul.f32 %v9641, %v9664
  %v9774 = vmul.f32 %v9642, %v9664
  %v9775 = vmul.f32 %v9643, %v9664
  %v9776 = vmul.f32 %v9644, %v9664
  %v9777 = vmul.f32 %v9645, %v9664
  %v9778 = vmul.f32 %v9646, %v9664
  %v9779 = vmul.f32 %v9647, %v9664
  %v9780 = vmul.f32 %v9648, %v9664
  %v9781 = vmul.f32 %v9649, %v9664
  %v9782 = vmul.f32 %v9650, %v9664
  %v9783 = vmul.f32 %v9651, %v9664
  %v9784 = vmul.f32 %v9652, %v9664
  %v9785 = vmul.f32 %v9653, %v9664
  %v9786 = vmul.f32 %v9654, %v9664
  %v9787 = vmul.f32 %v9655, %v9664
  %v9788 = vmul.f32 %v9656, %v9664
  %v9789 = vmul.f32 %v9657, %v9664
  %v9790 = vmul.f32 %v9658, %v9664
  %v9791 = vmul.f32 %v9659, %v9664
  %v9792 = vmul.f32 %v9660, %v9664
  %v9793 = vmul.f32 %v9661, %v9664
  %v9794 = vsel %vm492, %v9666, 0.0
  %9795 = vadd.xlane.f32.xlu0 %v9794
  %v9796 = vpop.xlane.xlu0 %9795
  %v9797 = vsel %vm492, %v9667, 0.0
  %9798 = vadd.xlane.f32.xlu0 %v9797
  %v9799 = vpop.xlane.xlu0 %9798
  %v9800 = vsel %vm492, %v9668, 0.0
  %9801 = vadd.xlane.f32.xlu0 %v9800
  %v9802 = vpop.xlane.xlu0 %9801
  %v9803 = vsel %vm492, %v9669, 0.0
  %9804 = vadd.xlane.f32.xlu0 %v9803
  %v9805 = vpop.xlane.xlu0 %9804
  %v9806 = vsel %vm492, %v9670, 0.0
  %9807 = vadd.xlane.f32.xlu0 %v9806
  %v9808 = vpop.xlane.xlu0 %9807
  %v9809 = vsel %vm492, %v9671, 0.0
  %9810 = vadd.xlane.f32.xlu0 %v9809
  %v9811 = vpop.xlane.xlu0 %9810
  %v9812 = vsel %vm492, %v9672, 0.0
  %9813 = vadd.xlane.f32.xlu0 %v9812
  %v9814 = vpop.xlane.xlu0 %9813
  %v9815 = vsel %vm492, %v9673, 0.0
  %9816 = vadd.xlane.f32.xlu0 %v9815
  %v9817 = vpop.xlane.xlu0 %9816
  %v9818 = vsel %vm492, %v9674, 0.0
  %9819 = vadd.xlane.f32.xlu0 %v9818
  %v9820 = vpop.xlane.xlu0 %9819
  %v9821 = vsel %vm492, %v9675, 0.0
  %9822 = vadd.xlane.f32.xlu0 %v9821
  %v9823 = vpop.xlane.xlu0 %9822
  %v9824 = vsel %vm492, %v9676, 0.0
  %9825 = vadd.xlane.f32.xlu0 %v9824
  %v9826 = vpop.xlane.xlu0 %9825
  %v9827 = vsel %vm492, %v9677, 0.0
  %9828 = vadd.xlane.f32.xlu0 %v9827
  %v9829 = vpop.xlane.xlu0 %9828
  %v9830 = vsel %vm492, %v9678, 0.0
  %9831 = vadd.xlane.f32.xlu0 %v9830
  %v9832 = vpop.xlane.xlu0 %9831
  %v9833 = vsel %vm492, %v9679, 0.0
  %9834 = vadd.xlane.f32.xlu0 %v9833
  %v9835 = vpop.xlane.xlu0 %9834
  %v9836 = vsel %vm492, %v9680, 0.0
  %9837 = vadd.xlane.f32.xlu0 %v9836
  %v9838 = vpop.xlane.xlu0 %9837
  %v9839 = vsel %vm492, %v9681, 0.0
  %9840 = vadd.xlane.f32.xlu0 %v9839
  %v9841 = vpop.xlane.xlu0 %9840
  %v9842 = vsel %vm492, %v9682, 0.0
  %9843 = vadd.xlane.f32.xlu0 %v9842
  %v9844 = vpop.xlane.xlu0 %9843
  %v9845 = vsel %vm492, %v9683, 0.0
  %9846 = vadd.xlane.f32.xlu0 %v9845
  %v9847 = vpop.xlane.xlu0 %9846
  %v9848 = vsel %vm492, %v9684, 0.0
  %9849 = vadd.xlane.f32.xlu0 %v9848
  %v9850 = vpop.xlane.xlu0 %9849
  %v9851 = vsel %vm492, %v9685, 0.0
  %9852 = vadd.xlane.f32.xlu0 %v9851
  %v9853 = vpop.xlane.xlu0 %9852
  %v9854 = vsel %vm492, %v9686, 0.0
  %9855 = vadd.xlane.f32.xlu0 %v9854
  %v9856 = vpop.xlane.xlu0 %9855
  %v9857 = vsel %vm492, %v9687, 0.0
  %9858 = vadd.xlane.f32.xlu0 %v9857
  %v9859 = vpop.xlane.xlu0 %9858
  %v9860 = vsel %vm492, %v9688, 0.0
  %9861 = vadd.xlane.f32.xlu0 %v9860
  %v9862 = vpop.xlane.xlu0 %9861
  %v9863 = vsel %vm492, %v9689, 0.0
  %9864 = vadd.xlane.f32.xlu0 %v9863
  %v9865 = vpop.xlane.xlu0 %9864
  %v9866 = vsel %vm492, %v9690, 0.0
  %9867 = vadd.xlane.f32.xlu0 %v9866
  %v9868 = vpop.xlane.xlu0 %9867
  %v9869 = vsel %vm492, %v9691, 0.0
  %9870 = vadd.xlane.f32.xlu0 %v9869
  %v9871 = vpop.xlane.xlu0 %9870
  %v9872 = vsel %vm492, %v9692, 0.0
  %9873 = vadd.xlane.f32.xlu0 %v9872
  %v9874 = vpop.xlane.xlu0 %9873
  %v9875 = vsel %vm492, %v9693, 0.0
  %9876 = vadd.xlane.f32.xlu0 %v9875
  %v9877 = vpop.xlane.xlu0 %9876
  %v9878 = vsel %vm492, %v9694, 0.0
  %9879 = vadd.xlane.f32.xlu0 %v9878
  %v9880 = vpop.xlane.xlu0 %9879
  %v9881 = vsel %vm492, %v9695, 0.0
  %9882 = vadd.xlane.f32.xlu0 %v9881
  %v9883 = vpop.xlane.xlu0 %9882
  %v9884 = vsel %vm492, %v9696, 0.0
  %9885 = vadd.xlane.f32.xlu0 %v9884
  %v9886 = vpop.xlane.xlu0 %9885
  %v9887 = vsel %vm492, %v9697, 0.0
  %9888 = vadd.xlane.f32.xlu0 %v9887
  %v9889 = vpop.xlane.xlu0 %9888
  %v9890 = vsel %vm492, %v9698, 0.0
  %9891 = vadd.xlane.f32.xlu0 %v9890
  %v9892 = vpop.xlane.xlu0 %9891
  %v9893 = vsel %vm492, %v9699, 0.0
  %9894 = vadd.xlane.f32.xlu0 %v9893
  %v9895 = vpop.xlane.xlu0 %9894
  %v9896 = vsel %vm492, %v9700, 0.0
  %9897 = vadd.xlane.f32.xlu0 %v9896
  %v9898 = vpop.xlane.xlu0 %9897
  %v9899 = vsel %vm492, %v9701, 0.0
  %9900 = vadd.xlane.f32.xlu0 %v9899
  %v9901 = vpop.xlane.xlu0 %9900
  %v9902 = vsel %vm492, %v9702, 0.0
  %9903 = vadd.xlane.f32.xlu0 %v9902
  %v9904 = vpop.xlane.xlu0 %9903
  %v9905 = vsel %vm492, %v9703, 0.0
  %9906 = vadd.xlane.f32.xlu0 %v9905
  %v9907 = vpop.xlane.xlu0 %9906
  %v9908 = vsel %vm492, %v9704, 0.0
  %9909 = vadd.xlane.f32.xlu0 %v9908
  %v9910 = vpop.xlane.xlu0 %9909
  %v9911 = vsel %vm492, %v9705, 0.0
  %9912 = vadd.xlane.f32.xlu0 %v9911
  %v9913 = vpop.xlane.xlu0 %9912
  %v9914 = vsel %vm492, %v9706, 0.0
  %9915 = vadd.xlane.f32.xlu0 %v9914
  %v9916 = vpop.xlane.xlu0 %9915
  %v9917 = vsel %vm492, %v9707, 0.0
  %9918 = vadd.xlane.f32.xlu0 %v9917
  %v9919 = vpop.xlane.xlu0 %9918
  %v9920 = vsel %vm492, %v9708, 0.0
  %9921 = vadd.xlane.f32.xlu0 %v9920
  %v9922 = vpop.xlane.xlu0 %9921
  %v9923 = vsel %vm492, %v9709, 0.0
  %9924 = vadd.xlane.f32.xlu0 %v9923
  %v9925 = vpop.xlane.xlu0 %9924
  %v9926 = vsel %vm492, %v9710, 0.0
  %9927 = vadd.xlane.f32.xlu0 %v9926
  %v9928 = vpop.xlane.xlu0 %9927
  %v9929 = vsel %vm492, %v9711, 0.0
  %9930 = vadd.xlane.f32.xlu0 %v9929
  %v9931 = vpop.xlane.xlu0 %9930
  %v9932 = vsel %vm492, %v9712, 0.0
  %9933 = vadd.xlane.f32.xlu0 %v9932
  %v9934 = vpop.xlane.xlu0 %9933
  %v9935 = vsel %vm492, %v9713, 0.0
  %9936 = vadd.xlane.f32.xlu0 %v9935
  %v9937 = vpop.xlane.xlu0 %9936
  %v9938 = vsel %vm492, %v9714, 0.0
  %9939 = vadd.xlane.f32.xlu0 %v9938
  %v9940 = vpop.xlane.xlu0 %9939
  %v9941 = vsel %vm492, %v9715, 0.0
  %9942 = vadd.xlane.f32.xlu0 %v9941
  %v9943 = vpop.xlane.xlu0 %9942
  %v9944 = vsel %vm492, %v9716, 0.0
  %9945 = vadd.xlane.f32.xlu0 %v9944
  %v9946 = vpop.xlane.xlu0 %9945
  %v9947 = vsel %vm492, %v9717, 0.0
  %9948 = vadd.xlane.f32.xlu0 %v9947
  %v9949 = vpop.xlane.xlu0 %9948
  %v9950 = vsel %vm492, %v9718, 0.0
  %9951 = vadd.xlane.f32.xlu0 %v9950
  %v9952 = vpop.xlane.xlu0 %9951
  %v9953 = vsel %vm492, %v9719, 0.0
  %9954 = vadd.xlane.f32.xlu0 %v9953
  %v9955 = vpop.xlane.xlu0 %9954
  %v9956 = vsel %vm492, %v9720, 0.0
  %9957 = vadd.xlane.f32.xlu0 %v9956
  %v9958 = vpop.xlane.xlu0 %9957
  %v9959 = vsel %vm492, %v9721, 0.0
  %9960 = vadd.xlane.f32.xlu0 %v9959
  %v9961 = vpop.xlane.xlu0 %9960
  %v9962 = vsel %vm492, %v9722, 0.0
  %9963 = vadd.xlane.f32.xlu0 %v9962
  %v9964 = vpop.xlane.xlu0 %9963
  %v9965 = vsel %vm492, %v9723, 0.0
  %9966 = vadd.xlane.f32.xlu0 %v9965
  %v9967 = vpop.xlane.xlu0 %9966
  %v9968 = vsel %vm492, %v9724, 0.0
  %9969 = vadd.xlane.f32.xlu0 %v9968
  %v9970 = vpop.xlane.xlu0 %9969
  %v9971 = vsel %vm492, %v9725, 0.0
  %9972 = vadd.xlane.f32.xlu0 %v9971
  %v9973 = vpop.xlane.xlu0 %9972
  %v9974 = vsel %vm492, %v9726, 0.0
  %9975 = vadd.xlane.f32.xlu0 %v9974
  %v9976 = vpop.xlane.xlu0 %9975
  %v9977 = vsel %vm492, %v9727, 0.0
  %9978 = vadd.xlane.f32.xlu0 %v9977
  %v9979 = vpop.xlane.xlu0 %9978
  %v9980 = vsel %vm492, %v9728, 0.0
  %9981 = vadd.xlane.f32.xlu0 %v9980
  %v9982 = vpop.xlane.xlu0 %9981
  %v9983 = vsel %vm492, %v9729, 0.0
  %9984 = vadd.xlane.f32.xlu0 %v9983
  %v9985 = vpop.xlane.xlu0 %9984
  %v9986 = vsel %vm492, %v9730, 0.0
  %9987 = vadd.xlane.f32.xlu0 %v9986
  %v9988 = vpop.xlane.xlu0 %9987
  %v9989 = vsel %vm492, %v9731, 0.0
  %9990 = vadd.xlane.f32.xlu0 %v9989
  %v9991 = vpop.xlane.xlu0 %9990
  %v9992 = vsel %vm492, %v9732, 0.0
  %9993 = vadd.xlane.f32.xlu0 %v9992
  %v9994 = vpop.xlane.xlu0 %9993
  %v9995 = vsel %vm492, %v9733, 0.0
  %9996 = vadd.xlane.f32.xlu0 %v9995
  %v9997 = vpop.xlane.xlu0 %9996
  %v9998 = vsel %vm492, %v9734, 0.0
  %9999 = vadd.xlane.f32.xlu0 %v9998
  %v10000 = vpop.xlane.xlu0 %9999
  %v10001 = vsel %vm492, %v9735, 0.0
  %10002 = vadd.xlane.f32.xlu0 %v10001
  %v10003 = vpop.xlane.xlu0 %10002
  %v10004 = vsel %vm492, %v9736, 0.0
  %10005 = vadd.xlane.f32.xlu0 %v10004
  %v10006 = vpop.xlane.xlu0 %10005
  %v10007 = vsel %vm492, %v9737, 0.0
  %10008 = vadd.xlane.f32.xlu0 %v10007
  %v10009 = vpop.xlane.xlu0 %10008
  %v10010 = vsel %vm492, %v9738, 0.0
  %10011 = vadd.xlane.f32.xlu0 %v10010
  %v10012 = vpop.xlane.xlu0 %10011
  %v10013 = vsel %vm492, %v9739, 0.0
  %10014 = vadd.xlane.f32.xlu0 %v10013
  %v10015 = vpop.xlane.xlu0 %10014
  %v10016 = vsel %vm492, %v9740, 0.0
  %10017 = vadd.xlane.f32.xlu0 %v10016
  %v10018 = vpop.xlane.xlu0 %10017
  %v10019 = vsel %vm492, %v9741, 0.0
  %10020 = vadd.xlane.f32.xlu0 %v10019
  %v10021 = vpop.xlane.xlu0 %10020
  %v10022 = vsel %vm492, %v9742, 0.0
  %10023 = vadd.xlane.f32.xlu0 %v10022
  %v10024 = vpop.xlane.xlu0 %10023
  %v10025 = vsel %vm492, %v9743, 0.0
  %10026 = vadd.xlane.f32.xlu0 %v10025
  %v10027 = vpop.xlane.xlu0 %10026
  %v10028 = vsel %vm492, %v9744, 0.0
  %10029 = vadd.xlane.f32.xlu0 %v10028
  %v10030 = vpop.xlane.xlu0 %10029
  %v10031 = vsel %vm492, %v9745, 0.0
  %10032 = vadd.xlane.f32.xlu0 %v10031
  %v10033 = vpop.xlane.xlu0 %10032
  %v10034 = vsel %vm492, %v9746, 0.0
  %10035 = vadd.xlane.f32.xlu0 %v10034
  %v10036 = vpop.xlane.xlu0 %10035
  %v10037 = vsel %vm492, %v9747, 0.0
  %10038 = vadd.xlane.f32.xlu0 %v10037
  %v10039 = vpop.xlane.xlu0 %10038
  %v10040 = vsel %vm492, %v9748, 0.0
  %10041 = vadd.xlane.f32.xlu0 %v10040
  %v10042 = vpop.xlane.xlu0 %10041
  %v10043 = vsel %vm492, %v9749, 0.0
  %10044 = vadd.xlane.f32.xlu0 %v10043
  %v10045 = vpop.xlane.xlu0 %10044
  %v10046 = vsel %vm492, %v9750, 0.0
  %10047 = vadd.xlane.f32.xlu0 %v10046
  %v10048 = vpop.xlane.xlu0 %10047
  %v10049 = vsel %vm492, %v9751, 0.0
  %10050 = vadd.xlane.f32.xlu0 %v10049
  %v10051 = vpop.xlane.xlu0 %10050
  %v10052 = vsel %vm492, %v9752, 0.0
  %10053 = vadd.xlane.f32.xlu0 %v10052
  %v10054 = vpop.xlane.xlu0 %10053
  %v10055 = vsel %vm492, %v9753, 0.0
  %10056 = vadd.xlane.f32.xlu0 %v10055
  %v10057 = vpop.xlane.xlu0 %10056
  %v10058 = vsel %vm492, %v9754, 0.0
  %10059 = vadd.xlane.f32.xlu0 %v10058
  %v10060 = vpop.xlane.xlu0 %10059
  %v10061 = vsel %vm492, %v9755, 0.0
  %10062 = vadd.xlane.f32.xlu0 %v10061
  %v10063 = vpop.xlane.xlu0 %10062
  %v10064 = vsel %vm492, %v9756, 0.0
  %10065 = vadd.xlane.f32.xlu0 %v10064
  %v10066 = vpop.xlane.xlu0 %10065
  %v10067 = vsel %vm492, %v9757, 0.0
  %10068 = vadd.xlane.f32.xlu0 %v10067
  %v10069 = vpop.xlane.xlu0 %10068
  %v10070 = vsel %vm492, %v9758, 0.0
  %10071 = vadd.xlane.f32.xlu0 %v10070
  %v10072 = vpop.xlane.xlu0 %10071
  %v10073 = vsel %vm492, %v9759, 0.0
  %10074 = vadd.xlane.f32.xlu0 %v10073
  %v10075 = vpop.xlane.xlu0 %10074
  %v10076 = vsel %vm492, %v9760, 0.0
  %10077 = vadd.xlane.f32.xlu0 %v10076
  %v10078 = vpop.xlane.xlu0 %10077
  %v10079 = vsel %vm492, %v9761, 0.0
  %10080 = vadd.xlane.f32.xlu0 %v10079
  %v10081 = vpop.xlane.xlu0 %10080
  %v10082 = vsel %vm492, %v9762, 0.0
  %10083 = vadd.xlane.f32.xlu0 %v10082
  %v10084 = vpop.xlane.xlu0 %10083
  %v10085 = vsel %vm492, %v9763, 0.0
  %10086 = vadd.xlane.f32.xlu0 %v10085
  %v10087 = vpop.xlane.xlu0 %10086
  %v10088 = vsel %vm492, %v9764, 0.0
  %10089 = vadd.xlane.f32.xlu0 %v10088
  %v10090 = vpop.xlane.xlu0 %10089
  %v10091 = vsel %vm492, %v9765, 0.0
  %10092 = vadd.xlane.f32.xlu0 %v10091
  %v10093 = vpop.xlane.xlu0 %10092
  %v10094 = vsel %vm492, %v9766, 0.0
  %10095 = vadd.xlane.f32.xlu0 %v10094
  %v10096 = vpop.xlane.xlu0 %10095
  %v10097 = vsel %vm492, %v9767, 0.0
  %10098 = vadd.xlane.f32.xlu0 %v10097
  %v10099 = vpop.xlane.xlu0 %10098
  %v10100 = vsel %vm492, %v9768, 0.0
  %10101 = vadd.xlane.f32.xlu0 %v10100
  %v10102 = vpop.xlane.xlu0 %10101
  %v10103 = vsel %vm492, %v9769, 0.0
  %10104 = vadd.xlane.f32.xlu0 %v10103
  %v10105 = vpop.xlane.xlu0 %10104
  %v10106 = vsel %vm492, %v9770, 0.0
  %10107 = vadd.xlane.f32.xlu0 %v10106
  %v10108 = vpop.xlane.xlu0 %10107
  %v10109 = vsel %vm492, %v9771, 0.0
  %10110 = vadd.xlane.f32.xlu0 %v10109
  %v10111 = vpop.xlane.xlu0 %10110
  %v10112 = vsel %vm492, %v9772, 0.0
  %10113 = vadd.xlane.f32.xlu0 %v10112
  %v10114 = vpop.xlane.xlu0 %10113
  %v10115 = vsel %vm492, %v9773, 0.0
  %10116 = vadd.xlane.f32.xlu0 %v10115
  %v10117 = vpop.xlane.xlu0 %10116
  %v10118 = vsel %vm492, %v9774, 0.0
  %10119 = vadd.xlane.f32.xlu0 %v10118
  %v10120 = vpop.xlane.xlu0 %10119
  %v10121 = vsel %vm492, %v9775, 0.0
  %10122 = vadd.xlane.f32.xlu0 %v10121
  %v10123 = vpop.xlane.xlu0 %10122
  %v10124 = vsel %vm492, %v9776, 0.0
  %10125 = vadd.xlane.f32.xlu0 %v10124
  %v10126 = vpop.xlane.xlu0 %10125
  %v10127 = vsel %vm492, %v9777, 0.0
  %10128 = vadd.xlane.f32.xlu0 %v10127
  %v10129 = vpop.xlane.xlu0 %10128
  %v10130 = vsel %vm492, %v9778, 0.0
  %10131 = vadd.xlane.f32.xlu0 %v10130
  %v10132 = vpop.xlane.xlu0 %10131
  %v10133 = vsel %vm492, %v9779, 0.0
  %10134 = vadd.xlane.f32.xlu0 %v10133
  %v10135 = vpop.xlane.xlu0 %10134
  %v10136 = vsel %vm492, %v9780, 0.0
  %10137 = vadd.xlane.f32.xlu0 %v10136
  %v10138 = vpop.xlane.xlu0 %10137
  %v10139 = vsel %vm492, %v9781, 0.0
  %10140 = vadd.xlane.f32.xlu0 %v10139
  %v10141 = vpop.xlane.xlu0 %10140
  %v10142 = vsel %vm492, %v9782, 0.0
  %10143 = vadd.xlane.f32.xlu0 %v10142
  %v10144 = vpop.xlane.xlu0 %10143
  %v10145 = vsel %vm492, %v9783, 0.0
  %10146 = vadd.xlane.f32.xlu0 %v10145
  %v10147 = vpop.xlane.xlu0 %10146
  %v10148 = vsel %vm492, %v9784, 0.0
  %10149 = vadd.xlane.f32.xlu0 %v10148
  %v10150 = vpop.xlane.xlu0 %10149
  %v10151 = vsel %vm492, %v9785, 0.0
  %10152 = vadd.xlane.f32.xlu0 %v10151
  %v10153 = vpop.xlane.xlu0 %10152
  %v10154 = vsel %vm492, %v9786, 0.0
  %10155 = vadd.xlane.f32.xlu0 %v10154
  %v10156 = vpop.xlane.xlu0 %10155
  %v10157 = vsel %vm492, %v9787, 0.0
  %10158 = vadd.xlane.f32.xlu0 %v10157
  %v10159 = vpop.xlane.xlu0 %10158
  %v10160 = vsel %vm492, %v9788, 0.0
  %10161 = vadd.xlane.f32.xlu0 %v10160
  %v10162 = vpop.xlane.xlu0 %10161
  %v10163 = vsel %vm492, %v9789, 0.0
  %10164 = vadd.xlane.f32.xlu0 %v10163
  %v10165 = vpop.xlane.xlu0 %10164
  %v10166 = vsel %vm492, %v9790, 0.0
  %10167 = vadd.xlane.f32.xlu0 %v10166
  %v10168 = vpop.xlane.xlu0 %10167
  %v10169 = vsel %vm492, %v9791, 0.0
  %10170 = vadd.xlane.f32.xlu0 %v10169
  %v10171 = vpop.xlane.xlu0 %10170
  %v10172 = vsel %vm492, %v9792, 0.0
  %10173 = vadd.xlane.f32.xlu0 %v10172
  %v10174 = vpop.xlane.xlu0 %10173
  %v10175 = vsel %vm492, %v9793, 0.0
  %10176 = vadd.xlane.f32.xlu0 %v10175
  %v10177 = vpop.xlane.xlu0 %10176
  %v10178 = vld [vmem:[#allocation4] sm:$0x1]
  %v10180 = vperm.slane %v10178, 0
  %10181 = vset.pattern.permute.xlu0 0
  %10182 = vperm.xlu0 %10181, %v10180
  %v10183 = vpop.permute.xlu0 %10182
  %v10185 = vadd.f32 %v9796, %v10183
  %v10186 = vadd.f32 %v9799, %v10183
  %v10187 = vadd.f32 %v9802, %v10183
  %v10188 = vadd.f32 %v9805, %v10183
  %v10189 = vadd.f32 %v9808, %v10183
  %v10190 = vadd.f32 %v9811, %v10183
  %v10191 = vadd.f32 %v9814, %v10183
  %v10192 = vadd.f32 %v9817, %v10183
  %v10193 = vadd.f32 %v9820, %v10183
  %v10194 = vadd.f32 %v9823, %v10183
  %v10195 = vadd.f32 %v9826, %v10183
  %v10196 = vadd.f32 %v9829, %v10183
  %v10197 = vadd.f32 %v9832, %v10183
  %v10198 = vadd.f32 %v9835, %v10183
  %v10199 = vadd.f32 %v9838, %v10183
  %v10200 = vadd.f32 %v9841, %v10183
  %v10201 = vadd.f32 %v9844, %v10183
  %v10202 = vadd.f32 %v9847, %v10183
  %v10203 = vadd.f32 %v9850, %v10183
  %v10204 = vadd.f32 %v9853, %v10183
  %v10205 = vadd.f32 %v9856, %v10183
  %v10206 = vadd.f32 %v9859, %v10183
  %v10207 = vadd.f32 %v9862, %v10183
  %v10208 = vadd.f32 %v9865, %v10183
  %v10209 = vadd.f32 %v9868, %v10183
  %v10210 = vadd.f32 %v9871, %v10183
  %v10211 = vadd.f32 %v9874, %v10183
  %v10212 = vadd.f32 %v9877, %v10183
  %v10213 = vadd.f32 %v9880, %v10183
  %v10214 = vadd.f32 %v9883, %v10183
  %v10215 = vadd.f32 %v9886, %v10183
  %v10216 = vadd.f32 %v9889, %v10183
  %v10217 = vadd.f32 %v9892, %v10183
  %v10218 = vadd.f32 %v9895, %v10183
  %v10219 = vadd.f32 %v9898, %v10183
  %v10220 = vadd.f32 %v9901, %v10183
  %v10221 = vadd.f32 %v9904, %v10183
  %v10222 = vadd.f32 %v9907, %v10183
  %v10223 = vadd.f32 %v9910, %v10183
  %v10224 = vadd.f32 %v9913, %v10183
  %v10225 = vadd.f32 %v9916, %v10183
  %v10226 = vadd.f32 %v9919, %v10183
  %v10227 = vadd.f32 %v9922, %v10183
  %v10228 = vadd.f32 %v9925, %v10183
  %v10229 = vadd.f32 %v9928, %v10183
  %v10230 = vadd.f32 %v9931, %v10183
  %v10231 = vadd.f32 %v9934, %v10183
  %v10232 = vadd.f32 %v9937, %v10183
  %v10233 = vadd.f32 %v9940, %v10183
  %v10234 = vadd.f32 %v9943, %v10183
  %v10235 = vadd.f32 %v9946, %v10183
  %v10236 = vadd.f32 %v9949, %v10183
  %v10237 = vadd.f32 %v9952, %v10183
  %v10238 = vadd.f32 %v9955, %v10183
  %v10239 = vadd.f32 %v9958, %v10183
  %v10240 = vadd.f32 %v9961, %v10183
  %v10241 = vadd.f32 %v9964, %v10183
  %v10242 = vadd.f32 %v9967, %v10183
  %v10243 = vadd.f32 %v9970, %v10183
  %v10244 = vadd.f32 %v9973, %v10183
  %v10245 = vadd.f32 %v9976, %v10183
  %v10246 = vadd.f32 %v9979, %v10183
  %v10247 = vadd.f32 %v9982, %v10183
  %v10248 = vadd.f32 %v9985, %v10183
  %v10249 = vadd.f32 %v9988, %v10183
  %v10250 = vadd.f32 %v9991, %v10183
  %v10251 = vadd.f32 %v9994, %v10183
  %v10252 = vadd.f32 %v9997, %v10183
  %v10253 = vadd.f32 %v10000, %v10183
  %v10254 = vadd.f32 %v10003, %v10183
  %v10255 = vadd.f32 %v10006, %v10183
  %v10256 = vadd.f32 %v10009, %v10183
  %v10257 = vadd.f32 %v10012, %v10183
  %v10258 = vadd.f32 %v10015, %v10183
  %v10259 = vadd.f32 %v10018, %v10183
  %v10260 = vadd.f32 %v10021, %v10183
  %v10261 = vadd.f32 %v10024, %v10183
  %v10262 = vadd.f32 %v10027, %v10183
  %v10263 = vadd.f32 %v10030, %v10183
  %v10264 = vadd.f32 %v10033, %v10183
  %v10265 = vadd.f32 %v10036, %v10183
  %v10266 = vadd.f32 %v10039, %v10183
  %v10267 = vadd.f32 %v10042, %v10183
  %v10268 = vadd.f32 %v10045, %v10183
  %v10269 = vadd.f32 %v10048, %v10183
  %v10270 = vadd.f32 %v10051, %v10183
  %v10271 = vadd.f32 %v10054, %v10183
  %v10272 = vadd.f32 %v10057, %v10183
  %v10273 = vadd.f32 %v10060, %v10183
  %v10274 = vadd.f32 %v10063, %v10183
  %v10275 = vadd.f32 %v10066, %v10183
  %v10276 = vadd.f32 %v10069, %v10183
  %v10277 = vadd.f32 %v10072, %v10183
  %v10278 = vadd.f32 %v10075, %v10183
  %v10279 = vadd.f32 %v10078, %v10183
  %v10280 = vadd.f32 %v10081, %v10183
  %v10281 = vadd.f32 %v10084, %v10183
  %v10282 = vadd.f32 %v10087, %v10183
  %v10283 = vadd.f32 %v10090, %v10183
  %v10284 = vadd.f32 %v10093, %v10183
  %v10285 = vadd.f32 %v10096, %v10183
  %v10286 = vadd.f32 %v10099, %v10183
  %v10287 = vadd.f32 %v10102, %v10183
  %v10288 = vadd.f32 %v10105, %v10183
  %v10289 = vadd.f32 %v10108, %v10183
  %v10290 = vadd.f32 %v10111, %v10183
  %v10291 = vadd.f32 %v10114, %v10183
  %v10292 = vadd.f32 %v10117, %v10183
  %v10293 = vadd.f32 %v10120, %v10183
  %v10294 = vadd.f32 %v10123, %v10183
  %v10295 = vadd.f32 %v10126, %v10183
  %v10296 = vadd.f32 %v10129, %v10183
  %v10297 = vadd.f32 %v10132, %v10183
  %v10298 = vadd.f32 %v10135, %v10183
  %v10299 = vadd.f32 %v10138, %v10183
  %v10300 = vadd.f32 %v10141, %v10183
  %v10301 = vadd.f32 %v10144, %v10183
  %v10302 = vadd.f32 %v10147, %v10183
  %v10303 = vadd.f32 %v10150, %v10183
  %v10304 = vadd.f32 %v10153, %v10183
  %v10305 = vadd.f32 %v10156, %v10183
  %v10306 = vadd.f32 %v10159, %v10183
  %v10307 = vadd.f32 %v10162, %v10183
  %v10308 = vadd.f32 %v10165, %v10183
  %v10309 = vadd.f32 %v10168, %v10183
  %v10310 = vadd.f32 %v10171, %v10183
  %v10311 = vadd.f32 %v10174, %v10183
  %v10312 = vadd.f32 %v10177, %v10183
  %v10441 = vlaneseq
  %v10442 = vand.u32 %v10441, 127
  %v10443 = vperm.slane %v10185, %v10442
  %v10444 = vadd.s32 %v10442, 4294967288
  %v10445 = vperm.slane %v10186, %v10444
  %vm10446 = vcmask 130112
  %v10447 = vsel %vm10446, %v10445, %v10443
  %v10448 = vadd.s32 %v10442, 4294967280
  %v10449 = vperm.slane %v10187, %v10448
  %vm10450 = vcmask 195712
  %v10451 = vsel %vm10450, %v10449, %v10447
  %v10452 = vadd.s32 %v10442, 4294967272
  %v10453 = vperm.slane %v10188, %v10452
  %vm10454 = vcmask 261312
  %v10455 = vsel %vm10454, %v10453, %v10451
  %v10456 = vadd.s32 %v10442, 4294967264
  %v10457 = vperm.slane %v10189, %v10456
  %vm10458 = vcmask 326912
  %v10459 = vsel %vm10458, %v10457, %v10455
  %v10460 = vadd.s32 %v10442, 4294967256
  %v10461 = vperm.slane %v10190, %v10460
  %vm10462 = vcmask 392512
  %v10463 = vsel %vm10462, %v10461, %v10459
  %v10464 = vadd.s32 %v10442, 4294967248
  %v10465 = vperm.slane %v10191, %v10464
  %vm10466 = vcmask 458112
  %v10467 = vsel %vm10466, %v10465, %v10463
  %v10468 = vadd.s32 %v10442, 4294967240
  %v10469 = vperm.slane %v10192, %v10468
  %vm10470 = vcmask 523712
  %v10471 = vsel %vm10470, %v10469, %v10467
  %v10472 = vadd.s32 %v10442, 4294967232
  %v10473 = vperm.slane %v10193, %v10472
  %vm10474 = vcmask 589312
  %v10475 = vsel %vm10474, %v10473, %v10471
  %v10476 = vadd.s32 %v10442, 4294967224
  %v10477 = vperm.slane %v10194, %v10476
  %vm10478 = vcmask 654912
  %v10479 = vsel %vm10478, %v10477, %v10475
  %v10480 = vadd.s32 %v10442, 4294967216
  %v10481 = vperm.slane %v10195, %v10480
  %vm10482 = vcmask 720512
  %v10483 = vsel %vm10482, %v10481, %v10479
  %v10484 = vadd.s32 %v10442, 4294967208
  %v10485 = vperm.slane %v10196, %v10484
  %vm10486 = vcmask 786112
  %v10487 = vsel %vm10486, %v10485, %v10483
  %v10488 = vadd.s32 %v10442, 4294967200
  %v10489 = vperm.slane %v10197, %v10488
  %vm10490 = vcmask 851712
  %v10491 = vsel %vm10490, %v10489, %v10487
  %v10492 = vadd.s32 %v10442, 4294967192
  %v10493 = vperm.slane %v10198, %v10492
  %vm10494 = vcmask 917312
  %v10495 = vsel %vm10494, %v10493, %v10491
  %v10496 = vadd.s32 %v10442, 4294967184
  %v10497 = vperm.slane %v10199, %v10496
  %vm10498 = vcmask 982912
  %v10499 = vsel %vm10498, %v10497, %v10495
  %v10500 = vadd.s32 %v10442, 4294967176
  %v10501 = vperm.slane %v10200, %v10500
  %vm10502 = vcmask 1048512
  %v10503 = vsel %vm10502, %v10501, %v10499
  %v10504 = vperm.slane %v10201, %v10442
  %v10505 = vperm.slane %v10202, %v10444
  %v10506 = vsel %vm10446, %v10505, %v10504
  %v10507 = vperm.slane %v10203, %v10448
  %v10508 = vsel %vm10450, %v10507, %v10506
  %v10509 = vperm.slane %v10204, %v10452
  %v10510 = vsel %vm10454, %v10509, %v10508
  %v10511 = vperm.slane %v10205, %v10456
  %v10512 = vsel %vm10458, %v10511, %v10510
  %v10513 = vperm.slane %v10206, %v10460
  %v10514 = vsel %vm10462, %v10513, %v10512
  %v10515 = vperm.slane %v10207, %v10464
  %v10516 = vsel %vm10466, %v10515, %v10514
  %v10517 = vperm.slane %v10208, %v10468
  %v10518 = vsel %vm10470, %v10517, %v10516
  %v10519 = vperm.slane %v10209, %v10472
  %v10520 = vsel %vm10474, %v10519, %v10518
  %v10521 = vperm.slane %v10210, %v10476
  %v10522 = vsel %vm10478, %v10521, %v10520
  %v10523 = vperm.slane %v10211, %v10480
  %v10524 = vsel %vm10482, %v10523, %v10522
  %v10525 = vperm.slane %v10212, %v10484
  %v10526 = vsel %vm10486, %v10525, %v10524
  %v10527 = vperm.slane %v10213, %v10488
  %v10528 = vsel %vm10490, %v10527, %v10526
  %v10529 = vperm.slane %v10214, %v10492
  %v10530 = vsel %vm10494, %v10529, %v10528
  %v10531 = vperm.slane %v10215, %v10496
  %v10532 = vsel %vm10498, %v10531, %v10530
  %v10533 = vperm.slane %v10216, %v10500
  %v10534 = vsel %vm10502, %v10533, %v10532
  %v10535 = vperm.slane %v10217, %v10442
  %v10536 = vperm.slane %v10218, %v10444
  %v10537 = vsel %vm10446, %v10536, %v10535
  %v10538 = vperm.slane %v10219, %v10448
  %v10539 = vsel %vm10450, %v10538, %v10537
  %v10540 = vperm.slane %v10220, %v10452
  %v10541 = vsel %vm10454, %v10540, %v10539
  %v10542 = vperm.slane %v10221, %v10456
  %v10543 = vsel %vm10458, %v10542, %v10541
  %v10544 = vperm.slane %v10222, %v10460
  %v10545 = vsel %vm10462, %v10544, %v10543
  %v10546 = vperm.slane %v10223, %v10464
  %v10547 = vsel %vm10466, %v10546, %v10545
  %v10548 = vperm.slane %v10224, %v10468
  %v10549 = vsel %vm10470, %v10548, %v10547
  %v10550 = vperm.slane %v10225, %v10472
  %v10551 = vsel %vm10474, %v10550, %v10549
  %v10552 = vperm.slane %v10226, %v10476
  %v10553 = vsel %vm10478, %v10552, %v10551
  %v10554 = vperm.slane %v10227, %v10480
  %v10555 = vsel %vm10482, %v10554, %v10553
  %v10556 = vperm.slane %v10228, %v10484
  %v10557 = vsel %vm10486, %v10556, %v10555
  %v10558 = vperm.slane %v10229, %v10488
  %v10559 = vsel %vm10490, %v10558, %v10557
  %v10560 = vperm.slane %v10230, %v10492
  %v10561 = vsel %vm10494, %v10560, %v10559
  %v10562 = vperm.slane %v10231, %v10496
  %v10563 = vsel %vm10498, %v10562, %v10561
  %v10564 = vperm.slane %v10232, %v10500
  %v10565 = vsel %vm10502, %v10564, %v10563
  %v10566 = vperm.slane %v10233, %v10442
  %v10567 = vperm.slane %v10234, %v10444
  %v10568 = vsel %vm10446, %v10567, %v10566
  %v10569 = vperm.slane %v10235, %v10448
  %v10570 = vsel %vm10450, %v10569, %v10568
  %v10571 = vperm.slane %v10236, %v10452
  %v10572 = vsel %vm10454, %v10571, %v10570
  %v10573 = vperm.slane %v10237, %v10456
  %v10574 = vsel %vm10458, %v10573, %v10572
  %v10575 = vperm.slane %v10238, %v10460
  %v10576 = vsel %vm10462, %v10575, %v10574
  %v10577 = vperm.slane %v10239, %v10464
  %v10578 = vsel %vm10466, %v10577, %v10576
  %v10579 = vperm.slane %v10240, %v10468
  %v10580 = vsel %vm10470, %v10579, %v10578
  %v10581 = vperm.slane %v10241, %v10472
  %v10582 = vsel %vm10474, %v10581, %v10580
  %v10583 = vperm.slane %v10242, %v10476
  %v10584 = vsel %vm10478, %v10583, %v10582
  %v10585 = vperm.slane %v10243, %v10480
  %v10586 = vsel %vm10482, %v10585, %v10584
  %v10587 = vperm.slane %v10244, %v10484
  %v10588 = vsel %vm10486, %v10587, %v10586
  %v10589 = vperm.slane %v10245, %v10488
  %v10590 = vsel %vm10490, %v10589, %v10588
  %v10591 = vperm.slane %v10246, %v10492
  %v10592 = vsel %vm10494, %v10591, %v10590
  %v10593 = vperm.slane %v10247, %v10496
  %v10594 = vsel %vm10498, %v10593, %v10592
  %v10595 = vperm.slane %v10248, %v10500
  %v10596 = vsel %vm10502, %v10595, %v10594
  %v10597 = vperm.slane %v10249, %v10442
  %v10598 = vperm.slane %v10250, %v10444
  %v10599 = vsel %vm10446, %v10598, %v10597
  %v10600 = vperm.slane %v10251, %v10448
  %v10601 = vsel %vm10450, %v10600, %v10599
  %v10602 = vperm.slane %v10252, %v10452
  %v10603 = vsel %vm10454, %v10602, %v10601
  %v10604 = vperm.slane %v10253, %v10456
  %v10605 = vsel %vm10458, %v10604, %v10603
  %v10606 = vperm.slane %v10254, %v10460
  %v10607 = vsel %vm10462, %v10606, %v10605
  %v10608 = vperm.slane %v10255, %v10464
  %v10609 = vsel %vm10466, %v10608, %v10607
  %v10610 = vperm.slane %v10256, %v10468
  %v10611 = vsel %vm10470, %v10610, %v10609
  %v10612 = vperm.slane %v10257, %v10472
  %v10613 = vsel %vm10474, %v10612, %v10611
  %v10614 = vperm.slane %v10258, %v10476
  %v10615 = vsel %vm10478, %v10614, %v10613
  %v10616 = vperm.slane %v10259, %v10480
  %v10617 = vsel %vm10482, %v10616, %v10615
  %v10618 = vperm.slane %v10260, %v10484
  %v10619 = vsel %vm10486, %v10618, %v10617
  %v10620 = vperm.slane %v10261, %v10488
  %v10621 = vsel %vm10490, %v10620, %v10619
  %v10622 = vperm.slane %v10262, %v10492
  %v10623 = vsel %vm10494, %v10622, %v10621
  %v10624 = vperm.slane %v10263, %v10496
  %v10625 = vsel %vm10498, %v10624, %v10623
  %v10626 = vperm.slane %v10264, %v10500
  %v10627 = vsel %vm10502, %v10626, %v10625
  %v10628 = vperm.slane %v10265, %v10442
  %v10629 = vperm.slane %v10266, %v10444
  %v10630 = vsel %vm10446, %v10629, %v10628
  %v10631 = vperm.slane %v10267, %v10448
  %v10632 = vsel %vm10450, %v10631, %v10630
  %v10633 = vperm.slane %v10268, %v10452
  %v10634 = vsel %vm10454, %v10633, %v10632
  %v10635 = vperm.slane %v10269, %v10456
  %v10636 = vsel %vm10458, %v10635, %v10634
  %v10637 = vperm.slane %v10270, %v10460
  %v10638 = vsel %vm10462, %v10637, %v10636
  %v10639 = vperm.slane %v10271, %v10464
  %v10640 = vsel %vm10466, %v10639, %v10638
  %v10641 = vperm.slane %v10272, %v10468
  %v10642 = vsel %vm10470, %v10641, %v10640
  %v10643 = vperm.slane %v10273, %v10472
  %v10644 = vsel %vm10474, %v10643, %v10642
  %v10645 = vperm.slane %v10274, %v10476
  %v10646 = vsel %vm10478, %v10645, %v10644
  %v10647 = vperm.slane %v10275, %v10480
  %v10648 = vsel %vm10482, %v10647, %v10646
  %v10649 = vperm.slane %v10276, %v10484
  %v10650 = vsel %vm10486, %v10649, %v10648
  %v10651 = vperm.slane %v10277, %v10488
  %v10652 = vsel %vm10490, %v10651, %v10650
  %v10653 = vperm.slane %v10278, %v10492
  %v10654 = vsel %vm10494, %v10653, %v10652
  %v10655 = vperm.slane %v10279, %v10496
  %v10656 = vsel %vm10498, %v10655, %v10654
  %v10657 = vperm.slane %v10280, %v10500
  %v10658 = vsel %vm10502, %v10657, %v10656
  %v10659 = vperm.slane %v10281, %v10442
  %v10660 = vperm.slane %v10282, %v10444
  %v10661 = vsel %vm10446, %v10660, %v10659
  %v10662 = vperm.slane %v10283, %v10448
  %v10663 = vsel %vm10450, %v10662, %v10661
  %v10664 = vperm.slane %v10284, %v10452
  %v10665 = vsel %vm10454, %v10664, %v10663
  %v10666 = vperm.slane %v10285, %v10456
  %v10667 = vsel %vm10458, %v10666, %v10665
  %v10668 = vperm.slane %v10286, %v10460
  %v10669 = vsel %vm10462, %v10668, %v10667
  %v10670 = vperm.slane %v10287, %v10464
  %v10671 = vsel %vm10466, %v10670, %v10669
  %v10672 = vperm.slane %v10288, %v10468
  %v10673 = vsel %vm10470, %v10672, %v10671
  %v10674 = vperm.slane %v10289, %v10472
  %v10675 = vsel %vm10474, %v10674, %v10673
  %v10676 = vperm.slane %v10290, %v10476
  %v10677 = vsel %vm10478, %v10676, %v10675
  %v10678 = vperm.slane %v10291, %v10480
  %v10679 = vsel %vm10482, %v10678, %v10677
  %v10680 = vperm.slane %v10292, %v10484
  %v10681 = vsel %vm10486, %v10680, %v10679
  %v10682 = vperm.slane %v10293, %v10488
  %v10683 = vsel %vm10490, %v10682, %v10681
  %v10684 = vperm.slane %v10294, %v10492
  %v10685 = vsel %vm10494, %v10684, %v10683
  %v10686 = vperm.slane %v10295, %v10496
  %v10687 = vsel %vm10498, %v10686, %v10685
  %v10688 = vperm.slane %v10296, %v10500
  %v10689 = vsel %vm10502, %v10688, %v10687
  %v10690 = vperm.slane %v10297, %v10442
  %v10691 = vperm.slane %v10298, %v10444
  %v10692 = vsel %vm10446, %v10691, %v10690
  %v10693 = vperm.slane %v10299, %v10448
  %v10694 = vsel %vm10450, %v10693, %v10692
  %v10695 = vperm.slane %v10300, %v10452
  %v10696 = vsel %vm10454, %v10695, %v10694
  %v10697 = vperm.slane %v10301, %v10456
  %v10698 = vsel %vm10458, %v10697, %v10696
  %v10699 = vperm.slane %v10302, %v10460
  %v10700 = vsel %vm10462, %v10699, %v10698
  %v10701 = vperm.slane %v10303, %v10464
  %v10702 = vsel %vm10466, %v10701, %v10700
  %v10703 = vperm.slane %v10304, %v10468
  %v10704 = vsel %vm10470, %v10703, %v10702
  %v10705 = vperm.slane %v10305, %v10472
  %v10706 = vsel %vm10474, %v10705, %v10704
  %v10707 = vperm.slane %v10306, %v10476
  %v10708 = vsel %vm10478, %v10707, %v10706
  %v10709 = vperm.slane %v10307, %v10480
  %v10710 = vsel %vm10482, %v10709, %v10708
  %v10711 = vperm.slane %v10308, %v10484
  %v10712 = vsel %vm10486, %v10711, %v10710
  %v10713 = vperm.slane %v10309, %v10488
  %v10714 = vsel %vm10490, %v10713, %v10712
  %v10715 = vperm.slane %v10310, %v10492
  %v10716 = vsel %vm10494, %v10715, %v10714
  %v10717 = vperm.slane %v10311, %v10496
  %v10718 = vsel %vm10498, %v10717, %v10716
  %v10719 = vperm.slane %v10312, %v10500
  %v10720 = vsel %vm10502, %v10719, %v10718
  %vm10721 = vcmask 1041409
  %v10722 = vsel %vm10721, %v10534, %v10503
  %vm10723 = vcmask 1042434
  %v10724 = vsel %vm10723, %v10565, %v10722
  %vm10725 = vcmask 1043459
  %v10726 = vsel %vm10725, %v10596, %v10724
  %vm10727 = vcmask 1044484
  %v10728 = vsel %vm10727, %v10627, %v10726
  %vm10729 = vcmask 1045509
  %v10730 = vsel %vm10729, %v10658, %v10728
  %vm10731 = vcmask 1046534
  %v10732 = vsel %vm10731, %v10689, %v10730
  %vm10733 = vcmask 1047559
  %v10734 = vsel %vm10733, %v10720, %v10732
  %10736 = vst [vmem:[%s8] sm:$0xff] %v10734
  // Predicated region
  $region34: #{lstm_single_2fc_forward.1} parent=0 // pred_check
    _
  $region35: #{lstm_single_2fc_forward.1} parent=0 // pred_check_branch
    %10738 = sbr.rel (0) target = $region37
  $region36: #{lstm_single_2fc_forward.1} parent=0 // pred_region
    _
  $region37: #{lstm_single_2fc_forward.1} parent=0 // pred_fallthru
    _
  // Predicated region
  $region38: #{lstm_single_2fc_forward.1} parent=0 // pred_check
    _
  $region39: #{lstm_single_2fc_forward.1} parent=0 // pred_check_branch
    %10740 = sbr.rel (0) target = $region41
  $region40: #{lstm_single_2fc_forward.1} parent=0 // pred_region
    _
  $region41: #{lstm_single_2fc_forward.1} parent=0 // pred_fallthru
    _

</llo_original>
